<compile_context>
chip_gen: v7x
topology: tpu7x:2x2x1
jax: 0.10.0
libtpu: 0.0.40
codegen_flags: <defaults>
</compile_context>

<pallas_src>
import functools

import jax
import jax.numpy as jnp
from jax.experimental import pallas as pl
from jax.experimental.pallas import tpu as pltpu

# --- config (mirrors the PyTorch `config` object, small synthetic sizes) -----
D_MODEL = 32
D_HEAD = 16
N_HEADS = 4
D_MLP = 64
N_LAYERS = 2
LN_EPS = 1e-5

SEQ = 2        # batch-like dim
RESIDUE = 16   # attention/sequence length


def transformer_kernel(
    x_ref,
    wq_ref, wk_ref, wv_ref, bq_ref, bk_ref, bv_ref, wo_ref, bo_ref,
    ln1_w_ref, ln1_b_ref,
    w_in_ref, b_in_ref, w_out_ref, b_out_ref,
    ln2_w_ref, ln2_b_ref,
    o_ref,
    *, seq, n_heads, n_layers,
):
    rows, d_model = x_ref.shape            # rows = seq * residue
    residue = rows // seq
    d_head = wq_ref.shape[-1]
    scale = 1.0 / (d_head ** 0.5)

    def layer_norm(v, w, b):
        mean = jnp.mean(v, axis=-1, keepdims=True)
        cent = v - mean
        var = jnp.mean(cent * cent, axis=-1, keepdims=True)   # unbiased=False
        return w * cent * jax.lax.rsqrt(var + LN_EPS) + b

    def layer_body(l, x):
        # One dynamic leading-dim load per weight stack; per-head access is
        # then static value indexing (lane-aligned, no concatenates).
        wq, wk, wv, wo = wq_ref[l], wk_ref[l], wv_ref[l], wo_ref[l]
        bq, bk, bv = bq_ref[l], bk_ref[l], bv_ref[l]

        attn = jnp.zeros((rows, d_model), jnp.float32)
        for h in range(n_heads):            # static unroll (n_heads = 4)
            qh = jnp.dot(x, wq[h], preferred_element_type=jnp.float32) + bq[h]
            kh = jnp.dot(x, wk[h], preferred_element_type=jnp.float32) + bk[h]
            vh = jnp.dot(x, wv[h], preferred_element_type=jnp.float32) + bv[h]
            q3 = qh.reshape(seq, residue, d_head)
            k3 = kh.reshape(seq, residue, d_head)
            v3 = vh.reshape(seq, residue, d_head)
            # seq-batched scores; K transpose folded into the MXU feed.
            s = jnp.einsum('sqd,skd->sqk', q3, k3,
                           preferred_element_type=jnp.float32) * scale
            s = s - jnp.max(s, axis=-1, keepdims=True)
            p = jnp.exp(s)
            p = p / jnp.sum(p, axis=-1, keepdims=True)        # exact softmax
            z = jnp.einsum('sqk,skd->sqd', p, v3,
                           preferred_element_type=jnp.float32)
            attn = attn + jnp.dot(z.reshape(rows, d_head), wo[h],
                                  preferred_element_type=jnp.float32)

        # residual + LayerNorm (attn); b_O was pre-summed over heads host-side
        x1 = layer_norm(x + attn + bo_ref[l], ln1_w_ref[l], ln1_b_ref[l])

        # MLP
        h1 = jnp.dot(x1, w_in_ref[l],
                     preferred_element_type=jnp.float32) + b_in_ref[l]
        h1 = jnp.maximum(h1, 0.0)
        mlp = jnp.dot(h1, w_out_ref[l],
                      preferred_element_type=jnp.float32) + b_out_ref[l]

        # residual + LayerNorm (mlp)
        return layer_norm(x1 + mlp, ln2_w_ref[l], ln2_b_ref[l])

    x0 = x_ref[...].astype(jnp.float32)
    out = jax.lax.fori_loop(0, n_layers, layer_body, x0, unroll=True)
    o_ref[...] = out.astype(o_ref.dtype)


def transformer_forward(x, fused_params):
    """x: (S, R, D); fused_params: tuple of arrays with leading n_layers axis."""
    S, R, D = x.shape
    n_layers = fused_params[0].shape[0]
    x2d = x.reshape(S * R, D)               # lane/sublane-friendlier 2D slab

    vmem = pl.BlockSpec(memory_space=pltpu.MemorySpace.VMEM)   # whole array, resident
    out2d = pl.pallas_call(
        functools.partial(transformer_kernel,
                          seq=S, n_heads=N_HEADS, n_layers=n_layers),
        out_shape=jax.ShapeDtypeStruct((S * R, D), x.dtype),
        in_specs=[vmem] * (1 + len(fused_params)),
        out_specs=vmem,
    )(x2d, *fused_params)
    return out2d.reshape(S, R, D)


# ---------------- deterministic parameter init, fusion, pure-JAX reference ----
def _kaiming_uniform(k, shape, fan_in):
    bound = jnp.sqrt(6.0 / fan_in)
    return jax.random.uniform(k, shape, jnp.float32, -bound, bound)


def init_layer_params(key):
    ks = jax.random.split(key, 16)
    # per-head weights stacked on a leading n_heads axis (matches the module)
    W_Q = _kaiming_uniform(ks[0], (N_HEADS, D_MODEL, D_HEAD), D_MODEL)
    W_K = _kaiming_uniform(ks[1], (N_HEADS, D_MODEL, D_HEAD), D_MODEL)
    W_V = _kaiming_uniform(ks[2], (N_HEADS, D_MODEL, D_HEAD), D_MODEL)
    W_O = _kaiming_uniform(ks[3], (N_HEADS, D_HEAD, D_MODEL), D_HEAD)
    # module zero-inits biases; use small random values so the fused bias math
    # (incl. the pre-summed b_O) is actually exercised by the check.
    b_Q = 0.05 * jax.random.normal(ks[4], (N_HEADS, D_HEAD), jnp.float32)
    b_K = 0.05 * jax.random.normal(ks[5], (N_HEADS, D_HEAD), jnp.float32)
    b_V = 0.05 * jax.random.normal(ks[6], (N_HEADS, D_HEAD), jnp.float32)
    b_O = 0.05 * jax.random.normal(ks[7], (N_HEADS, D_MODEL), jnp.float32)

    ln1_w = 1.0 + 0.05 * jax.random.normal(ks[8], (1, D_MODEL), jnp.float32)
    ln1_b = 0.05 * jax.random.normal(ks[9], (1, D_MODEL), jnp.float32)
    ln2_w = 1.0 + 0.05 * jax.random.normal(ks[10], (1, D_MODEL), jnp.float32)
    ln2_b = 0.05 * jax.random.normal(ks[11], (1, D_MODEL), jnp.float32)

    W_in = _kaiming_uniform(ks[12], (D_MODEL, D_MLP), D_MODEL)
    b_in = 0.05 * jax.random.normal(ks[13], (1, D_MLP), jnp.float32)
    W_out = _kaiming_uniform(ks[14], (D_MLP, D_MODEL), D_MLP)
    b_out = 0.05 * jax.random.normal(ks[15], (1, D_MODEL), jnp.float32)

    return (W_Q, W_K, W_V, W_O, b_Q, b_K, b_V, b_O,
            ln1_w, ln1_b, W_in, b_in, W_out, b_out, ln2_w, ln2_b)


def fuse_layer_params(p):
    """Host-side re-layout: per-head stacks kept on a leading head axis
    (lane-aligned per-head tiles), per-head output biases pre-summed."""
    (W_Q, W_K, W_V, W_O, b_Q, b_K, b_V, b_O,
     ln1_w, ln1_b, W_in, b_in, W_out, b_out, ln2_w, ln2_b) = p
    return (W_Q, W_K, W_V,                       # (H, D, Dh)
            b_Q[:, None, :], b_K[:, None, :], b_V[:, None, :],   # (H, 1, Dh)
            W_O,                                 # (H, Dh, D)
            jnp.sum(b_O, axis=0)[None, :],       # (1, D): heads summed in module
            ln1_w, ln1_b, W_in, b_in, W_out, b_out, ln2_w, ln2_b)


def stack_layers(per_layer_fused):
    n = len(per_layer_fused[0])
    return tuple(jnp.stack([layer[i] for layer in per_layer_fused], axis=0)
                 for i in range(n))


def reference_block(x, p):
    (W_Q, W_K, W_V, W_O, b_Q, b_K, b_V, b_O,
     ln1_w, ln1_b, W_in, b_in, W_out, b_out, ln2_w, ln2_b) = p
    ein = functools.partial(jnp.einsum, precision='highest')

    def layer_norm(v, w, b):
        mean = jnp.mean(v, axis=-1, keepdims=True)
        var = jnp.mean((v - mean) ** 2, axis=-1, keepdims=True)
        return w[0] * (v - mean) / jnp.sqrt(var + LN_EPS) + b[0]

    Q = ein('srd,hde->hsre', x, W_Q) + b_Q[:, None, None, :]
    K = ein('srd,hde->hsre', x, W_K) + b_K[:, None, None, :]
    V = ein('srd,hde->hsre', x, W_V) + b_V[:, None, None, :]
    scores = ein('hsqe,hske->hsqk', Q, K) / jnp.sqrt(jnp.float32(D_HEAD))
    attn = jax.nn.softmax(scores, axis=-1)
    Z = ein('hsqk,hske->hsqe', attn, V)
    head_out = ein('hsqe,hed->hsqd', Z, W_O) + b_O[:, None, None, :]
    x1 = x + jnp.sum(head_out, axis=0)
    x1n = layer_norm(x1, ln1_w, ln1_b)
    h1 = jax.nn.relu(ein('srd,dm->srm', x1n, W_in) + b_in[0])
    mlp_out = ein('srm,md->srd', h1, W_out) + b_out[0]
    x2 = x1n + mlp_out
    return layer_norm(x2, ln2_w, ln2_b)


def reference_transformer(x, per_layer_params):
    for p in per_layer_params:
        x = reference_block(x, p)
    return x


if __name__ == "__main__":
    key = jax.random.PRNGKey(0)
    kx, kp = jax.random.split(key)
    x = jax.random.normal(kx, (SEQ, RESIDUE, D_MODEL), jnp.float32)

    layer_keys = jax.random.split(kp, N_LAYERS)
    per_layer = [init_layer_params(k) for k in layer_keys]
    fused = stack_layers([fuse_layer_params(p) for p in per_layer])

    out = jax.block_until_ready(transformer_forward(x, fused))
    ref = jax.block_until_ready(reference_transformer(x, per_layer))

    assert out.shape == (SEQ, RESIDUE, D_MODEL)
    max_err = float(jnp.max(jnp.abs(out - ref)))
    # exact softmax denominator -> tolerance tightened from 1e-3 to 1e-4
    assert jnp.allclose(out, ref, rtol=1e-4, atol=1e-4), max_err

    print("KERNEL_OK")
</pallas_src>

<mosaic_0001>
module attributes {stable_mosaic.version = 11 : i64} {
  func.func @transformer_kernel(%arg0: memref<32x32xf32, #tpu.memory_space<vmem>>, %arg1: memref<2x4x32x16xf32, #tpu.memory_space<vmem>>, %arg2: memref<2x4x32x16xf32, #tpu.memory_space<vmem>>, %arg3: memref<2x4x32x16xf32, #tpu.memory_space<vmem>>, %arg4: memref<2x4x1x16xf32, #tpu.memory_space<vmem>>, %arg5: memref<2x4x1x16xf32, #tpu.memory_space<vmem>>, %arg6: memref<2x4x1x16xf32, #tpu.memory_space<vmem>>, %arg7: memref<2x4x16x32xf32, #tpu.memory_space<vmem>>, %arg8: memref<2x1x32xf32, #tpu.memory_space<vmem>>, %arg9: memref<2x1x32xf32, #tpu.memory_space<vmem>>, %arg10: memref<2x1x32xf32, #tpu.memory_space<vmem>>, %arg11: memref<2x32x64xf32, #tpu.memory_space<vmem>>, %arg12: memref<2x1x64xf32, #tpu.memory_space<vmem>>, %arg13: memref<2x64x32xf32, #tpu.memory_space<vmem>>, %arg14: memref<2x1x32xf32, #tpu.memory_space<vmem>>, %arg15: memref<2x1x32xf32, #tpu.memory_space<vmem>>, %arg16: memref<2x1x32xf32, #tpu.memory_space<vmem>>, %arg17: memref<32x32xf32, #tpu.memory_space<vmem>>) attributes {dimension_semantics = [], scalar_prefetch = 0 : i64, scratch_operands = 0 : i64, tpu.core_type = #tpu.core_type<tc>} {
    %c0 = arith.constant 0 : index
    %c0_0 = arith.constant 0 : index
    %0 = vector.load %arg0[%c0, %c0_0] : memref<32x32xf32, #tpu.memory_space<vmem>>, vector<32x32xf32>
    %c0_i32 = arith.constant 0 : i32
    %1 = arith.index_cast %c0_i32 : i32 to index
    %c0_1 = arith.constant 0 : index
    %c0_2 = arith.constant 0 : index
    %c0_3 = arith.constant 0 : index
    %2 = vector.load %arg1[%1, %c0_1, %c0_2, %c0_3] : memref<2x4x32x16xf32, #tpu.memory_space<vmem>>, vector<1x4x32x16xf32>
    %3 = vector.shape_cast %2 : vector<1x4x32x16xf32> to vector<4x32x16xf32>
    %4 = arith.index_cast %c0_i32 : i32 to index
    %c0_4 = arith.constant 0 : index
    %c0_5 = arith.constant 0 : index
    %c0_6 = arith.constant 0 : index
    %5 = vector.load %arg2[%4, %c0_4, %c0_5, %c0_6] : memref<2x4x32x16xf32, #tpu.memory_space<vmem>>, vector<1x4x32x16xf32>
    %6 = vector.shape_cast %5 : vector<1x4x32x16xf32> to vector<4x32x16xf32>
    %7 = arith.index_cast %c0_i32 : i32 to index
    %c0_7 = arith.constant 0 : index
    %c0_8 = arith.constant 0 : index
    %c0_9 = arith.constant 0 : index
    %8 = vector.load %arg3[%7, %c0_7, %c0_8, %c0_9] : memref<2x4x32x16xf32, #tpu.memory_space<vmem>>, vector<1x4x32x16xf32>
    %9 = vector.shape_cast %8 : vector<1x4x32x16xf32> to vector<4x32x16xf32>
    %10 = arith.index_cast %c0_i32 : i32 to index
    %c0_10 = arith.constant 0 : index
    %c0_11 = arith.constant 0 : index
    %c0_12 = arith.constant 0 : index
    %11 = vector.load %arg7[%10, %c0_10, %c0_11, %c0_12] : memref<2x4x16x32xf32, #tpu.memory_space<vmem>>, vector<1x4x16x32xf32>
    %12 = vector.shape_cast %11 : vector<1x4x16x32xf32> to vector<4x16x32xf32>
    %13 = arith.index_cast %c0_i32 : i32 to index
    %c0_13 = arith.constant 0 : index
    %c0_14 = arith.constant 0 : index
    %c0_15 = arith.constant 0 : index
    %14 = vector.load %arg4[%13, %c0_13, %c0_14, %c0_15] : memref<2x4x1x16xf32, #tpu.memory_space<vmem>>, vector<1x4x1x16xf32>
    %15 = vector.shape_cast %14 : vector<1x4x1x16xf32> to vector<4x1x16xf32>
    %16 = arith.index_cast %c0_i32 : i32 to index
    %c0_16 = arith.constant 0 : index
    %c0_17 = arith.constant 0 : index
    %c0_18 = arith.constant 0 : index
    %17 = vector.load %arg5[%16, %c0_16, %c0_17, %c0_18] : memref<2x4x1x16xf32, #tpu.memory_space<vmem>>, vector<1x4x1x16xf32>
    %18 = vector.shape_cast %17 : vector<1x4x1x16xf32> to vector<4x1x16xf32>
    %19 = arith.index_cast %c0_i32 : i32 to index
    %c0_19 = arith.constant 0 : index
    %c0_20 = arith.constant 0 : index
    %c0_21 = arith.constant 0 : index
    %20 = vector.load %arg6[%19, %c0_19, %c0_20, %c0_21] : memref<2x4x1x16xf32, #tpu.memory_space<vmem>>, vector<1x4x1x16xf32>
    %21 = vector.shape_cast %20 : vector<1x4x1x16xf32> to vector<4x1x16xf32>
    %cst = arith.constant 0.000000e+00 : f32
    %22 = vector.broadcast %cst : f32 to vector<32x32xf32>
    %23 = vector.extract_strided_slice %3 {offsets = [0, 0, 0], sizes = [1, 32, 16], strides = [1, 1, 1]} : vector<4x32x16xf32> to vector<1x32x16xf32>
    %24 = vector.shape_cast %23 : vector<1x32x16xf32> to vector<32x16xf32>
    %cst_22 = arith.constant dense<0.000000e+00> : vector<32x16xf32>
    %25 = tpu.matmul %0, %24, %cst_22 {dimension_numbers = #tpu.dot_dimension_numbers<[1], [0], [0], [1], [0, 0, 1, 1], [], []>} : vector<32x32xf32>, vector<32x16xf32>, vector<32x16xf32> -> vector<32x16xf32>
    %26 = vector.extract_strided_slice %15 {offsets = [0, 0, 0], sizes = [1, 1, 16], strides = [1, 1, 1]} : vector<4x1x16xf32> to vector<1x1x16xf32>
    %27 = vector.shape_cast %26 : vector<1x1x16xf32> to vector<1x16xf32>
    %28 = vector.broadcast %27 : vector<1x16xf32> to vector<32x16xf32>
    %29 = arith.addf %25, %28 : vector<32x16xf32>
    %30 = vector.extract_strided_slice %6 {offsets = [0, 0, 0], sizes = [1, 32, 16], strides = [1, 1, 1]} : vector<4x32x16xf32> to vector<1x32x16xf32>
    %31 = vector.shape_cast %30 : vector<1x32x16xf32> to vector<32x16xf32>
    %cst_23 = arith.constant dense<0.000000e+00> : vector<32x16xf32>
    %32 = tpu.matmul %0, %31, %cst_23 {dimension_numbers = #tpu.dot_dimension_numbers<[1], [0], [0], [1], [0, 0, 1, 1], [], []>} : vector<32x32xf32>, vector<32x16xf32>, vector<32x16xf32> -> vector<32x16xf32>
    %33 = vector.extract_strided_slice %18 {offsets = [0, 0, 0], sizes = [1, 1, 16], strides = [1, 1, 1]} : vector<4x1x16xf32> to vector<1x1x16xf32>
    %34 = vector.shape_cast %33 : vector<1x1x16xf32> to vector<1x16xf32>
    %35 = vector.broadcast %34 : vector<1x16xf32> to vector<32x16xf32>
    %36 = arith.addf %32, %35 : vector<32x16xf32>
    %37 = vector.extract_strided_slice %9 {offsets = [0, 0, 0], sizes = [1, 32, 16], strides = [1, 1, 1]} : vector<4x32x16xf32> to vector<1x32x16xf32>
    %38 = vector.shape_cast %37 : vector<1x32x16xf32> to vector<32x16xf32>
    %cst_24 = arith.constant dense<0.000000e+00> : vector<32x16xf32>
    %39 = tpu.matmul %0, %38, %cst_24 {dimension_numbers = #tpu.dot_dimension_numbers<[1], [0], [0], [1], [0, 0, 1, 1], [], []>} : vector<32x32xf32>, vector<32x16xf32>, vector<32x16xf32> -> vector<32x16xf32>
    %40 = vector.extract_strided_slice %21 {offsets = [0, 0, 0], sizes = [1, 1, 16], strides = [1, 1, 1]} : vector<4x1x16xf32> to vector<1x1x16xf32>
    %41 = vector.shape_cast %40 : vector<1x1x16xf32> to vector<1x16xf32>
    %42 = vector.broadcast %41 : vector<1x16xf32> to vector<32x16xf32>
    %43 = arith.addf %39, %42 : vector<32x16xf32>
    %44 = vector.shape_cast %29 : vector<32x16xf32> to vector<2x16x16xf32>
    %45 = vector.shape_cast %36 : vector<32x16xf32> to vector<2x16x16xf32>
    %46 = vector.shape_cast %43 : vector<32x16xf32> to vector<2x16x16xf32>
    "tpu.trace_start"() <{level = 10 : i32, message = "sqd,skd->sqk"}> : () -> ()
    %cst_25 = arith.constant dense<0.000000e+00> : vector<2x16x16xf32>
    %47 = tpu.matmul %44, %45, %cst_25 {dimension_numbers = #tpu.dot_dimension_numbers<[2], [2], [1], [1], [0, 0, 0, 1, 1, 1], [0], [0]>} : vector<2x16x16xf32>, vector<2x16x16xf32>, vector<2x16x16xf32> -> vector<2x16x16xf32>
    "tpu.trace_stop"() : () -> ()
    %cst_26 = arith.constant 2.500000e-01 : f32
    %48 = vector.broadcast %cst_26 : f32 to vector<2x16x16xf32>
    %49 = arith.mulf %47, %48 : vector<2x16x16xf32>
    %cst_27 = arith.constant dense<0xFF800000> : vector<2x16xf32>
    %50 = vector.multi_reduction <maximumf>, %49, %cst_27 [2] : vector<2x16x16xf32> to vector<2x16xf32>
    %51 = vector.shape_cast %50 : vector<2x16xf32> to vector<2x16x1xf32>
    %52 = vector.broadcast %51 : vector<2x16x1xf32> to vector<2x16x16xf32>
    %53 = arith.subf %49, %52 : vector<2x16x16xf32>
    %54 = math.exp %53 : vector<2x16x16xf32>
    %cst_28 = arith.constant dense<0.000000e+00> : vector<2x16xf32>
    %55 = vector.multi_reduction <add>, %54, %cst_28 [2] : vector<2x16x16xf32> to vector<2x16xf32>
    %56 = vector.shape_cast %55 : vector<2x16xf32> to vector<2x16x1xf32>
    %57 = vector.broadcast %56 : vector<2x16x1xf32> to vector<2x16x16xf32>
    %58 = arith.divf %54, %57 : vector<2x16x16xf32>
    "tpu.trace_start"() <{level = 10 : i32, message = "sqk,skd->sqd"}> : () -> ()
    %cst_29 = arith.constant dense<0.000000e+00> : vector<2x16x16xf32>
    %59 = tpu.matmul %58, %46, %cst_29 {dimension_numbers = #tpu.dot_dimension_numbers<[2], [1], [1], [2], [0, 0, 0, 1, 1, 2], [0], [0]>} : vector<2x16x16xf32>, vector<2x16x16xf32>, vector<2x16x16xf32> -> vector<2x16x16xf32>
    "tpu.trace_stop"() : () -> ()
    %60 = vector.shape_cast %59 : vector<2x16x16xf32> to vector<32x16xf32>
    %61 = vector.extract_strided_slice %12 {offsets = [0, 0, 0], sizes = [1, 16, 32], strides = [1, 1, 1]} : vector<4x16x32xf32> to vector<1x16x32xf32>
    %62 = vector.shape_cast %61 : vector<1x16x32xf32> to vector<16x32xf32>
    %cst_30 = arith.constant dense<0.000000e+00> : vector<32x32xf32>
    %63 = tpu.matmul %60, %62, %cst_30 {dimension_numbers = #tpu.dot_dimension_numbers<[1], [0], [0], [1], [0, 0, 1, 1], [], []>} : vector<32x16xf32>, vector<16x32xf32>, vector<32x32xf32> -> vector<32x32xf32>
    %64 = arith.addf %22, %63 : vector<32x32xf32>
    %65 = vector.extract_strided_slice %3 {offsets = [1, 0, 0], sizes = [1, 32, 16], strides = [1, 1, 1]} : vector<4x32x16xf32> to vector<1x32x16xf32>
    %66 = vector.shape_cast %65 : vector<1x32x16xf32> to vector<32x16xf32>
    %cst_31 = arith.constant dense<0.000000e+00> : vector<32x16xf32>
    %67 = tpu.matmul %0, %66, %cst_31 {dimension_numbers = #tpu.dot_dimension_numbers<[1], [0], [0], [1], [0, 0, 1, 1], [], []>} : vector<32x32xf32>, vector<32x16xf32>, vector<32x16xf32> -> vector<32x16xf32>
    %68 = vector.extract_strided_slice %15 {offsets = [1, 0, 0], sizes = [1, 1, 16], strides = [1, 1, 1]} : vector<4x1x16xf32> to vector<1x1x16xf32>
    %69 = vector.shape_cast %68 : vector<1x1x16xf32> to vector<1x16xf32>
    %70 = vector.broadcast %69 : vector<1x16xf32> to vector<32x16xf32>
    %71 = arith.addf %67, %70 : vector<32x16xf32>
    %72 = vector.extract_strided_slice %6 {offsets = [1, 0, 0], sizes = [1, 32, 16], strides = [1, 1, 1]} : vector<4x32x16xf32> to vector<1x32x16xf32>
    %73 = vector.shape_cast %72 : vector<1x32x16xf32> to vector<32x16xf32>
    %cst_32 = arith.constant dense<0.000000e+00> : vector<32x16xf32>
    %74 = tpu.matmul %0, %73, %cst_32 {dimension_numbers = #tpu.dot_dimension_numbers<[1], [0], [0], [1], [0, 0, 1, 1], [], []>} : vector<32x32xf32>, vector<32x16xf32>, vector<32x16xf32> -> vector<32x16xf32>
    %75 = vector.extract_strided_slice %18 {offsets = [1, 0, 0], sizes = [1, 1, 16], strides = [1, 1, 1]} : vector<4x1x16xf32> to vector<1x1x16xf32>
    %76 = vector.shape_cast %75 : vector<1x1x16xf32> to vector<1x16xf32>
    %77 = vector.broadcast %76 : vector<1x16xf32> to vector<32x16xf32>
    %78 = arith.addf %74, %77 : vector<32x16xf32>
    %79 = vector.extract_strided_slice %9 {offsets = [1, 0, 0], sizes = [1, 32, 16], strides = [1, 1, 1]} : vector<4x32x16xf32> to vector<1x32x16xf32>
    %80 = vector.shape_cast %79 : vector<1x32x16xf32> to vector<32x16xf32>
    %cst_33 = arith.constant dense<0.000000e+00> : vector<32x16xf32>
    %81 = tpu.matmul %0, %80, %cst_33 {dimension_numbers = #tpu.dot_dimension_numbers<[1], [0], [0], [1], [0, 0, 1, 1], [], []>} : vector<32x32xf32>, vector<32x16xf32>, vector<32x16xf32> -> vector<32x16xf32>
    %82 = vector.extract_strided_slice %21 {offsets = [1, 0, 0], sizes = [1, 1, 16], strides = [1, 1, 1]} : vector<4x1x16xf32> to vector<1x1x16xf32>
    %83 = vector.shape_cast %82 : vector<1x1x16xf32> to vector<1x16xf32>
    %84 = vector.broadcast %83 : vector<1x16xf32> to vector<32x16xf32>
    %85 = arith.addf %81, %84 : vector<32x16xf32>
    %86 = vector.shape_cast %71 : vector<32x16xf32> to vector<2x16x16xf32>
    %87 = vector.shape_cast %78 : vector<32x16xf32> to vector<2x16x16xf32>
    %88 = vector.shape_cast %85 : vector<32x16xf32> to vector<2x16x16xf32>
    "tpu.trace_start"() <{level = 10 : i32, message = "sqd,skd->sqk"}> : () -> ()
    %cst_34 = arith.constant dense<0.000000e+00> : vector<2x16x16xf32>
    %89 = tpu.matmul %86, %87, %cst_34 {dimension_numbers = #tpu.dot_dimension_numbers<[2], [2], [1], [1], [0, 0, 0, 1, 1, 1], [0], [0]>} : vector<2x16x16xf32>, vector<2x16x16xf32>, vector<2x16x16xf32> -> vector<2x16x16xf32>
    "tpu.trace_stop"() : () -> ()
    %cst_35 = arith.constant 2.500000e-01 : f32
    %90 = vector.broadcast %cst_35 : f32 to vector<2x16x16xf32>
    %91 = arith.mulf %89, %90 : vector<2x16x16xf32>
    %cst_36 = arith.constant dense<0xFF800000> : vector<2x16xf32>
    %92 = vector.multi_reduction <maximumf>, %91, %cst_36 [2] : vector<2x16x16xf32> to vector<2x16xf32>
    %93 = vector.shape_cast %92 : vector<2x16xf32> to vector<2x16x1xf32>
    %94 = vector.broadcast %93 : vector<2x16x1xf32> to vector<2x16x16xf32>
    %95 = arith.subf %91, %94 : vector<2x16x16xf32>
    %96 = math.exp %95 : vector<2x16x16xf32>
    %cst_37 = arith.constant dense<0.000000e+00> : vector<2x16xf32>
    %97 = vector.multi_reduction <add>, %96, %cst_37 [2] : vector<2x16x16xf32> to vector<2x16xf32>
    %98 = vector.shape_cast %97 : vector<2x16xf32> to vector<2x16x1xf32>
    %99 = vector.broadcast %98 : vector<2x16x1xf32> to vector<2x16x16xf32>
    %100 = arith.divf %96, %99 : vector<2x16x16xf32>
    "tpu.trace_start"() <{level = 10 : i32, message = "sqk,skd->sqd"}> : () -> ()
    %cst_38 = arith.constant dense<0.000000e+00> : vector<2x16x16xf32>
    %101 = tpu.matmul %100, %88, %cst_38 {dimension_numbers = #tpu.dot_dimension_numbers<[2], [1], [1], [2], [0, 0, 0, 1, 1, 2], [0], [0]>} : vector<2x16x16xf32>, vector<2x16x16xf32>, vector<2x16x16xf32> -> vector<2x16x16xf32>
    "tpu.trace_stop"() : () -> ()
    %102 = vector.shape_cast %101 : vector<2x16x16xf32> to vector<32x16xf32>
    %103 = vector.extract_strided_slice %12 {offsets = [1, 0, 0], sizes = [1, 16, 32], strides = [1, 1, 1]} : vector<4x16x32xf32> to vector<1x16x32xf32>
    %104 = vector.shape_cast %103 : vector<1x16x32xf32> to vector<16x32xf32>
    %cst_39 = arith.constant dense<0.000000e+00> : vector<32x32xf32>
    %105 = tpu.matmul %102, %104, %cst_39 {dimension_numbers = #tpu.dot_dimension_numbers<[1], [0], [0], [1], [0, 0, 1, 1], [], []>} : vector<32x16xf32>, vector<16x32xf32>, vector<32x32xf32> -> vector<32x32xf32>
    %106 = arith.addf %64, %105 : vector<32x32xf32>
    %107 = vector.extract_strided_slice %3 {offsets = [2, 0, 0], sizes = [1, 32, 16], strides = [1, 1, 1]} : vector<4x32x16xf32> to vector<1x32x16xf32>
    %108 = vector.shape_cast %107 : vector<1x32x16xf32> to vector<32x16xf32>
    %cst_40 = arith.constant dense<0.000000e+00> : vector<32x16xf32>
    %109 = tpu.matmul %0, %108, %cst_40 {dimension_numbers = #tpu.dot_dimension_numbers<[1], [0], [0], [1], [0, 0, 1, 1], [], []>} : vector<32x32xf32>, vector<32x16xf32>, vector<32x16xf32> -> vector<32x16xf32>
    %110 = vector.extract_strided_slice %15 {offsets = [2, 0, 0], sizes = [1, 1, 16], strides = [1, 1, 1]} : vector<4x1x16xf32> to vector<1x1x16xf32>
    %111 = vector.shape_cast %110 : vector<1x1x16xf32> to vector<1x16xf32>
    %112 = vector.broadcast %111 : vector<1x16xf32> to vector<32x16xf32>
    %113 = arith.addf %109, %112 : vector<32x16xf32>
    %114 = vector.extract_strided_slice %6 {offsets = [2, 0, 0], sizes = [1, 32, 16], strides = [1, 1, 1]} : vector<4x32x16xf32> to vector<1x32x16xf32>
    %115 = vector.shape_cast %114 : vector<1x32x16xf32> to vector<32x16xf32>
    %cst_41 = arith.constant dense<0.000000e+00> : vector<32x16xf32>
    %116 = tpu.matmul %0, %115, %cst_41 {dimension_numbers = #tpu.dot_dimension_numbers<[1], [0], [0], [1], [0, 0, 1, 1], [], []>} : vector<32x32xf32>, vector<32x16xf32>, vector<32x16xf32> -> vector<32x16xf32>
    %117 = vector.extract_strided_slice %18 {offsets = [2, 0, 0], sizes = [1, 1, 16], strides = [1, 1, 1]} : vector<4x1x16xf32> to vector<1x1x16xf32>
    %118 = vector.shape_cast %117 : vector<1x1x16xf32> to vector<1x16xf32>
    %119 = vector.broadcast %118 : vector<1x16xf32> to vector<32x16xf32>
    %120 = arith.addf %116, %119 : vector<32x16xf32>
    %121 = vector.extract_strided_slice %9 {offsets = [2, 0, 0], sizes = [1, 32, 16], strides = [1, 1, 1]} : vector<4x32x16xf32> to vector<1x32x16xf32>
    %122 = vector.shape_cast %121 : vector<1x32x16xf32> to vector<32x16xf32>
    %cst_42 = arith.constant dense<0.000000e+00> : vector<32x16xf32>
    %123 = tpu.matmul %0, %122, %cst_42 {dimension_numbers = #tpu.dot_dimension_numbers<[1], [0], [0], [1], [0, 0, 1, 1], [], []>} : vector<32x32xf32>, vector<32x16xf32>, vector<32x16xf32> -> vector<32x16xf32>
    %124 = vector.extract_strided_slice %21 {offsets = [2, 0, 0], sizes = [1, 1, 16], strides = [1, 1, 1]} : vector<4x1x16xf32> to vector<1x1x16xf32>
    %125 = vector.shape_cast %124 : vector<1x1x16xf32> to vector<1x16xf32>
    %126 = vector.broadcast %125 : vector<1x16xf32> to vector<32x16xf32>
    %127 = arith.addf %123, %126 : vector<32x16xf32>
    %128 = vector.shape_cast %113 : vector<32x16xf32> to vector<2x16x16xf32>
    %129 = vector.shape_cast %120 : vector<32x16xf32> to vector<2x16x16xf32>
    %130 = vector.shape_cast %127 : vector<32x16xf32> to vector<2x16x16xf32>
    "tpu.trace_start"() <{level = 10 : i32, message = "sqd,skd->sqk"}> : () -> ()
    %cst_43 = arith.constant dense<0.000000e+00> : vector<2x16x16xf32>
    %131 = tpu.matmul %128, %129, %cst_43 {dimension_numbers = #tpu.dot_dimension_numbers<[2], [2], [1], [1], [0, 0, 0, 1, 1, 1], [0], [0]>} : vector<2x16x16xf32>, vector<2x16x16xf32>, vector<2x16x16xf32> -> vector<2x16x16xf32>
    "tpu.trace_stop"() : () -> ()
    %cst_44 = arith.constant 2.500000e-01 : f32
    %132 = vector.broadcast %cst_44 : f32 to vector<2x16x16xf32>
    %133 = arith.mulf %131, %132 : vector<2x16x16xf32>
    %cst_45 = arith.constant dense<0xFF800000> : vector<2x16xf32>
    %134 = vector.multi_reduction <maximumf>, %133, %cst_45 [2] : vector<2x16x16xf32> to vector<2x16xf32>
    %135 = vector.shape_cast %134 : vector<2x16xf32> to vector<2x16x1xf32>
    %136 = vector.broadcast %135 : vector<2x16x1xf32> to vector<2x16x16xf32>
    %137 = arith.subf %133, %136 : vector<2x16x16xf32>
    %138 = math.exp %137 : vector<2x16x16xf32>
    %cst_46 = arith.constant dense<0.000000e+00> : vector<2x16xf32>
    %139 = vector.multi_reduction <add>, %138, %cst_46 [2] : vector<2x16x16xf32> to vector<2x16xf32>
    %140 = vector.shape_cast %139 : vector<2x16xf32> to vector<2x16x1xf32>
    %141 = vector.broadcast %140 : vector<2x16x1xf32> to vector<2x16x16xf32>
    %142 = arith.divf %138, %141 : vector<2x16x16xf32>
    "tpu.trace_start"() <{level = 10 : i32, message = "sqk,skd->sqd"}> : () -> ()
    %cst_47 = arith.constant dense<0.000000e+00> : vector<2x16x16xf32>
    %143 = tpu.matmul %142, %130, %cst_47 {dimension_numbers = #tpu.dot_dimension_numbers<[2], [1], [1], [2], [0, 0, 0, 1, 1, 2], [0], [0]>} : vector<2x16x16xf32>, vector<2x16x16xf32>, vector<2x16x16xf32> -> vector<2x16x16xf32>
    "tpu.trace_stop"() : () -> ()
    %144 = vector.shape_cast %143 : vector<2x16x16xf32> to vector<32x16xf32>
    %145 = vector.extract_strided_slice %12 {offsets = [2, 0, 0], sizes = [1, 16, 32], strides = [1, 1, 1]} : vector<4x16x32xf32> to vector<1x16x32xf32>
    %146 = vector.shape_cast %145 : vector<1x16x32xf32> to vector<16x32xf32>
    %cst_48 = arith.constant dense<0.000000e+00> : vector<32x32xf32>
    %147 = tpu.matmul %144, %146, %cst_48 {dimension_numbers = #tpu.dot_dimension_numbers<[1], [0], [0], [1], [0, 0, 1, 1], [], []>} : vector<32x16xf32>, vector<16x32xf32>, vector<32x32xf32> -> vector<32x32xf32>
    %148 = arith.addf %106, %147 : vector<32x32xf32>
    %149 = vector.extract_strided_slice %3 {offsets = [3, 0, 0], sizes = [1, 32, 16], strides = [1, 1, 1]} : vector<4x32x16xf32> to vector<1x32x16xf32>
    %150 = vector.shape_cast %149 : vector<1x32x16xf32> to vector<32x16xf32>
    %cst_49 = arith.constant dense<0.000000e+00> : vector<32x16xf32>
    %151 = tpu.matmul %0, %150, %cst_49 {dimension_numbers = #tpu.dot_dimension_numbers<[1], [0], [0], [1], [0, 0, 1, 1], [], []>} : vector<32x32xf32>, vector<32x16xf32>, vector<32x16xf32> -> vector<32x16xf32>
    %152 = vector.extract_strided_slice %15 {offsets = [3, 0, 0], sizes = [1, 1, 16], strides = [1, 1, 1]} : vector<4x1x16xf32> to vector<1x1x16xf32>
    %153 = vector.shape_cast %152 : vector<1x1x16xf32> to vector<1x16xf32>
    %154 = vector.broadcast %153 : vector<1x16xf32> to vector<32x16xf32>
    %155 = arith.addf %151, %154 : vector<32x16xf32>
    %156 = vector.extract_strided_slice %6 {offsets = [3, 0, 0], sizes = [1, 32, 16], strides = [1, 1, 1]} : vector<4x32x16xf32> to vector<1x32x16xf32>
    %157 = vector.shape_cast %156 : vector<1x32x16xf32> to vector<32x16xf32>
    %cst_50 = arith.constant dense<0.000000e+00> : vector<32x16xf32>
    %158 = tpu.matmul %0, %157, %cst_50 {dimension_numbers = #tpu.dot_dimension_numbers<[1], [0], [0], [1], [0, 0, 1, 1], [], []>} : vector<32x32xf32>, vector<32x16xf32>, vector<32x16xf32> -> vector<32x16xf32>
    %159 = vector.extract_strided_slice %18 {offsets = [3, 0, 0], sizes = [1, 1, 16], strides = [1, 1, 1]} : vector<4x1x16xf32> to vector<1x1x16xf32>
    %160 = vector.shape_cast %159 : vector<1x1x16xf32> to vector<1x16xf32>
    %161 = vector.broadcast %160 : vector<1x16xf32> to vector<32x16xf32>
    %162 = arith.addf %158, %161 : vector<32x16xf32>
    %163 = vector.extract_strided_slice %9 {offsets = [3, 0, 0], sizes = [1, 32, 16], strides = [1, 1, 1]} : vector<4x32x16xf32> to vector<1x32x16xf32>
    %164 = vector.shape_cast %163 : vector<1x32x16xf32> to vector<32x16xf32>
    %cst_51 = arith.constant dense<0.000000e+00> : vector<32x16xf32>
    %165 = tpu.matmul %0, %164, %cst_51 {dimension_numbers = #tpu.dot_dimension_numbers<[1], [0], [0], [1], [0, 0, 1, 1], [], []>} : vector<32x32xf32>, vector<32x16xf32>, vector<32x16xf32> -> vector<32x16xf32>
    %166 = vector.extract_strided_slice %21 {offsets = [3, 0, 0], sizes = [1, 1, 16], strides = [1, 1, 1]} : vector<4x1x16xf32> to vector<1x1x16xf32>
    %167 = vector.shape_cast %166 : vector<1x1x16xf32> to vector<1x16xf32>
    %168 = vector.broadcast %167 : vector<1x16xf32> to vector<32x16xf32>
    %169 = arith.addf %165, %168 : vector<32x16xf32>
    %170 = vector.shape_cast %155 : vector<32x16xf32> to vector<2x16x16xf32>
    %171 = vector.shape_cast %162 : vector<32x16xf32> to vector<2x16x16xf32>
    %172 = vector.shape_cast %169 : vector<32x16xf32> to vector<2x16x16xf32>
    "tpu.trace_start"() <{level = 10 : i32, message = "sqd,skd->sqk"}> : () -> ()
    %cst_52 = arith.constant dense<0.000000e+00> : vector<2x16x16xf32>
    %173 = tpu.matmul %170, %171, %cst_52 {dimension_numbers = #tpu.dot_dimension_numbers<[2], [2], [1], [1], [0, 0, 0, 1, 1, 1], [0], [0]>} : vector<2x16x16xf32>, vector<2x16x16xf32>, vector<2x16x16xf32> -> vector<2x16x16xf32>
    "tpu.trace_stop"() : () -> ()
    %cst_53 = arith.constant 2.500000e-01 : f32
    %174 = vector.broadcast %cst_53 : f32 to vector<2x16x16xf32>
    %175 = arith.mulf %173, %174 : vector<2x16x16xf32>
    %cst_54 = arith.constant dense<0xFF800000> : vector<2x16xf32>
    %176 = vector.multi_reduction <maximumf>, %175, %cst_54 [2] : vector<2x16x16xf32> to vector<2x16xf32>
    %177 = vector.shape_cast %176 : vector<2x16xf32> to vector<2x16x1xf32>
    %178 = vector.broadcast %177 : vector<2x16x1xf32> to vector<2x16x16xf32>
    %179 = arith.subf %175, %178 : vector<2x16x16xf32>
    %180 = math.exp %179 : vector<2x16x16xf32>
    %cst_55 = arith.constant dense<0.000000e+00> : vector<2x16xf32>
    %181 = vector.multi_reduction <add>, %180, %cst_55 [2] : vector<2x16x16xf32> to vector<2x16xf32>
    %182 = vector.shape_cast %181 : vector<2x16xf32> to vector<2x16x1xf32>
    %183 = vector.broadcast %182 : vector<2x16x1xf32> to vector<2x16x16xf32>
    %184 = arith.divf %180, %183 : vector<2x16x16xf32>
    "tpu.trace_start"() <{level = 10 : i32, message = "sqk,skd->sqd"}> : () -> ()
    %cst_56 = arith.constant dense<0.000000e+00> : vector<2x16x16xf32>
    %185 = tpu.matmul %184, %172, %cst_56 {dimension_numbers = #tpu.dot_dimension_numbers<[2], [1], [1], [2], [0, 0, 0, 1, 1, 2], [0], [0]>} : vector<2x16x16xf32>, vector<2x16x16xf32>, vector<2x16x16xf32> -> vector<2x16x16xf32>
    "tpu.trace_stop"() : () -> ()
    %186 = vector.shape_cast %185 : vector<2x16x16xf32> to vector<32x16xf32>
    %187 = vector.extract_strided_slice %12 {offsets = [3, 0, 0], sizes = [1, 16, 32], strides = [1, 1, 1]} : vector<4x16x32xf32> to vector<1x16x32xf32>
    %188 = vector.shape_cast %187 : vector<1x16x32xf32> to vector<16x32xf32>
    %cst_57 = arith.constant dense<0.000000e+00> : vector<32x32xf32>
    %189 = tpu.matmul %186, %188, %cst_57 {dimension_numbers = #tpu.dot_dimension_numbers<[1], [0], [0], [1], [0, 0, 1, 1], [], []>} : vector<32x16xf32>, vector<16x32xf32>, vector<32x32xf32> -> vector<32x32xf32>
    %190 = arith.addf %148, %189 : vector<32x32xf32>
    %191 = arith.addf %0, %190 : vector<32x32xf32>
    %192 = arith.index_cast %c0_i32 : i32 to index
    %c0_58 = arith.constant 0 : index
    %c0_59 = arith.constant 0 : index
    %193 = vector.load %arg8[%192, %c0_58, %c0_59] : memref<2x1x32xf32, #tpu.memory_space<vmem>>, vector<1x1x32xf32>
    %194 = vector.shape_cast %193 : vector<1x1x32xf32> to vector<1x32xf32>
    %195 = vector.broadcast %194 : vector<1x32xf32> to vector<32x32xf32>
    %196 = arith.addf %191, %195 : vector<32x32xf32>
    %197 = arith.index_cast %c0_i32 : i32 to index
    %c0_60 = arith.constant 0 : index
    %c0_61 = arith.constant 0 : index
    %198 = vector.load %arg9[%197, %c0_60, %c0_61] : memref<2x1x32xf32, #tpu.memory_space<vmem>>, vector<1x1x32xf32>
    %199 = vector.shape_cast %198 : vector<1x1x32xf32> to vector<1x32xf32>
    %200 = arith.index_cast %c0_i32 : i32 to index
    %c0_62 = arith.constant 0 : index
    %c0_63 = arith.constant 0 : index
    %201 = vector.load %arg10[%200, %c0_62, %c0_63] : memref<2x1x32xf32, #tpu.memory_space<vmem>>, vector<1x1x32xf32>
    %202 = vector.shape_cast %201 : vector<1x1x32xf32> to vector<1x32xf32>
    %cst_64 = arith.constant dense<0.000000e+00> : vector<32xf32>
    %203 = vector.multi_reduction <add>, %196, %cst_64 [1] : vector<32x32xf32> to vector<32xf32>
    %204 = vector.shape_cast %203 : vector<32xf32> to vector<32x1xf32>
    %cst_65 = arith.constant 3.200000e+01 : f32
    %205 = vector.broadcast %cst_65 : f32 to vector<32x1xf32>
    %206 = arith.divf %204, %205 : vector<32x1xf32>
    %207 = vector.broadcast %206 : vector<32x1xf32> to vector<32x32xf32>
    %208 = arith.subf %196, %207 : vector<32x32xf32>
    %209 = arith.mulf %208, %208 : vector<32x32xf32>
    %cst_66 = arith.constant dense<0.000000e+00> : vector<32xf32>
    %210 = vector.multi_reduction <add>, %209, %cst_66 [1] : vector<32x32xf32> to vector<32xf32>
    %211 = vector.shape_cast %210 : vector<32xf32> to vector<32x1xf32>
    %cst_67 = arith.constant 3.200000e+01 : f32
    %212 = vector.broadcast %cst_67 : f32 to vector<32x1xf32>
    %213 = arith.divf %211, %212 : vector<32x1xf32>
    %214 = vector.broadcast %199 : vector<1x32xf32> to vector<32x32xf32>
    %215 = arith.mulf %214, %208 : vector<32x32xf32>
    %cst_68 = arith.constant 9.99999974E-6 : f32
    %216 = vector.broadcast %cst_68 : f32 to vector<32x1xf32>
    %217 = arith.addf %213, %216 : vector<32x1xf32>
    %218 = math.rsqrt %217 : vector<32x1xf32>
    %219 = vector.broadcast %218 : vector<32x1xf32> to vector<32x32xf32>
    %220 = arith.mulf %215, %219 : vector<32x32xf32>
    %221 = vector.broadcast %202 : vector<1x32xf32> to vector<32x32xf32>
    %222 = arith.addf %220, %221 : vector<32x32xf32>
    %223 = arith.index_cast %c0_i32 : i32 to index
    %c0_69 = arith.constant 0 : index
    %c0_70 = arith.constant 0 : index
    %224 = vector.load %arg11[%223, %c0_69, %c0_70] : memref<2x32x64xf32, #tpu.memory_space<vmem>>, vector<1x32x64xf32>
    %225 = vector.shape_cast %224 : vector<1x32x64xf32> to vector<32x64xf32>
    %cst_71 = arith.constant dense<0.000000e+00> : vector<32x64xf32>
    %226 = tpu.matmul %222, %225, %cst_71 {dimension_numbers = #tpu.dot_dimension_numbers<[1], [0], [0], [1], [0, 0, 1, 1], [], []>} : vector<32x32xf32>, vector<32x64xf32>, vector<32x64xf32> -> vector<32x64xf32>
    %227 = arith.index_cast %c0_i32 : i32 to index
    %c0_72 = arith.constant 0 : index
    %c0_73 = arith.constant 0 : index
    %228 = vector.load %arg12[%227, %c0_72, %c0_73] : memref<2x1x64xf32, #tpu.memory_space<vmem>>, vector<1x1x64xf32>
    %229 = vector.shape_cast %228 : vector<1x1x64xf32> to vector<1x64xf32>
    %230 = vector.broadcast %229 : vector<1x64xf32> to vector<32x64xf32>
    %231 = arith.addf %226, %230 : vector<32x64xf32>
    %cst_74 = arith.constant 0.000000e+00 : f32
    %232 = vector.broadcast %cst_74 : f32 to vector<32x64xf32>
    %233 = arith.maximumf %231, %232 : vector<32x64xf32>
    %234 = arith.index_cast %c0_i32 : i32 to index
    %c0_75 = arith.constant 0 : index
    %c0_76 = arith.constant 0 : index
    %235 = vector.load %arg13[%234, %c0_75, %c0_76] : memref<2x64x32xf32, #tpu.memory_space<vmem>>, vector<1x64x32xf32>
    %236 = vector.shape_cast %235 : vector<1x64x32xf32> to vector<64x32xf32>
    %cst_77 = arith.constant dense<0.000000e+00> : vector<32x32xf32>
    %237 = tpu.matmul %233, %236, %cst_77 {dimension_numbers = #tpu.dot_dimension_numbers<[1], [0], [0], [1], [0, 0, 1, 1], [], []>} : vector<32x64xf32>, vector<64x32xf32>, vector<32x32xf32> -> vector<32x32xf32>
    %238 = arith.index_cast %c0_i32 : i32 to index
    %c0_78 = arith.constant 0 : index
    %c0_79 = arith.constant 0 : index
    %239 = vector.load %arg14[%238, %c0_78, %c0_79] : memref<2x1x32xf32, #tpu.memory_space<vmem>>, vector<1x1x32xf32>
    %240 = vector.shape_cast %239 : vector<1x1x32xf32> to vector<1x32xf32>
    %241 = vector.broadcast %240 : vector<1x32xf32> to vector<32x32xf32>
    %242 = arith.addf %237, %241 : vector<32x32xf32>
    %243 = arith.addf %222, %242 : vector<32x32xf32>
    %244 = arith.index_cast %c0_i32 : i32 to index
    %c0_80 = arith.constant 0 : index
    %c0_81 = arith.constant 0 : index
    %245 = vector.load %arg15[%244, %c0_80, %c0_81] : memref<2x1x32xf32, #tpu.memory_space<vmem>>, vector<1x1x32xf32>
    %246 = vector.shape_cast %245 : vector<1x1x32xf32> to vector<1x32xf32>
    %247 = arith.index_cast %c0_i32 : i32 to index
    %c0_82 = arith.constant 0 : index
    %c0_83 = arith.constant 0 : index
    %248 = vector.load %arg16[%247, %c0_82, %c0_83] : memref<2x1x32xf32, #tpu.memory_space<vmem>>, vector<1x1x32xf32>
    %249 = vector.shape_cast %248 : vector<1x1x32xf32> to vector<1x32xf32>
    %cst_84 = arith.constant dense<0.000000e+00> : vector<32xf32>
    %250 = vector.multi_reduction <add>, %243, %cst_84 [1] : vector<32x32xf32> to vector<32xf32>
    %251 = vector.shape_cast %250 : vector<32xf32> to vector<32x1xf32>
    %cst_85 = arith.constant 3.200000e+01 : f32
    %252 = vector.broadcast %cst_85 : f32 to vector<32x1xf32>
    %253 = arith.divf %251, %252 : vector<32x1xf32>
    %254 = vector.broadcast %253 : vector<32x1xf32> to vector<32x32xf32>
    %255 = arith.subf %243, %254 : vector<32x32xf32>
    %256 = arith.mulf %255, %255 : vector<32x32xf32>
    %cst_86 = arith.constant dense<0.000000e+00> : vector<32xf32>
    %257 = vector.multi_reduction <add>, %256, %cst_86 [1] : vector<32x32xf32> to vector<32xf32>
    %258 = vector.shape_cast %257 : vector<32xf32> to vector<32x1xf32>
    %cst_87 = arith.constant 3.200000e+01 : f32
    %259 = vector.broadcast %cst_87 : f32 to vector<32x1xf32>
    %260 = arith.divf %258, %259 : vector<32x1xf32>
    %261 = vector.broadcast %246 : vector<1x32xf32> to vector<32x32xf32>
    %262 = arith.mulf %261, %255 : vector<32x32xf32>
    %cst_88 = arith.constant 9.99999974E-6 : f32
    %263 = vector.broadcast %cst_88 : f32 to vector<32x1xf32>
    %264 = arith.addf %260, %263 : vector<32x1xf32>
    %265 = math.rsqrt %264 : vector<32x1xf32>
    %266 = vector.broadcast %265 : vector<32x1xf32> to vector<32x32xf32>
    %267 = arith.mulf %262, %266 : vector<32x32xf32>
    %268 = vector.broadcast %249 : vector<1x32xf32> to vector<32x32xf32>
    %269 = arith.addf %267, %268 : vector<32x32xf32>
    %c1_i32 = arith.constant 1 : i32
    %270 = arith.index_cast %c1_i32 : i32 to index
    %c0_89 = arith.constant 0 : index
    %c0_90 = arith.constant 0 : index
    %c0_91 = arith.constant 0 : index
    %271 = vector.load %arg1[%270, %c0_89, %c0_90, %c0_91] : memref<2x4x32x16xf32, #tpu.memory_space<vmem>>, vector<1x4x32x16xf32>
    %272 = vector.shape_cast %271 : vector<1x4x32x16xf32> to vector<4x32x16xf32>
    %273 = arith.index_cast %c1_i32 : i32 to index
    %c0_92 = arith.constant 0 : index
    %c0_93 = arith.constant 0 : index
    %c0_94 = arith.constant 0 : index
    %274 = vector.load %arg2[%273, %c0_92, %c0_93, %c0_94] : memref<2x4x32x16xf32, #tpu.memory_space<vmem>>, vector<1x4x32x16xf32>
    %275 = vector.shape_cast %274 : vector<1x4x32x16xf32> to vector<4x32x16xf32>
    %276 = arith.index_cast %c1_i32 : i32 to index
    %c0_95 = arith.constant 0 : index
    %c0_96 = arith.constant 0 : index
    %c0_97 = arith.constant 0 : index
    %277 = vector.load %arg3[%276, %c0_95, %c0_96, %c0_97] : memref<2x4x32x16xf32, #tpu.memory_space<vmem>>, vector<1x4x32x16xf32>
    %278 = vector.shape_cast %277 : vector<1x4x32x16xf32> to vector<4x32x16xf32>
    %279 = arith.index_cast %c1_i32 : i32 to index
    %c0_98 = arith.constant 0 : index
    %c0_99 = arith.constant 0 : index
    %c0_100 = arith.constant 0 : index
    %280 = vector.load %arg7[%279, %c0_98, %c0_99, %c0_100] : memref<2x4x16x32xf32, #tpu.memory_space<vmem>>, vector<1x4x16x32xf32>
    %281 = vector.shape_cast %280 : vector<1x4x16x32xf32> to vector<4x16x32xf32>
    %282 = arith.index_cast %c1_i32 : i32 to index
    %c0_101 = arith.constant 0 : index
    %c0_102 = arith.constant 0 : index
    %c0_103 = arith.constant 0 : index
    %283 = vector.load %arg4[%282, %c0_101, %c0_102, %c0_103] : memref<2x4x1x16xf32, #tpu.memory_space<vmem>>, vector<1x4x1x16xf32>
    %284 = vector.shape_cast %283 : vector<1x4x1x16xf32> to vector<4x1x16xf32>
    %285 = arith.index_cast %c1_i32 : i32 to index
    %c0_104 = arith.constant 0 : index
    %c0_105 = arith.constant 0 : index
    %c0_106 = arith.constant 0 : index
    %286 = vector.load %arg5[%285, %c0_104, %c0_105, %c0_106] : memref<2x4x1x16xf32, #tpu.memory_space<vmem>>, vector<1x4x1x16xf32>
    %287 = vector.shape_cast %286 : vector<1x4x1x16xf32> to vector<4x1x16xf32>
    %288 = arith.index_cast %c1_i32 : i32 to index
    %c0_107 = arith.constant 0 : index
    %c0_108 = arith.constant 0 : index
    %c0_109 = arith.constant 0 : index
    %289 = vector.load %arg6[%288, %c0_107, %c0_108, %c0_109] : memref<2x4x1x16xf32, #tpu.memory_space<vmem>>, vector<1x4x1x16xf32>
    %290 = vector.shape_cast %289 : vector<1x4x1x16xf32> to vector<4x1x16xf32>
    %cst_110 = arith.constant 0.000000e+00 : f32
    %291 = vector.broadcast %cst_110 : f32 to vector<32x32xf32>
    %292 = vector.extract_strided_slice %272 {offsets = [0, 0, 0], sizes = [1, 32, 16], strides = [1, 1, 1]} : vector<4x32x16xf32> to vector<1x32x16xf32>
    %293 = vector.shape_cast %292 : vector<1x32x16xf32> to vector<32x16xf32>
    %cst_111 = arith.constant dense<0.000000e+00> : vector<32x16xf32>
    %294 = tpu.matmul %269, %293, %cst_111 {dimension_numbers = #tpu.dot_dimension_numbers<[1], [0], [0], [1], [0, 0, 1, 1], [], []>} : vector<32x32xf32>, vector<32x16xf32>, vector<32x16xf32> -> vector<32x16xf32>
    %295 = vector.extract_strided_slice %284 {offsets = [0, 0, 0], sizes = [1, 1, 16], strides = [1, 1, 1]} : vector<4x1x16xf32> to vector<1x1x16xf32>
    %296 = vector.shape_cast %295 : vector<1x1x16xf32> to vector<1x16xf32>
    %297 = vector.broadcast %296 : vector<1x16xf32> to vector<32x16xf32>
    %298 = arith.addf %294, %297 : vector<32x16xf32>
    %299 = vector.extract_strided_slice %275 {offsets = [0, 0, 0], sizes = [1, 32, 16], strides = [1, 1, 1]} : vector<4x32x16xf32> to vector<1x32x16xf32>
    %300 = vector.shape_cast %299 : vector<1x32x16xf32> to vector<32x16xf32>
    %cst_112 = arith.constant dense<0.000000e+00> : vector<32x16xf32>
    %301 = tpu.matmul %269, %300, %cst_112 {dimension_numbers = #tpu.dot_dimension_numbers<[1], [0], [0], [1], [0, 0, 1, 1], [], []>} : vector<32x32xf32>, vector<32x16xf32>, vector<32x16xf32> -> vector<32x16xf32>
    %302 = vector.extract_strided_slice %287 {offsets = [0, 0, 0], sizes = [1, 1, 16], strides = [1, 1, 1]} : vector<4x1x16xf32> to vector<1x1x16xf32>
    %303 = vector.shape_cast %302 : vector<1x1x16xf32> to vector<1x16xf32>
    %304 = vector.broadcast %303 : vector<1x16xf32> to vector<32x16xf32>
    %305 = arith.addf %301, %304 : vector<32x16xf32>
    %306 = vector.extract_strided_slice %278 {offsets = [0, 0, 0], sizes = [1, 32, 16], strides = [1, 1, 1]} : vector<4x32x16xf32> to vector<1x32x16xf32>
    %307 = vector.shape_cast %306 : vector<1x32x16xf32> to vector<32x16xf32>
    %cst_113 = arith.constant dense<0.000000e+00> : vector<32x16xf32>
    %308 = tpu.matmul %269, %307, %cst_113 {dimension_numbers = #tpu.dot_dimension_numbers<[1], [0], [0], [1], [0, 0, 1, 1], [], []>} : vector<32x32xf32>, vector<32x16xf32>, vector<32x16xf32> -> vector<32x16xf32>
    %309 = vector.extract_strided_slice %290 {offsets = [0, 0, 0], sizes = [1, 1, 16], strides = [1, 1, 1]} : vector<4x1x16xf32> to vector<1x1x16xf32>
    %310 = vector.shape_cast %309 : vector<1x1x16xf32> to vector<1x16xf32>
    %311 = vector.broadcast %310 : vector<1x16xf32> to vector<32x16xf32>
    %312 = arith.addf %308, %311 : vector<32x16xf32>
    %313 = vector.shape_cast %298 : vector<32x16xf32> to vector<2x16x16xf32>
    %314 = vector.shape_cast %305 : vector<32x16xf32> to vector<2x16x16xf32>
    %315 = vector.shape_cast %312 : vector<32x16xf32> to vector<2x16x16xf32>
    "tpu.trace_start"() <{level = 10 : i32, message = "sqd,skd->sqk"}> : () -> ()
    %cst_114 = arith.constant dense<0.000000e+00> : vector<2x16x16xf32>
    %316 = tpu.matmul %313, %314, %cst_114 {dimension_numbers = #tpu.dot_dimension_numbers<[2], [2], [1], [1], [0, 0, 0, 1, 1, 1], [0], [0]>} : vector<2x16x16xf32>, vector<2x16x16xf32>, vector<2x16x16xf32> -> vector<2x16x16xf32>
    "tpu.trace_stop"() : () -> ()
    %cst_115 = arith.constant 2.500000e-01 : f32
    %317 = vector.broadcast %cst_115 : f32 to vector<2x16x16xf32>
    %318 = arith.mulf %316, %317 : vector<2x16x16xf32>
    %cst_116 = arith.constant dense<0xFF800000> : vector<2x16xf32>
    %319 = vector.multi_reduction <maximumf>, %318, %cst_116 [2] : vector<2x16x16xf32> to vector<2x16xf32>
    %320 = vector.shape_cast %319 : vector<2x16xf32> to vector<2x16x1xf32>
    %321 = vector.broadcast %320 : vector<2x16x1xf32> to vector<2x16x16xf32>
    %322 = arith.subf %318, %321 : vector<2x16x16xf32>
    %323 = math.exp %322 : vector<2x16x16xf32>
    %cst_117 = arith.constant dense<0.000000e+00> : vector<2x16xf32>
    %324 = vector.multi_reduction <add>, %323, %cst_117 [2] : vector<2x16x16xf32> to vector<2x16xf32>
    %325 = vector.shape_cast %324 : vector<2x16xf32> to vector<2x16x1xf32>
    %326 = vector.broadcast %325 : vector<2x16x1xf32> to vector<2x16x16xf32>
    %327 = arith.divf %323, %326 : vector<2x16x16xf32>
    "tpu.trace_start"() <{level = 10 : i32, message = "sqk,skd->sqd"}> : () -> ()
    %cst_118 = arith.constant dense<0.000000e+00> : vector<2x16x16xf32>
    %328 = tpu.matmul %327, %315, %cst_118 {dimension_numbers = #tpu.dot_dimension_numbers<[2], [1], [1], [2], [0, 0, 0, 1, 1, 2], [0], [0]>} : vector<2x16x16xf32>, vector<2x16x16xf32>, vector<2x16x16xf32> -> vector<2x16x16xf32>
    "tpu.trace_stop"() : () -> ()
    %329 = vector.shape_cast %328 : vector<2x16x16xf32> to vector<32x16xf32>
    %330 = vector.extract_strided_slice %281 {offsets = [0, 0, 0], sizes = [1, 16, 32], strides = [1, 1, 1]} : vector<4x16x32xf32> to vector<1x16x32xf32>
    %331 = vector.shape_cast %330 : vector<1x16x32xf32> to vector<16x32xf32>
    %cst_119 = arith.constant dense<0.000000e+00> : vector<32x32xf32>
    %332 = tpu.matmul %329, %331, %cst_119 {dimension_numbers = #tpu.dot_dimension_numbers<[1], [0], [0], [1], [0, 0, 1, 1], [], []>} : vector<32x16xf32>, vector<16x32xf32>, vector<32x32xf32> -> vector<32x32xf32>
    %333 = arith.addf %291, %332 : vector<32x32xf32>
    %334 = vector.extract_strided_slice %272 {offsets = [1, 0, 0], sizes = [1, 32, 16], strides = [1, 1, 1]} : vector<4x32x16xf32> to vector<1x32x16xf32>
    %335 = vector.shape_cast %334 : vector<1x32x16xf32> to vector<32x16xf32>
    %cst_120 = arith.constant dense<0.000000e+00> : vector<32x16xf32>
    %336 = tpu.matmul %269, %335, %cst_120 {dimension_numbers = #tpu.dot_dimension_numbers<[1], [0], [0], [1], [0, 0, 1, 1], [], []>} : vector<32x32xf32>, vector<32x16xf32>, vector<32x16xf32> -> vector<32x16xf32>
    %337 = vector.extract_strided_slice %284 {offsets = [1, 0, 0], sizes = [1, 1, 16], strides = [1, 1, 1]} : vector<4x1x16xf32> to vector<1x1x16xf32>
    %338 = vector.shape_cast %337 : vector<1x1x16xf32> to vector<1x16xf32>
    %339 = vector.broadcast %338 : vector<1x16xf32> to vector<32x16xf32>
    %340 = arith.addf %336, %339 : vector<32x16xf32>
    %341 = vector.extract_strided_slice %275 {offsets = [1, 0, 0], sizes = [1, 32, 16], strides = [1, 1, 1]} : vector<4x32x16xf32> to vector<1x32x16xf32>
    %342 = vector.shape_cast %341 : vector<1x32x16xf32> to vector<32x16xf32>
    %cst_121 = arith.constant dense<0.000000e+00> : vector<32x16xf32>
    %343 = tpu.matmul %269, %342, %cst_121 {dimension_numbers = #tpu.dot_dimension_numbers<[1], [0], [0], [1], [0, 0, 1, 1], [], []>} : vector<32x32xf32>, vector<32x16xf32>, vector<32x16xf32> -> vector<32x16xf32>
    %344 = vector.extract_strided_slice %287 {offsets = [1, 0, 0], sizes = [1, 1, 16], strides = [1, 1, 1]} : vector<4x1x16xf32> to vector<1x1x16xf32>
    %345 = vector.shape_cast %344 : vector<1x1x16xf32> to vector<1x16xf32>
    %346 = vector.broadcast %345 : vector<1x16xf32> to vector<32x16xf32>
    %347 = arith.addf %343, %346 : vector<32x16xf32>
    %348 = vector.extract_strided_slice %278 {offsets = [1, 0, 0], sizes = [1, 32, 16], strides = [1, 1, 1]} : vector<4x32x16xf32> to vector<1x32x16xf32>
    %349 = vector.shape_cast %348 : vector<1x32x16xf32> to vector<32x16xf32>
    %cst_122 = arith.constant dense<0.000000e+00> : vector<32x16xf32>
    %350 = tpu.matmul %269, %349, %cst_122 {dimension_numbers = #tpu.dot_dimension_numbers<[1], [0], [0], [1], [0, 0, 1, 1], [], []>} : vector<32x32xf32>, vector<32x16xf32>, vector<32x16xf32> -> vector<32x16xf32>
    %351 = vector.extract_strided_slice %290 {offsets = [1, 0, 0], sizes = [1, 1, 16], strides = [1, 1, 1]} : vector<4x1x16xf32> to vector<1x1x16xf32>
    %352 = vector.shape_cast %351 : vector<1x1x16xf32> to vector<1x16xf32>
    %353 = vector.broadcast %352 : vector<1x16xf32> to vector<32x16xf32>
    %354 = arith.addf %350, %353 : vector<32x16xf32>
    %355 = vector.shape_cast %340 : vector<32x16xf32> to vector<2x16x16xf32>
    %356 = vector.shape_cast %347 : vector<32x16xf32> to vector<2x16x16xf32>
    %357 = vector.shape_cast %354 : vector<32x16xf32> to vector<2x16x16xf32>
    "tpu.trace_start"() <{level = 10 : i32, message = "sqd,skd->sqk"}> : () -> ()
    %cst_123 = arith.constant dense<0.000000e+00> : vector<2x16x16xf32>
    %358 = tpu.matmul %355, %356, %cst_123 {dimension_numbers = #tpu.dot_dimension_numbers<[2], [2], [1], [1], [0, 0, 0, 1, 1, 1], [0], [0]>} : vector<2x16x16xf32>, vector<2x16x16xf32>, vector<2x16x16xf32> -> vector<2x16x16xf32>
    "tpu.trace_stop"() : () -> ()
    %cst_124 = arith.constant 2.500000e-01 : f32
    %359 = vector.broadcast %cst_124 : f32 to vector<2x16x16xf32>
    %360 = arith.mulf %358, %359 : vector<2x16x16xf32>
    %cst_125 = arith.constant dense<0xFF800000> : vector<2x16xf32>
    %361 = vector.multi_reduction <maximumf>, %360, %cst_125 [2] : vector<2x16x16xf32> to vector<2x16xf32>
    %362 = vector.shape_cast %361 : vector<2x16xf32> to vector<2x16x1xf32>
    %363 = vector.broadcast %362 : vector<2x16x1xf32> to vector<2x16x16xf32>
    %364 = arith.subf %360, %363 : vector<2x16x16xf32>
    %365 = math.exp %364 : vector<2x16x16xf32>
    %cst_126 = arith.constant dense<0.000000e+00> : vector<2x16xf32>
    %366 = vector.multi_reduction <add>, %365, %cst_126 [2] : vector<2x16x16xf32> to vector<2x16xf32>
    %367 = vector.shape_cast %366 : vector<2x16xf32> to vector<2x16x1xf32>
    %368 = vector.broadcast %367 : vector<2x16x1xf32> to vector<2x16x16xf32>
    %369 = arith.divf %365, %368 : vector<2x16x16xf32>
    "tpu.trace_start"() <{level = 10 : i32, message = "sqk,skd->sqd"}> : () -> ()
    %cst_127 = arith.constant dense<0.000000e+00> : vector<2x16x16xf32>
    %370 = tpu.matmul %369, %357, %cst_127 {dimension_numbers = #tpu.dot_dimension_numbers<[2], [1], [1], [2], [0, 0, 0, 1, 1, 2], [0], [0]>} : vector<2x16x16xf32>, vector<2x16x16xf32>, vector<2x16x16xf32> -> vector<2x16x16xf32>
    "tpu.trace_stop"() : () -> ()
    %371 = vector.shape_cast %370 : vector<2x16x16xf32> to vector<32x16xf32>
    %372 = vector.extract_strided_slice %281 {offsets = [1, 0, 0], sizes = [1, 16, 32], strides = [1, 1, 1]} : vector<4x16x32xf32> to vector<1x16x32xf32>
    %373 = vector.shape_cast %372 : vector<1x16x32xf32> to vector<16x32xf32>
    %cst_128 = arith.constant dense<0.000000e+00> : vector<32x32xf32>
    %374 = tpu.matmul %371, %373, %cst_128 {dimension_numbers = #tpu.dot_dimension_numbers<[1], [0], [0], [1], [0, 0, 1, 1], [], []>} : vector<32x16xf32>, vector<16x32xf32>, vector<32x32xf32> -> vector<32x32xf32>
    %375 = arith.addf %333, %374 : vector<32x32xf32>
    %376 = vector.extract_strided_slice %272 {offsets = [2, 0, 0], sizes = [1, 32, 16], strides = [1, 1, 1]} : vector<4x32x16xf32> to vector<1x32x16xf32>
    %377 = vector.shape_cast %376 : vector<1x32x16xf32> to vector<32x16xf32>
    %cst_129 = arith.constant dense<0.000000e+00> : vector<32x16xf32>
    %378 = tpu.matmul %269, %377, %cst_129 {dimension_numbers = #tpu.dot_dimension_numbers<[1], [0], [0], [1], [0, 0, 1, 1], [], []>} : vector<32x32xf32>, vector<32x16xf32>, vector<32x16xf32> -> vector<32x16xf32>
    %379 = vector.extract_strided_slice %284 {offsets = [2, 0, 0], sizes = [1, 1, 16], strides = [1, 1, 1]} : vector<4x1x16xf32> to vector<1x1x16xf32>
    %380 = vector.shape_cast %379 : vector<1x1x16xf32> to vector<1x16xf32>
    %381 = vector.broadcast %380 : vector<1x16xf32> to vector<32x16xf32>
    %382 = arith.addf %378, %381 : vector<32x16xf32>
    %383 = vector.extract_strided_slice %275 {offsets = [2, 0, 0], sizes = [1, 32, 16], strides = [1, 1, 1]} : vector<4x32x16xf32> to vector<1x32x16xf32>
    %384 = vector.shape_cast %383 : vector<1x32x16xf32> to vector<32x16xf32>
    %cst_130 = arith.constant dense<0.000000e+00> : vector<32x16xf32>
    %385 = tpu.matmul %269, %384, %cst_130 {dimension_numbers = #tpu.dot_dimension_numbers<[1], [0], [0], [1], [0, 0, 1, 1], [], []>} : vector<32x32xf32>, vector<32x16xf32>, vector<32x16xf32> -> vector<32x16xf32>
    %386 = vector.extract_strided_slice %287 {offsets = [2, 0, 0], sizes = [1, 1, 16], strides = [1, 1, 1]} : vector<4x1x16xf32> to vector<1x1x16xf32>
    %387 = vector.shape_cast %386 : vector<1x1x16xf32> to vector<1x16xf32>
    %388 = vector.broadcast %387 : vector<1x16xf32> to vector<32x16xf32>
    %389 = arith.addf %385, %388 : vector<32x16xf32>
    %390 = vector.extract_strided_slice %278 {offsets = [2, 0, 0], sizes = [1, 32, 16], strides = [1, 1, 1]} : vector<4x32x16xf32> to vector<1x32x16xf32>
    %391 = vector.shape_cast %390 : vector<1x32x16xf32> to vector<32x16xf32>
    %cst_131 = arith.constant dense<0.000000e+00> : vector<32x16xf32>
    %392 = tpu.matmul %269, %391, %cst_131 {dimension_numbers = #tpu.dot_dimension_numbers<[1], [0], [0], [1], [0, 0, 1, 1], [], []>} : vector<32x32xf32>, vector<32x16xf32>, vector<32x16xf32> -> vector<32x16xf32>
    %393 = vector.extract_strided_slice %290 {offsets = [2, 0, 0], sizes = [1, 1, 16], strides = [1, 1, 1]} : vector<4x1x16xf32> to vector<1x1x16xf32>
    %394 = vector.shape_cast %393 : vector<1x1x16xf32> to vector<1x16xf32>
    %395 = vector.broadcast %394 : vector<1x16xf32> to vector<32x16xf32>
    %396 = arith.addf %392, %395 : vector<32x16xf32>
    %397 = vector.shape_cast %382 : vector<32x16xf32> to vector<2x16x16xf32>
    %398 = vector.shape_cast %389 : vector<32x16xf32> to vector<2x16x16xf32>
    %399 = vector.shape_cast %396 : vector<32x16xf32> to vector<2x16x16xf32>
    "tpu.trace_start"() <{level = 10 : i32, message = "sqd,skd->sqk"}> : () -> ()
    %cst_132 = arith.constant dense<0.000000e+00> : vector<2x16x16xf32>
    %400 = tpu.matmul %397, %398, %cst_132 {dimension_numbers = #tpu.dot_dimension_numbers<[2], [2], [1], [1], [0, 0, 0, 1, 1, 1], [0], [0]>} : vector<2x16x16xf32>, vector<2x16x16xf32>, vector<2x16x16xf32> -> vector<2x16x16xf32>
    "tpu.trace_stop"() : () -> ()
    %cst_133 = arith.constant 2.500000e-01 : f32
    %401 = vector.broadcast %cst_133 : f32 to vector<2x16x16xf32>
    %402 = arith.mulf %400, %401 : vector<2x16x16xf32>
    %cst_134 = arith.constant dense<0xFF800000> : vector<2x16xf32>
    %403 = vector.multi_reduction <maximumf>, %402, %cst_134 [2] : vector<2x16x16xf32> to vector<2x16xf32>
    %404 = vector.shape_cast %403 : vector<2x16xf32> to vector<2x16x1xf32>
    %405 = vector.broadcast %404 : vector<2x16x1xf32> to vector<2x16x16xf32>
    %406 = arith.subf %402, %405 : vector<2x16x16xf32>
    %407 = math.exp %406 : vector<2x16x16xf32>
    %cst_135 = arith.constant dense<0.000000e+00> : vector<2x16xf32>
    %408 = vector.multi_reduction <add>, %407, %cst_135 [2] : vector<2x16x16xf32> to vector<2x16xf32>
    %409 = vector.shape_cast %408 : vector<2x16xf32> to vector<2x16x1xf32>
    %410 = vector.broadcast %409 : vector<2x16x1xf32> to vector<2x16x16xf32>
    %411 = arith.divf %407, %410 : vector<2x16x16xf32>
    "tpu.trace_start"() <{level = 10 : i32, message = "sqk,skd->sqd"}> : () -> ()
    %cst_136 = arith.constant dense<0.000000e+00> : vector<2x16x16xf32>
    %412 = tpu.matmul %411, %399, %cst_136 {dimension_numbers = #tpu.dot_dimension_numbers<[2], [1], [1], [2], [0, 0, 0, 1, 1, 2], [0], [0]>} : vector<2x16x16xf32>, vector<2x16x16xf32>, vector<2x16x16xf32> -> vector<2x16x16xf32>
    "tpu.trace_stop"() : () -> ()
    %413 = vector.shape_cast %412 : vector<2x16x16xf32> to vector<32x16xf32>
    %414 = vector.extract_strided_slice %281 {offsets = [2, 0, 0], sizes = [1, 16, 32], strides = [1, 1, 1]} : vector<4x16x32xf32> to vector<1x16x32xf32>
    %415 = vector.shape_cast %414 : vector<1x16x32xf32> to vector<16x32xf32>
    %cst_137 = arith.constant dense<0.000000e+00> : vector<32x32xf32>
    %416 = tpu.matmul %413, %415, %cst_137 {dimension_numbers = #tpu.dot_dimension_numbers<[1], [0], [0], [1], [0, 0, 1, 1], [], []>} : vector<32x16xf32>, vector<16x32xf32>, vector<32x32xf32> -> vector<32x32xf32>
    %417 = arith.addf %375, %416 : vector<32x32xf32>
    %418 = vector.extract_strided_slice %272 {offsets = [3, 0, 0], sizes = [1, 32, 16], strides = [1, 1, 1]} : vector<4x32x16xf32> to vector<1x32x16xf32>
    %419 = vector.shape_cast %418 : vector<1x32x16xf32> to vector<32x16xf32>
    %cst_138 = arith.constant dense<0.000000e+00> : vector<32x16xf32>
    %420 = tpu.matmul %269, %419, %cst_138 {dimension_numbers = #tpu.dot_dimension_numbers<[1], [0], [0], [1], [0, 0, 1, 1], [], []>} : vector<32x32xf32>, vector<32x16xf32>, vector<32x16xf32> -> vector<32x16xf32>
    %421 = vector.extract_strided_slice %284 {offsets = [3, 0, 0], sizes = [1, 1, 16], strides = [1, 1, 1]} : vector<4x1x16xf32> to vector<1x1x16xf32>
    %422 = vector.shape_cast %421 : vector<1x1x16xf32> to vector<1x16xf32>
    %423 = vector.broadcast %422 : vector<1x16xf32> to vector<32x16xf32>
    %424 = arith.addf %420, %423 : vector<32x16xf32>
    %425 = vector.extract_strided_slice %275 {offsets = [3, 0, 0], sizes = [1, 32, 16], strides = [1, 1, 1]} : vector<4x32x16xf32> to vector<1x32x16xf32>
    %426 = vector.shape_cast %425 : vector<1x32x16xf32> to vector<32x16xf32>
    %cst_139 = arith.constant dense<0.000000e+00> : vector<32x16xf32>
    %427 = tpu.matmul %269, %426, %cst_139 {dimension_numbers = #tpu.dot_dimension_numbers<[1], [0], [0], [1], [0, 0, 1, 1], [], []>} : vector<32x32xf32>, vector<32x16xf32>, vector<32x16xf32> -> vector<32x16xf32>
    %428 = vector.extract_strided_slice %287 {offsets = [3, 0, 0], sizes = [1, 1, 16], strides = [1, 1, 1]} : vector<4x1x16xf32> to vector<1x1x16xf32>
    %429 = vector.shape_cast %428 : vector<1x1x16xf32> to vector<1x16xf32>
    %430 = vector.broadcast %429 : vector<1x16xf32> to vector<32x16xf32>
    %431 = arith.addf %427, %430 : vector<32x16xf32>
    %432 = vector.extract_strided_slice %278 {offsets = [3, 0, 0], sizes = [1, 32, 16], strides = [1, 1, 1]} : vector<4x32x16xf32> to vector<1x32x16xf32>
    %433 = vector.shape_cast %432 : vector<1x32x16xf32> to vector<32x16xf32>
    %cst_140 = arith.constant dense<0.000000e+00> : vector<32x16xf32>
    %434 = tpu.matmul %269, %433, %cst_140 {dimension_numbers = #tpu.dot_dimension_numbers<[1], [0], [0], [1], [0, 0, 1, 1], [], []>} : vector<32x32xf32>, vector<32x16xf32>, vector<32x16xf32> -> vector<32x16xf32>
    %435 = vector.extract_strided_slice %290 {offsets = [3, 0, 0], sizes = [1, 1, 16], strides = [1, 1, 1]} : vector<4x1x16xf32> to vector<1x1x16xf32>
    %436 = vector.shape_cast %435 : vector<1x1x16xf32> to vector<1x16xf32>
    %437 = vector.broadcast %436 : vector<1x16xf32> to vector<32x16xf32>
    %438 = arith.addf %434, %437 : vector<32x16xf32>
    %439 = vector.shape_cast %424 : vector<32x16xf32> to vector<2x16x16xf32>
    %440 = vector.shape_cast %431 : vector<32x16xf32> to vector<2x16x16xf32>
    %441 = vector.shape_cast %438 : vector<32x16xf32> to vector<2x16x16xf32>
    "tpu.trace_start"() <{level = 10 : i32, message = "sqd,skd->sqk"}> : () -> ()
    %cst_141 = arith.constant dense<0.000000e+00> : vector<2x16x16xf32>
    %442 = tpu.matmul %439, %440, %cst_141 {dimension_numbers = #tpu.dot_dimension_numbers<[2], [2], [1], [1], [0, 0, 0, 1, 1, 1], [0], [0]>} : vector<2x16x16xf32>, vector<2x16x16xf32>, vector<2x16x16xf32> -> vector<2x16x16xf32>
    "tpu.trace_stop"() : () -> ()
    %cst_142 = arith.constant 2.500000e-01 : f32
    %443 = vector.broadcast %cst_142 : f32 to vector<2x16x16xf32>
    %444 = arith.mulf %442, %443 : vector<2x16x16xf32>
    %cst_143 = arith.constant dense<0xFF800000> : vector<2x16xf32>
    %445 = vector.multi_reduction <maximumf>, %444, %cst_143 [2] : vector<2x16x16xf32> to vector<2x16xf32>
    %446 = vector.shape_cast %445 : vector<2x16xf32> to vector<2x16x1xf32>
    %447 = vector.broadcast %446 : vector<2x16x1xf32> to vector<2x16x16xf32>
    %448 = arith.subf %444, %447 : vector<2x16x16xf32>
    %449 = math.exp %448 : vector<2x16x16xf32>
    %cst_144 = arith.constant dense<0.000000e+00> : vector<2x16xf32>
    %450 = vector.multi_reduction <add>, %449, %cst_144 [2] : vector<2x16x16xf32> to vector<2x16xf32>
    %451 = vector.shape_cast %450 : vector<2x16xf32> to vector<2x16x1xf32>
    %452 = vector.broadcast %451 : vector<2x16x1xf32> to vector<2x16x16xf32>
    %453 = arith.divf %449, %452 : vector<2x16x16xf32>
    "tpu.trace_start"() <{level = 10 : i32, message = "sqk,skd->sqd"}> : () -> ()
    %cst_145 = arith.constant dense<0.000000e+00> : vector<2x16x16xf32>
    %454 = tpu.matmul %453, %441, %cst_145 {dimension_numbers = #tpu.dot_dimension_numbers<[2], [1], [1], [2], [0, 0, 0, 1, 1, 2], [0], [0]>} : vector<2x16x16xf32>, vector<2x16x16xf32>, vector<2x16x16xf32> -> vector<2x16x16xf32>
    "tpu.trace_stop"() : () -> ()
    %455 = vector.shape_cast %454 : vector<2x16x16xf32> to vector<32x16xf32>
    %456 = vector.extract_strided_slice %281 {offsets = [3, 0, 0], sizes = [1, 16, 32], strides = [1, 1, 1]} : vector<4x16x32xf32> to vector<1x16x32xf32>
    %457 = vector.shape_cast %456 : vector<1x16x32xf32> to vector<16x32xf32>
    %cst_146 = arith.constant dense<0.000000e+00> : vector<32x32xf32>
    %458 = tpu.matmul %455, %457, %cst_146 {dimension_numbers = #tpu.dot_dimension_numbers<[1], [0], [0], [1], [0, 0, 1, 1], [], []>} : vector<32x16xf32>, vector<16x32xf32>, vector<32x32xf32> -> vector<32x32xf32>
    %459 = arith.addf %417, %458 : vector<32x32xf32>
    %460 = arith.addf %269, %459 : vector<32x32xf32>
    %461 = arith.index_cast %c1_i32 : i32 to index
    %c0_147 = arith.constant 0 : index
    %c0_148 = arith.constant 0 : index
    %462 = vector.load %arg8[%461, %c0_147, %c0_148] : memref<2x1x32xf32, #tpu.memory_space<vmem>>, vector<1x1x32xf32>
    %463 = vector.shape_cast %462 : vector<1x1x32xf32> to vector<1x32xf32>
    %464 = vector.broadcast %463 : vector<1x32xf32> to vector<32x32xf32>
    %465 = arith.addf %460, %464 : vector<32x32xf32>
    %466 = arith.index_cast %c1_i32 : i32 to index
    %c0_149 = arith.constant 0 : index
    %c0_150 = arith.constant 0 : index
    %467 = vector.load %arg9[%466, %c0_149, %c0_150] : memref<2x1x32xf32, #tpu.memory_space<vmem>>, vector<1x1x32xf32>
    %468 = vector.shape_cast %467 : vector<1x1x32xf32> to vector<1x32xf32>
    %469 = arith.index_cast %c1_i32 : i32 to index
    %c0_151 = arith.constant 0 : index
    %c0_152 = arith.constant 0 : index
    %470 = vector.load %arg10[%469, %c0_151, %c0_152] : memref<2x1x32xf32, #tpu.memory_space<vmem>>, vector<1x1x32xf32>
    %471 = vector.shape_cast %470 : vector<1x1x32xf32> to vector<1x32xf32>
    %cst_153 = arith.constant dense<0.000000e+00> : vector<32xf32>
    %472 = vector.multi_reduction <add>, %465, %cst_153 [1] : vector<32x32xf32> to vector<32xf32>
    %473 = vector.shape_cast %472 : vector<32xf32> to vector<32x1xf32>
    %cst_154 = arith.constant 3.200000e+01 : f32
    %474 = vector.broadcast %cst_154 : f32 to vector<32x1xf32>
    %475 = arith.divf %473, %474 : vector<32x1xf32>
    %476 = vector.broadcast %475 : vector<32x1xf32> to vector<32x32xf32>
    %477 = arith.subf %465, %476 : vector<32x32xf32>
    %478 = arith.mulf %477, %477 : vector<32x32xf32>
    %cst_155 = arith.constant dense<0.000000e+00> : vector<32xf32>
    %479 = vector.multi_reduction <add>, %478, %cst_155 [1] : vector<32x32xf32> to vector<32xf32>
    %480 = vector.shape_cast %479 : vector<32xf32> to vector<32x1xf32>
    %cst_156 = arith.constant 3.200000e+01 : f32
    %481 = vector.broadcast %cst_156 : f32 to vector<32x1xf32>
    %482 = arith.divf %480, %481 : vector<32x1xf32>
    %483 = vector.broadcast %468 : vector<1x32xf32> to vector<32x32xf32>
    %484 = arith.mulf %483, %477 : vector<32x32xf32>
    %cst_157 = arith.constant 9.99999974E-6 : f32
    %485 = vector.broadcast %cst_157 : f32 to vector<32x1xf32>
    %486 = arith.addf %482, %485 : vector<32x1xf32>
    %487 = math.rsqrt %486 : vector<32x1xf32>
    %488 = vector.broadcast %487 : vector<32x1xf32> to vector<32x32xf32>
    %489 = arith.mulf %484, %488 : vector<32x32xf32>
    %490 = vector.broadcast %471 : vector<1x32xf32> to vector<32x32xf32>
    %491 = arith.addf %489, %490 : vector<32x32xf32>
    %492 = arith.index_cast %c1_i32 : i32 to index
    %c0_158 = arith.constant 0 : index
    %c0_159 = arith.constant 0 : index
    %493 = vector.load %arg11[%492, %c0_158, %c0_159] : memref<2x32x64xf32, #tpu.memory_space<vmem>>, vector<1x32x64xf32>
    %494 = vector.shape_cast %493 : vector<1x32x64xf32> to vector<32x64xf32>
    %cst_160 = arith.constant dense<0.000000e+00> : vector<32x64xf32>
    %495 = tpu.matmul %491, %494, %cst_160 {dimension_numbers = #tpu.dot_dimension_numbers<[1], [0], [0], [1], [0, 0, 1, 1], [], []>} : vector<32x32xf32>, vector<32x64xf32>, vector<32x64xf32> -> vector<32x64xf32>
    %496 = arith.index_cast %c1_i32 : i32 to index
    %c0_161 = arith.constant 0 : index
    %c0_162 = arith.constant 0 : index
    %497 = vector.load %arg12[%496, %c0_161, %c0_162] : memref<2x1x64xf32, #tpu.memory_space<vmem>>, vector<1x1x64xf32>
    %498 = vector.shape_cast %497 : vector<1x1x64xf32> to vector<1x64xf32>
    %499 = vector.broadcast %498 : vector<1x64xf32> to vector<32x64xf32>
    %500 = arith.addf %495, %499 : vector<32x64xf32>
    %cst_163 = arith.constant 0.000000e+00 : f32
    %501 = vector.broadcast %cst_163 : f32 to vector<32x64xf32>
    %502 = arith.maximumf %500, %501 : vector<32x64xf32>
    %503 = arith.index_cast %c1_i32 : i32 to index
    %c0_164 = arith.constant 0 : index
    %c0_165 = arith.constant 0 : index
    %504 = vector.load %arg13[%503, %c0_164, %c0_165] : memref<2x64x32xf32, #tpu.memory_space<vmem>>, vector<1x64x32xf32>
    %505 = vector.shape_cast %504 : vector<1x64x32xf32> to vector<64x32xf32>
    %cst_166 = arith.constant dense<0.000000e+00> : vector<32x32xf32>
    %506 = tpu.matmul %502, %505, %cst_166 {dimension_numbers = #tpu.dot_dimension_numbers<[1], [0], [0], [1], [0, 0, 1, 1], [], []>} : vector<32x64xf32>, vector<64x32xf32>, vector<32x32xf32> -> vector<32x32xf32>
    %507 = arith.index_cast %c1_i32 : i32 to index
    %c0_167 = arith.constant 0 : index
    %c0_168 = arith.constant 0 : index
    %508 = vector.load %arg14[%507, %c0_167, %c0_168] : memref<2x1x32xf32, #tpu.memory_space<vmem>>, vector<1x1x32xf32>
    %509 = vector.shape_cast %508 : vector<1x1x32xf32> to vector<1x32xf32>
    %510 = vector.broadcast %509 : vector<1x32xf32> to vector<32x32xf32>
    %511 = arith.addf %506, %510 : vector<32x32xf32>
    %512 = arith.addf %491, %511 : vector<32x32xf32>
    %513 = arith.index_cast %c1_i32 : i32 to index
    %c0_169 = arith.constant 0 : index
    %c0_170 = arith.constant 0 : index
    %514 = vector.load %arg15[%513, %c0_169, %c0_170] : memref<2x1x32xf32, #tpu.memory_space<vmem>>, vector<1x1x32xf32>
    %515 = vector.shape_cast %514 : vector<1x1x32xf32> to vector<1x32xf32>
    %516 = arith.index_cast %c1_i32 : i32 to index
    %c0_171 = arith.constant 0 : index
    %c0_172 = arith.constant 0 : index
    %517 = vector.load %arg16[%516, %c0_171, %c0_172] : memref<2x1x32xf32, #tpu.memory_space<vmem>>, vector<1x1x32xf32>
    %518 = vector.shape_cast %517 : vector<1x1x32xf32> to vector<1x32xf32>
    %cst_173 = arith.constant dense<0.000000e+00> : vector<32xf32>
    %519 = vector.multi_reduction <add>, %512, %cst_173 [1] : vector<32x32xf32> to vector<32xf32>
    %520 = vector.shape_cast %519 : vector<32xf32> to vector<32x1xf32>
    %cst_174 = arith.constant 3.200000e+01 : f32
    %521 = vector.broadcast %cst_174 : f32 to vector<32x1xf32>
    %522 = arith.divf %520, %521 : vector<32x1xf32>
    %523 = vector.broadcast %522 : vector<32x1xf32> to vector<32x32xf32>
    %524 = arith.subf %512, %523 : vector<32x32xf32>
    %525 = arith.mulf %524, %524 : vector<32x32xf32>
    %cst_175 = arith.constant dense<0.000000e+00> : vector<32xf32>
    %526 = vector.multi_reduction <add>, %525, %cst_175 [1] : vector<32x32xf32> to vector<32xf32>
    %527 = vector.shape_cast %526 : vector<32xf32> to vector<32x1xf32>
    %cst_176 = arith.constant 3.200000e+01 : f32
    %528 = vector.broadcast %cst_176 : f32 to vector<32x1xf32>
    %529 = arith.divf %527, %528 : vector<32x1xf32>
    %530 = vector.broadcast %515 : vector<1x32xf32> to vector<32x32xf32>
    %531 = arith.mulf %530, %524 : vector<32x32xf32>
    %cst_177 = arith.constant 9.99999974E-6 : f32
    %532 = vector.broadcast %cst_177 : f32 to vector<32x1xf32>
    %533 = arith.addf %529, %532 : vector<32x1xf32>
    %534 = math.rsqrt %533 : vector<32x1xf32>
    %535 = vector.broadcast %534 : vector<32x1xf32> to vector<32x32xf32>
    %536 = arith.mulf %531, %535 : vector<32x32xf32>
    %537 = vector.broadcast %518 : vector<1x32xf32> to vector<32x32xf32>
    %538 = arith.addf %536, %537 : vector<32x32xf32>
    %c2_i32 = arith.constant 2 : i32
    %c0_178 = arith.constant 0 : index
    %c0_179 = arith.constant 0 : index
    %539 = vector.load %arg17[%c0_178, %c0_179] : memref<32x32xf32, #tpu.memory_space<vmem>>, vector<32x32xf32>
    tpu.vector_store %arg17[%c0_178, %c0_179], %538 {strides = array<i32>} : memref<32x32xf32, #tpu.memory_space<vmem>>, vector<32x32xf32>,
    return
  }
}

</mosaic_0001>

<llo_original>
// kernel: tpu_custom_call.1
$region0: #{tpu_custom_call.1}
  #allocation0 [shape = 'u32[]', space=smem, size = 0x4, offset = 0x4, fixed_abs, tag = 'smem constant byte address 0x4 - core index']
  #allocation1 [shape = 'u32[144,128]{1,0:T(1,128)}', space=vmem, size = 0x12000, scoped, tag = 'internal scratch']
  %s0 = inlined_call_operand.vmem [shape: f32[32,32], index: 0, kind: input, shape index: {}]
  %s1 = inlined_call_operand.vmem [shape: f32[2,4,32,16], index: 1, kind: input, shape index: {}]
  %s2 = inlined_call_operand.vmem [shape: f32[2,4,32,16], index: 2, kind: input, shape index: {}]
  %s3 = inlined_call_operand.vmem [shape: f32[2,4,32,16], index: 3, kind: input, shape index: {}]
  %s4 = inlined_call_operand.vmem [shape: f32[2,4,1,16], index: 4, kind: input, shape index: {}]
  %s5 = inlined_call_operand.vmem [shape: f32[2,4,1,16], index: 5, kind: input, shape index: {}]
  %s6 = inlined_call_operand.vmem [shape: f32[2,4,1,16], index: 6, kind: input, shape index: {}]
  %s7 = inlined_call_operand.vmem [shape: f32[2,4,16,32], index: 7, kind: input, shape index: {}]
  %s8 = inlined_call_operand.vmem [shape: f32[2,1,32], index: 8, kind: input, shape index: {}]
  %s9 = inlined_call_operand.vmem [shape: f32[2,1,32], index: 9, kind: input, shape index: {}]
  %s10 = inlined_call_operand.vmem [shape: f32[2,1,32], index: 10, kind: input, shape index: {}]
  %s11 = inlined_call_operand.vmem [shape: f32[2,32,64], index: 11, kind: input, shape index: {}]
  %s12 = inlined_call_operand.vmem [shape: f32[2,1,64], index: 12, kind: input, shape index: {}]
  %s13 = inlined_call_operand.vmem [shape: f32[2,64,32], index: 13, kind: input, shape index: {}]
  %s14 = inlined_call_operand.vmem [shape: f32[2,1,32], index: 14, kind: input, shape index: {}]
  %s15 = inlined_call_operand.vmem [shape: f32[2,1,32], index: 15, kind: input, shape index: {}]
  %s16 = inlined_call_operand.vmem [shape: f32[2,1,32], index: 16, kind: input, shape index: {}]
  %s17 = inlined_call_operand.hbm [shape: f32[32,32], index: 17, kind: output, shape index: {}]
  %s18 = sld [smem:[#allocation0]]
  $region78: #{tpu_custom_call.1} parent=0
    _
  %s20 = ssub.s32 1, %s18
  %s21 = scalar_select 0, %s20, %s18
  $region1: #{tpu_custom_call.1} parent=0
    #allocation2 [shape = 'u8[16384]{0}', space=vmem, size = 0x4000, scoped, tag = 'output window, operand 0, single buffered']
    #allocation3 [shape = 's32[1]{0}', space=sflag, size = 0x4, scoped, tag = 'scoped memory for tpu_custom_call.1']
    %22 = vsyncpa [#allocation3], 0
    // Predicated region
    $region2: #{tpu_custom_call.1} parent=1 // pred_check
      _
    $region3: #{tpu_custom_call.1} parent=1 // pred_check_branch
      %24 = sbr.rel (0) target = $region5
    $region4: #{tpu_custom_call.1} parent=1 // pred_region
      _
    $region5: #{tpu_custom_call.1} parent=1 // pred_fallthru
      _
    // Predicated region
    $region6: #{tpu_custom_call.1} parent=1 // pred_check
      _
    $region7: #{tpu_custom_call.1} parent=1 // pred_check_branch
      %26 = sbr.rel (0) target = $region9
    $region8: #{tpu_custom_call.1} parent=1 // pred_region
      _
    $region9: #{tpu_custom_call.1} parent=1 // pred_fallthru
      _
    // Predicated region
    $region10: #{tpu_custom_call.1} parent=1 // pred_check
      _
    $region11: #{tpu_custom_call.1} parent=1 // pred_check_branch
      %28 = sbr.rel (0) target = $region13
    $region12: #{tpu_custom_call.1} parent=1 // pred_region
      _
    $region13: #{tpu_custom_call.1} parent=1 // pred_fallthru
      _
    // Predicated region
    $region14: #{tpu_custom_call.1} parent=1 // pred_check
      _
    $region15: #{tpu_custom_call.1} parent=1 // pred_check_branch
      %30 = sbr.rel (0) target = $region17
    $region16: #{tpu_custom_call.1} parent=1 // pred_region
      _
    $region17: #{tpu_custom_call.1} parent=1 // pred_fallthru
      _
    // Predicated region
    $region18: #{tpu_custom_call.1} parent=1 // pred_check
      _
    $region19: #{tpu_custom_call.1} parent=1 // pred_check_branch
      %32 = sbr.rel (0) target = $region21
    $region20: #{tpu_custom_call.1} parent=1 // pred_region
      _
    $region21: #{tpu_custom_call.1} parent=1 // pred_fallthru
      _
    // Predicated region
    $region22: #{tpu_custom_call.1} parent=1 // pred_check
      _
    $region23: #{tpu_custom_call.1} parent=1 // pred_check_branch
      %34 = sbr.rel (0) target = $region25
    $region24: #{tpu_custom_call.1} parent=1 // pred_region
      _
    $region25: #{tpu_custom_call.1} parent=1 // pred_fallthru
      _
    // Predicated region
    $region26: #{tpu_custom_call.1} parent=1 // pred_check
      _
    $region27: #{tpu_custom_call.1} parent=1 // pred_check_branch
      %36 = sbr.rel (0) target = $region29
    $region28: #{tpu_custom_call.1} parent=1 // pred_region
      _
    $region29: #{tpu_custom_call.1} parent=1 // pred_fallthru
      _
    // Predicated region
    $region30: #{tpu_custom_call.1} parent=1 // pred_check
      _
    $region31: #{tpu_custom_call.1} parent=1 // pred_check_branch
      %38 = sbr.rel (0) target = $region33
    $region32: #{tpu_custom_call.1} parent=1 // pred_region
      _
    $region33: #{tpu_custom_call.1} parent=1 // pred_fallthru
      _
    // Predicated region
    $region34: #{tpu_custom_call.1} parent=1 // pred_check
      _
    $region35: #{tpu_custom_call.1} parent=1 // pred_check_branch
      %40 = sbr.rel (0) target = $region37
    $region36: #{tpu_custom_call.1} parent=1 // pred_region
      _
    $region37: #{tpu_custom_call.1} parent=1 // pred_fallthru
      _
    // Predicated region
    $region38: #{tpu_custom_call.1} parent=1 // pred_check
      _
    $region39: #{tpu_custom_call.1} parent=1 // pred_check_branch
      %42 = sbr.rel (0) target = $region41
    $region40: #{tpu_custom_call.1} parent=1 // pred_region
      _
    $region41: #{tpu_custom_call.1} parent=1 // pred_fallthru
      _
    // Predicated region
    $region42: #{tpu_custom_call.1} parent=1 // pred_check
      _
    $region43: #{tpu_custom_call.1} parent=1 // pred_check_branch
      %44 = sbr.rel (0) target = $region45
    $region44: #{tpu_custom_call.1} parent=1 // pred_region
      _
    $region45: #{tpu_custom_call.1} parent=1 // pred_fallthru
      _
    // Predicated region
    $region46: #{tpu_custom_call.1} parent=1 // pred_check
      _
    $region47: #{tpu_custom_call.1} parent=1 // pred_check_branch
      %46 = sbr.rel (0) target = $region49
    $region48: #{tpu_custom_call.1} parent=1 // pred_region
      _
    $region49: #{tpu_custom_call.1} parent=1 // pred_fallthru
      _
    // Predicated region
    $region50: #{tpu_custom_call.1} parent=1 // pred_check
      _
    $region51: #{tpu_custom_call.1} parent=1 // pred_check_branch
      %48 = sbr.rel (0) target = $region53
    $region52: #{tpu_custom_call.1} parent=1 // pred_region
      _
    $region53: #{tpu_custom_call.1} parent=1 // pred_fallthru
      _
    // Predicated region
    $region54: #{tpu_custom_call.1} parent=1 // pred_check
      _
    $region55: #{tpu_custom_call.1} parent=1 // pred_check_branch
      %50 = sbr.rel (0) target = $region57
    $region56: #{tpu_custom_call.1} parent=1 // pred_region
      _
    $region57: #{tpu_custom_call.1} parent=1 // pred_fallthru
      _
    // Predicated region
    $region58: #{tpu_custom_call.1} parent=1 // pred_check
      _
    $region59: #{tpu_custom_call.1} parent=1 // pred_check_branch
      %52 = sbr.rel (0) target = $region61
    $region60: #{tpu_custom_call.1} parent=1 // pred_region
      _
    $region61: #{tpu_custom_call.1} parent=1 // pred_fallthru
      _
    // Predicated region
    $region62: #{tpu_custom_call.1} parent=1 // pred_check
      _
    $region63: #{tpu_custom_call.1} parent=1 // pred_check_branch
      %54 = sbr.rel (0) target = $region65
    $region64: #{tpu_custom_call.1} parent=1 // pred_region
      _
    $region65: #{tpu_custom_call.1} parent=1 // pred_fallthru
      _
    // Predicated region
    $region66: #{tpu_custom_call.1} parent=1 // pred_check
      _
    $region67: #{tpu_custom_call.1} parent=1 // pred_check_branch
      %56 = sbr.rel (0) target = $region69
    $region68: #{tpu_custom_call.1} parent=1 // pred_region
      _
    $region69: #{tpu_custom_call.1} parent=1 // pred_fallthru
      _
    %v57 = vld [vmem:[%s0] sm:$0xff]
    %v58 = vld [vmem:[%s0 + $0x8] sm:$0xff]
    %v59 = vld [vmem:[%s0 + $0x10] sm:$0xff]
    %v60 = vld [vmem:[%s0 + $0x18] sm:$0xff]
    %v61 = vld [vmem:[%s1] sm:$0xff]
    %v62 = vld [vmem:[%s1 + $0x8] sm:$0xff]
    %v63 = vld [vmem:[%s1 + $0x10] sm:$0xff]
    %v64 = vld [vmem:[%s1 + $0x18] sm:$0xff]
    %v65 = vld [vmem:[%s1 + $0x20] sm:$0xff]
    %v66 = vld [vmem:[%s1 + $0x28] sm:$0xff]
    %v67 = vld [vmem:[%s1 + $0x30] sm:$0xff]
    %v68 = vld [vmem:[%s1 + $0x38] sm:$0xff]
    %v69 = vld [vmem:[%s1 + $0x40] sm:$0xff]
    %v70 = vld [vmem:[%s1 + $0x48] sm:$0xff]
    %v71 = vld [vmem:[%s1 + $0x50] sm:$0xff]
    %v72 = vld [vmem:[%s1 + $0x58] sm:$0xff]
    %v73 = vld [vmem:[%s1 + $0x60] sm:$0xff]
    %v74 = vld [vmem:[%s1 + $0x68] sm:$0xff]
    %v75 = vld [vmem:[%s1 + $0x70] sm:$0xff]
    %v76 = vld [vmem:[%s1 + $0x78] sm:$0xff]
    %v77 = vld [vmem:[%s2] sm:$0xff]
    %v78 = vld [vmem:[%s2 + $0x8] sm:$0xff]
    %v79 = vld [vmem:[%s2 + $0x10] sm:$0xff]
    %v80 = vld [vmem:[%s2 + $0x18] sm:$0xff]
    %v81 = vld [vmem:[%s2 + $0x20] sm:$0xff]
    %v82 = vld [vmem:[%s2 + $0x28] sm:$0xff]
    %v83 = vld [vmem:[%s2 + $0x30] sm:$0xff]
    %v84 = vld [vmem:[%s2 + $0x38] sm:$0xff]
    %v85 = vld [vmem:[%s2 + $0x40] sm:$0xff]
    %v86 = vld [vmem:[%s2 + $0x48] sm:$0xff]
    %v87 = vld [vmem:[%s2 + $0x50] sm:$0xff]
    %v88 = vld [vmem:[%s2 + $0x58] sm:$0xff]
    %v89 = vld [vmem:[%s2 + $0x60] sm:$0xff]
    %v90 = vld [vmem:[%s2 + $0x68] sm:$0xff]
    %v91 = vld [vmem:[%s2 + $0x70] sm:$0xff]
    %v92 = vld [vmem:[%s2 + $0x78] sm:$0xff]
    %v93 = vld [vmem:[%s3] sm:$0xff]
    %v94 = vld [vmem:[%s3 + $0x8] sm:$0xff]
    %v95 = vld [vmem:[%s3 + $0x10] sm:$0xff]
    %v96 = vld [vmem:[%s3 + $0x18] sm:$0xff]
    %v97 = vld [vmem:[%s3 + $0x20] sm:$0xff]
    %v98 = vld [vmem:[%s3 + $0x28] sm:$0xff]
    %v99 = vld [vmem:[%s3 + $0x30] sm:$0xff]
    %v100 = vld [vmem:[%s3 + $0x38] sm:$0xff]
    %v101 = vld [vmem:[%s3 + $0x40] sm:$0xff]
    %v102 = vld [vmem:[%s3 + $0x48] sm:$0xff]
    %v103 = vld [vmem:[%s3 + $0x50] sm:$0xff]
    %v104 = vld [vmem:[%s3 + $0x58] sm:$0xff]
    %v105 = vld [vmem:[%s3 + $0x60] sm:$0xff]
    %v106 = vld [vmem:[%s3 + $0x68] sm:$0xff]
    %v107 = vld [vmem:[%s3 + $0x70] sm:$0xff]
    %v108 = vld [vmem:[%s3 + $0x78] sm:$0xff]
    %v109 = vld [vmem:[%s7] sm:$0xff]
    %v110 = vld [vmem:[%s7 + $0x8] sm:$0xff]
    %v111 = vld [vmem:[%s7 + $0x10] sm:$0xff]
    %v112 = vld [vmem:[%s7 + $0x18] sm:$0xff]
    %v113 = vld [vmem:[%s7 + $0x20] sm:$0xff]
    %v114 = vld [vmem:[%s7 + $0x28] sm:$0xff]
    %v115 = vld [vmem:[%s7 + $0x30] sm:$0xff]
    %v116 = vld [vmem:[%s7 + $0x38] sm:$0xff]
    %v117 = vld [vmem:[%s4] sm:$0x1]
    %v118 = vld [vmem:[%s4 + $0x1] sm:$0x1]
    %v119 = vld [vmem:[%s4 + $0x2] sm:$0x1]
    %v120 = vld [vmem:[%s4 + $0x3] sm:$0x1]
    %v121 = vld [vmem:[%s5] sm:$0x1]
    %v122 = vld [vmem:[%s5 + $0x1] sm:$0x1]
    %v123 = vld [vmem:[%s5 + $0x2] sm:$0x1]
    %v124 = vld [vmem:[%s5 + $0x3] sm:$0x1]
    %v125 = vld [vmem:[%s6] sm:$0x1]
    %v126 = vld [vmem:[%s6 + $0x1] sm:$0x1]
    %v127 = vld [vmem:[%s6 + $0x2] sm:$0x1]
    %v128 = vld [vmem:[%s6 + $0x3] sm:$0x1]
    %v130 = vlaneseq
    %v131 = vshrl.u32 %v130, 7
    %v132 = vsub.s32 0, %v131
    %v133 = vrot.slane %v117, %v132
    %vm135 = vcmask 261120
    %v137 = vsel %vm135, %v57, 0
    %v140 = vsel %vm135, %v58, 0
    %v143 = vsel %vm135, %v59, 0
    %v146 = vsel %vm135, %v60, 0
    %148 = vmatprep.subr.mxu0 0.0
    %149 = vmatpush1.msra.mxu0 %v61
    %150 = vmatprep.subr.mxu0 0.0
    %151 = vmatpush1.msra.mxu0 %v62
    %152 = vmatprep.subr.mxu0 0.0
    %153 = vmatpush1.msra.mxu0 %v63
    %154 = vmatprep.subr.mxu0 0.0
    %155 = vmatpush1.msra.mxu0 %v64
    %156 = vmatprep.subr.mxu0 0.0
    %157 = vmatpush1.msra.mxu0 0.0
    %158 = vmatprep.subr.mxu0 0.0
    %159 = vmatpush1.msra.mxu0 0.0
    %160 = vmatprep.subr.mxu0 0.0
    %161 = vmatpush1.msra.mxu0 0.0
    %162 = vmatprep.subr.mxu0 0.0
    %163 = vmatpush1.msra.mxu0 0.0
    %164 = vmatprep.subr.mxu0 0.0
    %165 = vmatpush1.msra.mxu0 0.0
    %166 = vmatprep.subr.mxu0 0.0
    %167 = vmatpush1.msra.mxu0 0.0
    %168 = vmatprep.subr.mxu0 0.0
    %169 = vmatpush1.msra.mxu0 0.0
    %170 = vmatprep.subr.mxu0 0.0
    %171 = vmatpush1.msra.mxu0 0.0
    %172 = vmatprep.subr.mxu0 0.0
    %173 = vmatpush1.msra.mxu0 0.0
    %174 = vmatprep.subr.mxu0 0.0
    %175 = vmatpush1.msra.mxu0 0.0
    %176 = vmatprep.subr.mxu0 0.0
    %177 = vmatpush1.msra.mxu0 0.0
    %178 = vmatprep.subr.mxu0 0.0
    %179 = vmatpush1.msra.mxu0 0.0
    %180 = vmatprep.subr.mxu0 0.0
    %181 = vmatpush1.msra.mxu0 0.0
    %182 = vmatprep.subr.mxu0 0.0
    %183 = vmatpush1.msra.mxu0 0.0
    %184 = vmatprep.subr.mxu0 0.0
    %185 = vmatpush1.msra.mxu0 0.0
    %186 = vmatprep.subr.mxu0 0.0
    %187 = vmatpush1.msra.mxu0 0.0
    %188 = vmatprep.subr.mxu0 0.0
    %189 = vmatpush1.msra.mxu0 0.0
    %190 = vmatprep.subr.mxu0 0.0
    %191 = vmatpush1.msra.mxu0 0.0
    %192 = vmatprep.subr.mxu0 0.0
    %193 = vmatpush1.msra.mxu0 0.0
    %194 = vmatprep.subr.mxu0 0.0
    %195 = vmatpush1.msra.mxu0 0.0
    %196 = vmatprep.subr.mxu0 0.0
    %197 = vmatpush1.msra.mxu0 0.0
    %198 = vmatprep.subr.mxu0 0.0
    %199 = vmatpush1.msra.mxu0 0.0
    %200 = vmatprep.subr.mxu0 0.0
    %201 = vmatpush1.msra.mxu0 0.0
    %202 = vmatprep.subr.mxu0 0.0
    %203 = vmatpush1.msra.mxu0 0.0
    %204 = vmatprep.subr.mxu0 0.0
    %205 = vmatpush1.msra.mxu0 0.0
    %206 = vmatprep.subr.mxu0 0.0
    %207 = vmatpush1.msra.mxu0 0.0
    %208 = vmatprep.subr.mxu0 0.0
    %209 = vmatpush1.msra.mxu0 0.0
    %210 = vmatprep.subr.mxu0 0.0
    %211 = vmatpush1.msra.mxu0 0.0
    %212 = vmatprep.mubr.f32.mxu0 0.0
    %213 = vmatmul.mubr.f32.gmra.mrb[0].mxu0 %v137
    %v214 = vpop.f32.mrb[0].mxu0
    %v215 = vadd.f32 %v133, %v214
    %v216 = vpop.f32.mrb[0].mxu0
    %217 = vmatprep.mubr.f32.mxu0 0.0
    %218 = vmatmul.mubr.f32.gmra.mrb[0].mxu0 %v140
    %v219 = vpop.f32.mrb[0].mxu0
    %v220 = vadd.f32 %v133, %v219
    %v221 = vpop.f32.mrb[0].mxu0
    %222 = vmatprep.mubr.f32.mxu0 0.0
    %223 = vmatmul.mubr.f32.gmra.mrb[0].mxu0 %v143
    %v224 = vpop.f32.mrb[0].mxu0
    %v225 = vadd.f32 %v133, %v224
    %v226 = vpop.f32.mrb[0].mxu0
    %227 = vmatprep.mubr.f32.mxu0 0.0
    %228 = vmatmul.mubr.f32.gmra.mrb[0].mxu0 %v146
    %v229 = vpop.f32.mrb[0].mxu0
    %v230 = vadd.f32 %v133, %v229
    %v231 = vpop.f32.mrb[0].mxu0
    %232 = vdwg.mxu0
    %v234 = vlaneseq
    %v235 = vshrl.u32 %v234, 7
    %v236 = vsub.s32 0, %v235
    %v237 = vrot.slane %v121, %v236
    %239 = vmatprep.subr.mxu0 0.0
    %240 = vmatpush1.msra.mxu0 %v77
    %241 = vmatprep.subr.mxu0 0.0
    %242 = vmatpush1.msra.mxu0 %v78
    %243 = vmatprep.subr.mxu0 0.0
    %244 = vmatpush1.msra.mxu0 %v79
    %245 = vmatprep.subr.mxu0 0.0
    %246 = vmatpush1.msra.mxu0 %v80
    %247 = vmatprep.subr.mxu0 0.0
    %248 = vmatpush1.msra.mxu0 0.0
    %249 = vmatprep.subr.mxu0 0.0
    %250 = vmatpush1.msra.mxu0 0.0
    %251 = vmatprep.subr.mxu0 0.0
    %252 = vmatpush1.msra.mxu0 0.0
    %253 = vmatprep.subr.mxu0 0.0
    %254 = vmatpush1.msra.mxu0 0.0
    %255 = vmatprep.subr.mxu0 0.0
    %256 = vmatpush1.msra.mxu0 0.0
    %257 = vmatprep.subr.mxu0 0.0
    %258 = vmatpush1.msra.mxu0 0.0
    %259 = vmatprep.subr.mxu0 0.0
    %260 = vmatpush1.msra.mxu0 0.0
    %261 = vmatprep.subr.mxu0 0.0
    %262 = vmatpush1.msra.mxu0 0.0
    %263 = vmatprep.subr.mxu0 0.0
    %264 = vmatpush1.msra.mxu0 0.0
    %265 = vmatprep.subr.mxu0 0.0
    %266 = vmatpush1.msra.mxu0 0.0
    %267 = vmatprep.subr.mxu0 0.0
    %268 = vmatpush1.msra.mxu0 0.0
    %269 = vmatprep.subr.mxu0 0.0
    %270 = vmatpush1.msra.mxu0 0.0
    %271 = vmatprep.subr.mxu0 0.0
    %272 = vmatpush1.msra.mxu0 0.0
    %273 = vmatprep.subr.mxu0 0.0
    %274 = vmatpush1.msra.mxu0 0.0
    %275 = vmatprep.subr.mxu0 0.0
    %276 = vmatpush1.msra.mxu0 0.0
    %277 = vmatprep.subr.mxu0 0.0
    %278 = vmatpush1.msra.mxu0 0.0
    %279 = vmatprep.subr.mxu0 0.0
    %280 = vmatpush1.msra.mxu0 0.0
    %281 = vmatprep.subr.mxu0 0.0
    %282 = vmatpush1.msra.mxu0 0.0
    %283 = vmatprep.subr.mxu0 0.0
    %284 = vmatpush1.msra.mxu0 0.0
    %285 = vmatprep.subr.mxu0 0.0
    %286 = vmatpush1.msra.mxu0 0.0
    %287 = vmatprep.subr.mxu0 0.0
    %288 = vmatpush1.msra.mxu0 0.0
    %289 = vmatprep.subr.mxu0 0.0
    %290 = vmatpush1.msra.mxu0 0.0
    %291 = vmatprep.subr.mxu0 0.0
    %292 = vmatpush1.msra.mxu0 0.0
    %293 = vmatprep.subr.mxu0 0.0
    %294 = vmatpush1.msra.mxu0 0.0
    %295 = vmatprep.subr.mxu0 0.0
    %296 = vmatpush1.msra.mxu0 0.0
    %297 = vmatprep.subr.mxu0 0.0
    %298 = vmatpush1.msra.mxu0 0.0
    %299 = vmatprep.subr.mxu0 0.0
    %300 = vmatpush1.msra.mxu0 0.0
    %301 = vmatprep.subr.mxu0 0.0
    %302 = vmatpush1.msra.mxu0 0.0
    %303 = vmatprep.mubr.f32.mxu0 0.0
    %304 = vmatmul.mubr.f32.gmra.mrb[0].mxu0 %v137
    %v305 = vpop.f32.mrb[0].mxu0
    %v306 = vadd.f32 %v237, %v305
    %v307 = vpop.f32.mrb[0].mxu0
    %308 = vmatprep.mubr.f32.mxu0 0.0
    %309 = vmatmul.mubr.f32.gmra.mrb[0].mxu0 %v140
    %v310 = vpop.f32.mrb[0].mxu0
    %v311 = vadd.f32 %v237, %v310
    %v312 = vpop.f32.mrb[0].mxu0
    %313 = vmatprep.mubr.f32.mxu0 0.0
    %314 = vmatmul.mubr.f32.gmra.mrb[0].mxu0 %v143
    %v315 = vpop.f32.mrb[0].mxu0
    %v316 = vadd.f32 %v237, %v315
    %v317 = vpop.f32.mrb[0].mxu0
    %318 = vmatprep.mubr.f32.mxu0 0.0
    %319 = vmatmul.mubr.f32.gmra.mrb[0].mxu0 %v146
    %v320 = vpop.f32.mrb[0].mxu0
    %v321 = vadd.f32 %v237, %v320
    %v322 = vpop.f32.mrb[0].mxu0
    %323 = vdwg.mxu0
    %v325 = vlaneseq
    %v326 = vshrl.u32 %v325, 7
    %v327 = vsub.s32 0, %v326
    %v328 = vrot.slane %v125, %v327
    %330 = vmatprep.subr.mxu0 0.0
    %331 = vmatpush1.msra.mxu0 %v93
    %332 = vmatprep.subr.mxu0 0.0
    %333 = vmatpush1.msra.mxu0 %v94
    %334 = vmatprep.subr.mxu0 0.0
    %335 = vmatpush1.msra.mxu0 %v95
    %336 = vmatprep.subr.mxu0 0.0
    %337 = vmatpush1.msra.mxu0 %v96
    %338 = vmatprep.subr.mxu0 0.0
    %339 = vmatpush1.msra.mxu0 0.0
    %340 = vmatprep.subr.mxu0 0.0
    %341 = vmatpush1.msra.mxu0 0.0
    %342 = vmatprep.subr.mxu0 0.0
    %343 = vmatpush1.msra.mxu0 0.0
    %344 = vmatprep.subr.mxu0 0.0
    %345 = vmatpush1.msra.mxu0 0.0
    %346 = vmatprep.subr.mxu0 0.0
    %347 = vmatpush1.msra.mxu0 0.0
    %348 = vmatprep.subr.mxu0 0.0
    %349 = vmatpush1.msra.mxu0 0.0
    %350 = vmatprep.subr.mxu0 0.0
    %351 = vmatpush1.msra.mxu0 0.0
    %352 = vmatprep.subr.mxu0 0.0
    %353 = vmatpush1.msra.mxu0 0.0
    %354 = vmatprep.subr.mxu0 0.0
    %355 = vmatpush1.msra.mxu0 0.0
    %356 = vmatprep.subr.mxu0 0.0
    %357 = vmatpush1.msra.mxu0 0.0
    %358 = vmatprep.subr.mxu0 0.0
    %359 = vmatpush1.msra.mxu0 0.0
    %360 = vmatprep.subr.mxu0 0.0
    %361 = vmatpush1.msra.mxu0 0.0
    %362 = vmatprep.subr.mxu0 0.0
    %363 = vmatpush1.msra.mxu0 0.0
    %364 = vmatprep.subr.mxu0 0.0
    %365 = vmatpush1.msra.mxu0 0.0
    %366 = vmatprep.subr.mxu0 0.0
    %367 = vmatpush1.msra.mxu0 0.0
    %368 = vmatprep.subr.mxu0 0.0
    %369 = vmatpush1.msra.mxu0 0.0
    %370 = vmatprep.subr.mxu0 0.0
    %371 = vmatpush1.msra.mxu0 0.0
    %372 = vmatprep.subr.mxu0 0.0
    %373 = vmatpush1.msra.mxu0 0.0
    %374 = vmatprep.subr.mxu0 0.0
    %375 = vmatpush1.msra.mxu0 0.0
    %376 = vmatprep.subr.mxu0 0.0
    %377 = vmatpush1.msra.mxu0 0.0
    %378 = vmatprep.subr.mxu0 0.0
    %379 = vmatpush1.msra.mxu0 0.0
    %380 = vmatprep.subr.mxu0 0.0
    %381 = vmatpush1.msra.mxu0 0.0
    %382 = vmatprep.subr.mxu0 0.0
    %383 = vmatpush1.msra.mxu0 0.0
    %384 = vmatprep.subr.mxu0 0.0
    %385 = vmatpush1.msra.mxu0 0.0
    %386 = vmatprep.subr.mxu0 0.0
    %387 = vmatpush1.msra.mxu0 0.0
    %388 = vmatprep.subr.mxu0 0.0
    %389 = vmatpush1.msra.mxu0 0.0
    %390 = vmatprep.subr.mxu0 0.0
    %391 = vmatpush1.msra.mxu0 0.0
    %392 = vmatprep.subr.mxu0 0.0
    %393 = vmatpush1.msra.mxu0 0.0
    %394 = vmatprep.mubr.f32.mxu0 0.0
    %395 = vmatmul.mubr.f32.gmra.mrb[0].mxu0 %v137
    %v396 = vpop.f32.mrb[0].mxu0
    %v397 = vadd.f32 %v328, %v396
    %v398 = vpop.f32.mrb[0].mxu0
    %399 = vmatprep.mubr.f32.mxu0 0.0
    %400 = vmatmul.mubr.f32.gmra.mrb[0].mxu0 %v140
    %v401 = vpop.f32.mrb[0].mxu0
    %v402 = vadd.f32 %v328, %v401
    %v403 = vpop.f32.mrb[0].mxu0
    %404 = vmatprep.mubr.f32.mxu0 0.0
    %405 = vmatmul.mubr.f32.gmra.mrb[0].mxu0 %v143
    %v406 = vpop.f32.mrb[0].mxu0
    %v407 = vadd.f32 %v328, %v406
    %v408 = vpop.f32.mrb[0].mxu0
    %409 = vmatprep.mubr.f32.mxu0 0.0
    %410 = vmatmul.mubr.f32.gmra.mrb[0].mxu0 %v146
    %v411 = vpop.f32.mrb[0].mxu0
    %v412 = vadd.f32 %v328, %v411
    %v413 = vpop.f32.mrb[0].mxu0
    %414 = vdwg.mxu0
    %vm415 = vcmask 130048
    %v417 = vsel %vm415, %v215, 0
    %v420 = vsel %vm415, %v220, 0
    %v423 = vsel %vm415, %v306, 0
    %v426 = vsel %vm415, %v311, 0
    %428 = vmatprep.subr.mxu0 0.0
    %429 = vmatpush1.xpose.msra.mxu0 %v423
    %430 = vmatprep.subr.mxu0 0.0
    %431 = vmatpush1.xpose.msra.mxu0 %v426
    %432 = vmatprep.subr.mxu0 0.0
    %433 = vmatpush1.xpose.msra.mxu0 0.0
    %434 = vmatprep.subr.mxu0 0.0
    %435 = vmatpush1.xpose.msra.mxu0 0.0
    %436 = vmatprep.subr.mxu0 0.0
    %437 = vmatpush1.xpose.msra.mxu0 0.0
    %438 = vmatprep.subr.mxu0 0.0
    %439 = vmatpush1.xpose.msra.mxu0 0.0
    %440 = vmatprep.subr.mxu0 0.0
    %441 = vmatpush1.xpose.msra.mxu0 0.0
    %442 = vmatprep.subr.mxu0 0.0
    %443 = vmatpush1.xpose.msra.mxu0 0.0
    %444 = vmatprep.subr.mxu0 0.0
    %445 = vmatpush1.xpose.msra.mxu0 0.0
    %446 = vmatprep.subr.mxu0 0.0
    %447 = vmatpush1.xpose.msra.mxu0 0.0
    %448 = vmatprep.subr.mxu0 0.0
    %449 = vmatpush1.xpose.msra.mxu0 0.0
    %450 = vmatprep.subr.mxu0 0.0
    %451 = vmatpush1.xpose.msra.mxu0 0.0
    %452 = vmatprep.subr.mxu0 0.0
    %453 = vmatpush1.xpose.msra.mxu0 0.0
    %454 = vmatprep.subr.mxu0 0.0
    %455 = vmatpush1.xpose.msra.mxu0 0.0
    %456 = vmatprep.subr.mxu0 0.0
    %457 = vmatpush1.xpose.msra.mxu0 0.0
    %458 = vmatprep.subr.mxu0 0.0
    %459 = vmatpush1.xpose.msra.mxu0 0.0
    %460 = vmatprep.subr.mxu0 0.0
    %461 = vmatpush1.xpose.msra.mxu0 0.0
    %462 = vmatprep.subr.mxu0 0.0
    %463 = vmatpush1.xpose.msra.mxu0 0.0
    %464 = vmatprep.subr.mxu0 0.0
    %465 = vmatpush1.xpose.msra.mxu0 0.0
    %466 = vmatprep.subr.mxu0 0.0
    %467 = vmatpush1.xpose.msra.mxu0 0.0
    %468 = vmatprep.subr.mxu0 0.0
    %469 = vmatpush1.xpose.msra.mxu0 0.0
    %470 = vmatprep.subr.mxu0 0.0
    %471 = vmatpush1.xpose.msra.mxu0 0.0
    %472 = vmatprep.subr.mxu0 0.0
    %473 = vmatpush1.xpose.msra.mxu0 0.0
    %474 = vmatprep.subr.mxu0 0.0
    %475 = vmatpush1.xpose.msra.mxu0 0.0
    %476 = vmatprep.subr.mxu0 0.0
    %477 = vmatpush1.xpose.msra.mxu0 0.0
    %478 = vmatprep.subr.mxu0 0.0
    %479 = vmatpush1.xpose.msra.mxu0 0.0
    %480 = vmatprep.subr.mxu0 0.0
    %481 = vmatpush1.xpose.msra.mxu0 0.0
    %482 = vmatprep.subr.mxu0 0.0
    %483 = vmatpush1.xpose.msra.mxu0 0.0
    %484 = vmatprep.subr.mxu0 0.0
    %485 = vmatpush1.xpose.msra.mxu0 0.0
    %486 = vmatprep.subr.mxu0 0.0
    %487 = vmatpush1.xpose.msra.mxu0 0.0
    %488 = vmatprep.subr.mxu0 0.0
    %489 = vmatpush1.xpose.msra.mxu0 0.0
    %490 = vmatprep.subr.mxu0 0.0
    %491 = vmatpush1.xpose.msra.mxu0 0.0
    %492 = vmatprep.mubr.f32.mxu0 0.0
    %493 = vmatmul.mubr.f32.gmra.mrb[0].mxu0 %v417
    %v494 = vpop.f32.mrb[0].mxu0
    %v495 = vadd.f32 0.0, %v494
    %v496 = vpop.f32.mrb[0].mxu0
    %497 = vmatprep.mubr.f32.mxu0 0.0
    %498 = vmatmul.mubr.f32.gmra.mrb[0].mxu0 %v420
    %v499 = vpop.f32.mrb[0].mxu0
    %v500 = vadd.f32 0.0, %v499
    %v501 = vpop.f32.mrb[0].mxu0
    %502 = vdwg.mxu0
    %v504 = vsel %vm415, %v225, 0
    %v507 = vsel %vm415, %v230, 0
    %v510 = vsel %vm415, %v316, 0
    %v513 = vsel %vm415, %v321, 0
    %515 = vmatprep.subr.mxu0 0.0
    %516 = vmatpush1.xpose.msra.mxu0 %v510
    %517 = vmatprep.subr.mxu0 0.0
    %518 = vmatpush1.xpose.msra.mxu0 %v513
    %519 = vmatprep.subr.mxu0 0.0
    %520 = vmatpush1.xpose.msra.mxu0 0.0
    %521 = vmatprep.subr.mxu0 0.0
    %522 = vmatpush1.xpose.msra.mxu0 0.0
    %523 = vmatprep.subr.mxu0 0.0
    %524 = vmatpush1.xpose.msra.mxu0 0.0
    %525 = vmatprep.subr.mxu0 0.0
    %526 = vmatpush1.xpose.msra.mxu0 0.0
    %527 = vmatprep.subr.mxu0 0.0
    %528 = vmatpush1.xpose.msra.mxu0 0.0
    %529 = vmatprep.subr.mxu0 0.0
    %530 = vmatpush1.xpose.msra.mxu0 0.0
    %531 = vmatprep.subr.mxu0 0.0
    %532 = vmatpush1.xpose.msra.mxu0 0.0
    %533 = vmatprep.subr.mxu0 0.0
    %534 = vmatpush1.xpose.msra.mxu0 0.0
    %535 = vmatprep.subr.mxu0 0.0
    %536 = vmatpush1.xpose.msra.mxu0 0.0
    %537 = vmatprep.subr.mxu0 0.0
    %538 = vmatpush1.xpose.msra.mxu0 0.0
    %539 = vmatprep.subr.mxu0 0.0
    %540 = vmatpush1.xpose.msra.mxu0 0.0
    %541 = vmatprep.subr.mxu0 0.0
    %542 = vmatpush1.xpose.msra.mxu0 0.0
    %543 = vmatprep.subr.mxu0 0.0
    %544 = vmatpush1.xpose.msra.mxu0 0.0
    %545 = vmatprep.subr.mxu0 0.0
    %546 = vmatpush1.xpose.msra.mxu0 0.0
    %547 = vmatprep.subr.mxu0 0.0
    %548 = vmatpush1.xpose.msra.mxu0 0.0
    %549 = vmatprep.subr.mxu0 0.0
    %550 = vmatpush1.xpose.msra.mxu0 0.0
    %551 = vmatprep.subr.mxu0 0.0
    %552 = vmatpush1.xpose.msra.mxu0 0.0
    %553 = vmatprep.subr.mxu0 0.0
    %554 = vmatpush1.xpose.msra.mxu0 0.0
    %555 = vmatprep.subr.mxu0 0.0
    %556 = vmatpush1.xpose.msra.mxu0 0.0
    %557 = vmatprep.subr.mxu0 0.0
    %558 = vmatpush1.xpose.msra.mxu0 0.0
    %559 = vmatprep.subr.mxu0 0.0
    %560 = vmatpush1.xpose.msra.mxu0 0.0
    %561 = vmatprep.subr.mxu0 0.0
    %562 = vmatpush1.xpose.msra.mxu0 0.0
    %563 = vmatprep.subr.mxu0 0.0
    %564 = vmatpush1.xpose.msra.mxu0 0.0
    %565 = vmatprep.subr.mxu0 0.0
    %566 = vmatpush1.xpose.msra.mxu0 0.0
    %567 = vmatprep.subr.mxu0 0.0
    %568 = vmatpush1.xpose.msra.mxu0 0.0
    %569 = vmatprep.subr.mxu0 0.0
    %570 = vmatpush1.xpose.msra.mxu0 0.0
    %571 = vmatprep.subr.mxu0 0.0
    %572 = vmatpush1.xpose.msra.mxu0 0.0
    %573 = vmatprep.subr.mxu0 0.0
    %574 = vmatpush1.xpose.msra.mxu0 0.0
    %575 = vmatprep.subr.mxu0 0.0
    %576 = vmatpush1.xpose.msra.mxu0 0.0
    %577 = vmatprep.subr.mxu0 0.0
    %578 = vmatpush1.xpose.msra.mxu0 0.0
    %579 = vmatprep.mubr.f32.mxu0 0.0
    %580 = vmatmul.mubr.f32.gmra.mrb[0].mxu0 %v504
    %v581 = vpop.f32.mrb[0].mxu0
    %v582 = vadd.f32 0.0, %v581
    %v583 = vpop.f32.mrb[0].mxu0
    %584 = vmatprep.mubr.f32.mxu0 0.0
    %585 = vmatmul.mubr.f32.gmra.mrb[0].mxu0 %v507
    %v586 = vpop.f32.mrb[0].mxu0
    %v587 = vadd.f32 0.0, %v586
    %v588 = vpop.f32.mrb[0].mxu0
    %589 = vdwg.mxu0
    %v590 = vmul.f32 %v495, 0.25
    %v591 = vmul.f32 %v500, 0.25
    %v592 = vmul.f32 %v582, 0.25
    %v593 = vmul.f32 %v587, 0.25
    %v594 = vsel %vm415, %v590, -inf
    %595 = vmax.xlane.f32.xlu0 %v594
    %v596 = vpop.xlane.xlu0 %595
    %v597 = vsel %vm415, %v591, -inf
    %598 = vmax.xlane.f32.xlu0 %v597
    %v599 = vpop.xlane.xlu0 %598
    %v600 = vsel %vm415, %v592, -inf
    %601 = vmax.xlane.f32.xlu0 %v600
    %v602 = vpop.xlane.xlu0 %601
    %v603 = vsel %vm415, %v593, -inf
    %604 = vmax.xlane.f32.xlu0 %v603
    %v605 = vpop.xlane.xlu0 %604
    %v606 = vsub.f32 %v590, %v596
    %v607 = vsub.f32 %v591, %v599
    %v608 = vsub.f32 %v592, %v602
    %v609 = vsub.f32 %v593, %v605
    %v610 = vmul.f32 %v606, 1.442695
    %v611 = vpow.pop %v610
    %v612 = vmul.f32 %v607, 1.442695
    %v613 = vpow.pop %v612
    %v614 = vmul.f32 %v608, 1.442695
    %v615 = vpow.pop %v614
    %v616 = vmul.f32 %v609, 1.442695
    %v617 = vpow.pop %v616
    %v618 = vsel %vm415, %v611, 0.0
    %619 = vadd.xlane.f32.xlu0 %v618
    %v620 = vpop.xlane.xlu0 %619
    %v621 = vsel %vm415, %v613, 0.0
    %622 = vadd.xlane.f32.xlu0 %v621
    %v623 = vpop.xlane.xlu0 %622
    %v624 = vsel %vm415, %v615, 0.0
    %625 = vadd.xlane.f32.xlu0 %v624
    %v626 = vpop.xlane.xlu0 %625
    %v627 = vsel %vm415, %v617, 0.0
    %628 = vadd.xlane.f32.xlu0 %v627
    %v629 = vpop.xlane.xlu0 %628
    %v630 = vrcp.pop %v620
    %v631 = vmul.f32 %v611, %v630
    %v632 = vrcp.pop %v623
    %v633 = vmul.f32 %v613, %v632
    %v634 = vrcp.pop %v626
    %v635 = vmul.f32 %v615, %v634
    %v636 = vrcp.pop %v629
    %v637 = vmul.f32 %v617, %v636
    %v639 = vsel %vm415, %v631, 0
    %v642 = vsel %vm415, %v633, 0
    %644 = vmatprep.subr.mxu0 0.0
    %645 = vmatpush1.msra.mxu0 %v397
    %646 = vmatprep.subr.mxu0 0.0
    %647 = vmatpush1.msra.mxu0 %v402
    %648 = vmatprep.subr.mxu0 0.0
    %649 = vmatpush1.msra.mxu0 0.0
    %650 = vmatprep.subr.mxu0 0.0
    %651 = vmatpush1.msra.mxu0 0.0
    %652 = vmatprep.subr.mxu0 0.0
    %653 = vmatpush1.msra.mxu0 0.0
    %654 = vmatprep.subr.mxu0 0.0
    %655 = vmatpush1.msra.mxu0 0.0
    %656 = vmatprep.subr.mxu0 0.0
    %657 = vmatpush1.msra.mxu0 0.0
    %658 = vmatprep.subr.mxu0 0.0
    %659 = vmatpush1.msra.mxu0 0.0
    %660 = vmatprep.subr.mxu0 0.0
    %661 = vmatpush1.msra.mxu0 0.0
    %662 = vmatprep.subr.mxu0 0.0
    %663 = vmatpush1.msra.mxu0 0.0
    %664 = vmatprep.subr.mxu0 0.0
    %665 = vmatpush1.msra.mxu0 0.0
    %666 = vmatprep.subr.mxu0 0.0
    %667 = vmatpush1.msra.mxu0 0.0
    %668 = vmatprep.subr.mxu0 0.0
    %669 = vmatpush1.msra.mxu0 0.0
    %670 = vmatprep.subr.mxu0 0.0
    %671 = vmatpush1.msra.mxu0 0.0
    %672 = vmatprep.subr.mxu0 0.0
    %673 = vmatpush1.msra.mxu0 0.0
    %674 = vmatprep.subr.mxu0 0.0
    %675 = vmatpush1.msra.mxu0 0.0
    %676 = vmatprep.subr.mxu0 0.0
    %677 = vmatpush1.msra.mxu0 0.0
    %678 = vmatprep.subr.mxu0 0.0
    %679 = vmatpush1.msra.mxu0 0.0
    %680 = vmatprep.subr.mxu0 0.0
    %681 = vmatpush1.msra.mxu0 0.0
    %682 = vmatprep.subr.mxu0 0.0
    %683 = vmatpush1.msra.mxu0 0.0
    %684 = vmatprep.subr.mxu0 0.0
    %685 = vmatpush1.msra.mxu0 0.0
    %686 = vmatprep.subr.mxu0 0.0
    %687 = vmatpush1.msra.mxu0 0.0
    %688 = vmatprep.subr.mxu0 0.0
    %689 = vmatpush1.msra.mxu0 0.0
    %690 = vmatprep.subr.mxu0 0.0
    %691 = vmatpush1.msra.mxu0 0.0
    %692 = vmatprep.subr.mxu0 0.0
    %693 = vmatpush1.msra.mxu0 0.0
    %694 = vmatprep.subr.mxu0 0.0
    %695 = vmatpush1.msra.mxu0 0.0
    %696 = vmatprep.subr.mxu0 0.0
    %697 = vmatpush1.msra.mxu0 0.0
    %698 = vmatprep.subr.mxu0 0.0
    %699 = vmatpush1.msra.mxu0 0.0
    %700 = vmatprep.subr.mxu0 0.0
    %701 = vmatpush1.msra.mxu0 0.0
    %702 = vmatprep.subr.mxu0 0.0
    %703 = vmatpush1.msra.mxu0 0.0
    %704 = vmatprep.subr.mxu0 0.0
    %705 = vmatpush1.msra.mxu0 0.0
    %706 = vmatprep.subr.mxu0 0.0
    %707 = vmatpush1.msra.mxu0 0.0
    %708 = vmatprep.mubr.f32.mxu0 0.0
    %709 = vmatmul.mubr.f32.gmra.mrb[0].mxu0 %v639
    %v710 = vpop.f32.mrb[0].mxu0
    %v711 = vadd.f32 0.0, %v710
    %v712 = vpop.f32.mrb[0].mxu0
    %713 = vmatprep.mubr.f32.mxu0 0.0
    %714 = vmatmul.mubr.f32.gmra.mrb[0].mxu0 %v642
    %v715 = vpop.f32.mrb[0].mxu0
    %v716 = vadd.f32 0.0, %v715
    %v717 = vpop.f32.mrb[0].mxu0
    %718 = vdwg.mxu0
    %v720 = vsel %vm415, %v635, 0
    %v723 = vsel %vm415, %v637, 0
    %725 = vmatprep.subr.mxu0 0.0
    %726 = vmatpush1.msra.mxu0 %v407
    %727 = vmatprep.subr.mxu0 0.0
    %728 = vmatpush1.msra.mxu0 %v412
    %729 = vmatprep.subr.mxu0 0.0
    %730 = vmatpush1.msra.mxu0 0.0
    %731 = vmatprep.subr.mxu0 0.0
    %732 = vmatpush1.msra.mxu0 0.0
    %733 = vmatprep.subr.mxu0 0.0
    %734 = vmatpush1.msra.mxu0 0.0
    %735 = vmatprep.subr.mxu0 0.0
    %736 = vmatpush1.msra.mxu0 0.0
    %737 = vmatprep.subr.mxu0 0.0
    %738 = vmatpush1.msra.mxu0 0.0
    %739 = vmatprep.subr.mxu0 0.0
    %740 = vmatpush1.msra.mxu0 0.0
    %741 = vmatprep.subr.mxu0 0.0
    %742 = vmatpush1.msra.mxu0 0.0
    %743 = vmatprep.subr.mxu0 0.0
    %744 = vmatpush1.msra.mxu0 0.0
    %745 = vmatprep.subr.mxu0 0.0
    %746 = vmatpush1.msra.mxu0 0.0
    %747 = vmatprep.subr.mxu0 0.0
    %748 = vmatpush1.msra.mxu0 0.0
    %749 = vmatprep.subr.mxu0 0.0
    %750 = vmatpush1.msra.mxu0 0.0
    %751 = vmatprep.subr.mxu0 0.0
    %752 = vmatpush1.msra.mxu0 0.0
    %753 = vmatprep.subr.mxu0 0.0
    %754 = vmatpush1.msra.mxu0 0.0
    %755 = vmatprep.subr.mxu0 0.0
    %756 = vmatpush1.msra.mxu0 0.0
    %757 = vmatprep.subr.mxu0 0.0
    %758 = vmatpush1.msra.mxu0 0.0
    %759 = vmatprep.subr.mxu0 0.0
    %760 = vmatpush1.msra.mxu0 0.0
    %761 = vmatprep.subr.mxu0 0.0
    %762 = vmatpush1.msra.mxu0 0.0
    %763 = vmatprep.subr.mxu0 0.0
    %764 = vmatpush1.msra.mxu0 0.0
    %765 = vmatprep.subr.mxu0 0.0
    %766 = vmatpush1.msra.mxu0 0.0
    %767 = vmatprep.subr.mxu0 0.0
    %768 = vmatpush1.msra.mxu0 0.0
    %769 = vmatprep.subr.mxu0 0.0
    %770 = vmatpush1.msra.mxu0 0.0
    %771 = vmatprep.subr.mxu0 0.0
    %772 = vmatpush1.msra.mxu0 0.0
    %773 = vmatprep.subr.mxu0 0.0
    %774 = vmatpush1.msra.mxu0 0.0
    %775 = vmatprep.subr.mxu0 0.0
    %776 = vmatpush1.msra.mxu0 0.0
    %777 = vmatprep.subr.mxu0 0.0
    %778 = vmatpush1.msra.mxu0 0.0
    %779 = vmatprep.subr.mxu0 0.0
    %780 = vmatpush1.msra.mxu0 0.0
    %781 = vmatprep.subr.mxu0 0.0
    %782 = vmatpush1.msra.mxu0 0.0
    %783 = vmatprep.subr.mxu0 0.0
    %784 = vmatpush1.msra.mxu0 0.0
    %785 = vmatprep.subr.mxu0 0.0
    %786 = vmatpush1.msra.mxu0 0.0
    %787 = vmatprep.subr.mxu0 0.0
    %788 = vmatpush1.msra.mxu0 0.0
    %789 = vmatprep.mubr.f32.mxu0 0.0
    %790 = vmatmul.mubr.f32.gmra.mrb[0].mxu0 %v720
    %v791 = vpop.f32.mrb[0].mxu0
    %v792 = vadd.f32 0.0, %v791
    %v793 = vpop.f32.mrb[0].mxu0
    %794 = vmatprep.mubr.f32.mxu0 0.0
    %795 = vmatmul.mubr.f32.gmra.mrb[0].mxu0 %v723
    %v796 = vpop.f32.mrb[0].mxu0
    %v797 = vadd.f32 0.0, %v796
    %v798 = vpop.f32.mrb[0].mxu0
    %799 = vdwg.mxu0
    %v801 = vlaneseq
    %v802 = vshrl.u32 %v801, 7
    %v803 = vsub.s32 0, %v802
    %v804 = vrot.slane %v118, %v803
    %806 = vmatprep.subr.mxu0 0.0
    %807 = vmatpush1.msra.mxu0 %v65
    %808 = vmatprep.subr.mxu0 0.0
    %809 = vmatpush1.msra.mxu0 %v66
    %810 = vmatprep.subr.mxu0 0.0
    %811 = vmatpush1.msra.mxu0 %v67
    %812 = vmatprep.subr.mxu0 0.0
    %813 = vmatpush1.msra.mxu0 %v68
    %814 = vmatprep.subr.mxu0 0.0
    %815 = vmatpush1.msra.mxu0 0.0
    %816 = vmatprep.subr.mxu0 0.0
    %817 = vmatpush1.msra.mxu0 0.0
    %818 = vmatprep.subr.mxu0 0.0
    %819 = vmatpush1.msra.mxu0 0.0
    %820 = vmatprep.subr.mxu0 0.0
    %821 = vmatpush1.msra.mxu0 0.0
    %822 = vmatprep.subr.mxu0 0.0
    %823 = vmatpush1.msra.mxu0 0.0
    %824 = vmatprep.subr.mxu0 0.0
    %825 = vmatpush1.msra.mxu0 0.0
    %826 = vmatprep.subr.mxu0 0.0
    %827 = vmatpush1.msra.mxu0 0.0
    %828 = vmatprep.subr.mxu0 0.0
    %829 = vmatpush1.msra.mxu0 0.0
    %830 = vmatprep.subr.mxu0 0.0
    %831 = vmatpush1.msra.mxu0 0.0
    %832 = vmatprep.subr.mxu0 0.0
    %833 = vmatpush1.msra.mxu0 0.0
    %834 = vmatprep.subr.mxu0 0.0
    %835 = vmatpush1.msra.mxu0 0.0
    %836 = vmatprep.subr.mxu0 0.0
    %837 = vmatpush1.msra.mxu0 0.0
    %838 = vmatprep.subr.mxu0 0.0
    %839 = vmatpush1.msra.mxu0 0.0
    %840 = vmatprep.subr.mxu0 0.0
    %841 = vmatpush1.msra.mxu0 0.0
    %842 = vmatprep.subr.mxu0 0.0
    %843 = vmatpush1.msra.mxu0 0.0
    %844 = vmatprep.subr.mxu0 0.0
    %845 = vmatpush1.msra.mxu0 0.0
    %846 = vmatprep.subr.mxu0 0.0
    %847 = vmatpush1.msra.mxu0 0.0
    %848 = vmatprep.subr.mxu0 0.0
    %849 = vmatpush1.msra.mxu0 0.0
    %850 = vmatprep.subr.mxu0 0.0
    %851 = vmatpush1.msra.mxu0 0.0
    %852 = vmatprep.subr.mxu0 0.0
    %853 = vmatpush1.msra.mxu0 0.0
    %854 = vmatprep.subr.mxu0 0.0
    %855 = vmatpush1.msra.mxu0 0.0
    %856 = vmatprep.subr.mxu0 0.0
    %857 = vmatpush1.msra.mxu0 0.0
    %858 = vmatprep.subr.mxu0 0.0
    %859 = vmatpush1.msra.mxu0 0.0
    %860 = vmatprep.subr.mxu0 0.0
    %861 = vmatpush1.msra.mxu0 0.0
    %862 = vmatprep.subr.mxu0 0.0
    %863 = vmatpush1.msra.mxu0 0.0
    %864 = vmatprep.subr.mxu0 0.0
    %865 = vmatpush1.msra.mxu0 0.0
    %866 = vmatprep.subr.mxu0 0.0
    %867 = vmatpush1.msra.mxu0 0.0
    %868 = vmatprep.subr.mxu0 0.0
    %869 = vmatpush1.msra.mxu0 0.0
    %870 = vmatprep.mubr.f32.mxu0 0.0
    %871 = vmatmul.mubr.f32.gmra.mrb[0].mxu0 %v137
    %v872 = vpop.f32.mrb[0].mxu0
    %v873 = vadd.f32 %v804, %v872
    %v874 = vpop.f32.mrb[0].mxu0
    %875 = vmatprep.mubr.f32.mxu0 0.0
    %876 = vmatmul.mubr.f32.gmra.mrb[0].mxu0 %v140
    %v877 = vpop.f32.mrb[0].mxu0
    %v878 = vadd.f32 %v804, %v877
    %v879 = vpop.f32.mrb[0].mxu0
    %880 = vmatprep.mubr.f32.mxu0 0.0
    %881 = vmatmul.mubr.f32.gmra.mrb[0].mxu0 %v143
    %v882 = vpop.f32.mrb[0].mxu0
    %v883 = vadd.f32 %v804, %v882
    %v884 = vpop.f32.mrb[0].mxu0
    %885 = vmatprep.mubr.f32.mxu0 0.0
    %886 = vmatmul.mubr.f32.gmra.mrb[0].mxu0 %v146
    %v887 = vpop.f32.mrb[0].mxu0
    %v888 = vadd.f32 %v804, %v887
    %v889 = vpop.f32.mrb[0].mxu0
    %890 = vdwg.mxu0
    %v892 = vlaneseq
    %v893 = vshrl.u32 %v892, 7
    %v894 = vsub.s32 0, %v893
    %v895 = vrot.slane %v122, %v894
    %897 = vmatprep.subr.mxu0 0.0
    %898 = vmatpush1.msra.mxu0 %v81
    %899 = vmatprep.subr.mxu0 0.0
    %900 = vmatpush1.msra.mxu0 %v82
    %901 = vmatprep.subr.mxu0 0.0
    %902 = vmatpush1.msra.mxu0 %v83
    %903 = vmatprep.subr.mxu0 0.0
    %904 = vmatpush1.msra.mxu0 %v84
    %905 = vmatprep.subr.mxu0 0.0
    %906 = vmatpush1.msra.mxu0 0.0
    %907 = vmatprep.subr.mxu0 0.0
    %908 = vmatpush1.msra.mxu0 0.0
    %909 = vmatprep.subr.mxu0 0.0
    %910 = vmatpush1.msra.mxu0 0.0
    %911 = vmatprep.subr.mxu0 0.0
    %912 = vmatpush1.msra.mxu0 0.0
    %913 = vmatprep.subr.mxu0 0.0
    %914 = vmatpush1.msra.mxu0 0.0
    %915 = vmatprep.subr.mxu0 0.0
    %916 = vmatpush1.msra.mxu0 0.0
    %917 = vmatprep.subr.mxu0 0.0
    %918 = vmatpush1.msra.mxu0 0.0
    %919 = vmatprep.subr.mxu0 0.0
    %920 = vmatpush1.msra.mxu0 0.0
    %921 = vmatprep.subr.mxu0 0.0
    %922 = vmatpush1.msra.mxu0 0.0
    %923 = vmatprep.subr.mxu0 0.0
    %924 = vmatpush1.msra.mxu0 0.0
    %925 = vmatprep.subr.mxu0 0.0
    %926 = vmatpush1.msra.mxu0 0.0
    %927 = vmatprep.subr.mxu0 0.0
    %928 = vmatpush1.msra.mxu0 0.0
    %929 = vmatprep.subr.mxu0 0.0
    %930 = vmatpush1.msra.mxu0 0.0
    %931 = vmatprep.subr.mxu0 0.0
    %932 = vmatpush1.msra.mxu0 0.0
    %933 = vmatprep.subr.mxu0 0.0
    %934 = vmatpush1.msra.mxu0 0.0
    %935 = vmatprep.subr.mxu0 0.0
    %936 = vmatpush1.msra.mxu0 0.0
    %937 = vmatprep.subr.mxu0 0.0
    %938 = vmatpush1.msra.mxu0 0.0
    %939 = vmatprep.subr.mxu0 0.0
    %940 = vmatpush1.msra.mxu0 0.0
    %941 = vmatprep.subr.mxu0 0.0
    %942 = vmatpush1.msra.mxu0 0.0
    %943 = vmatprep.subr.mxu0 0.0
    %944 = vmatpush1.msra.mxu0 0.0
    %945 = vmatprep.subr.mxu0 0.0
    %946 = vmatpush1.msra.mxu0 0.0
    %947 = vmatprep.subr.mxu0 0.0
    %948 = vmatpush1.msra.mxu0 0.0
    %949 = vmatprep.subr.mxu0 0.0
    %950 = vmatpush1.msra.mxu0 0.0
    %951 = vmatprep.subr.mxu0 0.0
    %952 = vmatpush1.msra.mxu0 0.0
    %953 = vmatprep.subr.mxu0 0.0
    %954 = vmatpush1.msra.mxu0 0.0
    %955 = vmatprep.subr.mxu0 0.0
    %956 = vmatpush1.msra.mxu0 0.0
    %957 = vmatprep.subr.mxu0 0.0
    %958 = vmatpush1.msra.mxu0 0.0
    %959 = vmatprep.subr.mxu0 0.0
    %960 = vmatpush1.msra.mxu0 0.0
    %961 = vmatprep.mubr.f32.mxu0 0.0
    %962 = vmatmul.mubr.f32.gmra.mrb[0].mxu0 %v137
    %v963 = vpop.f32.mrb[0].mxu0
    %v964 = vadd.f32 %v895, %v963
    %v965 = vpop.f32.mrb[0].mxu0
    %966 = vmatprep.mubr.f32.mxu0 0.0
    %967 = vmatmul.mubr.f32.gmra.mrb[0].mxu0 %v140
    %v968 = vpop.f32.mrb[0].mxu0
    %v969 = vadd.f32 %v895, %v968
    %v970 = vpop.f32.mrb[0].mxu0
    %971 = vmatprep.mubr.f32.mxu0 0.0
    %972 = vmatmul.mubr.f32.gmra.mrb[0].mxu0 %v143
    %v973 = vpop.f32.mrb[0].mxu0
    %v974 = vadd.f32 %v895, %v973
    %v975 = vpop.f32.mrb[0].mxu0
    %976 = vmatprep.mubr.f32.mxu0 0.0
    %977 = vmatmul.mubr.f32.gmra.mrb[0].mxu0 %v146
    %v978 = vpop.f32.mrb[0].mxu0
    %v979 = vadd.f32 %v895, %v978
    %v980 = vpop.f32.mrb[0].mxu0
    %981 = vdwg.mxu0
    %v983 = vlaneseq
    %v984 = vshrl.u32 %v983, 7
    %v985 = vsub.s32 0, %v984
    %v986 = vrot.slane %v126, %v985
    %988 = vmatprep.subr.mxu0 0.0
    %989 = vmatpush1.msra.mxu0 %v97
    %990 = vmatprep.subr.mxu0 0.0
    %991 = vmatpush1.msra.mxu0 %v98
    %992 = vmatprep.subr.mxu0 0.0
    %993 = vmatpush1.msra.mxu0 %v99
    %994 = vmatprep.subr.mxu0 0.0
    %995 = vmatpush1.msra.mxu0 %v100
    %996 = vmatprep.subr.mxu0 0.0
    %997 = vmatpush1.msra.mxu0 0.0
    %998 = vmatprep.subr.mxu0 0.0
    %999 = vmatpush1.msra.mxu0 0.0
    %1000 = vmatprep.subr.mxu0 0.0
    %1001 = vmatpush1.msra.mxu0 0.0
    %1002 = vmatprep.subr.mxu0 0.0
    %1003 = vmatpush1.msra.mxu0 0.0
    %1004 = vmatprep.subr.mxu0 0.0
    %1005 = vmatpush1.msra.mxu0 0.0
    %1006 = vmatprep.subr.mxu0 0.0
    %1007 = vmatpush1.msra.mxu0 0.0
    %1008 = vmatprep.subr.mxu0 0.0
    %1009 = vmatpush1.msra.mxu0 0.0
    %1010 = vmatprep.subr.mxu0 0.0
    %1011 = vmatpush1.msra.mxu0 0.0
    %1012 = vmatprep.subr.mxu0 0.0
    %1013 = vmatpush1.msra.mxu0 0.0
    %1014 = vmatprep.subr.mxu0 0.0
    %1015 = vmatpush1.msra.mxu0 0.0
    %1016 = vmatprep.subr.mxu0 0.0
    %1017 = vmatpush1.msra.mxu0 0.0
    %1018 = vmatprep.subr.mxu0 0.0
    %1019 = vmatpush1.msra.mxu0 0.0
    %1020 = vmatprep.subr.mxu0 0.0
    %1021 = vmatpush1.msra.mxu0 0.0
    %1022 = vmatprep.subr.mxu0 0.0
    %1023 = vmatpush1.msra.mxu0 0.0
    %1024 = vmatprep.subr.mxu0 0.0
    %1025 = vmatpush1.msra.mxu0 0.0
    %1026 = vmatprep.subr.mxu0 0.0
    %1027 = vmatpush1.msra.mxu0 0.0
    %1028 = vmatprep.subr.mxu0 0.0
    %1029 = vmatpush1.msra.mxu0 0.0
    %1030 = vmatprep.subr.mxu0 0.0
    %1031 = vmatpush1.msra.mxu0 0.0
    %1032 = vmatprep.subr.mxu0 0.0
    %1033 = vmatpush1.msra.mxu0 0.0
    %1034 = vmatprep.subr.mxu0 0.0
    %1035 = vmatpush1.msra.mxu0 0.0
    %1036 = vmatprep.subr.mxu0 0.0
    %1037 = vmatpush1.msra.mxu0 0.0
    %1038 = vmatprep.subr.mxu0 0.0
    %1039 = vmatpush1.msra.mxu0 0.0
    %1040 = vmatprep.subr.mxu0 0.0
    %1041 = vmatpush1.msra.mxu0 0.0
    %1042 = vmatprep.subr.mxu0 0.0
    %1043 = vmatpush1.msra.mxu0 0.0
    %1044 = vmatprep.subr.mxu0 0.0
    %1045 = vmatpush1.msra.mxu0 0.0
    %1046 = vmatprep.subr.mxu0 0.0
    %1047 = vmatpush1.msra.mxu0 0.0
    %1048 = vmatprep.subr.mxu0 0.0
    %1049 = vmatpush1.msra.mxu0 0.0
    %1050 = vmatprep.subr.mxu0 0.0
    %1051 = vmatpush1.msra.mxu0 0.0
    %1052 = vmatprep.mubr.f32.mxu0 0.0
    %1053 = vmatmul.mubr.f32.gmra.mrb[0].mxu0 %v137
    %v1054 = vpop.f32.mrb[0].mxu0
    %v1055 = vadd.f32 %v986, %v1054
    %v1056 = vpop.f32.mrb[0].mxu0
    %1057 = vmatprep.mubr.f32.mxu0 0.0
    %1058 = vmatmul.mubr.f32.gmra.mrb[0].mxu0 %v140
    %v1059 = vpop.f32.mrb[0].mxu0
    %v1060 = vadd.f32 %v986, %v1059
    %v1061 = vpop.f32.mrb[0].mxu0
    %1062 = vmatprep.mubr.f32.mxu0 0.0
    %1063 = vmatmul.mubr.f32.gmra.mrb[0].mxu0 %v143
    %v1064 = vpop.f32.mrb[0].mxu0
    %v1065 = vadd.f32 %v986, %v1064
    %v1066 = vpop.f32.mrb[0].mxu0
    %1067 = vmatprep.mubr.f32.mxu0 0.0
    %1068 = vmatmul.mubr.f32.gmra.mrb[0].mxu0 %v146
    %v1069 = vpop.f32.mrb[0].mxu0
    %v1070 = vadd.f32 %v986, %v1069
    %v1071 = vpop.f32.mrb[0].mxu0
    %1072 = vdwg.mxu0
    %v1074 = vsel %vm415, %v873, 0
    %v1077 = vsel %vm415, %v878, 0
    %v1080 = vsel %vm415, %v964, 0
    %v1083 = vsel %vm415, %v969, 0
    %1085 = vmatprep.subr.mxu0 0.0
    %1086 = vmatpush1.xpose.msra.mxu0 %v1080
    %1087 = vmatprep.subr.mxu0 0.0
    %1088 = vmatpush1.xpose.msra.mxu0 %v1083
    %1089 = vmatprep.subr.mxu0 0.0
    %1090 = vmatpush1.xpose.msra.mxu0 0.0
    %1091 = vmatprep.subr.mxu0 0.0
    %1092 = vmatpush1.xpose.msra.mxu0 0.0
    %1093 = vmatprep.subr.mxu0 0.0
    %1094 = vmatpush1.xpose.msra.mxu0 0.0
    %1095 = vmatprep.subr.mxu0 0.0
    %1096 = vmatpush1.xpose.msra.mxu0 0.0
    %1097 = vmatprep.subr.mxu0 0.0
    %1098 = vmatpush1.xpose.msra.mxu0 0.0
    %1099 = vmatprep.subr.mxu0 0.0
    %1100 = vmatpush1.xpose.msra.mxu0 0.0
    %1101 = vmatprep.subr.mxu0 0.0
    %1102 = vmatpush1.xpose.msra.mxu0 0.0
    %1103 = vmatprep.subr.mxu0 0.0
    %1104 = vmatpush1.xpose.msra.mxu0 0.0
    %1105 = vmatprep.subr.mxu0 0.0
    %1106 = vmatpush1.xpose.msra.mxu0 0.0
    %1107 = vmatprep.subr.mxu0 0.0
    %1108 = vmatpush1.xpose.msra.mxu0 0.0
    %1109 = vmatprep.subr.mxu0 0.0
    %1110 = vmatpush1.xpose.msra.mxu0 0.0
    %1111 = vmatprep.subr.mxu0 0.0
    %1112 = vmatpush1.xpose.msra.mxu0 0.0
    %1113 = vmatprep.subr.mxu0 0.0
    %1114 = vmatpush1.xpose.msra.mxu0 0.0
    %1115 = vmatprep.subr.mxu0 0.0
    %1116 = vmatpush1.xpose.msra.mxu0 0.0
    %1117 = vmatprep.subr.mxu0 0.0
    %1118 = vmatpush1.xpose.msra.mxu0 0.0
    %1119 = vmatprep.subr.mxu0 0.0
    %1120 = vmatpush1.xpose.msra.mxu0 0.0
    %1121 = vmatprep.subr.mxu0 0.0
    %1122 = vmatpush1.xpose.msra.mxu0 0.0
    %1123 = vmatprep.subr.mxu0 0.0
    %1124 = vmatpush1.xpose.msra.mxu0 0.0
    %1125 = vmatprep.subr.mxu0 0.0
    %1126 = vmatpush1.xpose.msra.mxu0 0.0
    %1127 = vmatprep.subr.mxu0 0.0
    %1128 = vmatpush1.xpose.msra.mxu0 0.0
    %1129 = vmatprep.subr.mxu0 0.0
    %1130 = vmatpush1.xpose.msra.mxu0 0.0
    %1131 = vmatprep.subr.mxu0 0.0
    %1132 = vmatpush1.xpose.msra.mxu0 0.0
    %1133 = vmatprep.subr.mxu0 0.0
    %1134 = vmatpush1.xpose.msra.mxu0 0.0
    %1135 = vmatprep.subr.mxu0 0.0
    %1136 = vmatpush1.xpose.msra.mxu0 0.0
    %1137 = vmatprep.subr.mxu0 0.0
    %1138 = vmatpush1.xpose.msra.mxu0 0.0
    %1139 = vmatprep.subr.mxu0 0.0
    %1140 = vmatpush1.xpose.msra.mxu0 0.0
    %1141 = vmatprep.subr.mxu0 0.0
    %1142 = vmatpush1.xpose.msra.mxu0 0.0
    %1143 = vmatprep.subr.mxu0 0.0
    %1144 = vmatpush1.xpose.msra.mxu0 0.0
    %1145 = vmatprep.subr.mxu0 0.0
    %1146 = vmatpush1.xpose.msra.mxu0 0.0
    %1147 = vmatprep.subr.mxu0 0.0
    %1148 = vmatpush1.xpose.msra.mxu0 0.0
    %1149 = vmatprep.mubr.f32.mxu0 0.0
    %1150 = vmatmul.mubr.f32.gmra.mrb[0].mxu0 %v1074
    %v1151 = vpop.f32.mrb[0].mxu0
    %v1152 = vadd.f32 0.0, %v1151
    %v1153 = vpop.f32.mrb[0].mxu0
    %1154 = vmatprep.mubr.f32.mxu0 0.0
    %1155 = vmatmul.mubr.f32.gmra.mrb[0].mxu0 %v1077
    %v1156 = vpop.f32.mrb[0].mxu0
    %v1157 = vadd.f32 0.0, %v1156
    %v1158 = vpop.f32.mrb[0].mxu0
    %1159 = vdwg.mxu0
    %v1161 = vsel %vm415, %v883, 0
    %v1164 = vsel %vm415, %v888, 0
    %v1167 = vsel %vm415, %v974, 0
    %v1170 = vsel %vm415, %v979, 0
    %1172 = vmatprep.subr.mxu0 0.0
    %1173 = vmatpush1.xpose.msra.mxu0 %v1167
    %1174 = vmatprep.subr.mxu0 0.0
    %1175 = vmatpush1.xpose.msra.mxu0 %v1170
    %1176 = vmatprep.subr.mxu0 0.0
    %1177 = vmatpush1.xpose.msra.mxu0 0.0
    %1178 = vmatprep.subr.mxu0 0.0
    %1179 = vmatpush1.xpose.msra.mxu0 0.0
    %1180 = vmatprep.subr.mxu0 0.0
    %1181 = vmatpush1.xpose.msra.mxu0 0.0
    %1182 = vmatprep.subr.mxu0 0.0
    %1183 = vmatpush1.xpose.msra.mxu0 0.0
    %1184 = vmatprep.subr.mxu0 0.0
    %1185 = vmatpush1.xpose.msra.mxu0 0.0
    %1186 = vmatprep.subr.mxu0 0.0
    %1187 = vmatpush1.xpose.msra.mxu0 0.0
    %1188 = vmatprep.subr.mxu0 0.0
    %1189 = vmatpush1.xpose.msra.mxu0 0.0
    %1190 = vmatprep.subr.mxu0 0.0
    %1191 = vmatpush1.xpose.msra.mxu0 0.0
    %1192 = vmatprep.subr.mxu0 0.0
    %1193 = vmatpush1.xpose.msra.mxu0 0.0
    %1194 = vmatprep.subr.mxu0 0.0
    %1195 = vmatpush1.xpose.msra.mxu0 0.0
    %1196 = vmatprep.subr.mxu0 0.0
    %1197 = vmatpush1.xpose.msra.mxu0 0.0
    %1198 = vmatprep.subr.mxu0 0.0
    %1199 = vmatpush1.xpose.msra.mxu0 0.0
    %1200 = vmatprep.subr.mxu0 0.0
    %1201 = vmatpush1.xpose.msra.mxu0 0.0
    %1202 = vmatprep.subr.mxu0 0.0
    %1203 = vmatpush1.xpose.msra.mxu0 0.0
    %1204 = vmatprep.subr.mxu0 0.0
    %1205 = vmatpush1.xpose.msra.mxu0 0.0
    %1206 = vmatprep.subr.mxu0 0.0
    %1207 = vmatpush1.xpose.msra.mxu0 0.0
    %1208 = vmatprep.subr.mxu0 0.0
    %1209 = vmatpush1.xpose.msra.mxu0 0.0
    %1210 = vmatprep.subr.mxu0 0.0
    %1211 = vmatpush1.xpose.msra.mxu0 0.0
    %1212 = vmatprep.subr.mxu0 0.0
    %1213 = vmatpush1.xpose.msra.mxu0 0.0
    %1214 = vmatprep.subr.mxu0 0.0
    %1215 = vmatpush1.xpose.msra.mxu0 0.0
    %1216 = vmatprep.subr.mxu0 0.0
    %1217 = vmatpush1.xpose.msra.mxu0 0.0
    %1218 = vmatprep.subr.mxu0 0.0
    %1219 = vmatpush1.xpose.msra.mxu0 0.0
    %1220 = vmatprep.subr.mxu0 0.0
    %1221 = vmatpush1.xpose.msra.mxu0 0.0
    %1222 = vmatprep.subr.mxu0 0.0
    %1223 = vmatpush1.xpose.msra.mxu0 0.0
    %1224 = vmatprep.subr.mxu0 0.0
    %1225 = vmatpush1.xpose.msra.mxu0 0.0
    %1226 = vmatprep.subr.mxu0 0.0
    %1227 = vmatpush1.xpose.msra.mxu0 0.0
    %1228 = vmatprep.subr.mxu0 0.0
    %1229 = vmatpush1.xpose.msra.mxu0 0.0
    %1230 = vmatprep.subr.mxu0 0.0
    %1231 = vmatpush1.xpose.msra.mxu0 0.0
    %1232 = vmatprep.subr.mxu0 0.0
    %1233 = vmatpush1.xpose.msra.mxu0 0.0
    %1234 = vmatprep.subr.mxu0 0.0
    %1235 = vmatpush1.xpose.msra.mxu0 0.0
    %1236 = vmatprep.mubr.f32.mxu0 0.0
    %1237 = vmatmul.mubr.f32.gmra.mrb[0].mxu0 %v1161
    %v1238 = vpop.f32.mrb[0].mxu0
    %v1239 = vadd.f32 0.0, %v1238
    %v1240 = vpop.f32.mrb[0].mxu0
    %1241 = vmatprep.mubr.f32.mxu0 0.0
    %1242 = vmatmul.mubr.f32.gmra.mrb[0].mxu0 %v1164
    %v1243 = vpop.f32.mrb[0].mxu0
    %v1244 = vadd.f32 0.0, %v1243
    %v1245 = vpop.f32.mrb[0].mxu0
    %1246 = vdwg.mxu0
    %v1247 = vmul.f32 %v1152, 0.25
    %v1248 = vmul.f32 %v1157, 0.25
    %v1249 = vmul.f32 %v1239, 0.25
    %v1250 = vmul.f32 %v1244, 0.25
    %v1251 = vsel %vm415, %v1247, -inf
    %1252 = vmax.xlane.f32.xlu0 %v1251
    %v1253 = vpop.xlane.xlu0 %1252
    %v1254 = vsel %vm415, %v1248, -inf
    %1255 = vmax.xlane.f32.xlu0 %v1254
    %v1256 = vpop.xlane.xlu0 %1255
    %v1257 = vsel %vm415, %v1249, -inf
    %1258 = vmax.xlane.f32.xlu0 %v1257
    %v1259 = vpop.xlane.xlu0 %1258
    %v1260 = vsel %vm415, %v1250, -inf
    %1261 = vmax.xlane.f32.xlu0 %v1260
    %v1262 = vpop.xlane.xlu0 %1261
    %v1263 = vsub.f32 %v1247, %v1253
    %v1264 = vsub.f32 %v1248, %v1256
    %v1265 = vsub.f32 %v1249, %v1259
    %v1266 = vsub.f32 %v1250, %v1262
    %v1267 = vmul.f32 %v1263, 1.442695
    %v1268 = vpow.pop %v1267
    %v1269 = vmul.f32 %v1264, 1.442695
    %v1270 = vpow.pop %v1269
    %v1271 = vmul.f32 %v1265, 1.442695
    %v1272 = vpow.pop %v1271
    %v1273 = vmul.f32 %v1266, 1.442695
    %v1274 = vpow.pop %v1273
    %v1275 = vsel %vm415, %v1268, 0.0
    %1276 = vadd.xlane.f32.xlu0 %v1275
    %v1277 = vpop.xlane.xlu0 %1276
    %v1278 = vsel %vm415, %v1270, 0.0
    %1279 = vadd.xlane.f32.xlu0 %v1278
    %v1280 = vpop.xlane.xlu0 %1279
    %v1281 = vsel %vm415, %v1272, 0.0
    %1282 = vadd.xlane.f32.xlu0 %v1281
    %v1283 = vpop.xlane.xlu0 %1282
    %v1284 = vsel %vm415, %v1274, 0.0
    %1285 = vadd.xlane.f32.xlu0 %v1284
    %v1286 = vpop.xlane.xlu0 %1285
    %v1287 = vrcp.pop %v1277
    %v1288 = vmul.f32 %v1268, %v1287
    %v1289 = vrcp.pop %v1280
    %v1290 = vmul.f32 %v1270, %v1289
    %v1291 = vrcp.pop %v1283
    %v1292 = vmul.f32 %v1272, %v1291
    %v1293 = vrcp.pop %v1286
    %v1294 = vmul.f32 %v1274, %v1293
    %v1296 = vsel %vm415, %v1288, 0
    %v1299 = vsel %vm415, %v1290, 0
    %1301 = vmatprep.subr.mxu0 0.0
    %1302 = vmatpush1.msra.mxu0 %v1055
    %1303 = vmatprep.subr.mxu0 0.0
    %1304 = vmatpush1.msra.mxu0 %v1060
    %1305 = vmatprep.subr.mxu0 0.0
    %1306 = vmatpush1.msra.mxu0 0.0
    %1307 = vmatprep.subr.mxu0 0.0
    %1308 = vmatpush1.msra.mxu0 0.0
    %1309 = vmatprep.subr.mxu0 0.0
    %1310 = vmatpush1.msra.mxu0 0.0
    %1311 = vmatprep.subr.mxu0 0.0
    %1312 = vmatpush1.msra.mxu0 0.0
    %1313 = vmatprep.subr.mxu0 0.0
    %1314 = vmatpush1.msra.mxu0 0.0
    %1315 = vmatprep.subr.mxu0 0.0
    %1316 = vmatpush1.msra.mxu0 0.0
    %1317 = vmatprep.subr.mxu0 0.0
    %1318 = vmatpush1.msra.mxu0 0.0
    %1319 = vmatprep.subr.mxu0 0.0
    %1320 = vmatpush1.msra.mxu0 0.0
    %1321 = vmatprep.subr.mxu0 0.0
    %1322 = vmatpush1.msra.mxu0 0.0
    %1323 = vmatprep.subr.mxu0 0.0
    %1324 = vmatpush1.msra.mxu0 0.0
    %1325 = vmatprep.subr.mxu0 0.0
    %1326 = vmatpush1.msra.mxu0 0.0
    %1327 = vmatprep.subr.mxu0 0.0
    %1328 = vmatpush1.msra.mxu0 0.0
    %1329 = vmatprep.subr.mxu0 0.0
    %1330 = vmatpush1.msra.mxu0 0.0
    %1331 = vmatprep.subr.mxu0 0.0
    %1332 = vmatpush1.msra.mxu0 0.0
    %1333 = vmatprep.subr.mxu0 0.0
    %1334 = vmatpush1.msra.mxu0 0.0
    %1335 = vmatprep.subr.mxu0 0.0
    %1336 = vmatpush1.msra.mxu0 0.0
    %1337 = vmatprep.subr.mxu0 0.0
    %1338 = vmatpush1.msra.mxu0 0.0
    %1339 = vmatprep.subr.mxu0 0.0
    %1340 = vmatpush1.msra.mxu0 0.0
    %1341 = vmatprep.subr.mxu0 0.0
    %1342 = vmatpush1.msra.mxu0 0.0
    %1343 = vmatprep.subr.mxu0 0.0
    %1344 = vmatpush1.msra.mxu0 0.0
    %1345 = vmatprep.subr.mxu0 0.0
    %1346 = vmatpush1.msra.mxu0 0.0
    %1347 = vmatprep.subr.mxu0 0.0
    %1348 = vmatpush1.msra.mxu0 0.0
    %1349 = vmatprep.subr.mxu0 0.0
    %1350 = vmatpush1.msra.mxu0 0.0
    %1351 = vmatprep.subr.mxu0 0.0
    %1352 = vmatpush1.msra.mxu0 0.0
    %1353 = vmatprep.subr.mxu0 0.0
    %1354 = vmatpush1.msra.mxu0 0.0
    %1355 = vmatprep.subr.mxu0 0.0
    %1356 = vmatpush1.msra.mxu0 0.0
    %1357 = vmatprep.subr.mxu0 0.0
    %1358 = vmatpush1.msra.mxu0 0.0
    %1359 = vmatprep.subr.mxu0 0.0
    %1360 = vmatpush1.msra.mxu0 0.0
    %1361 = vmatprep.subr.mxu0 0.0
    %1362 = vmatpush1.msra.mxu0 0.0
    %1363 = vmatprep.subr.mxu0 0.0
    %1364 = vmatpush1.msra.mxu0 0.0
    %1365 = vmatprep.mubr.f32.mxu0 0.0
    %1366 = vmatmul.mubr.f32.gmra.mrb[0].mxu0 %v1296
    %v1367 = vpop.f32.mrb[0].mxu0
    %v1368 = vadd.f32 0.0, %v1367
    %v1369 = vpop.f32.mrb[0].mxu0
    %1370 = vmatprep.mubr.f32.mxu0 0.0
    %1371 = vmatmul.mubr.f32.gmra.mrb[0].mxu0 %v1299
    %v1372 = vpop.f32.mrb[0].mxu0
    %v1373 = vadd.f32 0.0, %v1372
    %v1374 = vpop.f32.mrb[0].mxu0
    %1375 = vdwg.mxu0
    %v1377 = vsel %vm415, %v1292, 0
    %v1380 = vsel %vm415, %v1294, 0
    %1382 = vmatprep.subr.mxu0 0.0
    %1383 = vmatpush1.msra.mxu0 %v1065
    %1384 = vmatprep.subr.mxu0 0.0
    %1385 = vmatpush1.msra.mxu0 %v1070
    %1386 = vmatprep.subr.mxu0 0.0
    %1387 = vmatpush1.msra.mxu0 0.0
    %1388 = vmatprep.subr.mxu0 0.0
    %1389 = vmatpush1.msra.mxu0 0.0
    %1390 = vmatprep.subr.mxu0 0.0
    %1391 = vmatpush1.msra.mxu0 0.0
    %1392 = vmatprep.subr.mxu0 0.0
    %1393 = vmatpush1.msra.mxu0 0.0
    %1394 = vmatprep.subr.mxu0 0.0
    %1395 = vmatpush1.msra.mxu0 0.0
    %1396 = vmatprep.subr.mxu0 0.0
    %1397 = vmatpush1.msra.mxu0 0.0
    %1398 = vmatprep.subr.mxu0 0.0
    %1399 = vmatpush1.msra.mxu0 0.0
    %1400 = vmatprep.subr.mxu0 0.0
    %1401 = vmatpush1.msra.mxu0 0.0
    %1402 = vmatprep.subr.mxu0 0.0
    %1403 = vmatpush1.msra.mxu0 0.0
    %1404 = vmatprep.subr.mxu0 0.0
    %1405 = vmatpush1.msra.mxu0 0.0
    %1406 = vmatprep.subr.mxu0 0.0
    %1407 = vmatpush1.msra.mxu0 0.0
    %1408 = vmatprep.subr.mxu0 0.0
    %1409 = vmatpush1.msra.mxu0 0.0
    %1410 = vmatprep.subr.mxu0 0.0
    %1411 = vmatpush1.msra.mxu0 0.0
    %1412 = vmatprep.subr.mxu0 0.0
    %1413 = vmatpush1.msra.mxu0 0.0
    %1414 = vmatprep.subr.mxu0 0.0
    %1415 = vmatpush1.msra.mxu0 0.0
    %1416 = vmatprep.subr.mxu0 0.0
    %1417 = vmatpush1.msra.mxu0 0.0
    %1418 = vmatprep.subr.mxu0 0.0
    %1419 = vmatpush1.msra.mxu0 0.0
    %1420 = vmatprep.subr.mxu0 0.0
    %1421 = vmatpush1.msra.mxu0 0.0
    %1422 = vmatprep.subr.mxu0 0.0
    %1423 = vmatpush1.msra.mxu0 0.0
    %1424 = vmatprep.subr.mxu0 0.0
    %1425 = vmatpush1.msra.mxu0 0.0
    %1426 = vmatprep.subr.mxu0 0.0
    %1427 = vmatpush1.msra.mxu0 0.0
    %1428 = vmatprep.subr.mxu0 0.0
    %1429 = vmatpush1.msra.mxu0 0.0
    %1430 = vmatprep.subr.mxu0 0.0
    %1431 = vmatpush1.msra.mxu0 0.0
    %1432 = vmatprep.subr.mxu0 0.0
    %1433 = vmatpush1.msra.mxu0 0.0
    %1434 = vmatprep.subr.mxu0 0.0
    %1435 = vmatpush1.msra.mxu0 0.0
    %1436 = vmatprep.subr.mxu0 0.0
    %1437 = vmatpush1.msra.mxu0 0.0
    %1438 = vmatprep.subr.mxu0 0.0
    %1439 = vmatpush1.msra.mxu0 0.0
    %1440 = vmatprep.subr.mxu0 0.0
    %1441 = vmatpush1.msra.mxu0 0.0
    %1442 = vmatprep.subr.mxu0 0.0
    %1443 = vmatpush1.msra.mxu0 0.0
    %1444 = vmatprep.subr.mxu0 0.0
    %1445 = vmatpush1.msra.mxu0 0.0
    %1446 = vmatprep.mubr.f32.mxu0 0.0
    %1447 = vmatmul.mubr.f32.gmra.mrb[0].mxu0 %v1377
    %v1448 = vpop.f32.mrb[0].mxu0
    %v1449 = vadd.f32 0.0, %v1448
    %v1450 = vpop.f32.mrb[0].mxu0
    %1451 = vmatprep.mubr.f32.mxu0 0.0
    %1452 = vmatmul.mubr.f32.gmra.mrb[0].mxu0 %v1380
    %v1453 = vpop.f32.mrb[0].mxu0
    %v1454 = vadd.f32 0.0, %v1453
    %v1455 = vpop.f32.mrb[0].mxu0
    %1456 = vdwg.mxu0
    %v1458 = vsel %vm415, %v1368, 0
    %v1461 = vsel %vm415, %v1373, 0
    %v1464 = vsel %vm415, %v1449, 0
    %v1467 = vsel %vm415, %v1454, 0
    %1469 = vmatprep.subr.mxu0 0.0
    %1470 = vmatpush1.msra.mxu0 %v111
    %1471 = vmatprep.subr.mxu0 0.0
    %1472 = vmatpush1.msra.mxu0 %v112
    %1473 = vmatprep.subr.mxu0 0.0
    %1474 = vmatpush1.msra.mxu0 0.0
    %1475 = vmatprep.subr.mxu0 0.0
    %1476 = vmatpush1.msra.mxu0 0.0
    %1477 = vmatprep.subr.mxu0 0.0
    %1478 = vmatpush1.msra.mxu0 0.0
    %1479 = vmatprep.subr.mxu0 0.0
    %1480 = vmatpush1.msra.mxu0 0.0
    %1481 = vmatprep.subr.mxu0 0.0
    %1482 = vmatpush1.msra.mxu0 0.0
    %1483 = vmatprep.subr.mxu0 0.0
    %1484 = vmatpush1.msra.mxu0 0.0
    %1485 = vmatprep.subr.mxu0 0.0
    %1486 = vmatpush1.msra.mxu0 0.0
    %1487 = vmatprep.subr.mxu0 0.0
    %1488 = vmatpush1.msra.mxu0 0.0
    %1489 = vmatprep.subr.mxu0 0.0
    %1490 = vmatpush1.msra.mxu0 0.0
    %1491 = vmatprep.subr.mxu0 0.0
    %1492 = vmatpush1.msra.mxu0 0.0
    %1493 = vmatprep.subr.mxu0 0.0
    %1494 = vmatpush1.msra.mxu0 0.0
    %1495 = vmatprep.subr.mxu0 0.0
    %1496 = vmatpush1.msra.mxu0 0.0
    %1497 = vmatprep.subr.mxu0 0.0
    %1498 = vmatpush1.msra.mxu0 0.0
    %1499 = vmatprep.subr.mxu0 0.0
    %1500 = vmatpush1.msra.mxu0 0.0
    %1501 = vmatprep.subr.mxu0 0.0
    %1502 = vmatpush1.msra.mxu0 0.0
    %1503 = vmatprep.subr.mxu0 0.0
    %1504 = vmatpush1.msra.mxu0 0.0
    %1505 = vmatprep.subr.mxu0 0.0
    %1506 = vmatpush1.msra.mxu0 0.0
    %1507 = vmatprep.subr.mxu0 0.0
    %1508 = vmatpush1.msra.mxu0 0.0
    %1509 = vmatprep.subr.mxu0 0.0
    %1510 = vmatpush1.msra.mxu0 0.0
    %1511 = vmatprep.subr.mxu0 0.0
    %1512 = vmatpush1.msra.mxu0 0.0
    %1513 = vmatprep.subr.mxu0 0.0
    %1514 = vmatpush1.msra.mxu0 0.0
    %1515 = vmatprep.subr.mxu0 0.0
    %1516 = vmatpush1.msra.mxu0 0.0
    %1517 = vmatprep.subr.mxu0 0.0
    %1518 = vmatpush1.msra.mxu0 0.0
    %1519 = vmatprep.subr.mxu0 0.0
    %1520 = vmatpush1.msra.mxu0 0.0
    %1521 = vmatprep.subr.mxu0 0.0
    %1522 = vmatpush1.msra.mxu0 0.0
    %1523 = vmatprep.subr.mxu0 0.0
    %1524 = vmatpush1.msra.mxu0 0.0
    %1525 = vmatprep.subr.mxu0 0.0
    %1526 = vmatpush1.msra.mxu0 0.0
    %1527 = vmatprep.subr.mxu0 0.0
    %1528 = vmatpush1.msra.mxu0 0.0
    %1529 = vmatprep.subr.mxu0 0.0
    %1530 = vmatpush1.msra.mxu0 0.0
    %1531 = vmatprep.subr.mxu0 0.0
    %1532 = vmatpush1.msra.mxu0 0.0
    %1533 = vmatprep.mubr.f32.mxu0 0.0
    %1534 = vmatmul.mubr.f32.gmra.mrb[0].mxu0 %v1458
    %v1535 = vpop.f32.mrb[0].mxu0
    %v1536 = vadd.f32 0.0, %v1535
    %v1537 = vpop.f32.mrb[0].mxu0
    %1538 = vmatprep.mubr.f32.mxu0 0.0
    %1539 = vmatmul.mubr.f32.gmra.mrb[0].mxu0 %v1461
    %v1540 = vpop.f32.mrb[0].mxu0
    %v1541 = vadd.f32 0.0, %v1540
    %v1542 = vpop.f32.mrb[0].mxu0
    %1543 = vmatprep.mubr.f32.mxu0 0.0
    %1544 = vmatmul.mubr.f32.gmra.mrb[0].mxu0 %v1464
    %v1545 = vpop.f32.mrb[0].mxu0
    %v1546 = vadd.f32 0.0, %v1545
    %v1547 = vpop.f32.mrb[0].mxu0
    %1548 = vmatprep.mubr.f32.mxu0 0.0
    %1549 = vmatmul.mubr.f32.gmra.mrb[0].mxu0 %v1467
    %v1550 = vpop.f32.mrb[0].mxu0
    %v1551 = vadd.f32 0.0, %v1550
    %v1552 = vpop.f32.mrb[0].mxu0
    %1553 = vdwg.mxu0
    %v1555 = vsel %vm415, %v711, 0
    %v1558 = vsel %vm415, %v716, 0
    %v1561 = vsel %vm415, %v792, 0
    %v1564 = vsel %vm415, %v797, 0
    %1566 = vmatprep.subr.mxu0 0.0
    %1567 = vmatpush1.msra.mxu0 %v109
    %1568 = vmatprep.subr.mxu0 0.0
    %1569 = vmatpush1.msra.mxu0 %v110
    %1570 = vmatprep.subr.mxu0 0.0
    %1571 = vmatpush1.msra.mxu0 0.0
    %1572 = vmatprep.subr.mxu0 0.0
    %1573 = vmatpush1.msra.mxu0 0.0
    %1574 = vmatprep.subr.mxu0 0.0
    %1575 = vmatpush1.msra.mxu0 0.0
    %1576 = vmatprep.subr.mxu0 0.0
    %1577 = vmatpush1.msra.mxu0 0.0
    %1578 = vmatprep.subr.mxu0 0.0
    %1579 = vmatpush1.msra.mxu0 0.0
    %1580 = vmatprep.subr.mxu0 0.0
    %1581 = vmatpush1.msra.mxu0 0.0
    %1582 = vmatprep.subr.mxu0 0.0
    %1583 = vmatpush1.msra.mxu0 0.0
    %1584 = vmatprep.subr.mxu0 0.0
    %1585 = vmatpush1.msra.mxu0 0.0
    %1586 = vmatprep.subr.mxu0 0.0
    %1587 = vmatpush1.msra.mxu0 0.0
    %1588 = vmatprep.subr.mxu0 0.0
    %1589 = vmatpush1.msra.mxu0 0.0
    %1590 = vmatprep.subr.mxu0 0.0
    %1591 = vmatpush1.msra.mxu0 0.0
    %1592 = vmatprep.subr.mxu0 0.0
    %1593 = vmatpush1.msra.mxu0 0.0
    %1594 = vmatprep.subr.mxu0 0.0
    %1595 = vmatpush1.msra.mxu0 0.0
    %1596 = vmatprep.subr.mxu0 0.0
    %1597 = vmatpush1.msra.mxu0 0.0
    %1598 = vmatprep.subr.mxu0 0.0
    %1599 = vmatpush1.msra.mxu0 0.0
    %1600 = vmatprep.subr.mxu0 0.0
    %1601 = vmatpush1.msra.mxu0 0.0
    %1602 = vmatprep.subr.mxu0 0.0
    %1603 = vmatpush1.msra.mxu0 0.0
    %1604 = vmatprep.subr.mxu0 0.0
    %1605 = vmatpush1.msra.mxu0 0.0
    %1606 = vmatprep.subr.mxu0 0.0
    %1607 = vmatpush1.msra.mxu0 0.0
    %1608 = vmatprep.subr.mxu0 0.0
    %1609 = vmatpush1.msra.mxu0 0.0
    %1610 = vmatprep.subr.mxu0 0.0
    %1611 = vmatpush1.msra.mxu0 0.0
    %1612 = vmatprep.subr.mxu0 0.0
    %1613 = vmatpush1.msra.mxu0 0.0
    %1614 = vmatprep.subr.mxu0 0.0
    %1615 = vmatpush1.msra.mxu0 0.0
    %1616 = vmatprep.subr.mxu0 0.0
    %1617 = vmatpush1.msra.mxu0 0.0
    %1618 = vmatprep.subr.mxu0 0.0
    %1619 = vmatpush1.msra.mxu0 0.0
    %1620 = vmatprep.subr.mxu0 0.0
    %1621 = vmatpush1.msra.mxu0 0.0
    %1622 = vmatprep.subr.mxu0 0.0
    %1623 = vmatpush1.msra.mxu0 0.0
    %1624 = vmatprep.subr.mxu0 0.0
    %1625 = vmatpush1.msra.mxu0 0.0
    %1626 = vmatprep.subr.mxu0 0.0
    %1627 = vmatpush1.msra.mxu0 0.0
    %1628 = vmatprep.subr.mxu0 0.0
    %1629 = vmatpush1.msra.mxu0 0.0
    %1630 = vmatprep.mubr.f32.mxu0 0.0
    %1631 = vmatmul.mubr.f32.gmra.mrb[0].mxu0 %v1555
    %v1632 = vpop.f32.mrb[0].mxu0
    %v1633 = vadd.f32 %v1536, %v1632
    %v1634 = vpop.f32.mrb[0].mxu0
    %1635 = vmatprep.mubr.f32.mxu0 0.0
    %1636 = vmatmul.mubr.f32.gmra.mrb[0].mxu0 %v1558
    %v1637 = vpop.f32.mrb[0].mxu0
    %v1638 = vadd.f32 %v1541, %v1637
    %v1639 = vpop.f32.mrb[0].mxu0
    %1640 = vmatprep.mubr.f32.mxu0 0.0
    %1641 = vmatmul.mubr.f32.gmra.mrb[0].mxu0 %v1561
    %v1642 = vpop.f32.mrb[0].mxu0
    %v1643 = vadd.f32 %v1546, %v1642
    %v1644 = vpop.f32.mrb[0].mxu0
    %1645 = vmatprep.mubr.f32.mxu0 0.0
    %1646 = vmatmul.mubr.f32.gmra.mrb[0].mxu0 %v1564
    %v1647 = vpop.f32.mrb[0].mxu0
    %v1648 = vadd.f32 %v1551, %v1647
    %v1649 = vpop.f32.mrb[0].mxu0
    %1650 = vdwg.mxu0
    %v1652 = vlaneseq
    %v1653 = vshrl.u32 %v1652, 7
    %v1654 = vsub.s32 0, %v1653
    %v1655 = vrot.slane %v119, %v1654
    %1657 = vmatprep.subr.mxu0 0.0
    %1658 = vmatpush1.msra.mxu0 %v69
    %1659 = vmatprep.subr.mxu0 0.0
    %1660 = vmatpush1.msra.mxu0 %v70
    %1661 = vmatprep.subr.mxu0 0.0
    %1662 = vmatpush1.msra.mxu0 %v71
    %1663 = vmatprep.subr.mxu0 0.0
    %1664 = vmatpush1.msra.mxu0 %v72
    %1665 = vmatprep.subr.mxu0 0.0
    %1666 = vmatpush1.msra.mxu0 0.0
    %1667 = vmatprep.subr.mxu0 0.0
    %1668 = vmatpush1.msra.mxu0 0.0
    %1669 = vmatprep.subr.mxu0 0.0
    %1670 = vmatpush1.msra.mxu0 0.0
    %1671 = vmatprep.subr.mxu0 0.0
    %1672 = vmatpush1.msra.mxu0 0.0
    %1673 = vmatprep.subr.mxu0 0.0
    %1674 = vmatpush1.msra.mxu0 0.0
    %1675 = vmatprep.subr.mxu0 0.0
    %1676 = vmatpush1.msra.mxu0 0.0
    %1677 = vmatprep.subr.mxu0 0.0
    %1678 = vmatpush1.msra.mxu0 0.0
    %1679 = vmatprep.subr.mxu0 0.0
    %1680 = vmatpush1.msra.mxu0 0.0
    %1681 = vmatprep.subr.mxu0 0.0
    %1682 = vmatpush1.msra.mxu0 0.0
    %1683 = vmatprep.subr.mxu0 0.0
    %1684 = vmatpush1.msra.mxu0 0.0
    %1685 = vmatprep.subr.mxu0 0.0
    %1686 = vmatpush1.msra.mxu0 0.0
    %1687 = vmatprep.subr.mxu0 0.0
    %1688 = vmatpush1.msra.mxu0 0.0
    %1689 = vmatprep.subr.mxu0 0.0
    %1690 = vmatpush1.msra.mxu0 0.0
    %1691 = vmatprep.subr.mxu0 0.0
    %1692 = vmatpush1.msra.mxu0 0.0
    %1693 = vmatprep.subr.mxu0 0.0
    %1694 = vmatpush1.msra.mxu0 0.0
    %1695 = vmatprep.subr.mxu0 0.0
    %1696 = vmatpush1.msra.mxu0 0.0
    %1697 = vmatprep.subr.mxu0 0.0
    %1698 = vmatpush1.msra.mxu0 0.0
    %1699 = vmatprep.subr.mxu0 0.0
    %1700 = vmatpush1.msra.mxu0 0.0
    %1701 = vmatprep.subr.mxu0 0.0
    %1702 = vmatpush1.msra.mxu0 0.0
    %1703 = vmatprep.subr.mxu0 0.0
    %1704 = vmatpush1.msra.mxu0 0.0
    %1705 = vmatprep.subr.mxu0 0.0
    %1706 = vmatpush1.msra.mxu0 0.0
    %1707 = vmatprep.subr.mxu0 0.0
    %1708 = vmatpush1.msra.mxu0 0.0
    %1709 = vmatprep.subr.mxu0 0.0
    %1710 = vmatpush1.msra.mxu0 0.0
    %1711 = vmatprep.subr.mxu0 0.0
    %1712 = vmatpush1.msra.mxu0 0.0
    %1713 = vmatprep.subr.mxu0 0.0
    %1714 = vmatpush1.msra.mxu0 0.0
    %1715 = vmatprep.subr.mxu0 0.0
    %1716 = vmatpush1.msra.mxu0 0.0
    %1717 = vmatprep.subr.mxu0 0.0
    %1718 = vmatpush1.msra.mxu0 0.0
    %1719 = vmatprep.subr.mxu0 0.0
    %1720 = vmatpush1.msra.mxu0 0.0
    %1721 = vmatprep.mubr.f32.mxu0 0.0
    %1722 = vmatmul.mubr.f32.gmra.mrb[0].mxu0 %v137
    %v1723 = vpop.f32.mrb[0].mxu0
    %v1724 = vadd.f32 %v1655, %v1723
    %v1725 = vpop.f32.mrb[0].mxu0
    %1726 = vmatprep.mubr.f32.mxu0 0.0
    %1727 = vmatmul.mubr.f32.gmra.mrb[0].mxu0 %v140
    %v1728 = vpop.f32.mrb[0].mxu0
    %v1729 = vadd.f32 %v1655, %v1728
    %v1730 = vpop.f32.mrb[0].mxu0
    %1731 = vmatprep.mubr.f32.mxu0 0.0
    %1732 = vmatmul.mubr.f32.gmra.mrb[0].mxu0 %v143
    %v1733 = vpop.f32.mrb[0].mxu0
    %v1734 = vadd.f32 %v1655, %v1733
    %v1735 = vpop.f32.mrb[0].mxu0
    %1736 = vmatprep.mubr.f32.mxu0 0.0
    %1737 = vmatmul.mubr.f32.gmra.mrb[0].mxu0 %v146
    %v1738 = vpop.f32.mrb[0].mxu0
    %v1739 = vadd.f32 %v1655, %v1738
    %v1740 = vpop.f32.mrb[0].mxu0
    %1741 = vdwg.mxu0
    %v1743 = vlaneseq
    %v1744 = vshrl.u32 %v1743, 7
    %v1745 = vsub.s32 0, %v1744
    %v1746 = vrot.slane %v123, %v1745
    %1748 = vmatprep.subr.mxu0 0.0
    %1749 = vmatpush1.msra.mxu0 %v85
    %1750 = vmatprep.subr.mxu0 0.0
    %1751 = vmatpush1.msra.mxu0 %v86
    %1752 = vmatprep.subr.mxu0 0.0
    %1753 = vmatpush1.msra.mxu0 %v87
    %1754 = vmatprep.subr.mxu0 0.0
    %1755 = vmatpush1.msra.mxu0 %v88
    %1756 = vmatprep.subr.mxu0 0.0
    %1757 = vmatpush1.msra.mxu0 0.0
    %1758 = vmatprep.subr.mxu0 0.0
    %1759 = vmatpush1.msra.mxu0 0.0
    %1760 = vmatprep.subr.mxu0 0.0
    %1761 = vmatpush1.msra.mxu0 0.0
    %1762 = vmatprep.subr.mxu0 0.0
    %1763 = vmatpush1.msra.mxu0 0.0
    %1764 = vmatprep.subr.mxu0 0.0
    %1765 = vmatpush1.msra.mxu0 0.0
    %1766 = vmatprep.subr.mxu0 0.0
    %1767 = vmatpush1.msra.mxu0 0.0
    %1768 = vmatprep.subr.mxu0 0.0
    %1769 = vmatpush1.msra.mxu0 0.0
    %1770 = vmatprep.subr.mxu0 0.0
    %1771 = vmatpush1.msra.mxu0 0.0
    %1772 = vmatprep.subr.mxu0 0.0
    %1773 = vmatpush1.msra.mxu0 0.0
    %1774 = vmatprep.subr.mxu0 0.0
    %1775 = vmatpush1.msra.mxu0 0.0
    %1776 = vmatprep.subr.mxu0 0.0
    %1777 = vmatpush1.msra.mxu0 0.0
    %1778 = vmatprep.subr.mxu0 0.0
    %1779 = vmatpush1.msra.mxu0 0.0
    %1780 = vmatprep.subr.mxu0 0.0
    %1781 = vmatpush1.msra.mxu0 0.0
    %1782 = vmatprep.subr.mxu0 0.0
    %1783 = vmatpush1.msra.mxu0 0.0
    %1784 = vmatprep.subr.mxu0 0.0
    %1785 = vmatpush1.msra.mxu0 0.0
    %1786 = vmatprep.subr.mxu0 0.0
    %1787 = vmatpush1.msra.mxu0 0.0
    %1788 = vmatprep.subr.mxu0 0.0
    %1789 = vmatpush1.msra.mxu0 0.0
    %1790 = vmatprep.subr.mxu0 0.0
    %1791 = vmatpush1.msra.mxu0 0.0
    %1792 = vmatprep.subr.mxu0 0.0
    %1793 = vmatpush1.msra.mxu0 0.0
    %1794 = vmatprep.subr.mxu0 0.0
    %1795 = vmatpush1.msra.mxu0 0.0
    %1796 = vmatprep.subr.mxu0 0.0
    %1797 = vmatpush1.msra.mxu0 0.0
    %1798 = vmatprep.subr.mxu0 0.0
    %1799 = vmatpush1.msra.mxu0 0.0
    %1800 = vmatprep.subr.mxu0 0.0
    %1801 = vmatpush1.msra.mxu0 0.0
    %1802 = vmatprep.subr.mxu0 0.0
    %1803 = vmatpush1.msra.mxu0 0.0
    %1804 = vmatprep.subr.mxu0 0.0
    %1805 = vmatpush1.msra.mxu0 0.0
    %1806 = vmatprep.subr.mxu0 0.0
    %1807 = vmatpush1.msra.mxu0 0.0
    %1808 = vmatprep.subr.mxu0 0.0
    %1809 = vmatpush1.msra.mxu0 0.0
    %1810 = vmatprep.subr.mxu0 0.0
    %1811 = vmatpush1.msra.mxu0 0.0
    %1812 = vmatprep.mubr.f32.mxu0 0.0
    %1813 = vmatmul.mubr.f32.gmra.mrb[0].mxu0 %v137
    %v1814 = vpop.f32.mrb[0].mxu0
    %v1815 = vadd.f32 %v1746, %v1814
    %v1816 = vpop.f32.mrb[0].mxu0
    %1817 = vmatprep.mubr.f32.mxu0 0.0
    %1818 = vmatmul.mubr.f32.gmra.mrb[0].mxu0 %v140
    %v1819 = vpop.f32.mrb[0].mxu0
    %v1820 = vadd.f32 %v1746, %v1819
    %v1821 = vpop.f32.mrb[0].mxu0
    %1822 = vmatprep.mubr.f32.mxu0 0.0
    %1823 = vmatmul.mubr.f32.gmra.mrb[0].mxu0 %v143
    %v1824 = vpop.f32.mrb[0].mxu0
    %v1825 = vadd.f32 %v1746, %v1824
    %v1826 = vpop.f32.mrb[0].mxu0
    %1827 = vmatprep.mubr.f32.mxu0 0.0
    %1828 = vmatmul.mubr.f32.gmra.mrb[0].mxu0 %v146
    %v1829 = vpop.f32.mrb[0].mxu0
    %v1830 = vadd.f32 %v1746, %v1829
    %v1831 = vpop.f32.mrb[0].mxu0
    %1832 = vdwg.mxu0
    %v1834 = vlaneseq
    %v1835 = vshrl.u32 %v1834, 7
    %v1836 = vsub.s32 0, %v1835
    %v1837 = vrot.slane %v127, %v1836
    %1839 = vmatprep.subr.mxu0 0.0
    %1840 = vmatpush1.msra.mxu0 %v101
    %1841 = vmatprep.subr.mxu0 0.0
    %1842 = vmatpush1.msra.mxu0 %v102
    %1843 = vmatprep.subr.mxu0 0.0
    %1844 = vmatpush1.msra.mxu0 %v103
    %1845 = vmatprep.subr.mxu0 0.0
    %1846 = vmatpush1.msra.mxu0 %v104
    %1847 = vmatprep.subr.mxu0 0.0
    %1848 = vmatpush1.msra.mxu0 0.0
    %1849 = vmatprep.subr.mxu0 0.0
    %1850 = vmatpush1.msra.mxu0 0.0
    %1851 = vmatprep.subr.mxu0 0.0
    %1852 = vmatpush1.msra.mxu0 0.0
    %1853 = vmatprep.subr.mxu0 0.0
    %1854 = vmatpush1.msra.mxu0 0.0
    %1855 = vmatprep.subr.mxu0 0.0
    %1856 = vmatpush1.msra.mxu0 0.0
    %1857 = vmatprep.subr.mxu0 0.0
    %1858 = vmatpush1.msra.mxu0 0.0
    %1859 = vmatprep.subr.mxu0 0.0
    %1860 = vmatpush1.msra.mxu0 0.0
    %1861 = vmatprep.subr.mxu0 0.0
    %1862 = vmatpush1.msra.mxu0 0.0
    %1863 = vmatprep.subr.mxu0 0.0
    %1864 = vmatpush1.msra.mxu0 0.0
    %1865 = vmatprep.subr.mxu0 0.0
    %1866 = vmatpush1.msra.mxu0 0.0
    %1867 = vmatprep.subr.mxu0 0.0
    %1868 = vmatpush1.msra.mxu0 0.0
    %1869 = vmatprep.subr.mxu0 0.0
    %1870 = vmatpush1.msra.mxu0 0.0
    %1871 = vmatprep.subr.mxu0 0.0
    %1872 = vmatpush1.msra.mxu0 0.0
    %1873 = vmatprep.subr.mxu0 0.0
    %1874 = vmatpush1.msra.mxu0 0.0
    %1875 = vmatprep.subr.mxu0 0.0
    %1876 = vmatpush1.msra.mxu0 0.0
    %1877 = vmatprep.subr.mxu0 0.0
    %1878 = vmatpush1.msra.mxu0 0.0
    %1879 = vmatprep.subr.mxu0 0.0
    %1880 = vmatpush1.msra.mxu0 0.0
    %1881 = vmatprep.subr.mxu0 0.0
    %1882 = vmatpush1.msra.mxu0 0.0
    %1883 = vmatprep.subr.mxu0 0.0
    %1884 = vmatpush1.msra.mxu0 0.0
    %1885 = vmatprep.subr.mxu0 0.0
    %1886 = vmatpush1.msra.mxu0 0.0
    %1887 = vmatprep.subr.mxu0 0.0
    %1888 = vmatpush1.msra.mxu0 0.0
    %1889 = vmatprep.subr.mxu0 0.0
    %1890 = vmatpush1.msra.mxu0 0.0
    %1891 = vmatprep.subr.mxu0 0.0
    %1892 = vmatpush1.msra.mxu0 0.0
    %1893 = vmatprep.subr.mxu0 0.0
    %1894 = vmatpush1.msra.mxu0 0.0
    %1895 = vmatprep.subr.mxu0 0.0
    %1896 = vmatpush1.msra.mxu0 0.0
    %1897 = vmatprep.subr.mxu0 0.0
    %1898 = vmatpush1.msra.mxu0 0.0
    %1899 = vmatprep.subr.mxu0 0.0
    %1900 = vmatpush1.msra.mxu0 0.0
    %1901 = vmatprep.subr.mxu0 0.0
    %1902 = vmatpush1.msra.mxu0 0.0
    %1903 = vmatprep.mubr.f32.mxu0 0.0
    %1904 = vmatmul.mubr.f32.gmra.mrb[0].mxu0 %v137
    %v1905 = vpop.f32.mrb[0].mxu0
    %v1906 = vadd.f32 %v1837, %v1905
    %v1907 = vpop.f32.mrb[0].mxu0
    %1908 = vmatprep.mubr.f32.mxu0 0.0
    %1909 = vmatmul.mubr.f32.gmra.mrb[0].mxu0 %v140
    %v1910 = vpop.f32.mrb[0].mxu0
    %v1911 = vadd.f32 %v1837, %v1910
    %v1912 = vpop.f32.mrb[0].mxu0
    %1913 = vmatprep.mubr.f32.mxu0 0.0
    %1914 = vmatmul.mubr.f32.gmra.mrb[0].mxu0 %v143
    %v1915 = vpop.f32.mrb[0].mxu0
    %v1916 = vadd.f32 %v1837, %v1915
    %v1917 = vpop.f32.mrb[0].mxu0
    %1918 = vmatprep.mubr.f32.mxu0 0.0
    %1919 = vmatmul.mubr.f32.gmra.mrb[0].mxu0 %v146
    %v1920 = vpop.f32.mrb[0].mxu0
    %v1921 = vadd.f32 %v1837, %v1920
    %v1922 = vpop.f32.mrb[0].mxu0
    %1923 = vdwg.mxu0
    %v1925 = vsel %vm415, %v1724, 0
    %v1928 = vsel %vm415, %v1729, 0
    %v1931 = vsel %vm415, %v1815, 0
    %v1934 = vsel %vm415, %v1820, 0
    %1936 = vmatprep.subr.mxu0 0.0
    %1937 = vmatpush1.xpose.msra.mxu0 %v1931
    %1938 = vmatprep.subr.mxu0 0.0
    %1939 = vmatpush1.xpose.msra.mxu0 %v1934
    %1940 = vmatprep.subr.mxu0 0.0
    %1941 = vmatpush1.xpose.msra.mxu0 0.0
    %1942 = vmatprep.subr.mxu0 0.0
    %1943 = vmatpush1.xpose.msra.mxu0 0.0
    %1944 = vmatprep.subr.mxu0 0.0
    %1945 = vmatpush1.xpose.msra.mxu0 0.0
    %1946 = vmatprep.subr.mxu0 0.0
    %1947 = vmatpush1.xpose.msra.mxu0 0.0
    %1948 = vmatprep.subr.mxu0 0.0
    %1949 = vmatpush1.xpose.msra.mxu0 0.0
    %1950 = vmatprep.subr.mxu0 0.0
    %1951 = vmatpush1.xpose.msra.mxu0 0.0
    %1952 = vmatprep.subr.mxu0 0.0
    %1953 = vmatpush1.xpose.msra.mxu0 0.0
    %1954 = vmatprep.subr.mxu0 0.0
    %1955 = vmatpush1.xpose.msra.mxu0 0.0
    %1956 = vmatprep.subr.mxu0 0.0
    %1957 = vmatpush1.xpose.msra.mxu0 0.0
    %1958 = vmatprep.subr.mxu0 0.0
    %1959 = vmatpush1.xpose.msra.mxu0 0.0
    %1960 = vmatprep.subr.mxu0 0.0
    %1961 = vmatpush1.xpose.msra.mxu0 0.0
    %1962 = vmatprep.subr.mxu0 0.0
    %1963 = vmatpush1.xpose.msra.mxu0 0.0
    %1964 = vmatprep.subr.mxu0 0.0
    %1965 = vmatpush1.xpose.msra.mxu0 0.0
    %1966 = vmatprep.subr.mxu0 0.0
    %1967 = vmatpush1.xpose.msra.mxu0 0.0
    %1968 = vmatprep.subr.mxu0 0.0
    %1969 = vmatpush1.xpose.msra.mxu0 0.0
    %1970 = vmatprep.subr.mxu0 0.0
    %1971 = vmatpush1.xpose.msra.mxu0 0.0
    %1972 = vmatprep.subr.mxu0 0.0
    %1973 = vmatpush1.xpose.msra.mxu0 0.0
    %1974 = vmatprep.subr.mxu0 0.0
    %1975 = vmatpush1.xpose.msra.mxu0 0.0
    %1976 = vmatprep.subr.mxu0 0.0
    %1977 = vmatpush1.xpose.msra.mxu0 0.0
    %1978 = vmatprep.subr.mxu0 0.0
    %1979 = vmatpush1.xpose.msra.mxu0 0.0
    %1980 = vmatprep.subr.mxu0 0.0
    %1981 = vmatpush1.xpose.msra.mxu0 0.0
    %1982 = vmatprep.subr.mxu0 0.0
    %1983 = vmatpush1.xpose.msra.mxu0 0.0
    %1984 = vmatprep.subr.mxu0 0.0
    %1985 = vmatpush1.xpose.msra.mxu0 0.0
    %1986 = vmatprep.subr.mxu0 0.0
    %1987 = vmatpush1.xpose.msra.mxu0 0.0
    %1988 = vmatprep.subr.mxu0 0.0
    %1989 = vmatpush1.xpose.msra.mxu0 0.0
    %1990 = vmatprep.subr.mxu0 0.0
    %1991 = vmatpush1.xpose.msra.mxu0 0.0
    %1992 = vmatprep.subr.mxu0 0.0
    %1993 = vmatpush1.xpose.msra.mxu0 0.0
    %1994 = vmatprep.subr.mxu0 0.0
    %1995 = vmatpush1.xpose.msra.mxu0 0.0
    %1996 = vmatprep.subr.mxu0 0.0
    %1997 = vmatpush1.xpose.msra.mxu0 0.0
    %1998 = vmatprep.subr.mxu0 0.0
    %1999 = vmatpush1.xpose.msra.mxu0 0.0
    %2000 = vmatprep.mubr.f32.mxu0 0.0
    %2001 = vmatmul.mubr.f32.gmra.mrb[0].mxu0 %v1925
    %v2002 = vpop.f32.mrb[0].mxu0
    %v2003 = vadd.f32 0.0, %v2002
    %v2004 = vpop.f32.mrb[0].mxu0
    %2005 = vmatprep.mubr.f32.mxu0 0.0
    %2006 = vmatmul.mubr.f32.gmra.mrb[0].mxu0 %v1928
    %v2007 = vpop.f32.mrb[0].mxu0
    %v2008 = vadd.f32 0.0, %v2007
    %v2009 = vpop.f32.mrb[0].mxu0
    %2010 = vdwg.mxu0
    %v2012 = vsel %vm415, %v1734, 0
    %v2015 = vsel %vm415, %v1739, 0
    %v2018 = vsel %vm415, %v1825, 0
    %v2021 = vsel %vm415, %v1830, 0
    %2023 = vmatprep.subr.mxu0 0.0
    %2024 = vmatpush1.xpose.msra.mxu0 %v2018
    %2025 = vmatprep.subr.mxu0 0.0
    %2026 = vmatpush1.xpose.msra.mxu0 %v2021
    %2027 = vmatprep.subr.mxu0 0.0
    %2028 = vmatpush1.xpose.msra.mxu0 0.0
    %2029 = vmatprep.subr.mxu0 0.0
    %2030 = vmatpush1.xpose.msra.mxu0 0.0
    %2031 = vmatprep.subr.mxu0 0.0
    %2032 = vmatpush1.xpose.msra.mxu0 0.0
    %2033 = vmatprep.subr.mxu0 0.0
    %2034 = vmatpush1.xpose.msra.mxu0 0.0
    %2035 = vmatprep.subr.mxu0 0.0
    %2036 = vmatpush1.xpose.msra.mxu0 0.0
    %2037 = vmatprep.subr.mxu0 0.0
    %2038 = vmatpush1.xpose.msra.mxu0 0.0
    %2039 = vmatprep.subr.mxu0 0.0
    %2040 = vmatpush1.xpose.msra.mxu0 0.0
    %2041 = vmatprep.subr.mxu0 0.0
    %2042 = vmatpush1.xpose.msra.mxu0 0.0
    %2043 = vmatprep.subr.mxu0 0.0
    %2044 = vmatpush1.xpose.msra.mxu0 0.0
    %2045 = vmatprep.subr.mxu0 0.0
    %2046 = vmatpush1.xpose.msra.mxu0 0.0
    %2047 = vmatprep.subr.mxu0 0.0
    %2048 = vmatpush1.xpose.msra.mxu0 0.0
    %2049 = vmatprep.subr.mxu0 0.0
    %2050 = vmatpush1.xpose.msra.mxu0 0.0
    %2051 = vmatprep.subr.mxu0 0.0
    %2052 = vmatpush1.xpose.msra.mxu0 0.0
    %2053 = vmatprep.subr.mxu0 0.0
    %2054 = vmatpush1.xpose.msra.mxu0 0.0
    %2055 = vmatprep.subr.mxu0 0.0
    %2056 = vmatpush1.xpose.msra.mxu0 0.0
    %2057 = vmatprep.subr.mxu0 0.0
    %2058 = vmatpush1.xpose.msra.mxu0 0.0
    %2059 = vmatprep.subr.mxu0 0.0
    %2060 = vmatpush1.xpose.msra.mxu0 0.0
    %2061 = vmatprep.subr.mxu0 0.0
    %2062 = vmatpush1.xpose.msra.mxu0 0.0
    %2063 = vmatprep.subr.mxu0 0.0
    %2064 = vmatpush1.xpose.msra.mxu0 0.0
    %2065 = vmatprep.subr.mxu0 0.0
    %2066 = vmatpush1.xpose.msra.mxu0 0.0
    %2067 = vmatprep.subr.mxu0 0.0
    %2068 = vmatpush1.xpose.msra.mxu0 0.0
    %2069 = vmatprep.subr.mxu0 0.0
    %2070 = vmatpush1.xpose.msra.mxu0 0.0
    %2071 = vmatprep.subr.mxu0 0.0
    %2072 = vmatpush1.xpose.msra.mxu0 0.0
    %2073 = vmatprep.subr.mxu0 0.0
    %2074 = vmatpush1.xpose.msra.mxu0 0.0
    %2075 = vmatprep.subr.mxu0 0.0
    %2076 = vmatpush1.xpose.msra.mxu0 0.0
    %2077 = vmatprep.subr.mxu0 0.0
    %2078 = vmatpush1.xpose.msra.mxu0 0.0
    %2079 = vmatprep.subr.mxu0 0.0
    %2080 = vmatpush1.xpose.msra.mxu0 0.0
    %2081 = vmatprep.subr.mxu0 0.0
    %2082 = vmatpush1.xpose.msra.mxu0 0.0
    %2083 = vmatprep.subr.mxu0 0.0
    %2084 = vmatpush1.xpose.msra.mxu0 0.0
    %2085 = vmatprep.subr.mxu0 0.0
    %2086 = vmatpush1.xpose.msra.mxu0 0.0
    %2087 = vmatprep.mubr.f32.mxu0 0.0
    %2088 = vmatmul.mubr.f32.gmra.mrb[0].mxu0 %v2012
    %v2089 = vpop.f32.mrb[0].mxu0
    %v2090 = vadd.f32 0.0, %v2089
    %v2091 = vpop.f32.mrb[0].mxu0
    %2092 = vmatprep.mubr.f32.mxu0 0.0
    %2093 = vmatmul.mubr.f32.gmra.mrb[0].mxu0 %v2015
    %v2094 = vpop.f32.mrb[0].mxu0
    %v2095 = vadd.f32 0.0, %v2094
    %v2096 = vpop.f32.mrb[0].mxu0
    %2097 = vdwg.mxu0
    %v2098 = vmul.f32 %v2003, 0.25
    %v2099 = vmul.f32 %v2008, 0.25
    %v2100 = vmul.f32 %v2090, 0.25
    %v2101 = vmul.f32 %v2095, 0.25
    %v2102 = vsel %vm415, %v2098, -inf
    %2103 = vmax.xlane.f32.xlu0 %v2102
    %v2104 = vpop.xlane.xlu0 %2103
    %v2105 = vsel %vm415, %v2099, -inf
    %2106 = vmax.xlane.f32.xlu0 %v2105
    %v2107 = vpop.xlane.xlu0 %2106
    %v2108 = vsel %vm415, %v2100, -inf
    %2109 = vmax.xlane.f32.xlu0 %v2108
    %v2110 = vpop.xlane.xlu0 %2109
    %v2111 = vsel %vm415, %v2101, -inf
    %2112 = vmax.xlane.f32.xlu0 %v2111
    %v2113 = vpop.xlane.xlu0 %2112
    %v2114 = vsub.f32 %v2098, %v2104
    %v2115 = vsub.f32 %v2099, %v2107
    %v2116 = vsub.f32 %v2100, %v2110
    %v2117 = vsub.f32 %v2101, %v2113
    %v2118 = vmul.f32 %v2114, 1.442695
    %v2119 = vpow.pop %v2118
    %v2120 = vmul.f32 %v2115, 1.442695
    %v2121 = vpow.pop %v2120
    %v2122 = vmul.f32 %v2116, 1.442695
    %v2123 = vpow.pop %v2122
    %v2124 = vmul.f32 %v2117, 1.442695
    %v2125 = vpow.pop %v2124
    %v2126 = vsel %vm415, %v2119, 0.0
    %2127 = vadd.xlane.f32.xlu0 %v2126
    %v2128 = vpop.xlane.xlu0 %2127
    %v2129 = vsel %vm415, %v2121, 0.0
    %2130 = vadd.xlane.f32.xlu0 %v2129
    %v2131 = vpop.xlane.xlu0 %2130
    %v2132 = vsel %vm415, %v2123, 0.0
    %2133 = vadd.xlane.f32.xlu0 %v2132
    %v2134 = vpop.xlane.xlu0 %2133
    %v2135 = vsel %vm415, %v2125, 0.0
    %2136 = vadd.xlane.f32.xlu0 %v2135
    %v2137 = vpop.xlane.xlu0 %2136
    %v2138 = vrcp.pop %v2128
    %v2139 = vmul.f32 %v2119, %v2138
    %v2140 = vrcp.pop %v2131
    %v2141 = vmul.f32 %v2121, %v2140
    %v2142 = vrcp.pop %v2134
    %v2143 = vmul.f32 %v2123, %v2142
    %v2144 = vrcp.pop %v2137
    %v2145 = vmul.f32 %v2125, %v2144
    %v2147 = vsel %vm415, %v2139, 0
    %v2150 = vsel %vm415, %v2141, 0
    %2152 = vmatprep.subr.mxu0 0.0
    %2153 = vmatpush1.msra.mxu0 %v1906
    %2154 = vmatprep.subr.mxu0 0.0
    %2155 = vmatpush1.msra.mxu0 %v1911
    %2156 = vmatprep.subr.mxu0 0.0
    %2157 = vmatpush1.msra.mxu0 0.0
    %2158 = vmatprep.subr.mxu0 0.0
    %2159 = vmatpush1.msra.mxu0 0.0
    %2160 = vmatprep.subr.mxu0 0.0
    %2161 = vmatpush1.msra.mxu0 0.0
    %2162 = vmatprep.subr.mxu0 0.0
    %2163 = vmatpush1.msra.mxu0 0.0
    %2164 = vmatprep.subr.mxu0 0.0
    %2165 = vmatpush1.msra.mxu0 0.0
    %2166 = vmatprep.subr.mxu0 0.0
    %2167 = vmatpush1.msra.mxu0 0.0
    %2168 = vmatprep.subr.mxu0 0.0
    %2169 = vmatpush1.msra.mxu0 0.0
    %2170 = vmatprep.subr.mxu0 0.0
    %2171 = vmatpush1.msra.mxu0 0.0
    %2172 = vmatprep.subr.mxu0 0.0
    %2173 = vmatpush1.msra.mxu0 0.0
    %2174 = vmatprep.subr.mxu0 0.0
    %2175 = vmatpush1.msra.mxu0 0.0
    %2176 = vmatprep.subr.mxu0 0.0
    %2177 = vmatpush1.msra.mxu0 0.0
    %2178 = vmatprep.subr.mxu0 0.0
    %2179 = vmatpush1.msra.mxu0 0.0
    %2180 = vmatprep.subr.mxu0 0.0
    %2181 = vmatpush1.msra.mxu0 0.0
    %2182 = vmatprep.subr.mxu0 0.0
    %2183 = vmatpush1.msra.mxu0 0.0
    %2184 = vmatprep.subr.mxu0 0.0
    %2185 = vmatpush1.msra.mxu0 0.0
    %2186 = vmatprep.subr.mxu0 0.0
    %2187 = vmatpush1.msra.mxu0 0.0
    %2188 = vmatprep.subr.mxu0 0.0
    %2189 = vmatpush1.msra.mxu0 0.0
    %2190 = vmatprep.subr.mxu0 0.0
    %2191 = vmatpush1.msra.mxu0 0.0
    %2192 = vmatprep.subr.mxu0 0.0
    %2193 = vmatpush1.msra.mxu0 0.0
    %2194 = vmatprep.subr.mxu0 0.0
    %2195 = vmatpush1.msra.mxu0 0.0
    %2196 = vmatprep.subr.mxu0 0.0
    %2197 = vmatpush1.msra.mxu0 0.0
    %2198 = vmatprep.subr.mxu0 0.0
    %2199 = vmatpush1.msra.mxu0 0.0
    %2200 = vmatprep.subr.mxu0 0.0
    %2201 = vmatpush1.msra.mxu0 0.0
    %2202 = vmatprep.subr.mxu0 0.0
    %2203 = vmatpush1.msra.mxu0 0.0
    %2204 = vmatprep.subr.mxu0 0.0
    %2205 = vmatpush1.msra.mxu0 0.0
    %2206 = vmatprep.subr.mxu0 0.0
    %2207 = vmatpush1.msra.mxu0 0.0
    %2208 = vmatprep.subr.mxu0 0.0
    %2209 = vmatpush1.msra.mxu0 0.0
    %2210 = vmatprep.subr.mxu0 0.0
    %2211 = vmatpush1.msra.mxu0 0.0
    %2212 = vmatprep.subr.mxu0 0.0
    %2213 = vmatpush1.msra.mxu0 0.0
    %2214 = vmatprep.subr.mxu0 0.0
    %2215 = vmatpush1.msra.mxu0 0.0
    %2216 = vmatprep.mubr.f32.mxu0 0.0
    %2217 = vmatmul.mubr.f32.gmra.mrb[0].mxu0 %v2147
    %v2218 = vpop.f32.mrb[0].mxu0
    %v2219 = vadd.f32 0.0, %v2218
    %v2220 = vpop.f32.mrb[0].mxu0
    %2221 = vmatprep.mubr.f32.mxu0 0.0
    %2222 = vmatmul.mubr.f32.gmra.mrb[0].mxu0 %v2150
    %v2223 = vpop.f32.mrb[0].mxu0
    %v2224 = vadd.f32 0.0, %v2223
    %v2225 = vpop.f32.mrb[0].mxu0
    %2226 = vdwg.mxu0
    %v2228 = vsel %vm415, %v2143, 0
    %v2231 = vsel %vm415, %v2145, 0
    %2233 = vmatprep.subr.mxu0 0.0
    %2234 = vmatpush1.msra.mxu0 %v1916
    %2235 = vmatprep.subr.mxu0 0.0
    %2236 = vmatpush1.msra.mxu0 %v1921
    %2237 = vmatprep.subr.mxu0 0.0
    %2238 = vmatpush1.msra.mxu0 0.0
    %2239 = vmatprep.subr.mxu0 0.0
    %2240 = vmatpush1.msra.mxu0 0.0
    %2241 = vmatprep.subr.mxu0 0.0
    %2242 = vmatpush1.msra.mxu0 0.0
    %2243 = vmatprep.subr.mxu0 0.0
    %2244 = vmatpush1.msra.mxu0 0.0
    %2245 = vmatprep.subr.mxu0 0.0
    %2246 = vmatpush1.msra.mxu0 0.0
    %2247 = vmatprep.subr.mxu0 0.0
    %2248 = vmatpush1.msra.mxu0 0.0
    %2249 = vmatprep.subr.mxu0 0.0
    %2250 = vmatpush1.msra.mxu0 0.0
    %2251 = vmatprep.subr.mxu0 0.0
    %2252 = vmatpush1.msra.mxu0 0.0
    %2253 = vmatprep.subr.mxu0 0.0
    %2254 = vmatpush1.msra.mxu0 0.0
    %2255 = vmatprep.subr.mxu0 0.0
    %2256 = vmatpush1.msra.mxu0 0.0
    %2257 = vmatprep.subr.mxu0 0.0
    %2258 = vmatpush1.msra.mxu0 0.0
    %2259 = vmatprep.subr.mxu0 0.0
    %2260 = vmatpush1.msra.mxu0 0.0
    %2261 = vmatprep.subr.mxu0 0.0
    %2262 = vmatpush1.msra.mxu0 0.0
    %2263 = vmatprep.subr.mxu0 0.0
    %2264 = vmatpush1.msra.mxu0 0.0
    %2265 = vmatprep.subr.mxu0 0.0
    %2266 = vmatpush1.msra.mxu0 0.0
    %2267 = vmatprep.subr.mxu0 0.0
    %2268 = vmatpush1.msra.mxu0 0.0
    %2269 = vmatprep.subr.mxu0 0.0
    %2270 = vmatpush1.msra.mxu0 0.0
    %2271 = vmatprep.subr.mxu0 0.0
    %2272 = vmatpush1.msra.mxu0 0.0
    %2273 = vmatprep.subr.mxu0 0.0
    %2274 = vmatpush1.msra.mxu0 0.0
    %2275 = vmatprep.subr.mxu0 0.0
    %2276 = vmatpush1.msra.mxu0 0.0
    %2277 = vmatprep.subr.mxu0 0.0
    %2278 = vmatpush1.msra.mxu0 0.0
    %2279 = vmatprep.subr.mxu0 0.0
    %2280 = vmatpush1.msra.mxu0 0.0
    %2281 = vmatprep.subr.mxu0 0.0
    %2282 = vmatpush1.msra.mxu0 0.0
    %2283 = vmatprep.subr.mxu0 0.0
    %2284 = vmatpush1.msra.mxu0 0.0
    %2285 = vmatprep.subr.mxu0 0.0
    %2286 = vmatpush1.msra.mxu0 0.0
    %2287 = vmatprep.subr.mxu0 0.0
    %2288 = vmatpush1.msra.mxu0 0.0
    %2289 = vmatprep.subr.mxu0 0.0
    %2290 = vmatpush1.msra.mxu0 0.0
    %2291 = vmatprep.subr.mxu0 0.0
    %2292 = vmatpush1.msra.mxu0 0.0
    %2293 = vmatprep.subr.mxu0 0.0
    %2294 = vmatpush1.msra.mxu0 0.0
    %2295 = vmatprep.subr.mxu0 0.0
    %2296 = vmatpush1.msra.mxu0 0.0
    %2297 = vmatprep.mubr.f32.mxu0 0.0
    %2298 = vmatmul.mubr.f32.gmra.mrb[0].mxu0 %v2228
    %v2299 = vpop.f32.mrb[0].mxu0
    %v2300 = vadd.f32 0.0, %v2299
    %v2301 = vpop.f32.mrb[0].mxu0
    %2302 = vmatprep.mubr.f32.mxu0 0.0
    %2303 = vmatmul.mubr.f32.gmra.mrb[0].mxu0 %v2231
    %v2304 = vpop.f32.mrb[0].mxu0
    %v2305 = vadd.f32 0.0, %v2304
    %v2306 = vpop.f32.mrb[0].mxu0
    %2307 = vdwg.mxu0
    %v2309 = vsel %vm415, %v2219, 0
    %v2312 = vsel %vm415, %v2224, 0
    %v2315 = vsel %vm415, %v2300, 0
    %v2318 = vsel %vm415, %v2305, 0
    %2320 = vmatprep.subr.mxu0 0.0
    %2321 = vmatpush1.msra.mxu0 %v113
    %2322 = vmatprep.subr.mxu0 0.0
    %2323 = vmatpush1.msra.mxu0 %v114
    %2324 = vmatprep.subr.mxu0 0.0
    %2325 = vmatpush1.msra.mxu0 0.0
    %2326 = vmatprep.subr.mxu0 0.0
    %2327 = vmatpush1.msra.mxu0 0.0
    %2328 = vmatprep.subr.mxu0 0.0
    %2329 = vmatpush1.msra.mxu0 0.0
    %2330 = vmatprep.subr.mxu0 0.0
    %2331 = vmatpush1.msra.mxu0 0.0
    %2332 = vmatprep.subr.mxu0 0.0
    %2333 = vmatpush1.msra.mxu0 0.0
    %2334 = vmatprep.subr.mxu0 0.0
    %2335 = vmatpush1.msra.mxu0 0.0
    %2336 = vmatprep.subr.mxu0 0.0
    %2337 = vmatpush1.msra.mxu0 0.0
    %2338 = vmatprep.subr.mxu0 0.0
    %2339 = vmatpush1.msra.mxu0 0.0
    %2340 = vmatprep.subr.mxu0 0.0
    %2341 = vmatpush1.msra.mxu0 0.0
    %2342 = vmatprep.subr.mxu0 0.0
    %2343 = vmatpush1.msra.mxu0 0.0
    %2344 = vmatprep.subr.mxu0 0.0
    %2345 = vmatpush1.msra.mxu0 0.0
    %2346 = vmatprep.subr.mxu0 0.0
    %2347 = vmatpush1.msra.mxu0 0.0
    %2348 = vmatprep.subr.mxu0 0.0
    %2349 = vmatpush1.msra.mxu0 0.0
    %2350 = vmatprep.subr.mxu0 0.0
    %2351 = vmatpush1.msra.mxu0 0.0
    %2352 = vmatprep.subr.mxu0 0.0
    %2353 = vmatpush1.msra.mxu0 0.0
    %2354 = vmatprep.subr.mxu0 0.0
    %2355 = vmatpush1.msra.mxu0 0.0
    %2356 = vmatprep.subr.mxu0 0.0
    %2357 = vmatpush1.msra.mxu0 0.0
    %2358 = vmatprep.subr.mxu0 0.0
    %2359 = vmatpush1.msra.mxu0 0.0
    %2360 = vmatprep.subr.mxu0 0.0
    %2361 = vmatpush1.msra.mxu0 0.0
    %2362 = vmatprep.subr.mxu0 0.0
    %2363 = vmatpush1.msra.mxu0 0.0
    %2364 = vmatprep.subr.mxu0 0.0
    %2365 = vmatpush1.msra.mxu0 0.0
    %2366 = vmatprep.subr.mxu0 0.0
    %2367 = vmatpush1.msra.mxu0 0.0
    %2368 = vmatprep.subr.mxu0 0.0
    %2369 = vmatpush1.msra.mxu0 0.0
    %2370 = vmatprep.subr.mxu0 0.0
    %2371 = vmatpush1.msra.mxu0 0.0
    %2372 = vmatprep.subr.mxu0 0.0
    %2373 = vmatpush1.msra.mxu0 0.0
    %2374 = vmatprep.subr.mxu0 0.0
    %2375 = vmatpush1.msra.mxu0 0.0
    %2376 = vmatprep.subr.mxu0 0.0
    %2377 = vmatpush1.msra.mxu0 0.0
    %2378 = vmatprep.subr.mxu0 0.0
    %2379 = vmatpush1.msra.mxu0 0.0
    %2380 = vmatprep.subr.mxu0 0.0
    %2381 = vmatpush1.msra.mxu0 0.0
    %2382 = vmatprep.subr.mxu0 0.0
    %2383 = vmatpush1.msra.mxu0 0.0
    %2384 = vmatprep.mubr.f32.mxu0 0.0
    %2385 = vmatmul.mubr.f32.gmra.mrb[0].mxu0 %v2309
    %v2386 = vpop.f32.mrb[0].mxu0
    %v2387 = vadd.f32 0.0, %v2386
    %v2388 = vpop.f32.mrb[0].mxu0
    %2389 = vmatprep.mubr.f32.mxu0 0.0
    %2390 = vmatmul.mubr.f32.gmra.mrb[0].mxu0 %v2312
    %v2391 = vpop.f32.mrb[0].mxu0
    %v2392 = vadd.f32 0.0, %v2391
    %v2393 = vpop.f32.mrb[0].mxu0
    %2394 = vmatprep.mubr.f32.mxu0 0.0
    %2395 = vmatmul.mubr.f32.gmra.mrb[0].mxu0 %v2315
    %v2396 = vpop.f32.mrb[0].mxu0
    %v2397 = vadd.f32 0.0, %v2396
    %v2398 = vpop.f32.mrb[0].mxu0
    %2399 = vmatprep.mubr.f32.mxu0 0.0
    %2400 = vmatmul.mubr.f32.gmra.mrb[0].mxu0 %v2318
    %v2401 = vpop.f32.mrb[0].mxu0
    %v2402 = vadd.f32 0.0, %v2401
    %v2403 = vpop.f32.mrb[0].mxu0
    %2404 = vdwg.mxu0
    %v2405 = vadd.f32 %v1633, %v2387
    %v2406 = vadd.f32 %v1638, %v2392
    %v2407 = vadd.f32 %v1643, %v2397
    %v2408 = vadd.f32 %v1648, %v2402
    %v2410 = vlaneseq
    %v2411 = vshrl.u32 %v2410, 7
    %v2412 = vsub.s32 0, %v2411
    %v2413 = vrot.slane %v120, %v2412
    %2415 = vmatprep.subr.mxu0 0.0
    %2416 = vmatpush1.msra.mxu0 %v73
    %2417 = vmatprep.subr.mxu0 0.0
    %2418 = vmatpush1.msra.mxu0 %v74
    %2419 = vmatprep.subr.mxu0 0.0
    %2420 = vmatpush1.msra.mxu0 %v75
    %2421 = vmatprep.subr.mxu0 0.0
    %2422 = vmatpush1.msra.mxu0 %v76
    %2423 = vmatprep.subr.mxu0 0.0
    %2424 = vmatpush1.msra.mxu0 0.0
    %2425 = vmatprep.subr.mxu0 0.0
    %2426 = vmatpush1.msra.mxu0 0.0
    %2427 = vmatprep.subr.mxu0 0.0
    %2428 = vmatpush1.msra.mxu0 0.0
    %2429 = vmatprep.subr.mxu0 0.0
    %2430 = vmatpush1.msra.mxu0 0.0
    %2431 = vmatprep.subr.mxu0 0.0
    %2432 = vmatpush1.msra.mxu0 0.0
    %2433 = vmatprep.subr.mxu0 0.0
    %2434 = vmatpush1.msra.mxu0 0.0
    %2435 = vmatprep.subr.mxu0 0.0
    %2436 = vmatpush1.msra.mxu0 0.0
    %2437 = vmatprep.subr.mxu0 0.0
    %2438 = vmatpush1.msra.mxu0 0.0
    %2439 = vmatprep.subr.mxu0 0.0
    %2440 = vmatpush1.msra.mxu0 0.0
    %2441 = vmatprep.subr.mxu0 0.0
    %2442 = vmatpush1.msra.mxu0 0.0
    %2443 = vmatprep.subr.mxu0 0.0
    %2444 = vmatpush1.msra.mxu0 0.0
    %2445 = vmatprep.subr.mxu0 0.0
    %2446 = vmatpush1.msra.mxu0 0.0
    %2447 = vmatprep.subr.mxu0 0.0
    %2448 = vmatpush1.msra.mxu0 0.0
    %2449 = vmatprep.subr.mxu0 0.0
    %2450 = vmatpush1.msra.mxu0 0.0
    %2451 = vmatprep.subr.mxu0 0.0
    %2452 = vmatpush1.msra.mxu0 0.0
    %2453 = vmatprep.subr.mxu0 0.0
    %2454 = vmatpush1.msra.mxu0 0.0
    %2455 = vmatprep.subr.mxu0 0.0
    %2456 = vmatpush1.msra.mxu0 0.0
    %2457 = vmatprep.subr.mxu0 0.0
    %2458 = vmatpush1.msra.mxu0 0.0
    %2459 = vmatprep.subr.mxu0 0.0
    %2460 = vmatpush1.msra.mxu0 0.0
    %2461 = vmatprep.subr.mxu0 0.0
    %2462 = vmatpush1.msra.mxu0 0.0
    %2463 = vmatprep.subr.mxu0 0.0
    %2464 = vmatpush1.msra.mxu0 0.0
    %2465 = vmatprep.subr.mxu0 0.0
    %2466 = vmatpush1.msra.mxu0 0.0
    %2467 = vmatprep.subr.mxu0 0.0
    %2468 = vmatpush1.msra.mxu0 0.0
    %2469 = vmatprep.subr.mxu0 0.0
    %2470 = vmatpush1.msra.mxu0 0.0
    %2471 = vmatprep.subr.mxu0 0.0
    %2472 = vmatpush1.msra.mxu0 0.0
    %2473 = vmatprep.subr.mxu0 0.0
    %2474 = vmatpush1.msra.mxu0 0.0
    %2475 = vmatprep.subr.mxu0 0.0
    %2476 = vmatpush1.msra.mxu0 0.0
    %2477 = vmatprep.subr.mxu0 0.0
    %2478 = vmatpush1.msra.mxu0 0.0
    %2479 = vmatprep.mubr.f32.mxu0 0.0
    %2480 = vmatmul.mubr.f32.gmra.mrb[0].mxu0 %v137
    %v2481 = vpop.f32.mrb[0].mxu0
    %v2482 = vadd.f32 %v2413, %v2481
    %v2483 = vpop.f32.mrb[0].mxu0
    %2484 = vmatprep.mubr.f32.mxu0 0.0
    %2485 = vmatmul.mubr.f32.gmra.mrb[0].mxu0 %v140
    %v2486 = vpop.f32.mrb[0].mxu0
    %v2487 = vadd.f32 %v2413, %v2486
    %v2488 = vpop.f32.mrb[0].mxu0
    %2489 = vmatprep.mubr.f32.mxu0 0.0
    %2490 = vmatmul.mubr.f32.gmra.mrb[0].mxu0 %v143
    %v2491 = vpop.f32.mrb[0].mxu0
    %v2492 = vadd.f32 %v2413, %v2491
    %v2493 = vpop.f32.mrb[0].mxu0
    %2494 = vmatprep.mubr.f32.mxu0 0.0
    %2495 = vmatmul.mubr.f32.gmra.mrb[0].mxu0 %v146
    %v2496 = vpop.f32.mrb[0].mxu0
    %v2497 = vadd.f32 %v2413, %v2496
    %v2498 = vpop.f32.mrb[0].mxu0
    %2499 = vdwg.mxu0
    %v2501 = vlaneseq
    %v2502 = vshrl.u32 %v2501, 7
    %v2503 = vsub.s32 0, %v2502
    %v2504 = vrot.slane %v124, %v2503
    %2506 = vmatprep.subr.mxu0 0.0
    %2507 = vmatpush1.msra.mxu0 %v89
    %2508 = vmatprep.subr.mxu0 0.0
    %2509 = vmatpush1.msra.mxu0 %v90
    %2510 = vmatprep.subr.mxu0 0.0
    %2511 = vmatpush1.msra.mxu0 %v91
    %2512 = vmatprep.subr.mxu0 0.0
    %2513 = vmatpush1.msra.mxu0 %v92
    %2514 = vmatprep.subr.mxu0 0.0
    %2515 = vmatpush1.msra.mxu0 0.0
    %2516 = vmatprep.subr.mxu0 0.0
    %2517 = vmatpush1.msra.mxu0 0.0
    %2518 = vmatprep.subr.mxu0 0.0
    %2519 = vmatpush1.msra.mxu0 0.0
    %2520 = vmatprep.subr.mxu0 0.0
    %2521 = vmatpush1.msra.mxu0 0.0
    %2522 = vmatprep.subr.mxu0 0.0
    %2523 = vmatpush1.msra.mxu0 0.0
    %2524 = vmatprep.subr.mxu0 0.0
    %2525 = vmatpush1.msra.mxu0 0.0
    %2526 = vmatprep.subr.mxu0 0.0
    %2527 = vmatpush1.msra.mxu0 0.0
    %2528 = vmatprep.subr.mxu0 0.0
    %2529 = vmatpush1.msra.mxu0 0.0
    %2530 = vmatprep.subr.mxu0 0.0
    %2531 = vmatpush1.msra.mxu0 0.0
    %2532 = vmatprep.subr.mxu0 0.0
    %2533 = vmatpush1.msra.mxu0 0.0
    %2534 = vmatprep.subr.mxu0 0.0
    %2535 = vmatpush1.msra.mxu0 0.0
    %2536 = vmatprep.subr.mxu0 0.0
    %2537 = vmatpush1.msra.mxu0 0.0
    %2538 = vmatprep.subr.mxu0 0.0
    %2539 = vmatpush1.msra.mxu0 0.0
    %2540 = vmatprep.subr.mxu0 0.0
    %2541 = vmatpush1.msra.mxu0 0.0
    %2542 = vmatprep.subr.mxu0 0.0
    %2543 = vmatpush1.msra.mxu0 0.0
    %2544 = vmatprep.subr.mxu0 0.0
    %2545 = vmatpush1.msra.mxu0 0.0
    %2546 = vmatprep.subr.mxu0 0.0
    %2547 = vmatpush1.msra.mxu0 0.0
    %2548 = vmatprep.subr.mxu0 0.0
    %2549 = vmatpush1.msra.mxu0 0.0
    %2550 = vmatprep.subr.mxu0 0.0
    %2551 = vmatpush1.msra.mxu0 0.0
    %2552 = vmatprep.subr.mxu0 0.0
    %2553 = vmatpush1.msra.mxu0 0.0
    %2554 = vmatprep.subr.mxu0 0.0
    %2555 = vmatpush1.msra.mxu0 0.0
    %2556 = vmatprep.subr.mxu0 0.0
    %2557 = vmatpush1.msra.mxu0 0.0
    %2558 = vmatprep.subr.mxu0 0.0
    %2559 = vmatpush1.msra.mxu0 0.0
    %2560 = vmatprep.subr.mxu0 0.0
    %2561 = vmatpush1.msra.mxu0 0.0
    %2562 = vmatprep.subr.mxu0 0.0
    %2563 = vmatpush1.msra.mxu0 0.0
    %2564 = vmatprep.subr.mxu0 0.0
    %2565 = vmatpush1.msra.mxu0 0.0
    %2566 = vmatprep.subr.mxu0 0.0
    %2567 = vmatpush1.msra.mxu0 0.0
    %2568 = vmatprep.subr.mxu0 0.0
    %2569 = vmatpush1.msra.mxu0 0.0
    %2570 = vmatprep.mubr.f32.mxu0 0.0
    %2571 = vmatmul.mubr.f32.gmra.mrb[0].mxu0 %v137
    %v2572 = vpop.f32.mrb[0].mxu0
    %v2573 = vadd.f32 %v2504, %v2572
    %v2574 = vpop.f32.mrb[0].mxu0
    %2575 = vmatprep.mubr.f32.mxu0 0.0
    %2576 = vmatmul.mubr.f32.gmra.mrb[0].mxu0 %v140
    %v2577 = vpop.f32.mrb[0].mxu0
    %v2578 = vadd.f32 %v2504, %v2577
    %v2579 = vpop.f32.mrb[0].mxu0
    %2580 = vmatprep.mubr.f32.mxu0 0.0
    %2581 = vmatmul.mubr.f32.gmra.mrb[0].mxu0 %v143
    %v2582 = vpop.f32.mrb[0].mxu0
    %v2583 = vadd.f32 %v2504, %v2582
    %v2584 = vpop.f32.mrb[0].mxu0
    %2585 = vmatprep.mubr.f32.mxu0 0.0
    %2586 = vmatmul.mubr.f32.gmra.mrb[0].mxu0 %v146
    %v2587 = vpop.f32.mrb[0].mxu0
    %v2588 = vadd.f32 %v2504, %v2587
    %v2589 = vpop.f32.mrb[0].mxu0
    %2590 = vdwg.mxu0
    %v2592 = vlaneseq
    %v2593 = vshrl.u32 %v2592, 7
    %v2594 = vsub.s32 0, %v2593
    %v2595 = vrot.slane %v128, %v2594
    %2597 = vmatprep.subr.mxu0 0.0
    %2598 = vmatpush1.msra.mxu0 %v105
    %2599 = vmatprep.subr.mxu0 0.0
    %2600 = vmatpush1.msra.mxu0 %v106
    %2601 = vmatprep.subr.mxu0 0.0
    %2602 = vmatpush1.msra.mxu0 %v107
    %2603 = vmatprep.subr.mxu0 0.0
    %2604 = vmatpush1.msra.mxu0 %v108
    %2605 = vmatprep.subr.mxu0 0.0
    %2606 = vmatpush1.msra.mxu0 0.0
    %2607 = vmatprep.subr.mxu0 0.0
    %2608 = vmatpush1.msra.mxu0 0.0
    %2609 = vmatprep.subr.mxu0 0.0
    %2610 = vmatpush1.msra.mxu0 0.0
    %2611 = vmatprep.subr.mxu0 0.0
    %2612 = vmatpush1.msra.mxu0 0.0
    %2613 = vmatprep.subr.mxu0 0.0
    %2614 = vmatpush1.msra.mxu0 0.0
    %2615 = vmatprep.subr.mxu0 0.0
    %2616 = vmatpush1.msra.mxu0 0.0
    %2617 = vmatprep.subr.mxu0 0.0
    %2618 = vmatpush1.msra.mxu0 0.0
    %2619 = vmatprep.subr.mxu0 0.0
    %2620 = vmatpush1.msra.mxu0 0.0
    %2621 = vmatprep.subr.mxu0 0.0
    %2622 = vmatpush1.msra.mxu0 0.0
    %2623 = vmatprep.subr.mxu0 0.0
    %2624 = vmatpush1.msra.mxu0 0.0
    %2625 = vmatprep.subr.mxu0 0.0
    %2626 = vmatpush1.msra.mxu0 0.0
    %2627 = vmatprep.subr.mxu0 0.0
    %2628 = vmatpush1.msra.mxu0 0.0
    %2629 = vmatprep.subr.mxu0 0.0
    %2630 = vmatpush1.msra.mxu0 0.0
    %2631 = vmatprep.subr.mxu0 0.0
    %2632 = vmatpush1.msra.mxu0 0.0
    %2633 = vmatprep.subr.mxu0 0.0
    %2634 = vmatpush1.msra.mxu0 0.0
    %2635 = vmatprep.subr.mxu0 0.0
    %2636 = vmatpush1.msra.mxu0 0.0
    %2637 = vmatprep.subr.mxu0 0.0
    %2638 = vmatpush1.msra.mxu0 0.0
    %2639 = vmatprep.subr.mxu0 0.0
    %2640 = vmatpush1.msra.mxu0 0.0
    %2641 = vmatprep.subr.mxu0 0.0
    %2642 = vmatpush1.msra.mxu0 0.0
    %2643 = vmatprep.subr.mxu0 0.0
    %2644 = vmatpush1.msra.mxu0 0.0
    %2645 = vmatprep.subr.mxu0 0.0
    %2646 = vmatpush1.msra.mxu0 0.0
    %2647 = vmatprep.subr.mxu0 0.0
    %2648 = vmatpush1.msra.mxu0 0.0
    %2649 = vmatprep.subr.mxu0 0.0
    %2650 = vmatpush1.msra.mxu0 0.0
    %2651 = vmatprep.subr.mxu0 0.0
    %2652 = vmatpush1.msra.mxu0 0.0
    %2653 = vmatprep.subr.mxu0 0.0
    %2654 = vmatpush1.msra.mxu0 0.0
    %2655 = vmatprep.subr.mxu0 0.0
    %2656 = vmatpush1.msra.mxu0 0.0
    %2657 = vmatprep.subr.mxu0 0.0
    %2658 = vmatpush1.msra.mxu0 0.0
    %2659 = vmatprep.subr.mxu0 0.0
    %2660 = vmatpush1.msra.mxu0 0.0
    %2661 = vmatprep.mubr.f32.mxu0 0.0
    %2662 = vmatmul.mubr.f32.gmra.mrb[0].mxu0 %v137
    %v2663 = vpop.f32.mrb[0].mxu0
    %v2664 = vadd.f32 %v2595, %v2663
    %v2665 = vpop.f32.mrb[0].mxu0
    %2666 = vmatprep.mubr.f32.mxu0 0.0
    %2667 = vmatmul.mubr.f32.gmra.mrb[0].mxu0 %v140
    %v2668 = vpop.f32.mrb[0].mxu0
    %v2669 = vadd.f32 %v2595, %v2668
    %v2670 = vpop.f32.mrb[0].mxu0
    %2671 = vmatprep.mubr.f32.mxu0 0.0
    %2672 = vmatmul.mubr.f32.gmra.mrb[0].mxu0 %v143
    %v2673 = vpop.f32.mrb[0].mxu0
    %v2674 = vadd.f32 %v2595, %v2673
    %v2675 = vpop.f32.mrb[0].mxu0
    %2676 = vmatprep.mubr.f32.mxu0 0.0
    %2677 = vmatmul.mubr.f32.gmra.mrb[0].mxu0 %v146
    %v2678 = vpop.f32.mrb[0].mxu0
    %v2679 = vadd.f32 %v2595, %v2678
    %v2680 = vpop.f32.mrb[0].mxu0
    %2681 = vdwg.mxu0
    %v2683 = vsel %vm415, %v2482, 0
    %v2686 = vsel %vm415, %v2487, 0
    %v2689 = vsel %vm415, %v2573, 0
    %v2692 = vsel %vm415, %v2578, 0
    %2694 = vmatprep.subr.mxu0 0.0
    %2695 = vmatpush1.xpose.msra.mxu0 %v2689
    %2696 = vmatprep.subr.mxu0 0.0
    %2697 = vmatpush1.xpose.msra.mxu0 %v2692
    %2698 = vmatprep.subr.mxu0 0.0
    %2699 = vmatpush1.xpose.msra.mxu0 0.0
    %2700 = vmatprep.subr.mxu0 0.0
    %2701 = vmatpush1.xpose.msra.mxu0 0.0
    %2702 = vmatprep.subr.mxu0 0.0
    %2703 = vmatpush1.xpose.msra.mxu0 0.0
    %2704 = vmatprep.subr.mxu0 0.0
    %2705 = vmatpush1.xpose.msra.mxu0 0.0
    %2706 = vmatprep.subr.mxu0 0.0
    %2707 = vmatpush1.xpose.msra.mxu0 0.0
    %2708 = vmatprep.subr.mxu0 0.0
    %2709 = vmatpush1.xpose.msra.mxu0 0.0
    %2710 = vmatprep.subr.mxu0 0.0
    %2711 = vmatpush1.xpose.msra.mxu0 0.0
    %2712 = vmatprep.subr.mxu0 0.0
    %2713 = vmatpush1.xpose.msra.mxu0 0.0
    %2714 = vmatprep.subr.mxu0 0.0
    %2715 = vmatpush1.xpose.msra.mxu0 0.0
    %2716 = vmatprep.subr.mxu0 0.0
    %2717 = vmatpush1.xpose.msra.mxu0 0.0
    %2718 = vmatprep.subr.mxu0 0.0
    %2719 = vmatpush1.xpose.msra.mxu0 0.0
    %2720 = vmatprep.subr.mxu0 0.0
    %2721 = vmatpush1.xpose.msra.mxu0 0.0
    %2722 = vmatprep.subr.mxu0 0.0
    %2723 = vmatpush1.xpose.msra.mxu0 0.0
    %2724 = vmatprep.subr.mxu0 0.0
    %2725 = vmatpush1.xpose.msra.mxu0 0.0
    %2726 = vmatprep.subr.mxu0 0.0
    %2727 = vmatpush1.xpose.msra.mxu0 0.0
    %2728 = vmatprep.subr.mxu0 0.0
    %2729 = vmatpush1.xpose.msra.mxu0 0.0
    %2730 = vmatprep.subr.mxu0 0.0
    %2731 = vmatpush1.xpose.msra.mxu0 0.0
    %2732 = vmatprep.subr.mxu0 0.0
    %2733 = vmatpush1.xpose.msra.mxu0 0.0
    %2734 = vmatprep.subr.mxu0 0.0
    %2735 = vmatpush1.xpose.msra.mxu0 0.0
    %2736 = vmatprep.subr.mxu0 0.0
    %2737 = vmatpush1.xpose.msra.mxu0 0.0
    %2738 = vmatprep.subr.mxu0 0.0
    %2739 = vmatpush1.xpose.msra.mxu0 0.0
    %2740 = vmatprep.subr.mxu0 0.0
    %2741 = vmatpush1.xpose.msra.mxu0 0.0
    %2742 = vmatprep.subr.mxu0 0.0
    %2743 = vmatpush1.xpose.msra.mxu0 0.0
    %2744 = vmatprep.subr.mxu0 0.0
    %2745 = vmatpush1.xpose.msra.mxu0 0.0
    %2746 = vmatprep.subr.mxu0 0.0
    %2747 = vmatpush1.xpose.msra.mxu0 0.0
    %2748 = vmatprep.subr.mxu0 0.0
    %2749 = vmatpush1.xpose.msra.mxu0 0.0
    %2750 = vmatprep.subr.mxu0 0.0
    %2751 = vmatpush1.xpose.msra.mxu0 0.0
    %2752 = vmatprep.subr.mxu0 0.0
    %2753 = vmatpush1.xpose.msra.mxu0 0.0
    %2754 = vmatprep.subr.mxu0 0.0
    %2755 = vmatpush1.xpose.msra.mxu0 0.0
    %2756 = vmatprep.subr.mxu0 0.0
    %2757 = vmatpush1.xpose.msra.mxu0 0.0
    %2758 = vmatprep.mubr.f32.mxu0 0.0
    %2759 = vmatmul.mubr.f32.gmra.mrb[0].mxu0 %v2683
    %v2760 = vpop.f32.mrb[0].mxu0
    %v2761 = vadd.f32 0.0, %v2760
    %v2762 = vpop.f32.mrb[0].mxu0
    %2763 = vmatprep.mubr.f32.mxu0 0.0
    %2764 = vmatmul.mubr.f32.gmra.mrb[0].mxu0 %v2686
    %v2765 = vpop.f32.mrb[0].mxu0
    %v2766 = vadd.f32 0.0, %v2765
    %v2767 = vpop.f32.mrb[0].mxu0
    %2768 = vdwg.mxu0
    %v2770 = vsel %vm415, %v2492, 0
    %v2773 = vsel %vm415, %v2497, 0
    %v2776 = vsel %vm415, %v2583, 0
    %v2779 = vsel %vm415, %v2588, 0
    %2781 = vmatprep.subr.mxu0 0.0
    %2782 = vmatpush1.xpose.msra.mxu0 %v2776
    %2783 = vmatprep.subr.mxu0 0.0
    %2784 = vmatpush1.xpose.msra.mxu0 %v2779
    %2785 = vmatprep.subr.mxu0 0.0
    %2786 = vmatpush1.xpose.msra.mxu0 0.0
    %2787 = vmatprep.subr.mxu0 0.0
    %2788 = vmatpush1.xpose.msra.mxu0 0.0
    %2789 = vmatprep.subr.mxu0 0.0
    %2790 = vmatpush1.xpose.msra.mxu0 0.0
    %2791 = vmatprep.subr.mxu0 0.0
    %2792 = vmatpush1.xpose.msra.mxu0 0.0
    %2793 = vmatprep.subr.mxu0 0.0
    %2794 = vmatpush1.xpose.msra.mxu0 0.0
    %2795 = vmatprep.subr.mxu0 0.0
    %2796 = vmatpush1.xpose.msra.mxu0 0.0
    %2797 = vmatprep.subr.mxu0 0.0
    %2798 = vmatpush1.xpose.msra.mxu0 0.0
    %2799 = vmatprep.subr.mxu0 0.0
    %2800 = vmatpush1.xpose.msra.mxu0 0.0
    %2801 = vmatprep.subr.mxu0 0.0
    %2802 = vmatpush1.xpose.msra.mxu0 0.0
    %2803 = vmatprep.subr.mxu0 0.0
    %2804 = vmatpush1.xpose.msra.mxu0 0.0
    %2805 = vmatprep.subr.mxu0 0.0
    %2806 = vmatpush1.xpose.msra.mxu0 0.0
    %2807 = vmatprep.subr.mxu0 0.0
    %2808 = vmatpush1.xpose.msra.mxu0 0.0
    %2809 = vmatprep.subr.mxu0 0.0
    %2810 = vmatpush1.xpose.msra.mxu0 0.0
    %2811 = vmatprep.subr.mxu0 0.0
    %2812 = vmatpush1.xpose.msra.mxu0 0.0
    %2813 = vmatprep.subr.mxu0 0.0
    %2814 = vmatpush1.xpose.msra.mxu0 0.0
    %2815 = vmatprep.subr.mxu0 0.0
    %2816 = vmatpush1.xpose.msra.mxu0 0.0
    %2817 = vmatprep.subr.mxu0 0.0
    %2818 = vmatpush1.xpose.msra.mxu0 0.0
    %2819 = vmatprep.subr.mxu0 0.0
    %2820 = vmatpush1.xpose.msra.mxu0 0.0
    %2821 = vmatprep.subr.mxu0 0.0
    %2822 = vmatpush1.xpose.msra.mxu0 0.0
    %2823 = vmatprep.subr.mxu0 0.0
    %2824 = vmatpush1.xpose.msra.mxu0 0.0
    %2825 = vmatprep.subr.mxu0 0.0
    %2826 = vmatpush1.xpose.msra.mxu0 0.0
    %2827 = vmatprep.subr.mxu0 0.0
    %2828 = vmatpush1.xpose.msra.mxu0 0.0
    %2829 = vmatprep.subr.mxu0 0.0
    %2830 = vmatpush1.xpose.msra.mxu0 0.0
    %2831 = vmatprep.subr.mxu0 0.0
    %2832 = vmatpush1.xpose.msra.mxu0 0.0
    %2833 = vmatprep.subr.mxu0 0.0
    %2834 = vmatpush1.xpose.msra.mxu0 0.0
    %2835 = vmatprep.subr.mxu0 0.0
    %2836 = vmatpush1.xpose.msra.mxu0 0.0
    %2837 = vmatprep.subr.mxu0 0.0
    %2838 = vmatpush1.xpose.msra.mxu0 0.0
    %2839 = vmatprep.subr.mxu0 0.0
    %2840 = vmatpush1.xpose.msra.mxu0 0.0
    %2841 = vmatprep.subr.mxu0 0.0
    %2842 = vmatpush1.xpose.msra.mxu0 0.0
    %2843 = vmatprep.subr.mxu0 0.0
    %2844 = vmatpush1.xpose.msra.mxu0 0.0
    %2845 = vmatprep.mubr.f32.mxu0 0.0
    %2846 = vmatmul.mubr.f32.gmra.mrb[0].mxu0 %v2770
    %v2847 = vpop.f32.mrb[0].mxu0
    %v2848 = vadd.f32 0.0, %v2847
    %v2849 = vpop.f32.mrb[0].mxu0
    %2850 = vmatprep.mubr.f32.mxu0 0.0
    %2851 = vmatmul.mubr.f32.gmra.mrb[0].mxu0 %v2773
    %v2852 = vpop.f32.mrb[0].mxu0
    %v2853 = vadd.f32 0.0, %v2852
    %v2854 = vpop.f32.mrb[0].mxu0
    %2855 = vdwg.mxu0
    %v2856 = vmul.f32 %v2761, 0.25
    %v2857 = vmul.f32 %v2766, 0.25
    %v2858 = vmul.f32 %v2848, 0.25
    %v2859 = vmul.f32 %v2853, 0.25
    %v2860 = vsel %vm415, %v2856, -inf
    %2861 = vmax.xlane.f32.xlu0 %v2860
    %v2862 = vpop.xlane.xlu0 %2861
    %v2863 = vsel %vm415, %v2857, -inf
    %2864 = vmax.xlane.f32.xlu0 %v2863
    %v2865 = vpop.xlane.xlu0 %2864
    %v2866 = vsel %vm415, %v2858, -inf
    %2867 = vmax.xlane.f32.xlu0 %v2866
    %v2868 = vpop.xlane.xlu0 %2867
    %v2869 = vsel %vm415, %v2859, -inf
    %2870 = vmax.xlane.f32.xlu0 %v2869
    %v2871 = vpop.xlane.xlu0 %2870
    %v2872 = vsub.f32 %v2856, %v2862
    %v2873 = vsub.f32 %v2857, %v2865
    %v2874 = vsub.f32 %v2858, %v2868
    %v2875 = vsub.f32 %v2859, %v2871
    %v2876 = vmul.f32 %v2872, 1.442695
    %v2877 = vpow.pop %v2876
    %v2878 = vmul.f32 %v2873, 1.442695
    %v2879 = vpow.pop %v2878
    %v2880 = vmul.f32 %v2874, 1.442695
    %v2881 = vpow.pop %v2880
    %v2882 = vmul.f32 %v2875, 1.442695
    %v2883 = vpow.pop %v2882
    %v2884 = vsel %vm415, %v2877, 0.0
    %2885 = vadd.xlane.f32.xlu0 %v2884
    %v2886 = vpop.xlane.xlu0 %2885
    %v2887 = vsel %vm415, %v2879, 0.0
    %2888 = vadd.xlane.f32.xlu0 %v2887
    %v2889 = vpop.xlane.xlu0 %2888
    %v2890 = vsel %vm415, %v2881, 0.0
    %2891 = vadd.xlane.f32.xlu0 %v2890
    %v2892 = vpop.xlane.xlu0 %2891
    %v2893 = vsel %vm415, %v2883, 0.0
    %2894 = vadd.xlane.f32.xlu0 %v2893
    %v2895 = vpop.xlane.xlu0 %2894
    %v2896 = vrcp.pop %v2886
    %v2897 = vmul.f32 %v2877, %v2896
    %v2898 = vrcp.pop %v2889
    %v2899 = vmul.f32 %v2879, %v2898
    %v2900 = vrcp.pop %v2892
    %v2901 = vmul.f32 %v2881, %v2900
    %v2902 = vrcp.pop %v2895
    %v2903 = vmul.f32 %v2883, %v2902
    %v2905 = vsel %vm415, %v2897, 0
    %v2908 = vsel %vm415, %v2899, 0
    %2910 = vmatprep.subr.mxu0 0.0
    %2911 = vmatpush1.msra.mxu0 %v2664
    %2912 = vmatprep.subr.mxu0 0.0
    %2913 = vmatpush1.msra.mxu0 %v2669
    %2914 = vmatprep.subr.mxu0 0.0
    %2915 = vmatpush1.msra.mxu0 0.0
    %2916 = vmatprep.subr.mxu0 0.0
    %2917 = vmatpush1.msra.mxu0 0.0
    %2918 = vmatprep.subr.mxu0 0.0
    %2919 = vmatpush1.msra.mxu0 0.0
    %2920 = vmatprep.subr.mxu0 0.0
    %2921 = vmatpush1.msra.mxu0 0.0
    %2922 = vmatprep.subr.mxu0 0.0
    %2923 = vmatpush1.msra.mxu0 0.0
    %2924 = vmatprep.subr.mxu0 0.0
    %2925 = vmatpush1.msra.mxu0 0.0
    %2926 = vmatprep.subr.mxu0 0.0
    %2927 = vmatpush1.msra.mxu0 0.0
    %2928 = vmatprep.subr.mxu0 0.0
    %2929 = vmatpush1.msra.mxu0 0.0
    %2930 = vmatprep.subr.mxu0 0.0
    %2931 = vmatpush1.msra.mxu0 0.0
    %2932 = vmatprep.subr.mxu0 0.0
    %2933 = vmatpush1.msra.mxu0 0.0
    %2934 = vmatprep.subr.mxu0 0.0
    %2935 = vmatpush1.msra.mxu0 0.0
    %2936 = vmatprep.subr.mxu0 0.0
    %2937 = vmatpush1.msra.mxu0 0.0
    %2938 = vmatprep.subr.mxu0 0.0
    %2939 = vmatpush1.msra.mxu0 0.0
    %2940 = vmatprep.subr.mxu0 0.0
    %2941 = vmatpush1.msra.mxu0 0.0
    %2942 = vmatprep.subr.mxu0 0.0
    %2943 = vmatpush1.msra.mxu0 0.0
    %2944 = vmatprep.subr.mxu0 0.0
    %2945 = vmatpush1.msra.mxu0 0.0
    %2946 = vmatprep.subr.mxu0 0.0
    %2947 = vmatpush1.msra.mxu0 0.0
    %2948 = vmatprep.subr.mxu0 0.0
    %2949 = vmatpush1.msra.mxu0 0.0
    %2950 = vmatprep.subr.mxu0 0.0
    %2951 = vmatpush1.msra.mxu0 0.0
    %2952 = vmatprep.subr.mxu0 0.0
    %2953 = vmatpush1.msra.mxu0 0.0
    %2954 = vmatprep.subr.mxu0 0.0
    %2955 = vmatpush1.msra.mxu0 0.0
    %2956 = vmatprep.subr.mxu0 0.0
    %2957 = vmatpush1.msra.mxu0 0.0
    %2958 = vmatprep.subr.mxu0 0.0
    %2959 = vmatpush1.msra.mxu0 0.0
    %2960 = vmatprep.subr.mxu0 0.0
    %2961 = vmatpush1.msra.mxu0 0.0
    %2962 = vmatprep.subr.mxu0 0.0
    %2963 = vmatpush1.msra.mxu0 0.0
    %2964 = vmatprep.subr.mxu0 0.0
    %2965 = vmatpush1.msra.mxu0 0.0
    %2966 = vmatprep.subr.mxu0 0.0
    %2967 = vmatpush1.msra.mxu0 0.0
    %2968 = vmatprep.subr.mxu0 0.0
    %2969 = vmatpush1.msra.mxu0 0.0
    %2970 = vmatprep.subr.mxu0 0.0
    %2971 = vmatpush1.msra.mxu0 0.0
    %2972 = vmatprep.subr.mxu0 0.0
    %2973 = vmatpush1.msra.mxu0 0.0
    %2974 = vmatprep.mubr.f32.mxu0 0.0
    %2975 = vmatmul.mubr.f32.gmra.mrb[0].mxu0 %v2905
    %v2976 = vpop.f32.mrb[0].mxu0
    %v2977 = vadd.f32 0.0, %v2976
    %v2978 = vpop.f32.mrb[0].mxu0
    %2979 = vmatprep.mubr.f32.mxu0 0.0
    %2980 = vmatmul.mubr.f32.gmra.mrb[0].mxu0 %v2908
    %v2981 = vpop.f32.mrb[0].mxu0
    %v2982 = vadd.f32 0.0, %v2981
    %v2983 = vpop.f32.mrb[0].mxu0
    %2984 = vdwg.mxu0
    %v2986 = vsel %vm415, %v2901, 0
    %v2989 = vsel %vm415, %v2903, 0
    %2991 = vmatprep.subr.mxu0 0.0
    %2992 = vmatpush1.msra.mxu0 %v2674
    %2993 = vmatprep.subr.mxu0 0.0
    %2994 = vmatpush1.msra.mxu0 %v2679
    %2995 = vmatprep.subr.mxu0 0.0
    %2996 = vmatpush1.msra.mxu0 0.0
    %2997 = vmatprep.subr.mxu0 0.0
    %2998 = vmatpush1.msra.mxu0 0.0
    %2999 = vmatprep.subr.mxu0 0.0
    %3000 = vmatpush1.msra.mxu0 0.0
    %3001 = vmatprep.subr.mxu0 0.0
    %3002 = vmatpush1.msra.mxu0 0.0
    %3003 = vmatprep.subr.mxu0 0.0
    %3004 = vmatpush1.msra.mxu0 0.0
    %3005 = vmatprep.subr.mxu0 0.0
    %3006 = vmatpush1.msra.mxu0 0.0
    %3007 = vmatprep.subr.mxu0 0.0
    %3008 = vmatpush1.msra.mxu0 0.0
    %3009 = vmatprep.subr.mxu0 0.0
    %3010 = vmatpush1.msra.mxu0 0.0
    %3011 = vmatprep.subr.mxu0 0.0
    %3012 = vmatpush1.msra.mxu0 0.0
    %3013 = vmatprep.subr.mxu0 0.0
    %3014 = vmatpush1.msra.mxu0 0.0
    %3015 = vmatprep.subr.mxu0 0.0
    %3016 = vmatpush1.msra.mxu0 0.0
    %3017 = vmatprep.subr.mxu0 0.0
    %3018 = vmatpush1.msra.mxu0 0.0
    %3019 = vmatprep.subr.mxu0 0.0
    %3020 = vmatpush1.msra.mxu0 0.0
    %3021 = vmatprep.subr.mxu0 0.0
    %3022 = vmatpush1.msra.mxu0 0.0
    %3023 = vmatprep.subr.mxu0 0.0
    %3024 = vmatpush1.msra.mxu0 0.0
    %3025 = vmatprep.subr.mxu0 0.0
    %3026 = vmatpush1.msra.mxu0 0.0
    %3027 = vmatprep.subr.mxu0 0.0
    %3028 = vmatpush1.msra.mxu0 0.0
    %3029 = vmatprep.subr.mxu0 0.0
    %3030 = vmatpush1.msra.mxu0 0.0
    %3031 = vmatprep.subr.mxu0 0.0
    %3032 = vmatpush1.msra.mxu0 0.0
    %3033 = vmatprep.subr.mxu0 0.0
    %3034 = vmatpush1.msra.mxu0 0.0
    %3035 = vmatprep.subr.mxu0 0.0
    %3036 = vmatpush1.msra.mxu0 0.0
    %3037 = vmatprep.subr.mxu0 0.0
    %3038 = vmatpush1.msra.mxu0 0.0
    %3039 = vmatprep.subr.mxu0 0.0
    %3040 = vmatpush1.msra.mxu0 0.0
    %3041 = vmatprep.subr.mxu0 0.0
    %3042 = vmatpush1.msra.mxu0 0.0
    %3043 = vmatprep.subr.mxu0 0.0
    %3044 = vmatpush1.msra.mxu0 0.0
    %3045 = vmatprep.subr.mxu0 0.0
    %3046 = vmatpush1.msra.mxu0 0.0
    %3047 = vmatprep.subr.mxu0 0.0
    %3048 = vmatpush1.msra.mxu0 0.0
    %3049 = vmatprep.subr.mxu0 0.0
    %3050 = vmatpush1.msra.mxu0 0.0
    %3051 = vmatprep.subr.mxu0 0.0
    %3052 = vmatpush1.msra.mxu0 0.0
    %3053 = vmatprep.subr.mxu0 0.0
    %3054 = vmatpush1.msra.mxu0 0.0
    %3055 = vmatprep.mubr.f32.mxu0 0.0
    %3056 = vmatmul.mubr.f32.gmra.mrb[0].mxu0 %v2986
    %v3057 = vpop.f32.mrb[0].mxu0
    %v3058 = vadd.f32 0.0, %v3057
    %v3059 = vpop.f32.mrb[0].mxu0
    %3060 = vmatprep.mubr.f32.mxu0 0.0
    %3061 = vmatmul.mubr.f32.gmra.mrb[0].mxu0 %v2989
    %v3062 = vpop.f32.mrb[0].mxu0
    %v3063 = vadd.f32 0.0, %v3062
    %v3064 = vpop.f32.mrb[0].mxu0
    %3065 = vdwg.mxu0
    %v3067 = vsel %vm415, %v2977, 0
    %v3070 = vsel %vm415, %v2982, 0
    %v3073 = vsel %vm415, %v3058, 0
    %v3076 = vsel %vm415, %v3063, 0
    %3078 = vmatprep.subr.mxu0 0.0
    %3079 = vmatpush1.msra.mxu0 %v115
    %3080 = vmatprep.subr.mxu0 0.0
    %3081 = vmatpush1.msra.mxu0 %v116
    %3082 = vmatprep.subr.mxu0 0.0
    %3083 = vmatpush1.msra.mxu0 0.0
    %3084 = vmatprep.subr.mxu0 0.0
    %3085 = vmatpush1.msra.mxu0 0.0
    %3086 = vmatprep.subr.mxu0 0.0
    %3087 = vmatpush1.msra.mxu0 0.0
    %3088 = vmatprep.subr.mxu0 0.0
    %3089 = vmatpush1.msra.mxu0 0.0
    %3090 = vmatprep.subr.mxu0 0.0
    %3091 = vmatpush1.msra.mxu0 0.0
    %3092 = vmatprep.subr.mxu0 0.0
    %3093 = vmatpush1.msra.mxu0 0.0
    %3094 = vmatprep.subr.mxu0 0.0
    %3095 = vmatpush1.msra.mxu0 0.0
    %3096 = vmatprep.subr.mxu0 0.0
    %3097 = vmatpush1.msra.mxu0 0.0
    %3098 = vmatprep.subr.mxu0 0.0
    %3099 = vmatpush1.msra.mxu0 0.0
    %3100 = vmatprep.subr.mxu0 0.0
    %3101 = vmatpush1.msra.mxu0 0.0
    %3102 = vmatprep.subr.mxu0 0.0
    %3103 = vmatpush1.msra.mxu0 0.0
    %3104 = vmatprep.subr.mxu0 0.0
    %3105 = vmatpush1.msra.mxu0 0.0
    %3106 = vmatprep.subr.mxu0 0.0
    %3107 = vmatpush1.msra.mxu0 0.0
    %3108 = vmatprep.subr.mxu0 0.0
    %3109 = vmatpush1.msra.mxu0 0.0
    %3110 = vmatprep.subr.mxu0 0.0
    %3111 = vmatpush1.msra.mxu0 0.0
    %3112 = vmatprep.subr.mxu0 0.0
    %3113 = vmatpush1.msra.mxu0 0.0
    %3114 = vmatprep.subr.mxu0 0.0
    %3115 = vmatpush1.msra.mxu0 0.0
    %3116 = vmatprep.subr.mxu0 0.0
    %3117 = vmatpush1.msra.mxu0 0.0
    %3118 = vmatprep.subr.mxu0 0.0
    %3119 = vmatpush1.msra.mxu0 0.0
    %3120 = vmatprep.subr.mxu0 0.0
    %3121 = vmatpush1.msra.mxu0 0.0
    %3122 = vmatprep.subr.mxu0 0.0
    %3123 = vmatpush1.msra.mxu0 0.0
    %3124 = vmatprep.subr.mxu0 0.0
    %3125 = vmatpush1.msra.mxu0 0.0
    %3126 = vmatprep.subr.mxu0 0.0
    %3127 = vmatpush1.msra.mxu0 0.0
    %3128 = vmatprep.subr.mxu0 0.0
    %3129 = vmatpush1.msra.mxu0 0.0
    %3130 = vmatprep.subr.mxu0 0.0
    %3131 = vmatpush1.msra.mxu0 0.0
    %3132 = vmatprep.subr.mxu0 0.0
    %3133 = vmatpush1.msra.mxu0 0.0
    %3134 = vmatprep.subr.mxu0 0.0
    %3135 = vmatpush1.msra.mxu0 0.0
    %3136 = vmatprep.subr.mxu0 0.0
    %3137 = vmatpush1.msra.mxu0 0.0
    %3138 = vmatprep.subr.mxu0 0.0
    %3139 = vmatpush1.msra.mxu0 0.0
    %3140 = vmatprep.subr.mxu0 0.0
    %3141 = vmatpush1.msra.mxu0 0.0
    %3142 = vmatprep.mubr.f32.mxu0 0.0
    %3143 = vmatmul.mubr.f32.gmra.mrb[0].mxu0 %v3067
    %v3144 = vpop.f32.mrb[0].mxu0
    %v3145 = vadd.f32 0.0, %v3144
    %v3146 = vpop.f32.mrb[0].mxu0
    %3147 = vmatprep.mubr.f32.mxu0 0.0
    %3148 = vmatmul.mubr.f32.gmra.mrb[0].mxu0 %v3070
    %v3149 = vpop.f32.mrb[0].mxu0
    %v3150 = vadd.f32 0.0, %v3149
    %v3151 = vpop.f32.mrb[0].mxu0
    %3152 = vmatprep.mubr.f32.mxu0 0.0
    %3153 = vmatmul.mubr.f32.gmra.mrb[0].mxu0 %v3073
    %v3154 = vpop.f32.mrb[0].mxu0
    %v3155 = vadd.f32 0.0, %v3154
    %v3156 = vpop.f32.mrb[0].mxu0
    %3157 = vmatprep.mubr.f32.mxu0 0.0
    %3158 = vmatmul.mubr.f32.gmra.mrb[0].mxu0 %v3076
    %v3159 = vpop.f32.mrb[0].mxu0
    %v3160 = vadd.f32 0.0, %v3159
    %v3161 = vpop.f32.mrb[0].mxu0
    %3162 = vdwg.mxu0
    %v3163 = vadd.f32 %v2405, %v3145
    %v3164 = vadd.f32 %v2406, %v3150
    %v3165 = vadd.f32 %v2407, %v3155
    %v3166 = vadd.f32 %v2408, %v3160
    %v3167 = vadd.f32 %v57, %v3163
    %v3168 = vadd.f32 %v58, %v3164
    %v3169 = vadd.f32 %v59, %v3165
    %v3170 = vadd.f32 %v60, %v3166
    %v3171 = vld [vmem:[%s8] sm:$0x1]
    %v3173 = vlaneseq
    %v3174 = vshrl.u32 %v3173, 7
    %v3175 = vsub.s32 0, %v3174
    %v3176 = vrot.slane %v3171, %v3175
    %v3178 = vadd.f32 %v3167, %v3176
    %v3179 = vadd.f32 %v3168, %v3176
    %v3180 = vadd.f32 %v3169, %v3176
    %v3181 = vadd.f32 %v3170, %v3176
    %v3182 = vld [vmem:[%s9] sm:$0x1]
    %v3183 = vld [vmem:[%s10] sm:$0x1]
    %v3184 = vsel %vm135, %v3178, 0.0
    %3185 = vadd.xlane.f32.xlu0 %v3184
    %v3186 = vpop.xlane.xlu0 %3185
    %v3187 = vsel %vm135, %v3179, 0.0
    %3188 = vadd.xlane.f32.xlu0 %v3187
    %v3189 = vpop.xlane.xlu0 %3188
    %v3190 = vsel %vm135, %v3180, 0.0
    %3191 = vadd.xlane.f32.xlu0 %v3190
    %v3192 = vpop.xlane.xlu0 %3191
    %v3193 = vsel %vm135, %v3181, 0.0
    %3194 = vadd.xlane.f32.xlu0 %v3193
    %v3195 = vpop.xlane.xlu0 %3194
    %v3196 = vrcp.pop 32.0
    %v3197 = vmul.f32 %v3186, %v3196
    %v3198 = vmul.f32 %v3189, %v3196
    %v3199 = vmul.f32 %v3192, %v3196
    %v3200 = vmul.f32 %v3195, %v3196
    %v3201 = vsub.f32 %v3178, %v3197
    %v3202 = vsub.f32 %v3179, %v3198
    %v3203 = vsub.f32 %v3180, %v3199
    %v3204 = vsub.f32 %v3181, %v3200
    %v3205 = vmul.f32 %v3201, %v3201
    %v3206 = vmul.f32 %v3202, %v3202
    %v3207 = vmul.f32 %v3203, %v3203
    %v3208 = vmul.f32 %v3204, %v3204
    %v3209 = vsel %vm135, %v3205, 0.0
    %3210 = vadd.xlane.f32.xlu0 %v3209
    %v3211 = vpop.xlane.xlu0 %3210
    %v3212 = vsel %vm135, %v3206, 0.0
    %3213 = vadd.xlane.f32.xlu0 %v3212
    %v3214 = vpop.xlane.xlu0 %3213
    %v3215 = vsel %vm135, %v3207, 0.0
    %3216 = vadd.xlane.f32.xlu0 %v3215
    %v3217 = vpop.xlane.xlu0 %3216
    %v3218 = vsel %vm135, %v3208, 0.0
    %3219 = vadd.xlane.f32.xlu0 %v3218
    %v3220 = vpop.xlane.xlu0 %3219
    %v3221 = vmul.f32 %v3211, %v3196
    %v3222 = vmul.f32 %v3214, %v3196
    %v3223 = vmul.f32 %v3217, %v3196
    %v3224 = vmul.f32 %v3220, %v3196
    %v3226 = vlaneseq
    %v3227 = vshrl.u32 %v3226, 7
    %v3228 = vsub.s32 0, %v3227
    %v3229 = vrot.slane %v3182, %v3228
    %v3231 = vmul.f32 %v3229, %v3201
    %v3232 = vmul.f32 %v3229, %v3202
    %v3233 = vmul.f32 %v3229, %v3203
    %v3234 = vmul.f32 %v3229, %v3204
    %v3235 = vadd.f32 %v3221, 1e-05
    %v3236 = vadd.f32 %v3222, 1e-05
    %v3237 = vadd.f32 %v3223, 1e-05
    %v3238 = vadd.f32 %v3224, 1e-05
    %v3239 = vrsqrt.pop %v3235
    %v3240 = vrsqrt.pop %v3236
    %v3241 = vrsqrt.pop %v3237
    %v3242 = vrsqrt.pop %v3238
    %v3243 = vmul.f32 %v3231, %v3239
    %v3244 = vmul.f32 %v3232, %v3240
    %v3245 = vmul.f32 %v3233, %v3241
    %v3246 = vmul.f32 %v3234, %v3242
    %v3248 = vlaneseq
    %v3249 = vshrl.u32 %v3248, 7
    %v3250 = vsub.s32 0, %v3249
    %v3251 = vrot.slane %v3183, %v3250
    %v3253 = vadd.f32 %v3243, %v3251
    %v3254 = vadd.f32 %v3244, %v3251
    %v3255 = vadd.f32 %v3245, %v3251
    %v3256 = vadd.f32 %v3246, %v3251
    %v3257 = vld [vmem:[%s11] sm:$0xff]
    %v3258 = vld [vmem:[%s11 + $0x8] sm:$0xff]
    %v3259 = vld [vmem:[%s11 + $0x10] sm:$0xff]
    %v3260 = vld [vmem:[%s11 + $0x18] sm:$0xff]
    %v3261 = vld [vmem:[%s12] sm:$0x1]
    %v3263 = vlaneseq
    %v3264 = vshrl.u32 %v3263, 7
    %v3265 = vsub.s32 0, %v3264
    %v3266 = vrot.slane %v3261, %v3265
    %v3269 = vsel %vm135, %v3253, 0
    %v3272 = vsel %vm135, %v3254, 0
    %v3275 = vsel %vm135, %v3255, 0
    %v3278 = vsel %vm135, %v3256, 0
    %3280 = vmatprep.subr.mxu0 0.0
    %3281 = vmatpush1.msra.mxu0 %v3257
    %3282 = vmatprep.subr.mxu0 0.0
    %3283 = vmatpush1.msra.mxu0 %v3258
    %3284 = vmatprep.subr.mxu0 0.0
    %3285 = vmatpush1.msra.mxu0 %v3259
    %3286 = vmatprep.subr.mxu0 0.0
    %3287 = vmatpush1.msra.mxu0 %v3260
    %3288 = vmatprep.subr.mxu0 0.0
    %3289 = vmatpush1.msra.mxu0 0.0
    %3290 = vmatprep.subr.mxu0 0.0
    %3291 = vmatpush1.msra.mxu0 0.0
    %3292 = vmatprep.subr.mxu0 0.0
    %3293 = vmatpush1.msra.mxu0 0.0
    %3294 = vmatprep.subr.mxu0 0.0
    %3295 = vmatpush1.msra.mxu0 0.0
    %3296 = vmatprep.subr.mxu0 0.0
    %3297 = vmatpush1.msra.mxu0 0.0
    %3298 = vmatprep.subr.mxu0 0.0
    %3299 = vmatpush1.msra.mxu0 0.0
    %3300 = vmatprep.subr.mxu0 0.0
    %3301 = vmatpush1.msra.mxu0 0.0
    %3302 = vmatprep.subr.mxu0 0.0
    %3303 = vmatpush1.msra.mxu0 0.0
    %3304 = vmatprep.subr.mxu0 0.0
    %3305 = vmatpush1.msra.mxu0 0.0
    %3306 = vmatprep.subr.mxu0 0.0
    %3307 = vmatpush1.msra.mxu0 0.0
    %3308 = vmatprep.subr.mxu0 0.0
    %3309 = vmatpush1.msra.mxu0 0.0
    %3310 = vmatprep.subr.mxu0 0.0
    %3311 = vmatpush1.msra.mxu0 0.0
    %3312 = vmatprep.subr.mxu0 0.0
    %3313 = vmatpush1.msra.mxu0 0.0
    %3314 = vmatprep.subr.mxu0 0.0
    %3315 = vmatpush1.msra.mxu0 0.0
    %3316 = vmatprep.subr.mxu0 0.0
    %3317 = vmatpush1.msra.mxu0 0.0
    %3318 = vmatprep.subr.mxu0 0.0
    %3319 = vmatpush1.msra.mxu0 0.0
    %3320 = vmatprep.subr.mxu0 0.0
    %3321 = vmatpush1.msra.mxu0 0.0
    %3322 = vmatprep.subr.mxu0 0.0
    %3323 = vmatpush1.msra.mxu0 0.0
    %3324 = vmatprep.subr.mxu0 0.0
    %3325 = vmatpush1.msra.mxu0 0.0
    %3326 = vmatprep.subr.mxu0 0.0
    %3327 = vmatpush1.msra.mxu0 0.0
    %3328 = vmatprep.subr.mxu0 0.0
    %3329 = vmatpush1.msra.mxu0 0.0
    %3330 = vmatprep.subr.mxu0 0.0
    %3331 = vmatpush1.msra.mxu0 0.0
    %3332 = vmatprep.subr.mxu0 0.0
    %3333 = vmatpush1.msra.mxu0 0.0
    %3334 = vmatprep.subr.mxu0 0.0
    %3335 = vmatpush1.msra.mxu0 0.0
    %3336 = vmatprep.subr.mxu0 0.0
    %3337 = vmatpush1.msra.mxu0 0.0
    %3338 = vmatprep.subr.mxu0 0.0
    %3339 = vmatpush1.msra.mxu0 0.0
    %3340 = vmatprep.subr.mxu0 0.0
    %3341 = vmatpush1.msra.mxu0 0.0
    %3342 = vmatprep.subr.mxu0 0.0
    %3343 = vmatpush1.msra.mxu0 0.0
    %3344 = vmatprep.mubr.f32.mxu0 0.0
    %3345 = vmatmul.mubr.f32.gmra.mrb[0].mxu0 %v3269
    %v3346 = vpop.f32.mrb[0].mxu0
    %v3347 = vadd.f32 %v3266, %v3346
    %v3348 = vpop.f32.mrb[0].mxu0
    %3349 = vmatprep.mubr.f32.mxu0 0.0
    %3350 = vmatmul.mubr.f32.gmra.mrb[0].mxu0 %v3272
    %v3351 = vpop.f32.mrb[0].mxu0
    %v3352 = vadd.f32 %v3266, %v3351
    %v3353 = vpop.f32.mrb[0].mxu0
    %3354 = vmatprep.mubr.f32.mxu0 0.0
    %3355 = vmatmul.mubr.f32.gmra.mrb[0].mxu0 %v3275
    %v3356 = vpop.f32.mrb[0].mxu0
    %v3357 = vadd.f32 %v3266, %v3356
    %v3358 = vpop.f32.mrb[0].mxu0
    %3359 = vmatprep.mubr.f32.mxu0 0.0
    %3360 = vmatmul.mubr.f32.gmra.mrb[0].mxu0 %v3278
    %v3361 = vpop.f32.mrb[0].mxu0
    %v3362 = vadd.f32 %v3266, %v3361
    %v3363 = vpop.f32.mrb[0].mxu0
    %3364 = vdwg.mxu0
    %v3365 = vmax.f32 %v3347, 0.0
    %v3366 = vmax.f32 %v3352, 0.0
    %v3367 = vmax.f32 %v3357, 0.0
    %v3368 = vmax.f32 %v3362, 0.0
    %v3369 = vld [vmem:[%s13] sm:$0xff]
    %v3370 = vld [vmem:[%s13 + $0x8] sm:$0xff]
    %v3371 = vld [vmem:[%s13 + $0x10] sm:$0xff]
    %v3372 = vld [vmem:[%s13 + $0x18] sm:$0xff]
    %v3373 = vld [vmem:[%s13 + $0x20] sm:$0xff]
    %v3374 = vld [vmem:[%s13 + $0x28] sm:$0xff]
    %v3375 = vld [vmem:[%s13 + $0x30] sm:$0xff]
    %v3376 = vld [vmem:[%s13 + $0x38] sm:$0xff]
    %v3377 = vld [vmem:[%s14] sm:$0x1]
    %v3379 = vlaneseq
    %v3380 = vshrl.u32 %v3379, 7
    %v3381 = vsub.s32 0, %v3380
    %v3382 = vrot.slane %v3377, %v3381
    %vm3384 = vcmask 523264
    %v3386 = vsel %vm3384, %v3365, 0
    %v3389 = vsel %vm3384, %v3366, 0
    %v3392 = vsel %vm3384, %v3367, 0
    %v3395 = vsel %vm3384, %v3368, 0
    %3397 = vmatprep.subr.mxu0 0.0
    %3398 = vmatpush1.msra.mxu0 %v3369
    %3399 = vmatprep.subr.mxu0 0.0
    %3400 = vmatpush1.msra.mxu0 %v3370
    %3401 = vmatprep.subr.mxu0 0.0
    %3402 = vmatpush1.msra.mxu0 %v3371
    %3403 = vmatprep.subr.mxu0 0.0
    %3404 = vmatpush1.msra.mxu0 %v3372
    %3405 = vmatprep.subr.mxu0 0.0
    %3406 = vmatpush1.msra.mxu0 %v3373
    %3407 = vmatprep.subr.mxu0 0.0
    %3408 = vmatpush1.msra.mxu0 %v3374
    %3409 = vmatprep.subr.mxu0 0.0
    %3410 = vmatpush1.msra.mxu0 %v3375
    %3411 = vmatprep.subr.mxu0 0.0
    %3412 = vmatpush1.msra.mxu0 %v3376
    %3413 = vmatprep.subr.mxu0 0.0
    %3414 = vmatpush1.msra.mxu0 0.0
    %3415 = vmatprep.subr.mxu0 0.0
    %3416 = vmatpush1.msra.mxu0 0.0
    %3417 = vmatprep.subr.mxu0 0.0
    %3418 = vmatpush1.msra.mxu0 0.0
    %3419 = vmatprep.subr.mxu0 0.0
    %3420 = vmatpush1.msra.mxu0 0.0
    %3421 = vmatprep.subr.mxu0 0.0
    %3422 = vmatpush1.msra.mxu0 0.0
    %3423 = vmatprep.subr.mxu0 0.0
    %3424 = vmatpush1.msra.mxu0 0.0
    %3425 = vmatprep.subr.mxu0 0.0
    %3426 = vmatpush1.msra.mxu0 0.0
    %3427 = vmatprep.subr.mxu0 0.0
    %3428 = vmatpush1.msra.mxu0 0.0
    %3429 = vmatprep.subr.mxu0 0.0
    %3430 = vmatpush1.msra.mxu0 0.0
    %3431 = vmatprep.subr.mxu0 0.0
    %3432 = vmatpush1.msra.mxu0 0.0
    %3433 = vmatprep.subr.mxu0 0.0
    %3434 = vmatpush1.msra.mxu0 0.0
    %3435 = vmatprep.subr.mxu0 0.0
    %3436 = vmatpush1.msra.mxu0 0.0
    %3437 = vmatprep.subr.mxu0 0.0
    %3438 = vmatpush1.msra.mxu0 0.0
    %3439 = vmatprep.subr.mxu0 0.0
    %3440 = vmatpush1.msra.mxu0 0.0
    %3441 = vmatprep.subr.mxu0 0.0
    %3442 = vmatpush1.msra.mxu0 0.0
    %3443 = vmatprep.subr.mxu0 0.0
    %3444 = vmatpush1.msra.mxu0 0.0
    %3445 = vmatprep.subr.mxu0 0.0
    %3446 = vmatpush1.msra.mxu0 0.0
    %3447 = vmatprep.subr.mxu0 0.0
    %3448 = vmatpush1.msra.mxu0 0.0
    %3449 = vmatprep.subr.mxu0 0.0
    %3450 = vmatpush1.msra.mxu0 0.0
    %3451 = vmatprep.subr.mxu0 0.0
    %3452 = vmatpush1.msra.mxu0 0.0
    %3453 = vmatprep.subr.mxu0 0.0
    %3454 = vmatpush1.msra.mxu0 0.0
    %3455 = vmatprep.subr.mxu0 0.0
    %3456 = vmatpush1.msra.mxu0 0.0
    %3457 = vmatprep.subr.mxu0 0.0
    %3458 = vmatpush1.msra.mxu0 0.0
    %3459 = vmatprep.subr.mxu0 0.0
    %3460 = vmatpush1.msra.mxu0 0.0
    %3461 = vmatprep.mubr.f32.mxu0 0.0
    %3462 = vmatmul.mubr.f32.gmra.mrb[0].mxu0 %v3386
    %v3463 = vpop.f32.mrb[0].mxu0
    %v3464 = vadd.f32 %v3382, %v3463
    %v3465 = vpop.f32.mrb[0].mxu0
    %3466 = vmatprep.mubr.f32.mxu0 0.0
    %3467 = vmatmul.mubr.f32.gmra.mrb[0].mxu0 %v3389
    %v3468 = vpop.f32.mrb[0].mxu0
    %v3469 = vadd.f32 %v3382, %v3468
    %v3470 = vpop.f32.mrb[0].mxu0
    %3471 = vmatprep.mubr.f32.mxu0 0.0
    %3472 = vmatmul.mubr.f32.gmra.mrb[0].mxu0 %v3392
    %v3473 = vpop.f32.mrb[0].mxu0
    %v3474 = vadd.f32 %v3382, %v3473
    %v3475 = vpop.f32.mrb[0].mxu0
    %3476 = vmatprep.mubr.f32.mxu0 0.0
    %3477 = vmatmul.mubr.f32.gmra.mrb[0].mxu0 %v3395
    %v3478 = vpop.f32.mrb[0].mxu0
    %v3479 = vadd.f32 %v3382, %v3478
    %v3480 = vpop.f32.mrb[0].mxu0
    %3481 = vdwg.mxu0
    %v3482 = vadd.f32 %v3253, %v3464
    %v3483 = vadd.f32 %v3254, %v3469
    %v3484 = vadd.f32 %v3255, %v3474
    %v3485 = vadd.f32 %v3256, %v3479
    %v3486 = vld [vmem:[%s15] sm:$0x1]
    %v3487 = vld [vmem:[%s16] sm:$0x1]
    %v3488 = vsel %vm135, %v3482, 0.0
    %3489 = vadd.xlane.f32.xlu0 %v3488
    %v3490 = vpop.xlane.xlu0 %3489
    %v3491 = vsel %vm135, %v3483, 0.0
    %3492 = vadd.xlane.f32.xlu0 %v3491
    %v3493 = vpop.xlane.xlu0 %3492
    %v3494 = vsel %vm135, %v3484, 0.0
    %3495 = vadd.xlane.f32.xlu0 %v3494
    %v3496 = vpop.xlane.xlu0 %3495
    %v3497 = vsel %vm135, %v3485, 0.0
    %3498 = vadd.xlane.f32.xlu0 %v3497
    %v3499 = vpop.xlane.xlu0 %3498
    %v3500 = vmul.f32 %v3490, %v3196
    %v3501 = vmul.f32 %v3493, %v3196
    %v3502 = vmul.f32 %v3496, %v3196
    %v3503 = vmul.f32 %v3499, %v3196
    %v3504 = vsub.f32 %v3482, %v3500
    %v3505 = vsub.f32 %v3483, %v3501
    %v3506 = vsub.f32 %v3484, %v3502
    %v3507 = vsub.f32 %v3485, %v3503
    %v3508 = vmul.f32 %v3504, %v3504
    %v3509 = vmul.f32 %v3505, %v3505
    %v3510 = vmul.f32 %v3506, %v3506
    %v3511 = vmul.f32 %v3507, %v3507
    %v3512 = vsel %vm135, %v3508, 0.0
    %3513 = vadd.xlane.f32.xlu0 %v3512
    %v3514 = vpop.xlane.xlu0 %3513
    %v3515 = vsel %vm135, %v3509, 0.0
    %3516 = vadd.xlane.f32.xlu0 %v3515
    %v3517 = vpop.xlane.xlu0 %3516
    %v3518 = vsel %vm135, %v3510, 0.0
    %3519 = vadd.xlane.f32.xlu0 %v3518
    %v3520 = vpop.xlane.xlu0 %3519
    %v3521 = vsel %vm135, %v3511, 0.0
    %3522 = vadd.xlane.f32.xlu0 %v3521
    %v3523 = vpop.xlane.xlu0 %3522
    %v3524 = vmul.f32 %v3514, %v3196
    %v3525 = vmul.f32 %v3517, %v3196
    %v3526 = vmul.f32 %v3520, %v3196
    %v3527 = vmul.f32 %v3523, %v3196
    %v3529 = vlaneseq
    %v3530 = vshrl.u32 %v3529, 7
    %v3531 = vsub.s32 0, %v3530
    %v3532 = vrot.slane %v3486, %v3531
    %v3534 = vmul.f32 %v3532, %v3504
    %v3535 = vmul.f32 %v3532, %v3505
    %v3536 = vmul.f32 %v3532, %v3506
    %v3537 = vmul.f32 %v3532, %v3507
    %v3538 = vadd.f32 %v3524, 1e-05
    %v3539 = vadd.f32 %v3525, 1e-05
    %v3540 = vadd.f32 %v3526, 1e-05
    %v3541 = vadd.f32 %v3527, 1e-05
    %v3542 = vrsqrt.pop %v3538
    %v3543 = vrsqrt.pop %v3539
    %v3544 = vrsqrt.pop %v3540
    %v3545 = vrsqrt.pop %v3541
    %v3546 = vmul.f32 %v3534, %v3542
    %v3547 = vmul.f32 %v3535, %v3543
    %v3548 = vmul.f32 %v3536, %v3544
    %v3549 = vmul.f32 %v3537, %v3545
    %v3551 = vlaneseq
    %v3552 = vshrl.u32 %v3551, 7
    %v3553 = vsub.s32 0, %v3552
    %v3554 = vrot.slane %v3487, %v3553
    %v3556 = vadd.f32 %v3546, %v3554
    %v3557 = vadd.f32 %v3547, %v3554
    %v3558 = vadd.f32 %v3548, %v3554
    %v3559 = vadd.f32 %v3549, %v3554
    %s3560 = scalar_lea.vmem %s1, 128
    %v3561 = vld [vmem:[%s3560] sm:$0xff]
    %v3562 = vld [vmem:[%s3560 + $0x8] sm:$0xff]
    %v3563 = vld [vmem:[%s3560 + $0x10] sm:$0xff]
    %v3564 = vld [vmem:[%s3560 + $0x18] sm:$0xff]
    %v3565 = vld [vmem:[%s3560 + $0x20] sm:$0xff]
    %v3566 = vld [vmem:[%s3560 + $0x28] sm:$0xff]
    %v3567 = vld [vmem:[%s3560 + $0x30] sm:$0xff]
    %v3568 = vld [vmem:[%s3560 + $0x38] sm:$0xff]
    %v3569 = vld [vmem:[%s3560 + $0x40] sm:$0xff]
    %v3570 = vld [vmem:[%s3560 + $0x48] sm:$0xff]
    %v3571 = vld [vmem:[%s3560 + $0x50] sm:$0xff]
    %v3572 = vld [vmem:[%s3560 + $0x58] sm:$0xff]
    %v3573 = vld [vmem:[%s3560 + $0x60] sm:$0xff]
    %v3574 = vld [vmem:[%s3560 + $0x68] sm:$0xff]
    %v3575 = vld [vmem:[%s3560 + $0x70] sm:$0xff]
    %v3576 = vld [vmem:[%s3560 + $0x78] sm:$0xff]
    %s3577 = scalar_lea.vmem %s2, 128
    %v3578 = vld [vmem:[%s3577] sm:$0xff]
    %v3579 = vld [vmem:[%s3577 + $0x8] sm:$0xff]
    %v3580 = vld [vmem:[%s3577 + $0x10] sm:$0xff]
    %v3581 = vld [vmem:[%s3577 + $0x18] sm:$0xff]
    %v3582 = vld [vmem:[%s3577 + $0x20] sm:$0xff]
    %v3583 = vld [vmem:[%s3577 + $0x28] sm:$0xff]
    %v3584 = vld [vmem:[%s3577 + $0x30] sm:$0xff]
    %v3585 = vld [vmem:[%s3577 + $0x38] sm:$0xff]
    %v3586 = vld [vmem:[%s3577 + $0x40] sm:$0xff]
    %v3587 = vld [vmem:[%s3577 + $0x48] sm:$0xff]
    %v3588 = vld [vmem:[%s3577 + $0x50] sm:$0xff]
    %v3589 = vld [vmem:[%s3577 + $0x58] sm:$0xff]
    %v3590 = vld [vmem:[%s3577 + $0x60] sm:$0xff]
    %v3591 = vld [vmem:[%s3577 + $0x68] sm:$0xff]
    %v3592 = vld [vmem:[%s3577 + $0x70] sm:$0xff]
    %v3593 = vld [vmem:[%s3577 + $0x78] sm:$0xff]
    %s3594 = scalar_lea.vmem %s3, 128
    %v3595 = vld [vmem:[%s3594] sm:$0xff]
    %v3596 = vld [vmem:[%s3594 + $0x8] sm:$0xff]
    %v3597 = vld [vmem:[%s3594 + $0x10] sm:$0xff]
    %v3598 = vld [vmem:[%s3594 + $0x18] sm:$0xff]
    %v3599 = vld [vmem:[%s3594 + $0x20] sm:$0xff]
    %v3600 = vld [vmem:[%s3594 + $0x28] sm:$0xff]
    %v3601 = vld [vmem:[%s3594 + $0x30] sm:$0xff]
    %v3602 = vld [vmem:[%s3594 + $0x38] sm:$0xff]
    %v3603 = vld [vmem:[%s3594 + $0x40] sm:$0xff]
    %v3604 = vld [vmem:[%s3594 + $0x48] sm:$0xff]
    %v3605 = vld [vmem:[%s3594 + $0x50] sm:$0xff]
    %v3606 = vld [vmem:[%s3594 + $0x58] sm:$0xff]
    %v3607 = vld [vmem:[%s3594 + $0x60] sm:$0xff]
    %v3608 = vld [vmem:[%s3594 + $0x68] sm:$0xff]
    %v3609 = vld [vmem:[%s3594 + $0x70] sm:$0xff]
    %v3610 = vld [vmem:[%s3594 + $0x78] sm:$0xff]
    %s3611 = scalar_lea.vmem %s7, 64
    %v3612 = vld [vmem:[%s3611] sm:$0xff]
    %v3613 = vld [vmem:[%s3611 + $0x8] sm:$0xff]
    %v3614 = vld [vmem:[%s3611 + $0x10] sm:$0xff]
    %v3615 = vld [vmem:[%s3611 + $0x18] sm:$0xff]
    %v3616 = vld [vmem:[%s3611 + $0x20] sm:$0xff]
    %v3617 = vld [vmem:[%s3611 + $0x28] sm:$0xff]
    %v3618 = vld [vmem:[%s3611 + $0x30] sm:$0xff]
    %v3619 = vld [vmem:[%s3611 + $0x38] sm:$0xff]
    %s3620 = scalar_lea.vmem %s4, 4
    %v3621 = vld [vmem:[%s3620] sm:$0x1]
    %v3622 = vld [vmem:[%s3620 + $0x1] sm:$0x1]
    %v3623 = vld [vmem:[%s3620 + $0x2] sm:$0x1]
    %v3624 = vld [vmem:[%s3620 + $0x3] sm:$0x1]
    %s3625 = scalar_lea.vmem %s5, 4
    %v3626 = vld [vmem:[%s3625] sm:$0x1]
    %v3627 = vld [vmem:[%s3625 + $0x1] sm:$0x1]
    %v3628 = vld [vmem:[%s3625 + $0x2] sm:$0x1]
    %v3629 = vld [vmem:[%s3625 + $0x3] sm:$0x1]
    %s3630 = scalar_lea.vmem %s6, 4
    %v3631 = vld [vmem:[%s3630] sm:$0x1]
    %v3632 = vld [vmem:[%s3630 + $0x1] sm:$0x1]
    %v3633 = vld [vmem:[%s3630 + $0x2] sm:$0x1]
    %v3634 = vld [vmem:[%s3630 + $0x3] sm:$0x1]
    %v3636 = vlaneseq
    %v3637 = vshrl.u32 %v3636, 7
    %v3638 = vsub.s32 0, %v3637
    %v3639 = vrot.slane %v3621, %v3638
    %v3642 = vsel %vm135, %v3556, 0
    %v3645 = vsel %vm135, %v3557, 0
    %v3648 = vsel %vm135, %v3558, 0
    %v3651 = vsel %vm135, %v3559, 0
    %3653 = vmatprep.subr.mxu0 0.0
    %3654 = vmatpush1.msra.mxu0 %v3561
    %3655 = vmatprep.subr.mxu0 0.0
    %3656 = vmatpush1.msra.mxu0 %v3562
    %3657 = vmatprep.subr.mxu0 0.0
    %3658 = vmatpush1.msra.mxu0 %v3563
    %3659 = vmatprep.subr.mxu0 0.0
    %3660 = vmatpush1.msra.mxu0 %v3564
    %3661 = vmatprep.subr.mxu0 0.0
    %3662 = vmatpush1.msra.mxu0 0.0
    %3663 = vmatprep.subr.mxu0 0.0
    %3664 = vmatpush1.msra.mxu0 0.0
    %3665 = vmatprep.subr.mxu0 0.0
    %3666 = vmatpush1.msra.mxu0 0.0
    %3667 = vmatprep.subr.mxu0 0.0
    %3668 = vmatpush1.msra.mxu0 0.0
    %3669 = vmatprep.subr.mxu0 0.0
    %3670 = vmatpush1.msra.mxu0 0.0
    %3671 = vmatprep.subr.mxu0 0.0
    %3672 = vmatpush1.msra.mxu0 0.0
    %3673 = vmatprep.subr.mxu0 0.0
    %3674 = vmatpush1.msra.mxu0 0.0
    %3675 = vmatprep.subr.mxu0 0.0
    %3676 = vmatpush1.msra.mxu0 0.0
    %3677 = vmatprep.subr.mxu0 0.0
    %3678 = vmatpush1.msra.mxu0 0.0
    %3679 = vmatprep.subr.mxu0 0.0
    %3680 = vmatpush1.msra.mxu0 0.0
    %3681 = vmatprep.subr.mxu0 0.0
    %3682 = vmatpush1.msra.mxu0 0.0
    %3683 = vmatprep.subr.mxu0 0.0
    %3684 = vmatpush1.msra.mxu0 0.0
    %3685 = vmatprep.subr.mxu0 0.0
    %3686 = vmatpush1.msra.mxu0 0.0
    %3687 = vmatprep.subr.mxu0 0.0
    %3688 = vmatpush1.msra.mxu0 0.0
    %3689 = vmatprep.subr.mxu0 0.0
    %3690 = vmatpush1.msra.mxu0 0.0
    %3691 = vmatprep.subr.mxu0 0.0
    %3692 = vmatpush1.msra.mxu0 0.0
    %3693 = vmatprep.subr.mxu0 0.0
    %3694 = vmatpush1.msra.mxu0 0.0
    %3695 = vmatprep.subr.mxu0 0.0
    %3696 = vmatpush1.msra.mxu0 0.0
    %3697 = vmatprep.subr.mxu0 0.0
    %3698 = vmatpush1.msra.mxu0 0.0
    %3699 = vmatprep.subr.mxu0 0.0
    %3700 = vmatpush1.msra.mxu0 0.0
    %3701 = vmatprep.subr.mxu0 0.0
    %3702 = vmatpush1.msra.mxu0 0.0
    %3703 = vmatprep.subr.mxu0 0.0
    %3704 = vmatpush1.msra.mxu0 0.0
    %3705 = vmatprep.subr.mxu0 0.0
    %3706 = vmatpush1.msra.mxu0 0.0
    %3707 = vmatprep.subr.mxu0 0.0
    %3708 = vmatpush1.msra.mxu0 0.0
    %3709 = vmatprep.subr.mxu0 0.0
    %3710 = vmatpush1.msra.mxu0 0.0
    %3711 = vmatprep.subr.mxu0 0.0
    %3712 = vmatpush1.msra.mxu0 0.0
    %3713 = vmatprep.subr.mxu0 0.0
    %3714 = vmatpush1.msra.mxu0 0.0
    %3715 = vmatprep.subr.mxu0 0.0
    %3716 = vmatpush1.msra.mxu0 0.0
    %3717 = vmatprep.mubr.f32.mxu0 0.0
    %3718 = vmatmul.mubr.f32.gmra.mrb[0].mxu0 %v3642
    %v3719 = vpop.f32.mrb[0].mxu0
    %v3720 = vadd.f32 %v3639, %v3719
    %v3721 = vpop.f32.mrb[0].mxu0
    %3722 = vmatprep.mubr.f32.mxu0 0.0
    %3723 = vmatmul.mubr.f32.gmra.mrb[0].mxu0 %v3645
    %v3724 = vpop.f32.mrb[0].mxu0
    %v3725 = vadd.f32 %v3639, %v3724
    %v3726 = vpop.f32.mrb[0].mxu0
    %3727 = vmatprep.mubr.f32.mxu0 0.0
    %3728 = vmatmul.mubr.f32.gmra.mrb[0].mxu0 %v3648
    %v3729 = vpop.f32.mrb[0].mxu0
    %v3730 = vadd.f32 %v3639, %v3729
    %v3731 = vpop.f32.mrb[0].mxu0
    %3732 = vmatprep.mubr.f32.mxu0 0.0
    %3733 = vmatmul.mubr.f32.gmra.mrb[0].mxu0 %v3651
    %v3734 = vpop.f32.mrb[0].mxu0
    %v3735 = vadd.f32 %v3639, %v3734
    %v3736 = vpop.f32.mrb[0].mxu0
    %3737 = vdwg.mxu0
    %v3739 = vlaneseq
    %v3740 = vshrl.u32 %v3739, 7
    %v3741 = vsub.s32 0, %v3740
    %v3742 = vrot.slane %v3626, %v3741
    %3744 = vmatprep.subr.mxu0 0.0
    %3745 = vmatpush1.msra.mxu0 %v3578
    %3746 = vmatprep.subr.mxu0 0.0
    %3747 = vmatpush1.msra.mxu0 %v3579
    %3748 = vmatprep.subr.mxu0 0.0
    %3749 = vmatpush1.msra.mxu0 %v3580
    %3750 = vmatprep.subr.mxu0 0.0
    %3751 = vmatpush1.msra.mxu0 %v3581
    %3752 = vmatprep.subr.mxu0 0.0
    %3753 = vmatpush1.msra.mxu0 0.0
    %3754 = vmatprep.subr.mxu0 0.0
    %3755 = vmatpush1.msra.mxu0 0.0
    %3756 = vmatprep.subr.mxu0 0.0
    %3757 = vmatpush1.msra.mxu0 0.0
    %3758 = vmatprep.subr.mxu0 0.0
    %3759 = vmatpush1.msra.mxu0 0.0
    %3760 = vmatprep.subr.mxu0 0.0
    %3761 = vmatpush1.msra.mxu0 0.0
    %3762 = vmatprep.subr.mxu0 0.0
    %3763 = vmatpush1.msra.mxu0 0.0
    %3764 = vmatprep.subr.mxu0 0.0
    %3765 = vmatpush1.msra.mxu0 0.0
    %3766 = vmatprep.subr.mxu0 0.0
    %3767 = vmatpush1.msra.mxu0 0.0
    %3768 = vmatprep.subr.mxu0 0.0
    %3769 = vmatpush1.msra.mxu0 0.0
    %3770 = vmatprep.subr.mxu0 0.0
    %3771 = vmatpush1.msra.mxu0 0.0
    %3772 = vmatprep.subr.mxu0 0.0
    %3773 = vmatpush1.msra.mxu0 0.0
    %3774 = vmatprep.subr.mxu0 0.0
    %3775 = vmatpush1.msra.mxu0 0.0
    %3776 = vmatprep.subr.mxu0 0.0
    %3777 = vmatpush1.msra.mxu0 0.0
    %3778 = vmatprep.subr.mxu0 0.0
    %3779 = vmatpush1.msra.mxu0 0.0
    %3780 = vmatprep.subr.mxu0 0.0
    %3781 = vmatpush1.msra.mxu0 0.0
    %3782 = vmatprep.subr.mxu0 0.0
    %3783 = vmatpush1.msra.mxu0 0.0
    %3784 = vmatprep.subr.mxu0 0.0
    %3785 = vmatpush1.msra.mxu0 0.0
    %3786 = vmatprep.subr.mxu0 0.0
    %3787 = vmatpush1.msra.mxu0 0.0
    %3788 = vmatprep.subr.mxu0 0.0
    %3789 = vmatpush1.msra.mxu0 0.0
    %3790 = vmatprep.subr.mxu0 0.0
    %3791 = vmatpush1.msra.mxu0 0.0
    %3792 = vmatprep.subr.mxu0 0.0
    %3793 = vmatpush1.msra.mxu0 0.0
    %3794 = vmatprep.subr.mxu0 0.0
    %3795 = vmatpush1.msra.mxu0 0.0
    %3796 = vmatprep.subr.mxu0 0.0
    %3797 = vmatpush1.msra.mxu0 0.0
    %3798 = vmatprep.subr.mxu0 0.0
    %3799 = vmatpush1.msra.mxu0 0.0
    %3800 = vmatprep.subr.mxu0 0.0
    %3801 = vmatpush1.msra.mxu0 0.0
    %3802 = vmatprep.subr.mxu0 0.0
    %3803 = vmatpush1.msra.mxu0 0.0
    %3804 = vmatprep.subr.mxu0 0.0
    %3805 = vmatpush1.msra.mxu0 0.0
    %3806 = vmatprep.subr.mxu0 0.0
    %3807 = vmatpush1.msra.mxu0 0.0
    %3808 = vmatprep.mubr.f32.mxu0 0.0
    %3809 = vmatmul.mubr.f32.gmra.mrb[0].mxu0 %v3642
    %v3810 = vpop.f32.mrb[0].mxu0
    %v3811 = vadd.f32 %v3742, %v3810
    %v3812 = vpop.f32.mrb[0].mxu0
    %3813 = vmatprep.mubr.f32.mxu0 0.0
    %3814 = vmatmul.mubr.f32.gmra.mrb[0].mxu0 %v3645
    %v3815 = vpop.f32.mrb[0].mxu0
    %v3816 = vadd.f32 %v3742, %v3815
    %v3817 = vpop.f32.mrb[0].mxu0
    %3818 = vmatprep.mubr.f32.mxu0 0.0
    %3819 = vmatmul.mubr.f32.gmra.mrb[0].mxu0 %v3648
    %v3820 = vpop.f32.mrb[0].mxu0
    %v3821 = vadd.f32 %v3742, %v3820
    %v3822 = vpop.f32.mrb[0].mxu0
    %3823 = vmatprep.mubr.f32.mxu0 0.0
    %3824 = vmatmul.mubr.f32.gmra.mrb[0].mxu0 %v3651
    %v3825 = vpop.f32.mrb[0].mxu0
    %v3826 = vadd.f32 %v3742, %v3825
    %v3827 = vpop.f32.mrb[0].mxu0
    %3828 = vdwg.mxu0
    %v3830 = vlaneseq
    %v3831 = vshrl.u32 %v3830, 7
    %v3832 = vsub.s32 0, %v3831
    %v3833 = vrot.slane %v3631, %v3832
    %3835 = vmatprep.subr.mxu0 0.0
    %3836 = vmatpush1.msra.mxu0 %v3595
    %3837 = vmatprep.subr.mxu0 0.0
    %3838 = vmatpush1.msra.mxu0 %v3596
    %3839 = vmatprep.subr.mxu0 0.0
    %3840 = vmatpush1.msra.mxu0 %v3597
    %3841 = vmatprep.subr.mxu0 0.0
    %3842 = vmatpush1.msra.mxu0 %v3598
    %3843 = vmatprep.subr.mxu0 0.0
    %3844 = vmatpush1.msra.mxu0 0.0
    %3845 = vmatprep.subr.mxu0 0.0
    %3846 = vmatpush1.msra.mxu0 0.0
    %3847 = vmatprep.subr.mxu0 0.0
    %3848 = vmatpush1.msra.mxu0 0.0
    %3849 = vmatprep.subr.mxu0 0.0
    %3850 = vmatpush1.msra.mxu0 0.0
    %3851 = vmatprep.subr.mxu0 0.0
    %3852 = vmatpush1.msra.mxu0 0.0
    %3853 = vmatprep.subr.mxu0 0.0
    %3854 = vmatpush1.msra.mxu0 0.0
    %3855 = vmatprep.subr.mxu0 0.0
    %3856 = vmatpush1.msra.mxu0 0.0
    %3857 = vmatprep.subr.mxu0 0.0
    %3858 = vmatpush1.msra.mxu0 0.0
    %3859 = vmatprep.subr.mxu0 0.0
    %3860 = vmatpush1.msra.mxu0 0.0
    %3861 = vmatprep.subr.mxu0 0.0
    %3862 = vmatpush1.msra.mxu0 0.0
    %3863 = vmatprep.subr.mxu0 0.0
    %3864 = vmatpush1.msra.mxu0 0.0
    %3865 = vmatprep.subr.mxu0 0.0
    %3866 = vmatpush1.msra.mxu0 0.0
    %3867 = vmatprep.subr.mxu0 0.0
    %3868 = vmatpush1.msra.mxu0 0.0
    %3869 = vmatprep.subr.mxu0 0.0
    %3870 = vmatpush1.msra.mxu0 0.0
    %3871 = vmatprep.subr.mxu0 0.0
    %3872 = vmatpush1.msra.mxu0 0.0
    %3873 = vmatprep.subr.mxu0 0.0
    %3874 = vmatpush1.msra.mxu0 0.0
    %3875 = vmatprep.subr.mxu0 0.0
    %3876 = vmatpush1.msra.mxu0 0.0
    %3877 = vmatprep.subr.mxu0 0.0
    %3878 = vmatpush1.msra.mxu0 0.0
    %3879 = vmatprep.subr.mxu0 0.0
    %3880 = vmatpush1.msra.mxu0 0.0
    %3881 = vmatprep.subr.mxu0 0.0
    %3882 = vmatpush1.msra.mxu0 0.0
    %3883 = vmatprep.subr.mxu0 0.0
    %3884 = vmatpush1.msra.mxu0 0.0
    %3885 = vmatprep.subr.mxu0 0.0
    %3886 = vmatpush1.msra.mxu0 0.0
    %3887 = vmatprep.subr.mxu0 0.0
    %3888 = vmatpush1.msra.mxu0 0.0
    %3889 = vmatprep.subr.mxu0 0.0
    %3890 = vmatpush1.msra.mxu0 0.0
    %3891 = vmatprep.subr.mxu0 0.0
    %3892 = vmatpush1.msra.mxu0 0.0
    %3893 = vmatprep.subr.mxu0 0.0
    %3894 = vmatpush1.msra.mxu0 0.0
    %3895 = vmatprep.subr.mxu0 0.0
    %3896 = vmatpush1.msra.mxu0 0.0
    %3897 = vmatprep.subr.mxu0 0.0
    %3898 = vmatpush1.msra.mxu0 0.0
    %3899 = vmatprep.mubr.f32.mxu0 0.0
    %3900 = vmatmul.mubr.f32.gmra.mrb[0].mxu0 %v3642
    %v3901 = vpop.f32.mrb[0].mxu0
    %v3902 = vadd.f32 %v3833, %v3901
    %v3903 = vpop.f32.mrb[0].mxu0
    %3904 = vmatprep.mubr.f32.mxu0 0.0
    %3905 = vmatmul.mubr.f32.gmra.mrb[0].mxu0 %v3645
    %v3906 = vpop.f32.mrb[0].mxu0
    %v3907 = vadd.f32 %v3833, %v3906
    %v3908 = vpop.f32.mrb[0].mxu0
    %3909 = vmatprep.mubr.f32.mxu0 0.0
    %3910 = vmatmul.mubr.f32.gmra.mrb[0].mxu0 %v3648
    %v3911 = vpop.f32.mrb[0].mxu0
    %v3912 = vadd.f32 %v3833, %v3911
    %v3913 = vpop.f32.mrb[0].mxu0
    %3914 = vmatprep.mubr.f32.mxu0 0.0
    %3915 = vmatmul.mubr.f32.gmra.mrb[0].mxu0 %v3651
    %v3916 = vpop.f32.mrb[0].mxu0
    %v3917 = vadd.f32 %v3833, %v3916
    %v3918 = vpop.f32.mrb[0].mxu0
    %3919 = vdwg.mxu0
    %v3921 = vsel %vm415, %v3720, 0
    %v3924 = vsel %vm415, %v3725, 0
    %v3927 = vsel %vm415, %v3811, 0
    %v3930 = vsel %vm415, %v3816, 0
    %3932 = vmatprep.subr.mxu0 0.0
    %3933 = vmatpush1.xpose.msra.mxu0 %v3927
    %3934 = vmatprep.subr.mxu0 0.0
    %3935 = vmatpush1.xpose.msra.mxu0 %v3930
    %3936 = vmatprep.subr.mxu0 0.0
    %3937 = vmatpush1.xpose.msra.mxu0 0.0
    %3938 = vmatprep.subr.mxu0 0.0
    %3939 = vmatpush1.xpose.msra.mxu0 0.0
    %3940 = vmatprep.subr.mxu0 0.0
    %3941 = vmatpush1.xpose.msra.mxu0 0.0
    %3942 = vmatprep.subr.mxu0 0.0
    %3943 = vmatpush1.xpose.msra.mxu0 0.0
    %3944 = vmatprep.subr.mxu0 0.0
    %3945 = vmatpush1.xpose.msra.mxu0 0.0
    %3946 = vmatprep.subr.mxu0 0.0
    %3947 = vmatpush1.xpose.msra.mxu0 0.0
    %3948 = vmatprep.subr.mxu0 0.0
    %3949 = vmatpush1.xpose.msra.mxu0 0.0
    %3950 = vmatprep.subr.mxu0 0.0
    %3951 = vmatpush1.xpose.msra.mxu0 0.0
    %3952 = vmatprep.subr.mxu0 0.0
    %3953 = vmatpush1.xpose.msra.mxu0 0.0
    %3954 = vmatprep.subr.mxu0 0.0
    %3955 = vmatpush1.xpose.msra.mxu0 0.0
    %3956 = vmatprep.subr.mxu0 0.0
    %3957 = vmatpush1.xpose.msra.mxu0 0.0
    %3958 = vmatprep.subr.mxu0 0.0
    %3959 = vmatpush1.xpose.msra.mxu0 0.0
    %3960 = vmatprep.subr.mxu0 0.0
    %3961 = vmatpush1.xpose.msra.mxu0 0.0
    %3962 = vmatprep.subr.mxu0 0.0
    %3963 = vmatpush1.xpose.msra.mxu0 0.0
    %3964 = vmatprep.subr.mxu0 0.0
    %3965 = vmatpush1.xpose.msra.mxu0 0.0
    %3966 = vmatprep.subr.mxu0 0.0
    %3967 = vmatpush1.xpose.msra.mxu0 0.0
    %3968 = vmatprep.subr.mxu0 0.0
    %3969 = vmatpush1.xpose.msra.mxu0 0.0
    %3970 = vmatprep.subr.mxu0 0.0
    %3971 = vmatpush1.xpose.msra.mxu0 0.0
    %3972 = vmatprep.subr.mxu0 0.0
    %3973 = vmatpush1.xpose.msra.mxu0 0.0
    %3974 = vmatprep.subr.mxu0 0.0
    %3975 = vmatpush1.xpose.msra.mxu0 0.0
    %3976 = vmatprep.subr.mxu0 0.0
    %3977 = vmatpush1.xpose.msra.mxu0 0.0
    %3978 = vmatprep.subr.mxu0 0.0
    %3979 = vmatpush1.xpose.msra.mxu0 0.0
    %3980 = vmatprep.subr.mxu0 0.0
    %3981 = vmatpush1.xpose.msra.mxu0 0.0
    %3982 = vmatprep.subr.mxu0 0.0
    %3983 = vmatpush1.xpose.msra.mxu0 0.0
    %3984 = vmatprep.subr.mxu0 0.0
    %3985 = vmatpush1.xpose.msra.mxu0 0.0
    %3986 = vmatprep.subr.mxu0 0.0
    %3987 = vmatpush1.xpose.msra.mxu0 0.0
    %3988 = vmatprep.subr.mxu0 0.0
    %3989 = vmatpush1.xpose.msra.mxu0 0.0
    %3990 = vmatprep.subr.mxu0 0.0
    %3991 = vmatpush1.xpose.msra.mxu0 0.0
    %3992 = vmatprep.subr.mxu0 0.0
    %3993 = vmatpush1.xpose.msra.mxu0 0.0
    %3994 = vmatprep.subr.mxu0 0.0
    %3995 = vmatpush1.xpose.msra.mxu0 0.0
    %3996 = vmatprep.mubr.f32.mxu0 0.0
    %3997 = vmatmul.mubr.f32.gmra.mrb[0].mxu0 %v3921
    %v3998 = vpop.f32.mrb[0].mxu0
    %v3999 = vadd.f32 0.0, %v3998
    %v4000 = vpop.f32.mrb[0].mxu0
    %4001 = vmatprep.mubr.f32.mxu0 0.0
    %4002 = vmatmul.mubr.f32.gmra.mrb[0].mxu0 %v3924
    %v4003 = vpop.f32.mrb[0].mxu0
    %v4004 = vadd.f32 0.0, %v4003
    %v4005 = vpop.f32.mrb[0].mxu0
    %4006 = vdwg.mxu0
    %v4008 = vsel %vm415, %v3730, 0
    %v4011 = vsel %vm415, %v3735, 0
    %v4014 = vsel %vm415, %v3821, 0
    %v4017 = vsel %vm415, %v3826, 0
    %4019 = vmatprep.subr.mxu0 0.0
    %4020 = vmatpush1.xpose.msra.mxu0 %v4014
    %4021 = vmatprep.subr.mxu0 0.0
    %4022 = vmatpush1.xpose.msra.mxu0 %v4017
    %4023 = vmatprep.subr.mxu0 0.0
    %4024 = vmatpush1.xpose.msra.mxu0 0.0
    %4025 = vmatprep.subr.mxu0 0.0
    %4026 = vmatpush1.xpose.msra.mxu0 0.0
    %4027 = vmatprep.subr.mxu0 0.0
    %4028 = vmatpush1.xpose.msra.mxu0 0.0
    %4029 = vmatprep.subr.mxu0 0.0
    %4030 = vmatpush1.xpose.msra.mxu0 0.0
    %4031 = vmatprep.subr.mxu0 0.0
    %4032 = vmatpush1.xpose.msra.mxu0 0.0
    %4033 = vmatprep.subr.mxu0 0.0
    %4034 = vmatpush1.xpose.msra.mxu0 0.0
    %4035 = vmatprep.subr.mxu0 0.0
    %4036 = vmatpush1.xpose.msra.mxu0 0.0
    %4037 = vmatprep.subr.mxu0 0.0
    %4038 = vmatpush1.xpose.msra.mxu0 0.0
    %4039 = vmatprep.subr.mxu0 0.0
    %4040 = vmatpush1.xpose.msra.mxu0 0.0
    %4041 = vmatprep.subr.mxu0 0.0
    %4042 = vmatpush1.xpose.msra.mxu0 0.0
    %4043 = vmatprep.subr.mxu0 0.0
    %4044 = vmatpush1.xpose.msra.mxu0 0.0
    %4045 = vmatprep.subr.mxu0 0.0
    %4046 = vmatpush1.xpose.msra.mxu0 0.0
    %4047 = vmatprep.subr.mxu0 0.0
    %4048 = vmatpush1.xpose.msra.mxu0 0.0
    %4049 = vmatprep.subr.mxu0 0.0
    %4050 = vmatpush1.xpose.msra.mxu0 0.0
    %4051 = vmatprep.subr.mxu0 0.0
    %4052 = vmatpush1.xpose.msra.mxu0 0.0
    %4053 = vmatprep.subr.mxu0 0.0
    %4054 = vmatpush1.xpose.msra.mxu0 0.0
    %4055 = vmatprep.subr.mxu0 0.0
    %4056 = vmatpush1.xpose.msra.mxu0 0.0
    %4057 = vmatprep.subr.mxu0 0.0
    %4058 = vmatpush1.xpose.msra.mxu0 0.0
    %4059 = vmatprep.subr.mxu0 0.0
    %4060 = vmatpush1.xpose.msra.mxu0 0.0
    %4061 = vmatprep.subr.mxu0 0.0
    %4062 = vmatpush1.xpose.msra.mxu0 0.0
    %4063 = vmatprep.subr.mxu0 0.0
    %4064 = vmatpush1.xpose.msra.mxu0 0.0
    %4065 = vmatprep.subr.mxu0 0.0
    %4066 = vmatpush1.xpose.msra.mxu0 0.0
    %4067 = vmatprep.subr.mxu0 0.0
    %4068 = vmatpush1.xpose.msra.mxu0 0.0
    %4069 = vmatprep.subr.mxu0 0.0
    %4070 = vmatpush1.xpose.msra.mxu0 0.0
    %4071 = vmatprep.subr.mxu0 0.0
    %4072 = vmatpush1.xpose.msra.mxu0 0.0
    %4073 = vmatprep.subr.mxu0 0.0
    %4074 = vmatpush1.xpose.msra.mxu0 0.0
    %4075 = vmatprep.subr.mxu0 0.0
    %4076 = vmatpush1.xpose.msra.mxu0 0.0
    %4077 = vmatprep.subr.mxu0 0.0
    %4078 = vmatpush1.xpose.msra.mxu0 0.0
    %4079 = vmatprep.subr.mxu0 0.0
    %4080 = vmatpush1.xpose.msra.mxu0 0.0
    %4081 = vmatprep.subr.mxu0 0.0
    %4082 = vmatpush1.xpose.msra.mxu0 0.0
    %4083 = vmatprep.mubr.f32.mxu0 0.0
    %4084 = vmatmul.mubr.f32.gmra.mrb[0].mxu0 %v4008
    %v4085 = vpop.f32.mrb[0].mxu0
    %v4086 = vadd.f32 0.0, %v4085
    %v4087 = vpop.f32.mrb[0].mxu0
    %4088 = vmatprep.mubr.f32.mxu0 0.0
    %4089 = vmatmul.mubr.f32.gmra.mrb[0].mxu0 %v4011
    %v4090 = vpop.f32.mrb[0].mxu0
    %v4091 = vadd.f32 0.0, %v4090
    %v4092 = vpop.f32.mrb[0].mxu0
    %4093 = vdwg.mxu0
    %v4094 = vmul.f32 %v3999, 0.25
    %v4095 = vmul.f32 %v4004, 0.25
    %v4096 = vmul.f32 %v4086, 0.25
    %v4097 = vmul.f32 %v4091, 0.25
    %v4098 = vsel %vm415, %v4094, -inf
    %4099 = vmax.xlane.f32.xlu0 %v4098
    %v4100 = vpop.xlane.xlu0 %4099
    %v4101 = vsel %vm415, %v4095, -inf
    %4102 = vmax.xlane.f32.xlu0 %v4101
    %v4103 = vpop.xlane.xlu0 %4102
    %v4104 = vsel %vm415, %v4096, -inf
    %4105 = vmax.xlane.f32.xlu0 %v4104
    %v4106 = vpop.xlane.xlu0 %4105
    %v4107 = vsel %vm415, %v4097, -inf
    %4108 = vmax.xlane.f32.xlu0 %v4107
    %v4109 = vpop.xlane.xlu0 %4108
    %v4110 = vsub.f32 %v4094, %v4100
    %v4111 = vsub.f32 %v4095, %v4103
    %v4112 = vsub.f32 %v4096, %v4106
    %v4113 = vsub.f32 %v4097, %v4109
    %v4114 = vmul.f32 %v4110, 1.442695
    %v4115 = vpow.pop %v4114
    %v4116 = vmul.f32 %v4111, 1.442695
    %v4117 = vpow.pop %v4116
    %v4118 = vmul.f32 %v4112, 1.442695
    %v4119 = vpow.pop %v4118
    %v4120 = vmul.f32 %v4113, 1.442695
    %v4121 = vpow.pop %v4120
    %v4122 = vsel %vm415, %v4115, 0.0
    %4123 = vadd.xlane.f32.xlu0 %v4122
    %v4124 = vpop.xlane.xlu0 %4123
    %v4125 = vsel %vm415, %v4117, 0.0
    %4126 = vadd.xlane.f32.xlu0 %v4125
    %v4127 = vpop.xlane.xlu0 %4126
    %v4128 = vsel %vm415, %v4119, 0.0
    %4129 = vadd.xlane.f32.xlu0 %v4128
    %v4130 = vpop.xlane.xlu0 %4129
    %v4131 = vsel %vm415, %v4121, 0.0
    %4132 = vadd.xlane.f32.xlu0 %v4131
    %v4133 = vpop.xlane.xlu0 %4132
    %v4134 = vrcp.pop %v4124
    %v4135 = vmul.f32 %v4115, %v4134
    %v4136 = vrcp.pop %v4127
    %v4137 = vmul.f32 %v4117, %v4136
    %v4138 = vrcp.pop %v4130
    %v4139 = vmul.f32 %v4119, %v4138
    %v4140 = vrcp.pop %v4133
    %v4141 = vmul.f32 %v4121, %v4140
    %v4143 = vsel %vm415, %v4135, 0
    %v4146 = vsel %vm415, %v4137, 0
    %4148 = vmatprep.subr.mxu0 0.0
    %4149 = vmatpush1.msra.mxu0 %v3902
    %4150 = vmatprep.subr.mxu0 0.0
    %4151 = vmatpush1.msra.mxu0 %v3907
    %4152 = vmatprep.subr.mxu0 0.0
    %4153 = vmatpush1.msra.mxu0 0.0
    %4154 = vmatprep.subr.mxu0 0.0
    %4155 = vmatpush1.msra.mxu0 0.0
    %4156 = vmatprep.subr.mxu0 0.0
    %4157 = vmatpush1.msra.mxu0 0.0
    %4158 = vmatprep.subr.mxu0 0.0
    %4159 = vmatpush1.msra.mxu0 0.0
    %4160 = vmatprep.subr.mxu0 0.0
    %4161 = vmatpush1.msra.mxu0 0.0
    %4162 = vmatprep.subr.mxu0 0.0
    %4163 = vmatpush1.msra.mxu0 0.0
    %4164 = vmatprep.subr.mxu0 0.0
    %4165 = vmatpush1.msra.mxu0 0.0
    %4166 = vmatprep.subr.mxu0 0.0
    %4167 = vmatpush1.msra.mxu0 0.0
    %4168 = vmatprep.subr.mxu0 0.0
    %4169 = vmatpush1.msra.mxu0 0.0
    %4170 = vmatprep.subr.mxu0 0.0
    %4171 = vmatpush1.msra.mxu0 0.0
    %4172 = vmatprep.subr.mxu0 0.0
    %4173 = vmatpush1.msra.mxu0 0.0
    %4174 = vmatprep.subr.mxu0 0.0
    %4175 = vmatpush1.msra.mxu0 0.0
    %4176 = vmatprep.subr.mxu0 0.0
    %4177 = vmatpush1.msra.mxu0 0.0
    %4178 = vmatprep.subr.mxu0 0.0
    %4179 = vmatpush1.msra.mxu0 0.0
    %4180 = vmatprep.subr.mxu0 0.0
    %4181 = vmatpush1.msra.mxu0 0.0
    %4182 = vmatprep.subr.mxu0 0.0
    %4183 = vmatpush1.msra.mxu0 0.0
    %4184 = vmatprep.subr.mxu0 0.0
    %4185 = vmatpush1.msra.mxu0 0.0
    %4186 = vmatprep.subr.mxu0 0.0
    %4187 = vmatpush1.msra.mxu0 0.0
    %4188 = vmatprep.subr.mxu0 0.0
    %4189 = vmatpush1.msra.mxu0 0.0
    %4190 = vmatprep.subr.mxu0 0.0
    %4191 = vmatpush1.msra.mxu0 0.0
    %4192 = vmatprep.subr.mxu0 0.0
    %4193 = vmatpush1.msra.mxu0 0.0
    %4194 = vmatprep.subr.mxu0 0.0
    %4195 = vmatpush1.msra.mxu0 0.0
    %4196 = vmatprep.subr.mxu0 0.0
    %4197 = vmatpush1.msra.mxu0 0.0
    %4198 = vmatprep.subr.mxu0 0.0
    %4199 = vmatpush1.msra.mxu0 0.0
    %4200 = vmatprep.subr.mxu0 0.0
    %4201 = vmatpush1.msra.mxu0 0.0
    %4202 = vmatprep.subr.mxu0 0.0
    %4203 = vmatpush1.msra.mxu0 0.0
    %4204 = vmatprep.subr.mxu0 0.0
    %4205 = vmatpush1.msra.mxu0 0.0
    %4206 = vmatprep.subr.mxu0 0.0
    %4207 = vmatpush1.msra.mxu0 0.0
    %4208 = vmatprep.subr.mxu0 0.0
    %4209 = vmatpush1.msra.mxu0 0.0
    %4210 = vmatprep.subr.mxu0 0.0
    %4211 = vmatpush1.msra.mxu0 0.0
    %4212 = vmatprep.mubr.f32.mxu0 0.0
    %4213 = vmatmul.mubr.f32.gmra.mrb[0].mxu0 %v4143
    %v4214 = vpop.f32.mrb[0].mxu0
    %v4215 = vadd.f32 0.0, %v4214
    %v4216 = vpop.f32.mrb[0].mxu0
    %4217 = vmatprep.mubr.f32.mxu0 0.0
    %4218 = vmatmul.mubr.f32.gmra.mrb[0].mxu0 %v4146
    %v4219 = vpop.f32.mrb[0].mxu0
    %v4220 = vadd.f32 0.0, %v4219
    %v4221 = vpop.f32.mrb[0].mxu0
    %4222 = vdwg.mxu0
    %v4224 = vsel %vm415, %v4139, 0
    %v4227 = vsel %vm415, %v4141, 0
    %4229 = vmatprep.subr.mxu0 0.0
    %4230 = vmatpush1.msra.mxu0 %v3912
    %4231 = vmatprep.subr.mxu0 0.0
    %4232 = vmatpush1.msra.mxu0 %v3917
    %4233 = vmatprep.subr.mxu0 0.0
    %4234 = vmatpush1.msra.mxu0 0.0
    %4235 = vmatprep.subr.mxu0 0.0
    %4236 = vmatpush1.msra.mxu0 0.0
    %4237 = vmatprep.subr.mxu0 0.0
    %4238 = vmatpush1.msra.mxu0 0.0
    %4239 = vmatprep.subr.mxu0 0.0
    %4240 = vmatpush1.msra.mxu0 0.0
    %4241 = vmatprep.subr.mxu0 0.0
    %4242 = vmatpush1.msra.mxu0 0.0
    %4243 = vmatprep.subr.mxu0 0.0
    %4244 = vmatpush1.msra.mxu0 0.0
    %4245 = vmatprep.subr.mxu0 0.0
    %4246 = vmatpush1.msra.mxu0 0.0
    %4247 = vmatprep.subr.mxu0 0.0
    %4248 = vmatpush1.msra.mxu0 0.0
    %4249 = vmatprep.subr.mxu0 0.0
    %4250 = vmatpush1.msra.mxu0 0.0
    %4251 = vmatprep.subr.mxu0 0.0
    %4252 = vmatpush1.msra.mxu0 0.0
    %4253 = vmatprep.subr.mxu0 0.0
    %4254 = vmatpush1.msra.mxu0 0.0
    %4255 = vmatprep.subr.mxu0 0.0
    %4256 = vmatpush1.msra.mxu0 0.0
    %4257 = vmatprep.subr.mxu0 0.0
    %4258 = vmatpush1.msra.mxu0 0.0
    %4259 = vmatprep.subr.mxu0 0.0
    %4260 = vmatpush1.msra.mxu0 0.0
    %4261 = vmatprep.subr.mxu0 0.0
    %4262 = vmatpush1.msra.mxu0 0.0
    %4263 = vmatprep.subr.mxu0 0.0
    %4264 = vmatpush1.msra.mxu0 0.0
    %4265 = vmatprep.subr.mxu0 0.0
    %4266 = vmatpush1.msra.mxu0 0.0
    %4267 = vmatprep.subr.mxu0 0.0
    %4268 = vmatpush1.msra.mxu0 0.0
    %4269 = vmatprep.subr.mxu0 0.0
    %4270 = vmatpush1.msra.mxu0 0.0
    %4271 = vmatprep.subr.mxu0 0.0
    %4272 = vmatpush1.msra.mxu0 0.0
    %4273 = vmatprep.subr.mxu0 0.0
    %4274 = vmatpush1.msra.mxu0 0.0
    %4275 = vmatprep.subr.mxu0 0.0
    %4276 = vmatpush1.msra.mxu0 0.0
    %4277 = vmatprep.subr.mxu0 0.0
    %4278 = vmatpush1.msra.mxu0 0.0
    %4279 = vmatprep.subr.mxu0 0.0
    %4280 = vmatpush1.msra.mxu0 0.0
    %4281 = vmatprep.subr.mxu0 0.0
    %4282 = vmatpush1.msra.mxu0 0.0
    %4283 = vmatprep.subr.mxu0 0.0
    %4284 = vmatpush1.msra.mxu0 0.0
    %4285 = vmatprep.subr.mxu0 0.0
    %4286 = vmatpush1.msra.mxu0 0.0
    %4287 = vmatprep.subr.mxu0 0.0
    %4288 = vmatpush1.msra.mxu0 0.0
    %4289 = vmatprep.subr.mxu0 0.0
    %4290 = vmatpush1.msra.mxu0 0.0
    %4291 = vmatprep.subr.mxu0 0.0
    %4292 = vmatpush1.msra.mxu0 0.0
    %4293 = vmatprep.mubr.f32.mxu0 0.0
    %4294 = vmatmul.mubr.f32.gmra.mrb[0].mxu0 %v4224
    %v4295 = vpop.f32.mrb[0].mxu0
    %v4296 = vadd.f32 0.0, %v4295
    %v4297 = vpop.f32.mrb[0].mxu0
    %4298 = vmatprep.mubr.f32.mxu0 0.0
    %4299 = vmatmul.mubr.f32.gmra.mrb[0].mxu0 %v4227
    %v4300 = vpop.f32.mrb[0].mxu0
    %v4301 = vadd.f32 0.0, %v4300
    %v4302 = vpop.f32.mrb[0].mxu0
    %4303 = vdwg.mxu0
    %v4305 = vlaneseq
    %v4306 = vshrl.u32 %v4305, 7
    %v4307 = vsub.s32 0, %v4306
    %v4308 = vrot.slane %v3622, %v4307
    %4310 = vmatprep.subr.mxu0 0.0
    %4311 = vmatpush1.msra.mxu0 %v3565
    %4312 = vmatprep.subr.mxu0 0.0
    %4313 = vmatpush1.msra.mxu0 %v3566
    %4314 = vmatprep.subr.mxu0 0.0
    %4315 = vmatpush1.msra.mxu0 %v3567
    %4316 = vmatprep.subr.mxu0 0.0
    %4317 = vmatpush1.msra.mxu0 %v3568
    %4318 = vmatprep.subr.mxu0 0.0
    %4319 = vmatpush1.msra.mxu0 0.0
    %4320 = vmatprep.subr.mxu0 0.0
    %4321 = vmatpush1.msra.mxu0 0.0
    %4322 = vmatprep.subr.mxu0 0.0
    %4323 = vmatpush1.msra.mxu0 0.0
    %4324 = vmatprep.subr.mxu0 0.0
    %4325 = vmatpush1.msra.mxu0 0.0
    %4326 = vmatprep.subr.mxu0 0.0
    %4327 = vmatpush1.msra.mxu0 0.0
    %4328 = vmatprep.subr.mxu0 0.0
    %4329 = vmatpush1.msra.mxu0 0.0
    %4330 = vmatprep.subr.mxu0 0.0
    %4331 = vmatpush1.msra.mxu0 0.0
    %4332 = vmatprep.subr.mxu0 0.0
    %4333 = vmatpush1.msra.mxu0 0.0
    %4334 = vmatprep.subr.mxu0 0.0
    %4335 = vmatpush1.msra.mxu0 0.0
    %4336 = vmatprep.subr.mxu0 0.0
    %4337 = vmatpush1.msra.mxu0 0.0
    %4338 = vmatprep.subr.mxu0 0.0
    %4339 = vmatpush1.msra.mxu0 0.0
    %4340 = vmatprep.subr.mxu0 0.0
    %4341 = vmatpush1.msra.mxu0 0.0
    %4342 = vmatprep.subr.mxu0 0.0
    %4343 = vmatpush1.msra.mxu0 0.0
    %4344 = vmatprep.subr.mxu0 0.0
    %4345 = vmatpush1.msra.mxu0 0.0
    %4346 = vmatprep.subr.mxu0 0.0
    %4347 = vmatpush1.msra.mxu0 0.0
    %4348 = vmatprep.subr.mxu0 0.0
    %4349 = vmatpush1.msra.mxu0 0.0
    %4350 = vmatprep.subr.mxu0 0.0
    %4351 = vmatpush1.msra.mxu0 0.0
    %4352 = vmatprep.subr.mxu0 0.0
    %4353 = vmatpush1.msra.mxu0 0.0
    %4354 = vmatprep.subr.mxu0 0.0
    %4355 = vmatpush1.msra.mxu0 0.0
    %4356 = vmatprep.subr.mxu0 0.0
    %4357 = vmatpush1.msra.mxu0 0.0
    %4358 = vmatprep.subr.mxu0 0.0
    %4359 = vmatpush1.msra.mxu0 0.0
    %4360 = vmatprep.subr.mxu0 0.0
    %4361 = vmatpush1.msra.mxu0 0.0
    %4362 = vmatprep.subr.mxu0 0.0
    %4363 = vmatpush1.msra.mxu0 0.0
    %4364 = vmatprep.subr.mxu0 0.0
    %4365 = vmatpush1.msra.mxu0 0.0
    %4366 = vmatprep.subr.mxu0 0.0
    %4367 = vmatpush1.msra.mxu0 0.0
    %4368 = vmatprep.subr.mxu0 0.0
    %4369 = vmatpush1.msra.mxu0 0.0
    %4370 = vmatprep.subr.mxu0 0.0
    %4371 = vmatpush1.msra.mxu0 0.0
    %4372 = vmatprep.subr.mxu0 0.0
    %4373 = vmatpush1.msra.mxu0 0.0
    %4374 = vmatprep.mubr.f32.mxu0 0.0
    %4375 = vmatmul.mubr.f32.gmra.mrb[0].mxu0 %v3642
    %v4376 = vpop.f32.mrb[0].mxu0
    %v4377 = vadd.f32 %v4308, %v4376
    %v4378 = vpop.f32.mrb[0].mxu0
    %4379 = vmatprep.mubr.f32.mxu0 0.0
    %4380 = vmatmul.mubr.f32.gmra.mrb[0].mxu0 %v3645
    %v4381 = vpop.f32.mrb[0].mxu0
    %v4382 = vadd.f32 %v4308, %v4381
    %v4383 = vpop.f32.mrb[0].mxu0
    %4384 = vmatprep.mubr.f32.mxu0 0.0
    %4385 = vmatmul.mubr.f32.gmra.mrb[0].mxu0 %v3648
    %v4386 = vpop.f32.mrb[0].mxu0
    %v4387 = vadd.f32 %v4308, %v4386
    %v4388 = vpop.f32.mrb[0].mxu0
    %4389 = vmatprep.mubr.f32.mxu0 0.0
    %4390 = vmatmul.mubr.f32.gmra.mrb[0].mxu0 %v3651
    %v4391 = vpop.f32.mrb[0].mxu0
    %v4392 = vadd.f32 %v4308, %v4391
    %v4393 = vpop.f32.mrb[0].mxu0
    %4394 = vdwg.mxu0
    %v4396 = vlaneseq
    %v4397 = vshrl.u32 %v4396, 7
    %v4398 = vsub.s32 0, %v4397
    %v4399 = vrot.slane %v3627, %v4398
    %4401 = vmatprep.subr.mxu0 0.0
    %4402 = vmatpush1.msra.mxu0 %v3582
    %4403 = vmatprep.subr.mxu0 0.0
    %4404 = vmatpush1.msra.mxu0 %v3583
    %4405 = vmatprep.subr.mxu0 0.0
    %4406 = vmatpush1.msra.mxu0 %v3584
    %4407 = vmatprep.subr.mxu0 0.0
    %4408 = vmatpush1.msra.mxu0 %v3585
    %4409 = vmatprep.subr.mxu0 0.0
    %4410 = vmatpush1.msra.mxu0 0.0
    %4411 = vmatprep.subr.mxu0 0.0
    %4412 = vmatpush1.msra.mxu0 0.0
    %4413 = vmatprep.subr.mxu0 0.0
    %4414 = vmatpush1.msra.mxu0 0.0
    %4415 = vmatprep.subr.mxu0 0.0
    %4416 = vmatpush1.msra.mxu0 0.0
    %4417 = vmatprep.subr.mxu0 0.0
    %4418 = vmatpush1.msra.mxu0 0.0
    %4419 = vmatprep.subr.mxu0 0.0
    %4420 = vmatpush1.msra.mxu0 0.0
    %4421 = vmatprep.subr.mxu0 0.0
    %4422 = vmatpush1.msra.mxu0 0.0
    %4423 = vmatprep.subr.mxu0 0.0
    %4424 = vmatpush1.msra.mxu0 0.0
    %4425 = vmatprep.subr.mxu0 0.0
    %4426 = vmatpush1.msra.mxu0 0.0
    %4427 = vmatprep.subr.mxu0 0.0
    %4428 = vmatpush1.msra.mxu0 0.0
    %4429 = vmatprep.subr.mxu0 0.0
    %4430 = vmatpush1.msra.mxu0 0.0
    %4431 = vmatprep.subr.mxu0 0.0
    %4432 = vmatpush1.msra.mxu0 0.0
    %4433 = vmatprep.subr.mxu0 0.0
    %4434 = vmatpush1.msra.mxu0 0.0
    %4435 = vmatprep.subr.mxu0 0.0
    %4436 = vmatpush1.msra.mxu0 0.0
    %4437 = vmatprep.subr.mxu0 0.0
    %4438 = vmatpush1.msra.mxu0 0.0
    %4439 = vmatprep.subr.mxu0 0.0
    %4440 = vmatpush1.msra.mxu0 0.0
    %4441 = vmatprep.subr.mxu0 0.0
    %4442 = vmatpush1.msra.mxu0 0.0
    %4443 = vmatprep.subr.mxu0 0.0
    %4444 = vmatpush1.msra.mxu0 0.0
    %4445 = vmatprep.subr.mxu0 0.0
    %4446 = vmatpush1.msra.mxu0 0.0
    %4447 = vmatprep.subr.mxu0 0.0
    %4448 = vmatpush1.msra.mxu0 0.0
    %4449 = vmatprep.subr.mxu0 0.0
    %4450 = vmatpush1.msra.mxu0 0.0
    %4451 = vmatprep.subr.mxu0 0.0
    %4452 = vmatpush1.msra.mxu0 0.0
    %4453 = vmatprep.subr.mxu0 0.0
    %4454 = vmatpush1.msra.mxu0 0.0
    %4455 = vmatprep.subr.mxu0 0.0
    %4456 = vmatpush1.msra.mxu0 0.0
    %4457 = vmatprep.subr.mxu0 0.0
    %4458 = vmatpush1.msra.mxu0 0.0
    %4459 = vmatprep.subr.mxu0 0.0
    %4460 = vmatpush1.msra.mxu0 0.0
    %4461 = vmatprep.subr.mxu0 0.0
    %4462 = vmatpush1.msra.mxu0 0.0
    %4463 = vmatprep.subr.mxu0 0.0
    %4464 = vmatpush1.msra.mxu0 0.0
    %4465 = vmatprep.mubr.f32.mxu0 0.0
    %4466 = vmatmul.mubr.f32.gmra.mrb[0].mxu0 %v3642
    %v4467 = vpop.f32.mrb[0].mxu0
    %v4468 = vadd.f32 %v4399, %v4467
    %v4469 = vpop.f32.mrb[0].mxu0
    %4470 = vmatprep.mubr.f32.mxu0 0.0
    %4471 = vmatmul.mubr.f32.gmra.mrb[0].mxu0 %v3645
    %v4472 = vpop.f32.mrb[0].mxu0
    %v4473 = vadd.f32 %v4399, %v4472
    %v4474 = vpop.f32.mrb[0].mxu0
    %4475 = vmatprep.mubr.f32.mxu0 0.0
    %4476 = vmatmul.mubr.f32.gmra.mrb[0].mxu0 %v3648
    %v4477 = vpop.f32.mrb[0].mxu0
    %v4478 = vadd.f32 %v4399, %v4477
    %v4479 = vpop.f32.mrb[0].mxu0
    %4480 = vmatprep.mubr.f32.mxu0 0.0
    %4481 = vmatmul.mubr.f32.gmra.mrb[0].mxu0 %v3651
    %v4482 = vpop.f32.mrb[0].mxu0
    %v4483 = vadd.f32 %v4399, %v4482
    %v4484 = vpop.f32.mrb[0].mxu0
    %4485 = vdwg.mxu0
    %v4487 = vlaneseq
    %v4488 = vshrl.u32 %v4487, 7
    %v4489 = vsub.s32 0, %v4488
    %v4490 = vrot.slane %v3632, %v4489
    %4492 = vmatprep.subr.mxu0 0.0
    %4493 = vmatpush1.msra.mxu0 %v3599
    %4494 = vmatprep.subr.mxu0 0.0
    %4495 = vmatpush1.msra.mxu0 %v3600
    %4496 = vmatprep.subr.mxu0 0.0
    %4497 = vmatpush1.msra.mxu0 %v3601
    %4498 = vmatprep.subr.mxu0 0.0
    %4499 = vmatpush1.msra.mxu0 %v3602
    %4500 = vmatprep.subr.mxu0 0.0
    %4501 = vmatpush1.msra.mxu0 0.0
    %4502 = vmatprep.subr.mxu0 0.0
    %4503 = vmatpush1.msra.mxu0 0.0
    %4504 = vmatprep.subr.mxu0 0.0
    %4505 = vmatpush1.msra.mxu0 0.0
    %4506 = vmatprep.subr.mxu0 0.0
    %4507 = vmatpush1.msra.mxu0 0.0
    %4508 = vmatprep.subr.mxu0 0.0
    %4509 = vmatpush1.msra.mxu0 0.0
    %4510 = vmatprep.subr.mxu0 0.0
    %4511 = vmatpush1.msra.mxu0 0.0
    %4512 = vmatprep.subr.mxu0 0.0
    %4513 = vmatpush1.msra.mxu0 0.0
    %4514 = vmatprep.subr.mxu0 0.0
    %4515 = vmatpush1.msra.mxu0 0.0
    %4516 = vmatprep.subr.mxu0 0.0
    %4517 = vmatpush1.msra.mxu0 0.0
    %4518 = vmatprep.subr.mxu0 0.0
    %4519 = vmatpush1.msra.mxu0 0.0
    %4520 = vmatprep.subr.mxu0 0.0
    %4521 = vmatpush1.msra.mxu0 0.0
    %4522 = vmatprep.subr.mxu0 0.0
    %4523 = vmatpush1.msra.mxu0 0.0
    %4524 = vmatprep.subr.mxu0 0.0
    %4525 = vmatpush1.msra.mxu0 0.0
    %4526 = vmatprep.subr.mxu0 0.0
    %4527 = vmatpush1.msra.mxu0 0.0
    %4528 = vmatprep.subr.mxu0 0.0
    %4529 = vmatpush1.msra.mxu0 0.0
    %4530 = vmatprep.subr.mxu0 0.0
    %4531 = vmatpush1.msra.mxu0 0.0
    %4532 = vmatprep.subr.mxu0 0.0
    %4533 = vmatpush1.msra.mxu0 0.0
    %4534 = vmatprep.subr.mxu0 0.0
    %4535 = vmatpush1.msra.mxu0 0.0
    %4536 = vmatprep.subr.mxu0 0.0
    %4537 = vmatpush1.msra.mxu0 0.0
    %4538 = vmatprep.subr.mxu0 0.0
    %4539 = vmatpush1.msra.mxu0 0.0
    %4540 = vmatprep.subr.mxu0 0.0
    %4541 = vmatpush1.msra.mxu0 0.0
    %4542 = vmatprep.subr.mxu0 0.0
    %4543 = vmatpush1.msra.mxu0 0.0
    %4544 = vmatprep.subr.mxu0 0.0
    %4545 = vmatpush1.msra.mxu0 0.0
    %4546 = vmatprep.subr.mxu0 0.0
    %4547 = vmatpush1.msra.mxu0 0.0
    %4548 = vmatprep.subr.mxu0 0.0
    %4549 = vmatpush1.msra.mxu0 0.0
    %4550 = vmatprep.subr.mxu0 0.0
    %4551 = vmatpush1.msra.mxu0 0.0
    %4552 = vmatprep.subr.mxu0 0.0
    %4553 = vmatpush1.msra.mxu0 0.0
    %4554 = vmatprep.subr.mxu0 0.0
    %4555 = vmatpush1.msra.mxu0 0.0
    %4556 = vmatprep.mubr.f32.mxu0 0.0
    %4557 = vmatmul.mubr.f32.gmra.mrb[0].mxu0 %v3642
    %v4558 = vpop.f32.mrb[0].mxu0
    %v4559 = vadd.f32 %v4490, %v4558
    %v4560 = vpop.f32.mrb[0].mxu0
    %4561 = vmatprep.mubr.f32.mxu0 0.0
    %4562 = vmatmul.mubr.f32.gmra.mrb[0].mxu0 %v3645
    %v4563 = vpop.f32.mrb[0].mxu0
    %v4564 = vadd.f32 %v4490, %v4563
    %v4565 = vpop.f32.mrb[0].mxu0
    %4566 = vmatprep.mubr.f32.mxu0 0.0
    %4567 = vmatmul.mubr.f32.gmra.mrb[0].mxu0 %v3648
    %v4568 = vpop.f32.mrb[0].mxu0
    %v4569 = vadd.f32 %v4490, %v4568
    %v4570 = vpop.f32.mrb[0].mxu0
    %4571 = vmatprep.mubr.f32.mxu0 0.0
    %4572 = vmatmul.mubr.f32.gmra.mrb[0].mxu0 %v3651
    %v4573 = vpop.f32.mrb[0].mxu0
    %v4574 = vadd.f32 %v4490, %v4573
    %v4575 = vpop.f32.mrb[0].mxu0
    %4576 = vdwg.mxu0
    %v4578 = vsel %vm415, %v4377, 0
    %v4581 = vsel %vm415, %v4382, 0
    %v4584 = vsel %vm415, %v4468, 0
    %v4587 = vsel %vm415, %v4473, 0
    %4589 = vmatprep.subr.mxu0 0.0
    %4590 = vmatpush1.xpose.msra.mxu0 %v4584
    %4591 = vmatprep.subr.mxu0 0.0
    %4592 = vmatpush1.xpose.msra.mxu0 %v4587
    %4593 = vmatprep.subr.mxu0 0.0
    %4594 = vmatpush1.xpose.msra.mxu0 0.0
    %4595 = vmatprep.subr.mxu0 0.0
    %4596 = vmatpush1.xpose.msra.mxu0 0.0
    %4597 = vmatprep.subr.mxu0 0.0
    %4598 = vmatpush1.xpose.msra.mxu0 0.0
    %4599 = vmatprep.subr.mxu0 0.0
    %4600 = vmatpush1.xpose.msra.mxu0 0.0
    %4601 = vmatprep.subr.mxu0 0.0
    %4602 = vmatpush1.xpose.msra.mxu0 0.0
    %4603 = vmatprep.subr.mxu0 0.0
    %4604 = vmatpush1.xpose.msra.mxu0 0.0
    %4605 = vmatprep.subr.mxu0 0.0
    %4606 = vmatpush1.xpose.msra.mxu0 0.0
    %4607 = vmatprep.subr.mxu0 0.0
    %4608 = vmatpush1.xpose.msra.mxu0 0.0
    %4609 = vmatprep.subr.mxu0 0.0
    %4610 = vmatpush1.xpose.msra.mxu0 0.0
    %4611 = vmatprep.subr.mxu0 0.0
    %4612 = vmatpush1.xpose.msra.mxu0 0.0
    %4613 = vmatprep.subr.mxu0 0.0
    %4614 = vmatpush1.xpose.msra.mxu0 0.0
    %4615 = vmatprep.subr.mxu0 0.0
    %4616 = vmatpush1.xpose.msra.mxu0 0.0
    %4617 = vmatprep.subr.mxu0 0.0
    %4618 = vmatpush1.xpose.msra.mxu0 0.0
    %4619 = vmatprep.subr.mxu0 0.0
    %4620 = vmatpush1.xpose.msra.mxu0 0.0
    %4621 = vmatprep.subr.mxu0 0.0
    %4622 = vmatpush1.xpose.msra.mxu0 0.0
    %4623 = vmatprep.subr.mxu0 0.0
    %4624 = vmatpush1.xpose.msra.mxu0 0.0
    %4625 = vmatprep.subr.mxu0 0.0
    %4626 = vmatpush1.xpose.msra.mxu0 0.0
    %4627 = vmatprep.subr.mxu0 0.0
    %4628 = vmatpush1.xpose.msra.mxu0 0.0
    %4629 = vmatprep.subr.mxu0 0.0
    %4630 = vmatpush1.xpose.msra.mxu0 0.0
    %4631 = vmatprep.subr.mxu0 0.0
    %4632 = vmatpush1.xpose.msra.mxu0 0.0
    %4633 = vmatprep.subr.mxu0 0.0
    %4634 = vmatpush1.xpose.msra.mxu0 0.0
    %4635 = vmatprep.subr.mxu0 0.0
    %4636 = vmatpush1.xpose.msra.mxu0 0.0
    %4637 = vmatprep.subr.mxu0 0.0
    %4638 = vmatpush1.xpose.msra.mxu0 0.0
    %4639 = vmatprep.subr.mxu0 0.0
    %4640 = vmatpush1.xpose.msra.mxu0 0.0
    %4641 = vmatprep.subr.mxu0 0.0
    %4642 = vmatpush1.xpose.msra.mxu0 0.0
    %4643 = vmatprep.subr.mxu0 0.0
    %4644 = vmatpush1.xpose.msra.mxu0 0.0
    %4645 = vmatprep.subr.mxu0 0.0
    %4646 = vmatpush1.xpose.msra.mxu0 0.0
    %4647 = vmatprep.subr.mxu0 0.0
    %4648 = vmatpush1.xpose.msra.mxu0 0.0
    %4649 = vmatprep.subr.mxu0 0.0
    %4650 = vmatpush1.xpose.msra.mxu0 0.0
    %4651 = vmatprep.subr.mxu0 0.0
    %4652 = vmatpush1.xpose.msra.mxu0 0.0
    %4653 = vmatprep.mubr.f32.mxu0 0.0
    %4654 = vmatmul.mubr.f32.gmra.mrb[0].mxu0 %v4578
    %v4655 = vpop.f32.mrb[0].mxu0
    %v4656 = vadd.f32 0.0, %v4655
    %v4657 = vpop.f32.mrb[0].mxu0
    %4658 = vmatprep.mubr.f32.mxu0 0.0
    %4659 = vmatmul.mubr.f32.gmra.mrb[0].mxu0 %v4581
    %v4660 = vpop.f32.mrb[0].mxu0
    %v4661 = vadd.f32 0.0, %v4660
    %v4662 = vpop.f32.mrb[0].mxu0
    %4663 = vdwg.mxu0
    %v4665 = vsel %vm415, %v4387, 0
    %v4668 = vsel %vm415, %v4392, 0
    %v4671 = vsel %vm415, %v4478, 0
    %v4674 = vsel %vm415, %v4483, 0
    %4676 = vmatprep.subr.mxu0 0.0
    %4677 = vmatpush1.xpose.msra.mxu0 %v4671
    %4678 = vmatprep.subr.mxu0 0.0
    %4679 = vmatpush1.xpose.msra.mxu0 %v4674
    %4680 = vmatprep.subr.mxu0 0.0
    %4681 = vmatpush1.xpose.msra.mxu0 0.0
    %4682 = vmatprep.subr.mxu0 0.0
    %4683 = vmatpush1.xpose.msra.mxu0 0.0
    %4684 = vmatprep.subr.mxu0 0.0
    %4685 = vmatpush1.xpose.msra.mxu0 0.0
    %4686 = vmatprep.subr.mxu0 0.0
    %4687 = vmatpush1.xpose.msra.mxu0 0.0
    %4688 = vmatprep.subr.mxu0 0.0
    %4689 = vmatpush1.xpose.msra.mxu0 0.0
    %4690 = vmatprep.subr.mxu0 0.0
    %4691 = vmatpush1.xpose.msra.mxu0 0.0
    %4692 = vmatprep.subr.mxu0 0.0
    %4693 = vmatpush1.xpose.msra.mxu0 0.0
    %4694 = vmatprep.subr.mxu0 0.0
    %4695 = vmatpush1.xpose.msra.mxu0 0.0
    %4696 = vmatprep.subr.mxu0 0.0
    %4697 = vmatpush1.xpose.msra.mxu0 0.0
    %4698 = vmatprep.subr.mxu0 0.0
    %4699 = vmatpush1.xpose.msra.mxu0 0.0
    %4700 = vmatprep.subr.mxu0 0.0
    %4701 = vmatpush1.xpose.msra.mxu0 0.0
    %4702 = vmatprep.subr.mxu0 0.0
    %4703 = vmatpush1.xpose.msra.mxu0 0.0
    %4704 = vmatprep.subr.mxu0 0.0
    %4705 = vmatpush1.xpose.msra.mxu0 0.0
    %4706 = vmatprep.subr.mxu0 0.0
    %4707 = vmatpush1.xpose.msra.mxu0 0.0
    %4708 = vmatprep.subr.mxu0 0.0
    %4709 = vmatpush1.xpose.msra.mxu0 0.0
    %4710 = vmatprep.subr.mxu0 0.0
    %4711 = vmatpush1.xpose.msra.mxu0 0.0
    %4712 = vmatprep.subr.mxu0 0.0
    %4713 = vmatpush1.xpose.msra.mxu0 0.0
    %4714 = vmatprep.subr.mxu0 0.0
    %4715 = vmatpush1.xpose.msra.mxu0 0.0
    %4716 = vmatprep.subr.mxu0 0.0
    %4717 = vmatpush1.xpose.msra.mxu0 0.0
    %4718 = vmatprep.subr.mxu0 0.0
    %4719 = vmatpush1.xpose.msra.mxu0 0.0
    %4720 = vmatprep.subr.mxu0 0.0
    %4721 = vmatpush1.xpose.msra.mxu0 0.0
    %4722 = vmatprep.subr.mxu0 0.0
    %4723 = vmatpush1.xpose.msra.mxu0 0.0
    %4724 = vmatprep.subr.mxu0 0.0
    %4725 = vmatpush1.xpose.msra.mxu0 0.0
    %4726 = vmatprep.subr.mxu0 0.0
    %4727 = vmatpush1.xpose.msra.mxu0 0.0
    %4728 = vmatprep.subr.mxu0 0.0
    %4729 = vmatpush1.xpose.msra.mxu0 0.0
    %4730 = vmatprep.subr.mxu0 0.0
    %4731 = vmatpush1.xpose.msra.mxu0 0.0
    %4732 = vmatprep.subr.mxu0 0.0
    %4733 = vmatpush1.xpose.msra.mxu0 0.0
    %4734 = vmatprep.subr.mxu0 0.0
    %4735 = vmatpush1.xpose.msra.mxu0 0.0
    %4736 = vmatprep.subr.mxu0 0.0
    %4737 = vmatpush1.xpose.msra.mxu0 0.0
    %4738 = vmatprep.subr.mxu0 0.0
    %4739 = vmatpush1.xpose.msra.mxu0 0.0
    %4740 = vmatprep.mubr.f32.mxu0 0.0
    %4741 = vmatmul.mubr.f32.gmra.mrb[0].mxu0 %v4665
    %v4742 = vpop.f32.mrb[0].mxu0
    %v4743 = vadd.f32 0.0, %v4742
    %v4744 = vpop.f32.mrb[0].mxu0
    %4745 = vmatprep.mubr.f32.mxu0 0.0
    %4746 = vmatmul.mubr.f32.gmra.mrb[0].mxu0 %v4668
    %v4747 = vpop.f32.mrb[0].mxu0
    %v4748 = vadd.f32 0.0, %v4747
    %v4749 = vpop.f32.mrb[0].mxu0
    %4750 = vdwg.mxu0
    %v4751 = vmul.f32 %v4656, 0.25
    %v4752 = vmul.f32 %v4661, 0.25
    %v4753 = vmul.f32 %v4743, 0.25
    %v4754 = vmul.f32 %v4748, 0.25
    %v4755 = vsel %vm415, %v4751, -inf
    %4756 = vmax.xlane.f32.xlu0 %v4755
    %v4757 = vpop.xlane.xlu0 %4756
    %v4758 = vsel %vm415, %v4752, -inf
    %4759 = vmax.xlane.f32.xlu0 %v4758
    %v4760 = vpop.xlane.xlu0 %4759
    %v4761 = vsel %vm415, %v4753, -inf
    %4762 = vmax.xlane.f32.xlu0 %v4761
    %v4763 = vpop.xlane.xlu0 %4762
    %v4764 = vsel %vm415, %v4754, -inf
    %4765 = vmax.xlane.f32.xlu0 %v4764
    %v4766 = vpop.xlane.xlu0 %4765
    %v4767 = vsub.f32 %v4751, %v4757
    %v4768 = vsub.f32 %v4752, %v4760
    %v4769 = vsub.f32 %v4753, %v4763
    %v4770 = vsub.f32 %v4754, %v4766
    %v4771 = vmul.f32 %v4767, 1.442695
    %v4772 = vpow.pop %v4771
    %v4773 = vmul.f32 %v4768, 1.442695
    %v4774 = vpow.pop %v4773
    %v4775 = vmul.f32 %v4769, 1.442695
    %v4776 = vpow.pop %v4775
    %v4777 = vmul.f32 %v4770, 1.442695
    %v4778 = vpow.pop %v4777
    %v4779 = vsel %vm415, %v4772, 0.0
    %4780 = vadd.xlane.f32.xlu0 %v4779
    %v4781 = vpop.xlane.xlu0 %4780
    %v4782 = vsel %vm415, %v4774, 0.0
    %4783 = vadd.xlane.f32.xlu0 %v4782
    %v4784 = vpop.xlane.xlu0 %4783
    %v4785 = vsel %vm415, %v4776, 0.0
    %4786 = vadd.xlane.f32.xlu0 %v4785
    %v4787 = vpop.xlane.xlu0 %4786
    %v4788 = vsel %vm415, %v4778, 0.0
    %4789 = vadd.xlane.f32.xlu0 %v4788
    %v4790 = vpop.xlane.xlu0 %4789
    %v4791 = vrcp.pop %v4781
    %v4792 = vmul.f32 %v4772, %v4791
    %v4793 = vrcp.pop %v4784
    %v4794 = vmul.f32 %v4774, %v4793
    %v4795 = vrcp.pop %v4787
    %v4796 = vmul.f32 %v4776, %v4795
    %v4797 = vrcp.pop %v4790
    %v4798 = vmul.f32 %v4778, %v4797
    %v4800 = vsel %vm415, %v4792, 0
    %v4803 = vsel %vm415, %v4794, 0
    %4805 = vmatprep.subr.mxu0 0.0
    %4806 = vmatpush1.msra.mxu0 %v4559
    %4807 = vmatprep.subr.mxu0 0.0
    %4808 = vmatpush1.msra.mxu0 %v4564
    %4809 = vmatprep.subr.mxu0 0.0
    %4810 = vmatpush1.msra.mxu0 0.0
    %4811 = vmatprep.subr.mxu0 0.0
    %4812 = vmatpush1.msra.mxu0 0.0
    %4813 = vmatprep.subr.mxu0 0.0
    %4814 = vmatpush1.msra.mxu0 0.0
    %4815 = vmatprep.subr.mxu0 0.0
    %4816 = vmatpush1.msra.mxu0 0.0
    %4817 = vmatprep.subr.mxu0 0.0
    %4818 = vmatpush1.msra.mxu0 0.0
    %4819 = vmatprep.subr.mxu0 0.0
    %4820 = vmatpush1.msra.mxu0 0.0
    %4821 = vmatprep.subr.mxu0 0.0
    %4822 = vmatpush1.msra.mxu0 0.0
    %4823 = vmatprep.subr.mxu0 0.0
    %4824 = vmatpush1.msra.mxu0 0.0
    %4825 = vmatprep.subr.mxu0 0.0
    %4826 = vmatpush1.msra.mxu0 0.0
    %4827 = vmatprep.subr.mxu0 0.0
    %4828 = vmatpush1.msra.mxu0 0.0
    %4829 = vmatprep.subr.mxu0 0.0
    %4830 = vmatpush1.msra.mxu0 0.0
    %4831 = vmatprep.subr.mxu0 0.0
    %4832 = vmatpush1.msra.mxu0 0.0
    %4833 = vmatprep.subr.mxu0 0.0
    %4834 = vmatpush1.msra.mxu0 0.0
    %4835 = vmatprep.subr.mxu0 0.0
    %4836 = vmatpush1.msra.mxu0 0.0
    %4837 = vmatprep.subr.mxu0 0.0
    %4838 = vmatpush1.msra.mxu0 0.0
    %4839 = vmatprep.subr.mxu0 0.0
    %4840 = vmatpush1.msra.mxu0 0.0
    %4841 = vmatprep.subr.mxu0 0.0
    %4842 = vmatpush1.msra.mxu0 0.0
    %4843 = vmatprep.subr.mxu0 0.0
    %4844 = vmatpush1.msra.mxu0 0.0
    %4845 = vmatprep.subr.mxu0 0.0
    %4846 = vmatpush1.msra.mxu0 0.0
    %4847 = vmatprep.subr.mxu0 0.0
    %4848 = vmatpush1.msra.mxu0 0.0
    %4849 = vmatprep.subr.mxu0 0.0
    %4850 = vmatpush1.msra.mxu0 0.0
    %4851 = vmatprep.subr.mxu0 0.0
    %4852 = vmatpush1.msra.mxu0 0.0
    %4853 = vmatprep.subr.mxu0 0.0
    %4854 = vmatpush1.msra.mxu0 0.0
    %4855 = vmatprep.subr.mxu0 0.0
    %4856 = vmatpush1.msra.mxu0 0.0
    %4857 = vmatprep.subr.mxu0 0.0
    %4858 = vmatpush1.msra.mxu0 0.0
    %4859 = vmatprep.subr.mxu0 0.0
    %4860 = vmatpush1.msra.mxu0 0.0
    %4861 = vmatprep.subr.mxu0 0.0
    %4862 = vmatpush1.msra.mxu0 0.0
    %4863 = vmatprep.subr.mxu0 0.0
    %4864 = vmatpush1.msra.mxu0 0.0
    %4865 = vmatprep.subr.mxu0 0.0
    %4866 = vmatpush1.msra.mxu0 0.0
    %4867 = vmatprep.subr.mxu0 0.0
    %4868 = vmatpush1.msra.mxu0 0.0
    %4869 = vmatprep.mubr.f32.mxu0 0.0
    %4870 = vmatmul.mubr.f32.gmra.mrb[0].mxu0 %v4800
    %v4871 = vpop.f32.mrb[0].mxu0
    %v4872 = vadd.f32 0.0, %v4871
    %v4873 = vpop.f32.mrb[0].mxu0
    %4874 = vmatprep.mubr.f32.mxu0 0.0
    %4875 = vmatmul.mubr.f32.gmra.mrb[0].mxu0 %v4803
    %v4876 = vpop.f32.mrb[0].mxu0
    %v4877 = vadd.f32 0.0, %v4876
    %v4878 = vpop.f32.mrb[0].mxu0
    %4879 = vdwg.mxu0
    %v4881 = vsel %vm415, %v4796, 0
    %v4884 = vsel %vm415, %v4798, 0
    %4886 = vmatprep.subr.mxu0 0.0
    %4887 = vmatpush1.msra.mxu0 %v4569
    %4888 = vmatprep.subr.mxu0 0.0
    %4889 = vmatpush1.msra.mxu0 %v4574
    %4890 = vmatprep.subr.mxu0 0.0
    %4891 = vmatpush1.msra.mxu0 0.0
    %4892 = vmatprep.subr.mxu0 0.0
    %4893 = vmatpush1.msra.mxu0 0.0
    %4894 = vmatprep.subr.mxu0 0.0
    %4895 = vmatpush1.msra.mxu0 0.0
    %4896 = vmatprep.subr.mxu0 0.0
    %4897 = vmatpush1.msra.mxu0 0.0
    %4898 = vmatprep.subr.mxu0 0.0
    %4899 = vmatpush1.msra.mxu0 0.0
    %4900 = vmatprep.subr.mxu0 0.0
    %4901 = vmatpush1.msra.mxu0 0.0
    %4902 = vmatprep.subr.mxu0 0.0
    %4903 = vmatpush1.msra.mxu0 0.0
    %4904 = vmatprep.subr.mxu0 0.0
    %4905 = vmatpush1.msra.mxu0 0.0
    %4906 = vmatprep.subr.mxu0 0.0
    %4907 = vmatpush1.msra.mxu0 0.0
    %4908 = vmatprep.subr.mxu0 0.0
    %4909 = vmatpush1.msra.mxu0 0.0
    %4910 = vmatprep.subr.mxu0 0.0
    %4911 = vmatpush1.msra.mxu0 0.0
    %4912 = vmatprep.subr.mxu0 0.0
    %4913 = vmatpush1.msra.mxu0 0.0
    %4914 = vmatprep.subr.mxu0 0.0
    %4915 = vmatpush1.msra.mxu0 0.0
    %4916 = vmatprep.subr.mxu0 0.0
    %4917 = vmatpush1.msra.mxu0 0.0
    %4918 = vmatprep.subr.mxu0 0.0
    %4919 = vmatpush1.msra.mxu0 0.0
    %4920 = vmatprep.subr.mxu0 0.0
    %4921 = vmatpush1.msra.mxu0 0.0
    %4922 = vmatprep.subr.mxu0 0.0
    %4923 = vmatpush1.msra.mxu0 0.0
    %4924 = vmatprep.subr.mxu0 0.0
    %4925 = vmatpush1.msra.mxu0 0.0
    %4926 = vmatprep.subr.mxu0 0.0
    %4927 = vmatpush1.msra.mxu0 0.0
    %4928 = vmatprep.subr.mxu0 0.0
    %4929 = vmatpush1.msra.mxu0 0.0
    %4930 = vmatprep.subr.mxu0 0.0
    %4931 = vmatpush1.msra.mxu0 0.0
    %4932 = vmatprep.subr.mxu0 0.0
    %4933 = vmatpush1.msra.mxu0 0.0
    %4934 = vmatprep.subr.mxu0 0.0
    %4935 = vmatpush1.msra.mxu0 0.0
    %4936 = vmatprep.subr.mxu0 0.0
    %4937 = vmatpush1.msra.mxu0 0.0
    %4938 = vmatprep.subr.mxu0 0.0
    %4939 = vmatpush1.msra.mxu0 0.0
    %4940 = vmatprep.subr.mxu0 0.0
    %4941 = vmatpush1.msra.mxu0 0.0
    %4942 = vmatprep.subr.mxu0 0.0
    %4943 = vmatpush1.msra.mxu0 0.0
    %4944 = vmatprep.subr.mxu0 0.0
    %4945 = vmatpush1.msra.mxu0 0.0
    %4946 = vmatprep.subr.mxu0 0.0
    %4947 = vmatpush1.msra.mxu0 0.0
    %4948 = vmatprep.subr.mxu0 0.0
    %4949 = vmatpush1.msra.mxu0 0.0
    %4950 = vmatprep.mubr.f32.mxu0 0.0
    %4951 = vmatmul.mubr.f32.gmra.mrb[0].mxu0 %v4881
    %v4952 = vpop.f32.mrb[0].mxu0
    %v4953 = vadd.f32 0.0, %v4952
    %v4954 = vpop.f32.mrb[0].mxu0
    %4955 = vmatprep.mubr.f32.mxu0 0.0
    %4956 = vmatmul.mubr.f32.gmra.mrb[0].mxu0 %v4884
    %v4957 = vpop.f32.mrb[0].mxu0
    %v4958 = vadd.f32 0.0, %v4957
    %v4959 = vpop.f32.mrb[0].mxu0
    %4960 = vdwg.mxu0
    %v4962 = vsel %vm415, %v4872, 0
    %v4965 = vsel %vm415, %v4877, 0
    %v4968 = vsel %vm415, %v4953, 0
    %v4971 = vsel %vm415, %v4958, 0
    %4973 = vmatprep.subr.mxu0 0.0
    %4974 = vmatpush1.msra.mxu0 %v3614
    %4975 = vmatprep.subr.mxu0 0.0
    %4976 = vmatpush1.msra.mxu0 %v3615
    %4977 = vmatprep.subr.mxu0 0.0
    %4978 = vmatpush1.msra.mxu0 0.0
    %4979 = vmatprep.subr.mxu0 0.0
    %4980 = vmatpush1.msra.mxu0 0.0
    %4981 = vmatprep.subr.mxu0 0.0
    %4982 = vmatpush1.msra.mxu0 0.0
    %4983 = vmatprep.subr.mxu0 0.0
    %4984 = vmatpush1.msra.mxu0 0.0
    %4985 = vmatprep.subr.mxu0 0.0
    %4986 = vmatpush1.msra.mxu0 0.0
    %4987 = vmatprep.subr.mxu0 0.0
    %4988 = vmatpush1.msra.mxu0 0.0
    %4989 = vmatprep.subr.mxu0 0.0
    %4990 = vmatpush1.msra.mxu0 0.0
    %4991 = vmatprep.subr.mxu0 0.0
    %4992 = vmatpush1.msra.mxu0 0.0
    %4993 = vmatprep.subr.mxu0 0.0
    %4994 = vmatpush1.msra.mxu0 0.0
    %4995 = vmatprep.subr.mxu0 0.0
    %4996 = vmatpush1.msra.mxu0 0.0
    %4997 = vmatprep.subr.mxu0 0.0
    %4998 = vmatpush1.msra.mxu0 0.0
    %4999 = vmatprep.subr.mxu0 0.0
    %5000 = vmatpush1.msra.mxu0 0.0
    %5001 = vmatprep.subr.mxu0 0.0
    %5002 = vmatpush1.msra.mxu0 0.0
    %5003 = vmatprep.subr.mxu0 0.0
    %5004 = vmatpush1.msra.mxu0 0.0
    %5005 = vmatprep.subr.mxu0 0.0
    %5006 = vmatpush1.msra.mxu0 0.0
    %5007 = vmatprep.subr.mxu0 0.0
    %5008 = vmatpush1.msra.mxu0 0.0
    %5009 = vmatprep.subr.mxu0 0.0
    %5010 = vmatpush1.msra.mxu0 0.0
    %5011 = vmatprep.subr.mxu0 0.0
    %5012 = vmatpush1.msra.mxu0 0.0
    %5013 = vmatprep.subr.mxu0 0.0
    %5014 = vmatpush1.msra.mxu0 0.0
    %5015 = vmatprep.subr.mxu0 0.0
    %5016 = vmatpush1.msra.mxu0 0.0
    %5017 = vmatprep.subr.mxu0 0.0
    %5018 = vmatpush1.msra.mxu0 0.0
    %5019 = vmatprep.subr.mxu0 0.0
    %5020 = vmatpush1.msra.mxu0 0.0
    %5021 = vmatprep.subr.mxu0 0.0
    %5022 = vmatpush1.msra.mxu0 0.0
    %5023 = vmatprep.subr.mxu0 0.0
    %5024 = vmatpush1.msra.mxu0 0.0
    %5025 = vmatprep.subr.mxu0 0.0
    %5026 = vmatpush1.msra.mxu0 0.0
    %5027 = vmatprep.subr.mxu0 0.0
    %5028 = vmatpush1.msra.mxu0 0.0
    %5029 = vmatprep.subr.mxu0 0.0
    %5030 = vmatpush1.msra.mxu0 0.0
    %5031 = vmatprep.subr.mxu0 0.0
    %5032 = vmatpush1.msra.mxu0 0.0
    %5033 = vmatprep.subr.mxu0 0.0
    %5034 = vmatpush1.msra.mxu0 0.0
    %5035 = vmatprep.subr.mxu0 0.0
    %5036 = vmatpush1.msra.mxu0 0.0
    %5037 = vmatprep.mubr.f32.mxu0 0.0
    %5038 = vmatmul.mubr.f32.gmra.mrb[0].mxu0 %v4962
    %v5039 = vpop.f32.mrb[0].mxu0
    %v5040 = vadd.f32 0.0, %v5039
    %v5041 = vpop.f32.mrb[0].mxu0
    %5042 = vmatprep.mubr.f32.mxu0 0.0
    %5043 = vmatmul.mubr.f32.gmra.mrb[0].mxu0 %v4965
    %v5044 = vpop.f32.mrb[0].mxu0
    %v5045 = vadd.f32 0.0, %v5044
    %v5046 = vpop.f32.mrb[0].mxu0
    %5047 = vmatprep.mubr.f32.mxu0 0.0
    %5048 = vmatmul.mubr.f32.gmra.mrb[0].mxu0 %v4968
    %v5049 = vpop.f32.mrb[0].mxu0
    %v5050 = vadd.f32 0.0, %v5049
    %v5051 = vpop.f32.mrb[0].mxu0
    %5052 = vmatprep.mubr.f32.mxu0 0.0
    %5053 = vmatmul.mubr.f32.gmra.mrb[0].mxu0 %v4971
    %v5054 = vpop.f32.mrb[0].mxu0
    %v5055 = vadd.f32 0.0, %v5054
    %v5056 = vpop.f32.mrb[0].mxu0
    %5057 = vdwg.mxu0
    %v5059 = vsel %vm415, %v4215, 0
    %v5062 = vsel %vm415, %v4220, 0
    %v5065 = vsel %vm415, %v4296, 0
    %v5068 = vsel %vm415, %v4301, 0
    %5070 = vmatprep.subr.mxu0 0.0
    %5071 = vmatpush1.msra.mxu0 %v3612
    %5072 = vmatprep.subr.mxu0 0.0
    %5073 = vmatpush1.msra.mxu0 %v3613
    %5074 = vmatprep.subr.mxu0 0.0
    %5075 = vmatpush1.msra.mxu0 0.0
    %5076 = vmatprep.subr.mxu0 0.0
    %5077 = vmatpush1.msra.mxu0 0.0
    %5078 = vmatprep.subr.mxu0 0.0
    %5079 = vmatpush1.msra.mxu0 0.0
    %5080 = vmatprep.subr.mxu0 0.0
    %5081 = vmatpush1.msra.mxu0 0.0
    %5082 = vmatprep.subr.mxu0 0.0
    %5083 = vmatpush1.msra.mxu0 0.0
    %5084 = vmatprep.subr.mxu0 0.0
    %5085 = vmatpush1.msra.mxu0 0.0
    %5086 = vmatprep.subr.mxu0 0.0
    %5087 = vmatpush1.msra.mxu0 0.0
    %5088 = vmatprep.subr.mxu0 0.0
    %5089 = vmatpush1.msra.mxu0 0.0
    %5090 = vmatprep.subr.mxu0 0.0
    %5091 = vmatpush1.msra.mxu0 0.0
    %5092 = vmatprep.subr.mxu0 0.0
    %5093 = vmatpush1.msra.mxu0 0.0
    %5094 = vmatprep.subr.mxu0 0.0
    %5095 = vmatpush1.msra.mxu0 0.0
    %5096 = vmatprep.subr.mxu0 0.0
    %5097 = vmatpush1.msra.mxu0 0.0
    %5098 = vmatprep.subr.mxu0 0.0
    %5099 = vmatpush1.msra.mxu0 0.0
    %5100 = vmatprep.subr.mxu0 0.0
    %5101 = vmatpush1.msra.mxu0 0.0
    %5102 = vmatprep.subr.mxu0 0.0
    %5103 = vmatpush1.msra.mxu0 0.0
    %5104 = vmatprep.subr.mxu0 0.0
    %5105 = vmatpush1.msra.mxu0 0.0
    %5106 = vmatprep.subr.mxu0 0.0
    %5107 = vmatpush1.msra.mxu0 0.0
    %5108 = vmatprep.subr.mxu0 0.0
    %5109 = vmatpush1.msra.mxu0 0.0
    %5110 = vmatprep.subr.mxu0 0.0
    %5111 = vmatpush1.msra.mxu0 0.0
    %5112 = vmatprep.subr.mxu0 0.0
    %5113 = vmatpush1.msra.mxu0 0.0
    %5114 = vmatprep.subr.mxu0 0.0
    %5115 = vmatpush1.msra.mxu0 0.0
    %5116 = vmatprep.subr.mxu0 0.0
    %5117 = vmatpush1.msra.mxu0 0.0
    %5118 = vmatprep.subr.mxu0 0.0
    %5119 = vmatpush1.msra.mxu0 0.0
    %5120 = vmatprep.subr.mxu0 0.0
    %5121 = vmatpush1.msra.mxu0 0.0
    %5122 = vmatprep.subr.mxu0 0.0
    %5123 = vmatpush1.msra.mxu0 0.0
    %5124 = vmatprep.subr.mxu0 0.0
    %5125 = vmatpush1.msra.mxu0 0.0
    %5126 = vmatprep.subr.mxu0 0.0
    %5127 = vmatpush1.msra.mxu0 0.0
    %5128 = vmatprep.subr.mxu0 0.0
    %5129 = vmatpush1.msra.mxu0 0.0
    %5130 = vmatprep.subr.mxu0 0.0
    %5131 = vmatpush1.msra.mxu0 0.0
    %5132 = vmatprep.subr.mxu0 0.0
    %5133 = vmatpush1.msra.mxu0 0.0
    %5134 = vmatprep.mubr.f32.mxu0 0.0
    %5135 = vmatmul.mubr.f32.gmra.mrb[0].mxu0 %v5059
    %v5136 = vpop.f32.mrb[0].mxu0
    %v5137 = vadd.f32 %v5040, %v5136
    %v5138 = vpop.f32.mrb[0].mxu0
    %5139 = vmatprep.mubr.f32.mxu0 0.0
    %5140 = vmatmul.mubr.f32.gmra.mrb[0].mxu0 %v5062
    %v5141 = vpop.f32.mrb[0].mxu0
    %v5142 = vadd.f32 %v5045, %v5141
    %v5143 = vpop.f32.mrb[0].mxu0
    %5144 = vmatprep.mubr.f32.mxu0 0.0
    %5145 = vmatmul.mubr.f32.gmra.mrb[0].mxu0 %v5065
    %v5146 = vpop.f32.mrb[0].mxu0
    %v5147 = vadd.f32 %v5050, %v5146
    %v5148 = vpop.f32.mrb[0].mxu0
    %5149 = vmatprep.mubr.f32.mxu0 0.0
    %5150 = vmatmul.mubr.f32.gmra.mrb[0].mxu0 %v5068
    %v5151 = vpop.f32.mrb[0].mxu0
    %v5152 = vadd.f32 %v5055, %v5151
    %v5153 = vpop.f32.mrb[0].mxu0
    %5154 = vdwg.mxu0
    %v5156 = vlaneseq
    %v5157 = vshrl.u32 %v5156, 7
    %v5158 = vsub.s32 0, %v5157
    %v5159 = vrot.slane %v3623, %v5158
    %5161 = vmatprep.subr.mxu0 0.0
    %5162 = vmatpush1.msra.mxu0 %v3569
    %5163 = vmatprep.subr.mxu0 0.0
    %5164 = vmatpush1.msra.mxu0 %v3570
    %5165 = vmatprep.subr.mxu0 0.0
    %5166 = vmatpush1.msra.mxu0 %v3571
    %5167 = vmatprep.subr.mxu0 0.0
    %5168 = vmatpush1.msra.mxu0 %v3572
    %5169 = vmatprep.subr.mxu0 0.0
    %5170 = vmatpush1.msra.mxu0 0.0
    %5171 = vmatprep.subr.mxu0 0.0
    %5172 = vmatpush1.msra.mxu0 0.0
    %5173 = vmatprep.subr.mxu0 0.0
    %5174 = vmatpush1.msra.mxu0 0.0
    %5175 = vmatprep.subr.mxu0 0.0
    %5176 = vmatpush1.msra.mxu0 0.0
    %5177 = vmatprep.subr.mxu0 0.0
    %5178 = vmatpush1.msra.mxu0 0.0
    %5179 = vmatprep.subr.mxu0 0.0
    %5180 = vmatpush1.msra.mxu0 0.0
    %5181 = vmatprep.subr.mxu0 0.0
    %5182 = vmatpush1.msra.mxu0 0.0
    %5183 = vmatprep.subr.mxu0 0.0
    %5184 = vmatpush1.msra.mxu0 0.0
    %5185 = vmatprep.subr.mxu0 0.0
    %5186 = vmatpush1.msra.mxu0 0.0
    %5187 = vmatprep.subr.mxu0 0.0
    %5188 = vmatpush1.msra.mxu0 0.0
    %5189 = vmatprep.subr.mxu0 0.0
    %5190 = vmatpush1.msra.mxu0 0.0
    %5191 = vmatprep.subr.mxu0 0.0
    %5192 = vmatpush1.msra.mxu0 0.0
    %5193 = vmatprep.subr.mxu0 0.0
    %5194 = vmatpush1.msra.mxu0 0.0
    %5195 = vmatprep.subr.mxu0 0.0
    %5196 = vmatpush1.msra.mxu0 0.0
    %5197 = vmatprep.subr.mxu0 0.0
    %5198 = vmatpush1.msra.mxu0 0.0
    %5199 = vmatprep.subr.mxu0 0.0
    %5200 = vmatpush1.msra.mxu0 0.0
    %5201 = vmatprep.subr.mxu0 0.0
    %5202 = vmatpush1.msra.mxu0 0.0
    %5203 = vmatprep.subr.mxu0 0.0
    %5204 = vmatpush1.msra.mxu0 0.0
    %5205 = vmatprep.subr.mxu0 0.0
    %5206 = vmatpush1.msra.mxu0 0.0
    %5207 = vmatprep.subr.mxu0 0.0
    %5208 = vmatpush1.msra.mxu0 0.0
    %5209 = vmatprep.subr.mxu0 0.0
    %5210 = vmatpush1.msra.mxu0 0.0
    %5211 = vmatprep.subr.mxu0 0.0
    %5212 = vmatpush1.msra.mxu0 0.0
    %5213 = vmatprep.subr.mxu0 0.0
    %5214 = vmatpush1.msra.mxu0 0.0
    %5215 = vmatprep.subr.mxu0 0.0
    %5216 = vmatpush1.msra.mxu0 0.0
    %5217 = vmatprep.subr.mxu0 0.0
    %5218 = vmatpush1.msra.mxu0 0.0
    %5219 = vmatprep.subr.mxu0 0.0
    %5220 = vmatpush1.msra.mxu0 0.0
    %5221 = vmatprep.subr.mxu0 0.0
    %5222 = vmatpush1.msra.mxu0 0.0
    %5223 = vmatprep.subr.mxu0 0.0
    %5224 = vmatpush1.msra.mxu0 0.0
    %5225 = vmatprep.mubr.f32.mxu0 0.0
    %5226 = vmatmul.mubr.f32.gmra.mrb[0].mxu0 %v3642
    %v5227 = vpop.f32.mrb[0].mxu0
    %v5228 = vadd.f32 %v5159, %v5227
    %v5229 = vpop.f32.mrb[0].mxu0
    %5230 = vmatprep.mubr.f32.mxu0 0.0
    %5231 = vmatmul.mubr.f32.gmra.mrb[0].mxu0 %v3645
    %v5232 = vpop.f32.mrb[0].mxu0
    %v5233 = vadd.f32 %v5159, %v5232
    %v5234 = vpop.f32.mrb[0].mxu0
    %5235 = vmatprep.mubr.f32.mxu0 0.0
    %5236 = vmatmul.mubr.f32.gmra.mrb[0].mxu0 %v3648
    %v5237 = vpop.f32.mrb[0].mxu0
    %v5238 = vadd.f32 %v5159, %v5237
    %v5239 = vpop.f32.mrb[0].mxu0
    %5240 = vmatprep.mubr.f32.mxu0 0.0
    %5241 = vmatmul.mubr.f32.gmra.mrb[0].mxu0 %v3651
    %v5242 = vpop.f32.mrb[0].mxu0
    %v5243 = vadd.f32 %v5159, %v5242
    %v5244 = vpop.f32.mrb[0].mxu0
    %5245 = vdwg.mxu0
    %v5247 = vlaneseq
    %v5248 = vshrl.u32 %v5247, 7
    %v5249 = vsub.s32 0, %v5248
    %v5250 = vrot.slane %v3628, %v5249
    %5252 = vmatprep.subr.mxu0 0.0
    %5253 = vmatpush1.msra.mxu0 %v3586
    %5254 = vmatprep.subr.mxu0 0.0
    %5255 = vmatpush1.msra.mxu0 %v3587
    %5256 = vmatprep.subr.mxu0 0.0
    %5257 = vmatpush1.msra.mxu0 %v3588
    %5258 = vmatprep.subr.mxu0 0.0
    %5259 = vmatpush1.msra.mxu0 %v3589
    %5260 = vmatprep.subr.mxu0 0.0
    %5261 = vmatpush1.msra.mxu0 0.0
    %5262 = vmatprep.subr.mxu0 0.0
    %5263 = vmatpush1.msra.mxu0 0.0
    %5264 = vmatprep.subr.mxu0 0.0
    %5265 = vmatpush1.msra.mxu0 0.0
    %5266 = vmatprep.subr.mxu0 0.0
    %5267 = vmatpush1.msra.mxu0 0.0
    %5268 = vmatprep.subr.mxu0 0.0
    %5269 = vmatpush1.msra.mxu0 0.0
    %5270 = vmatprep.subr.mxu0 0.0
    %5271 = vmatpush1.msra.mxu0 0.0
    %5272 = vmatprep.subr.mxu0 0.0
    %5273 = vmatpush1.msra.mxu0 0.0
    %5274 = vmatprep.subr.mxu0 0.0
    %5275 = vmatpush1.msra.mxu0 0.0
    %5276 = vmatprep.subr.mxu0 0.0
    %5277 = vmatpush1.msra.mxu0 0.0
    %5278 = vmatprep.subr.mxu0 0.0
    %5279 = vmatpush1.msra.mxu0 0.0
    %5280 = vmatprep.subr.mxu0 0.0
    %5281 = vmatpush1.msra.mxu0 0.0
    %5282 = vmatprep.subr.mxu0 0.0
    %5283 = vmatpush1.msra.mxu0 0.0
    %5284 = vmatprep.subr.mxu0 0.0
    %5285 = vmatpush1.msra.mxu0 0.0
    %5286 = vmatprep.subr.mxu0 0.0
    %5287 = vmatpush1.msra.mxu0 0.0
    %5288 = vmatprep.subr.mxu0 0.0
    %5289 = vmatpush1.msra.mxu0 0.0
    %5290 = vmatprep.subr.mxu0 0.0
    %5291 = vmatpush1.msra.mxu0 0.0
    %5292 = vmatprep.subr.mxu0 0.0
    %5293 = vmatpush1.msra.mxu0 0.0
    %5294 = vmatprep.subr.mxu0 0.0
    %5295 = vmatpush1.msra.mxu0 0.0
    %5296 = vmatprep.subr.mxu0 0.0
    %5297 = vmatpush1.msra.mxu0 0.0
    %5298 = vmatprep.subr.mxu0 0.0
    %5299 = vmatpush1.msra.mxu0 0.0
    %5300 = vmatprep.subr.mxu0 0.0
    %5301 = vmatpush1.msra.mxu0 0.0
    %5302 = vmatprep.subr.mxu0 0.0
    %5303 = vmatpush1.msra.mxu0 0.0
    %5304 = vmatprep.subr.mxu0 0.0
    %5305 = vmatpush1.msra.mxu0 0.0
    %5306 = vmatprep.subr.mxu0 0.0
    %5307 = vmatpush1.msra.mxu0 0.0
    %5308 = vmatprep.subr.mxu0 0.0
    %5309 = vmatpush1.msra.mxu0 0.0
    %5310 = vmatprep.subr.mxu0 0.0
    %5311 = vmatpush1.msra.mxu0 0.0
    %5312 = vmatprep.subr.mxu0 0.0
    %5313 = vmatpush1.msra.mxu0 0.0
    %5314 = vmatprep.subr.mxu0 0.0
    %5315 = vmatpush1.msra.mxu0 0.0
    %5316 = vmatprep.mubr.f32.mxu0 0.0
    %5317 = vmatmul.mubr.f32.gmra.mrb[0].mxu0 %v3642
    %v5318 = vpop.f32.mrb[0].mxu0
    %v5319 = vadd.f32 %v5250, %v5318
    %v5320 = vpop.f32.mrb[0].mxu0
    %5321 = vmatprep.mubr.f32.mxu0 0.0
    %5322 = vmatmul.mubr.f32.gmra.mrb[0].mxu0 %v3645
    %v5323 = vpop.f32.mrb[0].mxu0
    %v5324 = vadd.f32 %v5250, %v5323
    %v5325 = vpop.f32.mrb[0].mxu0
    %5326 = vmatprep.mubr.f32.mxu0 0.0
    %5327 = vmatmul.mubr.f32.gmra.mrb[0].mxu0 %v3648
    %v5328 = vpop.f32.mrb[0].mxu0
    %v5329 = vadd.f32 %v5250, %v5328
    %v5330 = vpop.f32.mrb[0].mxu0
    %5331 = vmatprep.mubr.f32.mxu0 0.0
    %5332 = vmatmul.mubr.f32.gmra.mrb[0].mxu0 %v3651
    %v5333 = vpop.f32.mrb[0].mxu0
    %v5334 = vadd.f32 %v5250, %v5333
    %v5335 = vpop.f32.mrb[0].mxu0
    %5336 = vdwg.mxu0
    %v5338 = vlaneseq
    %v5339 = vshrl.u32 %v5338, 7
    %v5340 = vsub.s32 0, %v5339
    %v5341 = vrot.slane %v3633, %v5340
    %5343 = vmatprep.subr.mxu0 0.0
    %5344 = vmatpush1.msra.mxu0 %v3603
    %5345 = vmatprep.subr.mxu0 0.0
    %5346 = vmatpush1.msra.mxu0 %v3604
    %5347 = vmatprep.subr.mxu0 0.0
    %5348 = vmatpush1.msra.mxu0 %v3605
    %5349 = vmatprep.subr.mxu0 0.0
    %5350 = vmatpush1.msra.mxu0 %v3606
    %5351 = vmatprep.subr.mxu0 0.0
    %5352 = vmatpush1.msra.mxu0 0.0
    %5353 = vmatprep.subr.mxu0 0.0
    %5354 = vmatpush1.msra.mxu0 0.0
    %5355 = vmatprep.subr.mxu0 0.0
    %5356 = vmatpush1.msra.mxu0 0.0
    %5357 = vmatprep.subr.mxu0 0.0
    %5358 = vmatpush1.msra.mxu0 0.0
    %5359 = vmatprep.subr.mxu0 0.0
    %5360 = vmatpush1.msra.mxu0 0.0
    %5361 = vmatprep.subr.mxu0 0.0
    %5362 = vmatpush1.msra.mxu0 0.0
    %5363 = vmatprep.subr.mxu0 0.0
    %5364 = vmatpush1.msra.mxu0 0.0
    %5365 = vmatprep.subr.mxu0 0.0
    %5366 = vmatpush1.msra.mxu0 0.0
    %5367 = vmatprep.subr.mxu0 0.0
    %5368 = vmatpush1.msra.mxu0 0.0
    %5369 = vmatprep.subr.mxu0 0.0
    %5370 = vmatpush1.msra.mxu0 0.0
    %5371 = vmatprep.subr.mxu0 0.0
    %5372 = vmatpush1.msra.mxu0 0.0
    %5373 = vmatprep.subr.mxu0 0.0
    %5374 = vmatpush1.msra.mxu0 0.0
    %5375 = vmatprep.subr.mxu0 0.0
    %5376 = vmatpush1.msra.mxu0 0.0
    %5377 = vmatprep.subr.mxu0 0.0
    %5378 = vmatpush1.msra.mxu0 0.0
    %5379 = vmatprep.subr.mxu0 0.0
    %5380 = vmatpush1.msra.mxu0 0.0
    %5381 = vmatprep.subr.mxu0 0.0
    %5382 = vmatpush1.msra.mxu0 0.0
    %5383 = vmatprep.subr.mxu0 0.0
    %5384 = vmatpush1.msra.mxu0 0.0
    %5385 = vmatprep.subr.mxu0 0.0
    %5386 = vmatpush1.msra.mxu0 0.0
    %5387 = vmatprep.subr.mxu0 0.0
    %5388 = vmatpush1.msra.mxu0 0.0
    %5389 = vmatprep.subr.mxu0 0.0
    %5390 = vmatpush1.msra.mxu0 0.0
    %5391 = vmatprep.subr.mxu0 0.0
    %5392 = vmatpush1.msra.mxu0 0.0
    %5393 = vmatprep.subr.mxu0 0.0
    %5394 = vmatpush1.msra.mxu0 0.0
    %5395 = vmatprep.subr.mxu0 0.0
    %5396 = vmatpush1.msra.mxu0 0.0
    %5397 = vmatprep.subr.mxu0 0.0
    %5398 = vmatpush1.msra.mxu0 0.0
    %5399 = vmatprep.subr.mxu0 0.0
    %5400 = vmatpush1.msra.mxu0 0.0
    %5401 = vmatprep.subr.mxu0 0.0
    %5402 = vmatpush1.msra.mxu0 0.0
    %5403 = vmatprep.subr.mxu0 0.0
    %5404 = vmatpush1.msra.mxu0 0.0
    %5405 = vmatprep.subr.mxu0 0.0
    %5406 = vmatpush1.msra.mxu0 0.0
    %5407 = vmatprep.mubr.f32.mxu0 0.0
    %5408 = vmatmul.mubr.f32.gmra.mrb[0].mxu0 %v3642
    %v5409 = vpop.f32.mrb[0].mxu0
    %v5410 = vadd.f32 %v5341, %v5409
    %v5411 = vpop.f32.mrb[0].mxu0
    %5412 = vmatprep.mubr.f32.mxu0 0.0
    %5413 = vmatmul.mubr.f32.gmra.mrb[0].mxu0 %v3645
    %v5414 = vpop.f32.mrb[0].mxu0
    %v5415 = vadd.f32 %v5341, %v5414
    %v5416 = vpop.f32.mrb[0].mxu0
    %5417 = vmatprep.mubr.f32.mxu0 0.0
    %5418 = vmatmul.mubr.f32.gmra.mrb[0].mxu0 %v3648
    %v5419 = vpop.f32.mrb[0].mxu0
    %v5420 = vadd.f32 %v5341, %v5419
    %v5421 = vpop.f32.mrb[0].mxu0
    %5422 = vmatprep.mubr.f32.mxu0 0.0
    %5423 = vmatmul.mubr.f32.gmra.mrb[0].mxu0 %v3651
    %v5424 = vpop.f32.mrb[0].mxu0
    %v5425 = vadd.f32 %v5341, %v5424
    %v5426 = vpop.f32.mrb[0].mxu0
    %5427 = vdwg.mxu0
    %v5429 = vsel %vm415, %v5228, 0
    %v5432 = vsel %vm415, %v5233, 0
    %v5435 = vsel %vm415, %v5319, 0
    %v5438 = vsel %vm415, %v5324, 0
    %5440 = vmatprep.subr.mxu0 0.0
    %5441 = vmatpush1.xpose.msra.mxu0 %v5435
    %5442 = vmatprep.subr.mxu0 0.0
    %5443 = vmatpush1.xpose.msra.mxu0 %v5438
    %5444 = vmatprep.subr.mxu0 0.0
    %5445 = vmatpush1.xpose.msra.mxu0 0.0
    %5446 = vmatprep.subr.mxu0 0.0
    %5447 = vmatpush1.xpose.msra.mxu0 0.0
    %5448 = vmatprep.subr.mxu0 0.0
    %5449 = vmatpush1.xpose.msra.mxu0 0.0
    %5450 = vmatprep.subr.mxu0 0.0
    %5451 = vmatpush1.xpose.msra.mxu0 0.0
    %5452 = vmatprep.subr.mxu0 0.0
    %5453 = vmatpush1.xpose.msra.mxu0 0.0
    %5454 = vmatprep.subr.mxu0 0.0
    %5455 = vmatpush1.xpose.msra.mxu0 0.0
    %5456 = vmatprep.subr.mxu0 0.0
    %5457 = vmatpush1.xpose.msra.mxu0 0.0
    %5458 = vmatprep.subr.mxu0 0.0
    %5459 = vmatpush1.xpose.msra.mxu0 0.0
    %5460 = vmatprep.subr.mxu0 0.0
    %5461 = vmatpush1.xpose.msra.mxu0 0.0
    %5462 = vmatprep.subr.mxu0 0.0
    %5463 = vmatpush1.xpose.msra.mxu0 0.0
    %5464 = vmatprep.subr.mxu0 0.0
    %5465 = vmatpush1.xpose.msra.mxu0 0.0
    %5466 = vmatprep.subr.mxu0 0.0
    %5467 = vmatpush1.xpose.msra.mxu0 0.0
    %5468 = vmatprep.subr.mxu0 0.0
    %5469 = vmatpush1.xpose.msra.mxu0 0.0
    %5470 = vmatprep.subr.mxu0 0.0
    %5471 = vmatpush1.xpose.msra.mxu0 0.0
    %5472 = vmatprep.subr.mxu0 0.0
    %5473 = vmatpush1.xpose.msra.mxu0 0.0
    %5474 = vmatprep.subr.mxu0 0.0
    %5475 = vmatpush1.xpose.msra.mxu0 0.0
    %5476 = vmatprep.subr.mxu0 0.0
    %5477 = vmatpush1.xpose.msra.mxu0 0.0
    %5478 = vmatprep.subr.mxu0 0.0
    %5479 = vmatpush1.xpose.msra.mxu0 0.0
    %5480 = vmatprep.subr.mxu0 0.0
    %5481 = vmatpush1.xpose.msra.mxu0 0.0
    %5482 = vmatprep.subr.mxu0 0.0
    %5483 = vmatpush1.xpose.msra.mxu0 0.0
    %5484 = vmatprep.subr.mxu0 0.0
    %5485 = vmatpush1.xpose.msra.mxu0 0.0
    %5486 = vmatprep.subr.mxu0 0.0
    %5487 = vmatpush1.xpose.msra.mxu0 0.0
    %5488 = vmatprep.subr.mxu0 0.0
    %5489 = vmatpush1.xpose.msra.mxu0 0.0
    %5490 = vmatprep.subr.mxu0 0.0
    %5491 = vmatpush1.xpose.msra.mxu0 0.0
    %5492 = vmatprep.subr.mxu0 0.0
    %5493 = vmatpush1.xpose.msra.mxu0 0.0
    %5494 = vmatprep.subr.mxu0 0.0
    %5495 = vmatpush1.xpose.msra.mxu0 0.0
    %5496 = vmatprep.subr.mxu0 0.0
    %5497 = vmatpush1.xpose.msra.mxu0 0.0
    %5498 = vmatprep.subr.mxu0 0.0
    %5499 = vmatpush1.xpose.msra.mxu0 0.0
    %5500 = vmatprep.subr.mxu0 0.0
    %5501 = vmatpush1.xpose.msra.mxu0 0.0
    %5502 = vmatprep.subr.mxu0 0.0
    %5503 = vmatpush1.xpose.msra.mxu0 0.0
    %5504 = vmatprep.mubr.f32.mxu0 0.0
    %5505 = vmatmul.mubr.f32.gmra.mrb[0].mxu0 %v5429
    %v5506 = vpop.f32.mrb[0].mxu0
    %v5507 = vadd.f32 0.0, %v5506
    %v5508 = vpop.f32.mrb[0].mxu0
    %5509 = vmatprep.mubr.f32.mxu0 0.0
    %5510 = vmatmul.mubr.f32.gmra.mrb[0].mxu0 %v5432
    %v5511 = vpop.f32.mrb[0].mxu0
    %v5512 = vadd.f32 0.0, %v5511
    %v5513 = vpop.f32.mrb[0].mxu0
    %5514 = vdwg.mxu0
    %v5516 = vsel %vm415, %v5238, 0
    %v5519 = vsel %vm415, %v5243, 0
    %v5522 = vsel %vm415, %v5329, 0
    %v5525 = vsel %vm415, %v5334, 0
    %5527 = vmatprep.subr.mxu0 0.0
    %5528 = vmatpush1.xpose.msra.mxu0 %v5522
    %5529 = vmatprep.subr.mxu0 0.0
    %5530 = vmatpush1.xpose.msra.mxu0 %v5525
    %5531 = vmatprep.subr.mxu0 0.0
    %5532 = vmatpush1.xpose.msra.mxu0 0.0
    %5533 = vmatprep.subr.mxu0 0.0
    %5534 = vmatpush1.xpose.msra.mxu0 0.0
    %5535 = vmatprep.subr.mxu0 0.0
    %5536 = vmatpush1.xpose.msra.mxu0 0.0
    %5537 = vmatprep.subr.mxu0 0.0
    %5538 = vmatpush1.xpose.msra.mxu0 0.0
    %5539 = vmatprep.subr.mxu0 0.0
    %5540 = vmatpush1.xpose.msra.mxu0 0.0
    %5541 = vmatprep.subr.mxu0 0.0
    %5542 = vmatpush1.xpose.msra.mxu0 0.0
    %5543 = vmatprep.subr.mxu0 0.0
    %5544 = vmatpush1.xpose.msra.mxu0 0.0
    %5545 = vmatprep.subr.mxu0 0.0
    %5546 = vmatpush1.xpose.msra.mxu0 0.0
    %5547 = vmatprep.subr.mxu0 0.0
    %5548 = vmatpush1.xpose.msra.mxu0 0.0
    %5549 = vmatprep.subr.mxu0 0.0
    %5550 = vmatpush1.xpose.msra.mxu0 0.0
    %5551 = vmatprep.subr.mxu0 0.0
    %5552 = vmatpush1.xpose.msra.mxu0 0.0
    %5553 = vmatprep.subr.mxu0 0.0
    %5554 = vmatpush1.xpose.msra.mxu0 0.0
    %5555 = vmatprep.subr.mxu0 0.0
    %5556 = vmatpush1.xpose.msra.mxu0 0.0
    %5557 = vmatprep.subr.mxu0 0.0
    %5558 = vmatpush1.xpose.msra.mxu0 0.0
    %5559 = vmatprep.subr.mxu0 0.0
    %5560 = vmatpush1.xpose.msra.mxu0 0.0
    %5561 = vmatprep.subr.mxu0 0.0
    %5562 = vmatpush1.xpose.msra.mxu0 0.0
    %5563 = vmatprep.subr.mxu0 0.0
    %5564 = vmatpush1.xpose.msra.mxu0 0.0
    %5565 = vmatprep.subr.mxu0 0.0
    %5566 = vmatpush1.xpose.msra.mxu0 0.0
    %5567 = vmatprep.subr.mxu0 0.0
    %5568 = vmatpush1.xpose.msra.mxu0 0.0
    %5569 = vmatprep.subr.mxu0 0.0
    %5570 = vmatpush1.xpose.msra.mxu0 0.0
    %5571 = vmatprep.subr.mxu0 0.0
    %5572 = vmatpush1.xpose.msra.mxu0 0.0
    %5573 = vmatprep.subr.mxu0 0.0
    %5574 = vmatpush1.xpose.msra.mxu0 0.0
    %5575 = vmatprep.subr.mxu0 0.0
    %5576 = vmatpush1.xpose.msra.mxu0 0.0
    %5577 = vmatprep.subr.mxu0 0.0
    %5578 = vmatpush1.xpose.msra.mxu0 0.0
    %5579 = vmatprep.subr.mxu0 0.0
    %5580 = vmatpush1.xpose.msra.mxu0 0.0
    %5581 = vmatprep.subr.mxu0 0.0
    %5582 = vmatpush1.xpose.msra.mxu0 0.0
    %5583 = vmatprep.subr.mxu0 0.0
    %5584 = vmatpush1.xpose.msra.mxu0 0.0
    %5585 = vmatprep.subr.mxu0 0.0
    %5586 = vmatpush1.xpose.msra.mxu0 0.0
    %5587 = vmatprep.subr.mxu0 0.0
    %5588 = vmatpush1.xpose.msra.mxu0 0.0
    %5589 = vmatprep.subr.mxu0 0.0
    %5590 = vmatpush1.xpose.msra.mxu0 0.0
    %5591 = vmatprep.mubr.f32.mxu0 0.0
    %5592 = vmatmul.mubr.f32.gmra.mrb[0].mxu0 %v5516
    %v5593 = vpop.f32.mrb[0].mxu0
    %v5594 = vadd.f32 0.0, %v5593
    %v5595 = vpop.f32.mrb[0].mxu0
    %5596 = vmatprep.mubr.f32.mxu0 0.0
    %5597 = vmatmul.mubr.f32.gmra.mrb[0].mxu0 %v5519
    %v5598 = vpop.f32.mrb[0].mxu0
    %v5599 = vadd.f32 0.0, %v5598
    %v5600 = vpop.f32.mrb[0].mxu0
    %5601 = vdwg.mxu0
    %v5602 = vmul.f32 %v5507, 0.25
    %v5603 = vmul.f32 %v5512, 0.25
    %v5604 = vmul.f32 %v5594, 0.25
    %v5605 = vmul.f32 %v5599, 0.25
    %v5606 = vsel %vm415, %v5602, -inf
    %5607 = vmax.xlane.f32.xlu0 %v5606
    %v5608 = vpop.xlane.xlu0 %5607
    %v5609 = vsel %vm415, %v5603, -inf
    %5610 = vmax.xlane.f32.xlu0 %v5609
    %v5611 = vpop.xlane.xlu0 %5610
    %v5612 = vsel %vm415, %v5604, -inf
    %5613 = vmax.xlane.f32.xlu0 %v5612
    %v5614 = vpop.xlane.xlu0 %5613
    %v5615 = vsel %vm415, %v5605, -inf
    %5616 = vmax.xlane.f32.xlu0 %v5615
    %v5617 = vpop.xlane.xlu0 %5616
    %v5618 = vsub.f32 %v5602, %v5608
    %v5619 = vsub.f32 %v5603, %v5611
    %v5620 = vsub.f32 %v5604, %v5614
    %v5621 = vsub.f32 %v5605, %v5617
    %v5622 = vmul.f32 %v5618, 1.442695
    %v5623 = vpow.pop %v5622
    %v5624 = vmul.f32 %v5619, 1.442695
    %v5625 = vpow.pop %v5624
    %v5626 = vmul.f32 %v5620, 1.442695
    %v5627 = vpow.pop %v5626
    %v5628 = vmul.f32 %v5621, 1.442695
    %v5629 = vpow.pop %v5628
    %v5630 = vsel %vm415, %v5623, 0.0
    %5631 = vadd.xlane.f32.xlu0 %v5630
    %v5632 = vpop.xlane.xlu0 %5631
    %v5633 = vsel %vm415, %v5625, 0.0
    %5634 = vadd.xlane.f32.xlu0 %v5633
    %v5635 = vpop.xlane.xlu0 %5634
    %v5636 = vsel %vm415, %v5627, 0.0
    %5637 = vadd.xlane.f32.xlu0 %v5636
    %v5638 = vpop.xlane.xlu0 %5637
    %v5639 = vsel %vm415, %v5629, 0.0
    %5640 = vadd.xlane.f32.xlu0 %v5639
    %v5641 = vpop.xlane.xlu0 %5640
    %v5642 = vrcp.pop %v5632
    %v5643 = vmul.f32 %v5623, %v5642
    %v5644 = vrcp.pop %v5635
    %v5645 = vmul.f32 %v5625, %v5644
    %v5646 = vrcp.pop %v5638
    %v5647 = vmul.f32 %v5627, %v5646
    %v5648 = vrcp.pop %v5641
    %v5649 = vmul.f32 %v5629, %v5648
    %v5651 = vsel %vm415, %v5643, 0
    %v5654 = vsel %vm415, %v5645, 0
    %5656 = vmatprep.subr.mxu0 0.0
    %5657 = vmatpush1.msra.mxu0 %v5410
    %5658 = vmatprep.subr.mxu0 0.0
    %5659 = vmatpush1.msra.mxu0 %v5415
    %5660 = vmatprep.subr.mxu0 0.0
    %5661 = vmatpush1.msra.mxu0 0.0
    %5662 = vmatprep.subr.mxu0 0.0
    %5663 = vmatpush1.msra.mxu0 0.0
    %5664 = vmatprep.subr.mxu0 0.0
    %5665 = vmatpush1.msra.mxu0 0.0
    %5666 = vmatprep.subr.mxu0 0.0
    %5667 = vmatpush1.msra.mxu0 0.0
    %5668 = vmatprep.subr.mxu0 0.0
    %5669 = vmatpush1.msra.mxu0 0.0
    %5670 = vmatprep.subr.mxu0 0.0
    %5671 = vmatpush1.msra.mxu0 0.0
    %5672 = vmatprep.subr.mxu0 0.0
    %5673 = vmatpush1.msra.mxu0 0.0
    %5674 = vmatprep.subr.mxu0 0.0
    %5675 = vmatpush1.msra.mxu0 0.0
    %5676 = vmatprep.subr.mxu0 0.0
    %5677 = vmatpush1.msra.mxu0 0.0
    %5678 = vmatprep.subr.mxu0 0.0
    %5679 = vmatpush1.msra.mxu0 0.0
    %5680 = vmatprep.subr.mxu0 0.0
    %5681 = vmatpush1.msra.mxu0 0.0
    %5682 = vmatprep.subr.mxu0 0.0
    %5683 = vmatpush1.msra.mxu0 0.0
    %5684 = vmatprep.subr.mxu0 0.0
    %5685 = vmatpush1.msra.mxu0 0.0
    %5686 = vmatprep.subr.mxu0 0.0
    %5687 = vmatpush1.msra.mxu0 0.0
    %5688 = vmatprep.subr.mxu0 0.0
    %5689 = vmatpush1.msra.mxu0 0.0
    %5690 = vmatprep.subr.mxu0 0.0
    %5691 = vmatpush1.msra.mxu0 0.0
    %5692 = vmatprep.subr.mxu0 0.0
    %5693 = vmatpush1.msra.mxu0 0.0
    %5694 = vmatprep.subr.mxu0 0.0
    %5695 = vmatpush1.msra.mxu0 0.0
    %5696 = vmatprep.subr.mxu0 0.0
    %5697 = vmatpush1.msra.mxu0 0.0
    %5698 = vmatprep.subr.mxu0 0.0
    %5699 = vmatpush1.msra.mxu0 0.0
    %5700 = vmatprep.subr.mxu0 0.0
    %5701 = vmatpush1.msra.mxu0 0.0
    %5702 = vmatprep.subr.mxu0 0.0
    %5703 = vmatpush1.msra.mxu0 0.0
    %5704 = vmatprep.subr.mxu0 0.0
    %5705 = vmatpush1.msra.mxu0 0.0
    %5706 = vmatprep.subr.mxu0 0.0
    %5707 = vmatpush1.msra.mxu0 0.0
    %5708 = vmatprep.subr.mxu0 0.0
    %5709 = vmatpush1.msra.mxu0 0.0
    %5710 = vmatprep.subr.mxu0 0.0
    %5711 = vmatpush1.msra.mxu0 0.0
    %5712 = vmatprep.subr.mxu0 0.0
    %5713 = vmatpush1.msra.mxu0 0.0
    %5714 = vmatprep.subr.mxu0 0.0
    %5715 = vmatpush1.msra.mxu0 0.0
    %5716 = vmatprep.subr.mxu0 0.0
    %5717 = vmatpush1.msra.mxu0 0.0
    %5718 = vmatprep.subr.mxu0 0.0
    %5719 = vmatpush1.msra.mxu0 0.0
    %5720 = vmatprep.mubr.f32.mxu0 0.0
    %5721 = vmatmul.mubr.f32.gmra.mrb[0].mxu0 %v5651
    %v5722 = vpop.f32.mrb[0].mxu0
    %v5723 = vadd.f32 0.0, %v5722
    %v5724 = vpop.f32.mrb[0].mxu0
    %5725 = vmatprep.mubr.f32.mxu0 0.0
    %5726 = vmatmul.mubr.f32.gmra.mrb[0].mxu0 %v5654
    %v5727 = vpop.f32.mrb[0].mxu0
    %v5728 = vadd.f32 0.0, %v5727
    %v5729 = vpop.f32.mrb[0].mxu0
    %5730 = vdwg.mxu0
    %v5732 = vsel %vm415, %v5647, 0
    %v5735 = vsel %vm415, %v5649, 0
    %5737 = vmatprep.subr.mxu0 0.0
    %5738 = vmatpush1.msra.mxu0 %v5420
    %5739 = vmatprep.subr.mxu0 0.0
    %5740 = vmatpush1.msra.mxu0 %v5425
    %5741 = vmatprep.subr.mxu0 0.0
    %5742 = vmatpush1.msra.mxu0 0.0
    %5743 = vmatprep.subr.mxu0 0.0
    %5744 = vmatpush1.msra.mxu0 0.0
    %5745 = vmatprep.subr.mxu0 0.0
    %5746 = vmatpush1.msra.mxu0 0.0
    %5747 = vmatprep.subr.mxu0 0.0
    %5748 = vmatpush1.msra.mxu0 0.0
    %5749 = vmatprep.subr.mxu0 0.0
    %5750 = vmatpush1.msra.mxu0 0.0
    %5751 = vmatprep.subr.mxu0 0.0
    %5752 = vmatpush1.msra.mxu0 0.0
    %5753 = vmatprep.subr.mxu0 0.0
    %5754 = vmatpush1.msra.mxu0 0.0
    %5755 = vmatprep.subr.mxu0 0.0
    %5756 = vmatpush1.msra.mxu0 0.0
    %5757 = vmatprep.subr.mxu0 0.0
    %5758 = vmatpush1.msra.mxu0 0.0
    %5759 = vmatprep.subr.mxu0 0.0
    %5760 = vmatpush1.msra.mxu0 0.0
    %5761 = vmatprep.subr.mxu0 0.0
    %5762 = vmatpush1.msra.mxu0 0.0
    %5763 = vmatprep.subr.mxu0 0.0
    %5764 = vmatpush1.msra.mxu0 0.0
    %5765 = vmatprep.subr.mxu0 0.0
    %5766 = vmatpush1.msra.mxu0 0.0
    %5767 = vmatprep.subr.mxu0 0.0
    %5768 = vmatpush1.msra.mxu0 0.0
    %5769 = vmatprep.subr.mxu0 0.0
    %5770 = vmatpush1.msra.mxu0 0.0
    %5771 = vmatprep.subr.mxu0 0.0
    %5772 = vmatpush1.msra.mxu0 0.0
    %5773 = vmatprep.subr.mxu0 0.0
    %5774 = vmatpush1.msra.mxu0 0.0
    %5775 = vmatprep.subr.mxu0 0.0
    %5776 = vmatpush1.msra.mxu0 0.0
    %5777 = vmatprep.subr.mxu0 0.0
    %5778 = vmatpush1.msra.mxu0 0.0
    %5779 = vmatprep.subr.mxu0 0.0
    %5780 = vmatpush1.msra.mxu0 0.0
    %5781 = vmatprep.subr.mxu0 0.0
    %5782 = vmatpush1.msra.mxu0 0.0
    %5783 = vmatprep.subr.mxu0 0.0
    %5784 = vmatpush1.msra.mxu0 0.0
    %5785 = vmatprep.subr.mxu0 0.0
    %5786 = vmatpush1.msra.mxu0 0.0
    %5787 = vmatprep.subr.mxu0 0.0
    %5788 = vmatpush1.msra.mxu0 0.0
    %5789 = vmatprep.subr.mxu0 0.0
    %5790 = vmatpush1.msra.mxu0 0.0
    %5791 = vmatprep.subr.mxu0 0.0
    %5792 = vmatpush1.msra.mxu0 0.0
    %5793 = vmatprep.subr.mxu0 0.0
    %5794 = vmatpush1.msra.mxu0 0.0
    %5795 = vmatprep.subr.mxu0 0.0
    %5796 = vmatpush1.msra.mxu0 0.0
    %5797 = vmatprep.subr.mxu0 0.0
    %5798 = vmatpush1.msra.mxu0 0.0
    %5799 = vmatprep.subr.mxu0 0.0
    %5800 = vmatpush1.msra.mxu0 0.0
    %5801 = vmatprep.mubr.f32.mxu0 0.0
    %5802 = vmatmul.mubr.f32.gmra.mrb[0].mxu0 %v5732
    %v5803 = vpop.f32.mrb[0].mxu0
    %v5804 = vadd.f32 0.0, %v5803
    %v5805 = vpop.f32.mrb[0].mxu0
    %5806 = vmatprep.mubr.f32.mxu0 0.0
    %5807 = vmatmul.mubr.f32.gmra.mrb[0].mxu0 %v5735
    %v5808 = vpop.f32.mrb[0].mxu0
    %v5809 = vadd.f32 0.0, %v5808
    %v5810 = vpop.f32.mrb[0].mxu0
    %5811 = vdwg.mxu0
    %v5813 = vsel %vm415, %v5723, 0
    %v5816 = vsel %vm415, %v5728, 0
    %v5819 = vsel %vm415, %v5804, 0
    %v5822 = vsel %vm415, %v5809, 0
    %5824 = vmatprep.subr.mxu0 0.0
    %5825 = vmatpush1.msra.mxu0 %v3616
    %5826 = vmatprep.subr.mxu0 0.0
    %5827 = vmatpush1.msra.mxu0 %v3617
    %5828 = vmatprep.subr.mxu0 0.0
    %5829 = vmatpush1.msra.mxu0 0.0
    %5830 = vmatprep.subr.mxu0 0.0
    %5831 = vmatpush1.msra.mxu0 0.0
    %5832 = vmatprep.subr.mxu0 0.0
    %5833 = vmatpush1.msra.mxu0 0.0
    %5834 = vmatprep.subr.mxu0 0.0
    %5835 = vmatpush1.msra.mxu0 0.0
    %5836 = vmatprep.subr.mxu0 0.0
    %5837 = vmatpush1.msra.mxu0 0.0
    %5838 = vmatprep.subr.mxu0 0.0
    %5839 = vmatpush1.msra.mxu0 0.0
    %5840 = vmatprep.subr.mxu0 0.0
    %5841 = vmatpush1.msra.mxu0 0.0
    %5842 = vmatprep.subr.mxu0 0.0
    %5843 = vmatpush1.msra.mxu0 0.0
    %5844 = vmatprep.subr.mxu0 0.0
    %5845 = vmatpush1.msra.mxu0 0.0
    %5846 = vmatprep.subr.mxu0 0.0
    %5847 = vmatpush1.msra.mxu0 0.0
    %5848 = vmatprep.subr.mxu0 0.0
    %5849 = vmatpush1.msra.mxu0 0.0
    %5850 = vmatprep.subr.mxu0 0.0
    %5851 = vmatpush1.msra.mxu0 0.0
    %5852 = vmatprep.subr.mxu0 0.0
    %5853 = vmatpush1.msra.mxu0 0.0
    %5854 = vmatprep.subr.mxu0 0.0
    %5855 = vmatpush1.msra.mxu0 0.0
    %5856 = vmatprep.subr.mxu0 0.0
    %5857 = vmatpush1.msra.mxu0 0.0
    %5858 = vmatprep.subr.mxu0 0.0
    %5859 = vmatpush1.msra.mxu0 0.0
    %5860 = vmatprep.subr.mxu0 0.0
    %5861 = vmatpush1.msra.mxu0 0.0
    %5862 = vmatprep.subr.mxu0 0.0
    %5863 = vmatpush1.msra.mxu0 0.0
    %5864 = vmatprep.subr.mxu0 0.0
    %5865 = vmatpush1.msra.mxu0 0.0
    %5866 = vmatprep.subr.mxu0 0.0
    %5867 = vmatpush1.msra.mxu0 0.0
    %5868 = vmatprep.subr.mxu0 0.0
    %5869 = vmatpush1.msra.mxu0 0.0
    %5870 = vmatprep.subr.mxu0 0.0
    %5871 = vmatpush1.msra.mxu0 0.0
    %5872 = vmatprep.subr.mxu0 0.0
    %5873 = vmatpush1.msra.mxu0 0.0
    %5874 = vmatprep.subr.mxu0 0.0
    %5875 = vmatpush1.msra.mxu0 0.0
    %5876 = vmatprep.subr.mxu0 0.0
    %5877 = vmatpush1.msra.mxu0 0.0
    %5878 = vmatprep.subr.mxu0 0.0
    %5879 = vmatpush1.msra.mxu0 0.0
    %5880 = vmatprep.subr.mxu0 0.0
    %5881 = vmatpush1.msra.mxu0 0.0
    %5882 = vmatprep.subr.mxu0 0.0
    %5883 = vmatpush1.msra.mxu0 0.0
    %5884 = vmatprep.subr.mxu0 0.0
    %5885 = vmatpush1.msra.mxu0 0.0
    %5886 = vmatprep.subr.mxu0 0.0
    %5887 = vmatpush1.msra.mxu0 0.0
    %5888 = vmatprep.mubr.f32.mxu0 0.0
    %5889 = vmatmul.mubr.f32.gmra.mrb[0].mxu0 %v5813
    %v5890 = vpop.f32.mrb[0].mxu0
    %v5891 = vadd.f32 0.0, %v5890
    %v5892 = vpop.f32.mrb[0].mxu0
    %5893 = vmatprep.mubr.f32.mxu0 0.0
    %5894 = vmatmul.mubr.f32.gmra.mrb[0].mxu0 %v5816
    %v5895 = vpop.f32.mrb[0].mxu0
    %v5896 = vadd.f32 0.0, %v5895
    %v5897 = vpop.f32.mrb[0].mxu0
    %5898 = vmatprep.mubr.f32.mxu0 0.0
    %5899 = vmatmul.mubr.f32.gmra.mrb[0].mxu0 %v5819
    %v5900 = vpop.f32.mrb[0].mxu0
    %v5901 = vadd.f32 0.0, %v5900
    %v5902 = vpop.f32.mrb[0].mxu0
    %5903 = vmatprep.mubr.f32.mxu0 0.0
    %5904 = vmatmul.mubr.f32.gmra.mrb[0].mxu0 %v5822
    %v5905 = vpop.f32.mrb[0].mxu0
    %v5906 = vadd.f32 0.0, %v5905
    %v5907 = vpop.f32.mrb[0].mxu0
    %5908 = vdwg.mxu0
    %v5909 = vadd.f32 %v5137, %v5891
    %v5910 = vadd.f32 %v5142, %v5896
    %v5911 = vadd.f32 %v5147, %v5901
    %v5912 = vadd.f32 %v5152, %v5906
    %v5914 = vlaneseq
    %v5915 = vshrl.u32 %v5914, 7
    %v5916 = vsub.s32 0, %v5915
    %v5917 = vrot.slane %v3624, %v5916
    %5919 = vmatprep.subr.mxu0 0.0
    %5920 = vmatpush1.msra.mxu0 %v3573
    %5921 = vmatprep.subr.mxu0 0.0
    %5922 = vmatpush1.msra.mxu0 %v3574
    %5923 = vmatprep.subr.mxu0 0.0
    %5924 = vmatpush1.msra.mxu0 %v3575
    %5925 = vmatprep.subr.mxu0 0.0
    %5926 = vmatpush1.msra.mxu0 %v3576
    %5927 = vmatprep.subr.mxu0 0.0
    %5928 = vmatpush1.msra.mxu0 0.0
    %5929 = vmatprep.subr.mxu0 0.0
    %5930 = vmatpush1.msra.mxu0 0.0
    %5931 = vmatprep.subr.mxu0 0.0
    %5932 = vmatpush1.msra.mxu0 0.0
    %5933 = vmatprep.subr.mxu0 0.0
    %5934 = vmatpush1.msra.mxu0 0.0
    %5935 = vmatprep.subr.mxu0 0.0
    %5936 = vmatpush1.msra.mxu0 0.0
    %5937 = vmatprep.subr.mxu0 0.0
    %5938 = vmatpush1.msra.mxu0 0.0
    %5939 = vmatprep.subr.mxu0 0.0
    %5940 = vmatpush1.msra.mxu0 0.0
    %5941 = vmatprep.subr.mxu0 0.0
    %5942 = vmatpush1.msra.mxu0 0.0
    %5943 = vmatprep.subr.mxu0 0.0
    %5944 = vmatpush1.msra.mxu0 0.0
    %5945 = vmatprep.subr.mxu0 0.0
    %5946 = vmatpush1.msra.mxu0 0.0
    %5947 = vmatprep.subr.mxu0 0.0
    %5948 = vmatpush1.msra.mxu0 0.0
    %5949 = vmatprep.subr.mxu0 0.0
    %5950 = vmatpush1.msra.mxu0 0.0
    %5951 = vmatprep.subr.mxu0 0.0
    %5952 = vmatpush1.msra.mxu0 0.0
    %5953 = vmatprep.subr.mxu0 0.0
    %5954 = vmatpush1.msra.mxu0 0.0
    %5955 = vmatprep.subr.mxu0 0.0
    %5956 = vmatpush1.msra.mxu0 0.0
    %5957 = vmatprep.subr.mxu0 0.0
    %5958 = vmatpush1.msra.mxu0 0.0
    %5959 = vmatprep.subr.mxu0 0.0
    %5960 = vmatpush1.msra.mxu0 0.0
    %5961 = vmatprep.subr.mxu0 0.0
    %5962 = vmatpush1.msra.mxu0 0.0
    %5963 = vmatprep.subr.mxu0 0.0
    %5964 = vmatpush1.msra.mxu0 0.0
    %5965 = vmatprep.subr.mxu0 0.0
    %5966 = vmatpush1.msra.mxu0 0.0
    %5967 = vmatprep.subr.mxu0 0.0
    %5968 = vmatpush1.msra.mxu0 0.0
    %5969 = vmatprep.subr.mxu0 0.0
    %5970 = vmatpush1.msra.mxu0 0.0
    %5971 = vmatprep.subr.mxu0 0.0
    %5972 = vmatpush1.msra.mxu0 0.0
    %5973 = vmatprep.subr.mxu0 0.0
    %5974 = vmatpush1.msra.mxu0 0.0
    %5975 = vmatprep.subr.mxu0 0.0
    %5976 = vmatpush1.msra.mxu0 0.0
    %5977 = vmatprep.subr.mxu0 0.0
    %5978 = vmatpush1.msra.mxu0 0.0
    %5979 = vmatprep.subr.mxu0 0.0
    %5980 = vmatpush1.msra.mxu0 0.0
    %5981 = vmatprep.subr.mxu0 0.0
    %5982 = vmatpush1.msra.mxu0 0.0
    %5983 = vmatprep.mubr.f32.mxu0 0.0
    %5984 = vmatmul.mubr.f32.gmra.mrb[0].mxu0 %v3642
    %v5985 = vpop.f32.mrb[0].mxu0
    %v5986 = vadd.f32 %v5917, %v5985
    %v5987 = vpop.f32.mrb[0].mxu0
    %5988 = vmatprep.mubr.f32.mxu0 0.0
    %5989 = vmatmul.mubr.f32.gmra.mrb[0].mxu0 %v3645
    %v5990 = vpop.f32.mrb[0].mxu0
    %v5991 = vadd.f32 %v5917, %v5990
    %v5992 = vpop.f32.mrb[0].mxu0
    %5993 = vmatprep.mubr.f32.mxu0 0.0
    %5994 = vmatmul.mubr.f32.gmra.mrb[0].mxu0 %v3648
    %v5995 = vpop.f32.mrb[0].mxu0
    %v5996 = vadd.f32 %v5917, %v5995
    %v5997 = vpop.f32.mrb[0].mxu0
    %5998 = vmatprep.mubr.f32.mxu0 0.0
    %5999 = vmatmul.mubr.f32.gmra.mrb[0].mxu0 %v3651
    %v6000 = vpop.f32.mrb[0].mxu0
    %v6001 = vadd.f32 %v5917, %v6000
    %v6002 = vpop.f32.mrb[0].mxu0
    %6003 = vdwg.mxu0
    %v6005 = vlaneseq
    %v6006 = vshrl.u32 %v6005, 7
    %v6007 = vsub.s32 0, %v6006
    %v6008 = vrot.slane %v3629, %v6007
    %6010 = vmatprep.subr.mxu0 0.0
    %6011 = vmatpush1.msra.mxu0 %v3590
    %6012 = vmatprep.subr.mxu0 0.0
    %6013 = vmatpush1.msra.mxu0 %v3591
    %6014 = vmatprep.subr.mxu0 0.0
    %6015 = vmatpush1.msra.mxu0 %v3592
    %6016 = vmatprep.subr.mxu0 0.0
    %6017 = vmatpush1.msra.mxu0 %v3593
    %6018 = vmatprep.subr.mxu0 0.0
    %6019 = vmatpush1.msra.mxu0 0.0
    %6020 = vmatprep.subr.mxu0 0.0
    %6021 = vmatpush1.msra.mxu0 0.0
    %6022 = vmatprep.subr.mxu0 0.0
    %6023 = vmatpush1.msra.mxu0 0.0
    %6024 = vmatprep.subr.mxu0 0.0
    %6025 = vmatpush1.msra.mxu0 0.0
    %6026 = vmatprep.subr.mxu0 0.0
    %6027 = vmatpush1.msra.mxu0 0.0
    %6028 = vmatprep.subr.mxu0 0.0
    %6029 = vmatpush1.msra.mxu0 0.0
    %6030 = vmatprep.subr.mxu0 0.0
    %6031 = vmatpush1.msra.mxu0 0.0
    %6032 = vmatprep.subr.mxu0 0.0
    %6033 = vmatpush1.msra.mxu0 0.0
    %6034 = vmatprep.subr.mxu0 0.0
    %6035 = vmatpush1.msra.mxu0 0.0
    %6036 = vmatprep.subr.mxu0 0.0
    %6037 = vmatpush1.msra.mxu0 0.0
    %6038 = vmatprep.subr.mxu0 0.0
    %6039 = vmatpush1.msra.mxu0 0.0
    %6040 = vmatprep.subr.mxu0 0.0
    %6041 = vmatpush1.msra.mxu0 0.0
    %6042 = vmatprep.subr.mxu0 0.0
    %6043 = vmatpush1.msra.mxu0 0.0
    %6044 = vmatprep.subr.mxu0 0.0
    %6045 = vmatpush1.msra.mxu0 0.0
    %6046 = vmatprep.subr.mxu0 0.0
    %6047 = vmatpush1.msra.mxu0 0.0
    %6048 = vmatprep.subr.mxu0 0.0
    %6049 = vmatpush1.msra.mxu0 0.0
    %6050 = vmatprep.subr.mxu0 0.0
    %6051 = vmatpush1.msra.mxu0 0.0
    %6052 = vmatprep.subr.mxu0 0.0
    %6053 = vmatpush1.msra.mxu0 0.0
    %6054 = vmatprep.subr.mxu0 0.0
    %6055 = vmatpush1.msra.mxu0 0.0
    %6056 = vmatprep.subr.mxu0 0.0
    %6057 = vmatpush1.msra.mxu0 0.0
    %6058 = vmatprep.subr.mxu0 0.0
    %6059 = vmatpush1.msra.mxu0 0.0
    %6060 = vmatprep.subr.mxu0 0.0
    %6061 = vmatpush1.msra.mxu0 0.0
    %6062 = vmatprep.subr.mxu0 0.0
    %6063 = vmatpush1.msra.mxu0 0.0
    %6064 = vmatprep.subr.mxu0 0.0
    %6065 = vmatpush1.msra.mxu0 0.0
    %6066 = vmatprep.subr.mxu0 0.0
    %6067 = vmatpush1.msra.mxu0 0.0
    %6068 = vmatprep.subr.mxu0 0.0
    %6069 = vmatpush1.msra.mxu0 0.0
    %6070 = vmatprep.subr.mxu0 0.0
    %6071 = vmatpush1.msra.mxu0 0.0
    %6072 = vmatprep.subr.mxu0 0.0
    %6073 = vmatpush1.msra.mxu0 0.0
    %6074 = vmatprep.mubr.f32.mxu0 0.0
    %6075 = vmatmul.mubr.f32.gmra.mrb[0].mxu0 %v3642
    %v6076 = vpop.f32.mrb[0].mxu0
    %v6077 = vadd.f32 %v6008, %v6076
    %v6078 = vpop.f32.mrb[0].mxu0
    %6079 = vmatprep.mubr.f32.mxu0 0.0
    %6080 = vmatmul.mubr.f32.gmra.mrb[0].mxu0 %v3645
    %v6081 = vpop.f32.mrb[0].mxu0
    %v6082 = vadd.f32 %v6008, %v6081
    %v6083 = vpop.f32.mrb[0].mxu0
    %6084 = vmatprep.mubr.f32.mxu0 0.0
    %6085 = vmatmul.mubr.f32.gmra.mrb[0].mxu0 %v3648
    %v6086 = vpop.f32.mrb[0].mxu0
    %v6087 = vadd.f32 %v6008, %v6086
    %v6088 = vpop.f32.mrb[0].mxu0
    %6089 = vmatprep.mubr.f32.mxu0 0.0
    %6090 = vmatmul.mubr.f32.gmra.mrb[0].mxu0 %v3651
    %v6091 = vpop.f32.mrb[0].mxu0
    %v6092 = vadd.f32 %v6008, %v6091
    %v6093 = vpop.f32.mrb[0].mxu0
    %6094 = vdwg.mxu0
    %v6096 = vlaneseq
    %v6097 = vshrl.u32 %v6096, 7
    %v6098 = vsub.s32 0, %v6097
    %v6099 = vrot.slane %v3634, %v6098
    %6101 = vmatprep.subr.mxu0 0.0
    %6102 = vmatpush1.msra.mxu0 %v3607
    %6103 = vmatprep.subr.mxu0 0.0
    %6104 = vmatpush1.msra.mxu0 %v3608
    %6105 = vmatprep.subr.mxu0 0.0
    %6106 = vmatpush1.msra.mxu0 %v3609
    %6107 = vmatprep.subr.mxu0 0.0
    %6108 = vmatpush1.msra.mxu0 %v3610
    %6109 = vmatprep.subr.mxu0 0.0
    %6110 = vmatpush1.msra.mxu0 0.0
    %6111 = vmatprep.subr.mxu0 0.0
    %6112 = vmatpush1.msra.mxu0 0.0
    %6113 = vmatprep.subr.mxu0 0.0
    %6114 = vmatpush1.msra.mxu0 0.0
    %6115 = vmatprep.subr.mxu0 0.0
    %6116 = vmatpush1.msra.mxu0 0.0
    %6117 = vmatprep.subr.mxu0 0.0
    %6118 = vmatpush1.msra.mxu0 0.0
    %6119 = vmatprep.subr.mxu0 0.0
    %6120 = vmatpush1.msra.mxu0 0.0
    %6121 = vmatprep.subr.mxu0 0.0
    %6122 = vmatpush1.msra.mxu0 0.0
    %6123 = vmatprep.subr.mxu0 0.0
    %6124 = vmatpush1.msra.mxu0 0.0
    %6125 = vmatprep.subr.mxu0 0.0
    %6126 = vmatpush1.msra.mxu0 0.0
    %6127 = vmatprep.subr.mxu0 0.0
    %6128 = vmatpush1.msra.mxu0 0.0
    %6129 = vmatprep.subr.mxu0 0.0
    %6130 = vmatpush1.msra.mxu0 0.0
    %6131 = vmatprep.subr.mxu0 0.0
    %6132 = vmatpush1.msra.mxu0 0.0
    %6133 = vmatprep.subr.mxu0 0.0
    %6134 = vmatpush1.msra.mxu0 0.0
    %6135 = vmatprep.subr.mxu0 0.0
    %6136 = vmatpush1.msra.mxu0 0.0
    %6137 = vmatprep.subr.mxu0 0.0
    %6138 = vmatpush1.msra.mxu0 0.0
    %6139 = vmatprep.subr.mxu0 0.0
    %6140 = vmatpush1.msra.mxu0 0.0
    %6141 = vmatprep.subr.mxu0 0.0
    %6142 = vmatpush1.msra.mxu0 0.0
    %6143 = vmatprep.subr.mxu0 0.0
    %6144 = vmatpush1.msra.mxu0 0.0
    %6145 = vmatprep.subr.mxu0 0.0
    %6146 = vmatpush1.msra.mxu0 0.0
    %6147 = vmatprep.subr.mxu0 0.0
    %6148 = vmatpush1.msra.mxu0 0.0
    %6149 = vmatprep.subr.mxu0 0.0
    %6150 = vmatpush1.msra.mxu0 0.0
    %6151 = vmatprep.subr.mxu0 0.0
    %6152 = vmatpush1.msra.mxu0 0.0
    %6153 = vmatprep.subr.mxu0 0.0
    %6154 = vmatpush1.msra.mxu0 0.0
    %6155 = vmatprep.subr.mxu0 0.0
    %6156 = vmatpush1.msra.mxu0 0.0
    %6157 = vmatprep.subr.mxu0 0.0
    %6158 = vmatpush1.msra.mxu0 0.0
    %6159 = vmatprep.subr.mxu0 0.0
    %6160 = vmatpush1.msra.mxu0 0.0
    %6161 = vmatprep.subr.mxu0 0.0
    %6162 = vmatpush1.msra.mxu0 0.0
    %6163 = vmatprep.subr.mxu0 0.0
    %6164 = vmatpush1.msra.mxu0 0.0
    %6165 = vmatprep.mubr.f32.mxu0 0.0
    %6166 = vmatmul.mubr.f32.gmra.mrb[0].mxu0 %v3642
    %v6167 = vpop.f32.mrb[0].mxu0
    %v6168 = vadd.f32 %v6099, %v6167
    %v6169 = vpop.f32.mrb[0].mxu0
    %6170 = vmatprep.mubr.f32.mxu0 0.0
    %6171 = vmatmul.mubr.f32.gmra.mrb[0].mxu0 %v3645
    %v6172 = vpop.f32.mrb[0].mxu0
    %v6173 = vadd.f32 %v6099, %v6172
    %v6174 = vpop.f32.mrb[0].mxu0
    %6175 = vmatprep.mubr.f32.mxu0 0.0
    %6176 = vmatmul.mubr.f32.gmra.mrb[0].mxu0 %v3648
    %v6177 = vpop.f32.mrb[0].mxu0
    %v6178 = vadd.f32 %v6099, %v6177
    %v6179 = vpop.f32.mrb[0].mxu0
    %6180 = vmatprep.mubr.f32.mxu0 0.0
    %6181 = vmatmul.mubr.f32.gmra.mrb[0].mxu0 %v3651
    %v6182 = vpop.f32.mrb[0].mxu0
    %v6183 = vadd.f32 %v6099, %v6182
    %v6184 = vpop.f32.mrb[0].mxu0
    %6185 = vdwg.mxu0
    %v6187 = vsel %vm415, %v5986, 0
    %v6190 = vsel %vm415, %v5991, 0
    %v6193 = vsel %vm415, %v6077, 0
    %v6196 = vsel %vm415, %v6082, 0
    %6198 = vmatprep.subr.mxu0 0.0
    %6199 = vmatpush1.xpose.msra.mxu0 %v6193
    %6200 = vmatprep.subr.mxu0 0.0
    %6201 = vmatpush1.xpose.msra.mxu0 %v6196
    %6202 = vmatprep.subr.mxu0 0.0
    %6203 = vmatpush1.xpose.msra.mxu0 0.0
    %6204 = vmatprep.subr.mxu0 0.0
    %6205 = vmatpush1.xpose.msra.mxu0 0.0
    %6206 = vmatprep.subr.mxu0 0.0
    %6207 = vmatpush1.xpose.msra.mxu0 0.0
    %6208 = vmatprep.subr.mxu0 0.0
    %6209 = vmatpush1.xpose.msra.mxu0 0.0
    %6210 = vmatprep.subr.mxu0 0.0
    %6211 = vmatpush1.xpose.msra.mxu0 0.0
    %6212 = vmatprep.subr.mxu0 0.0
    %6213 = vmatpush1.xpose.msra.mxu0 0.0
    %6214 = vmatprep.subr.mxu0 0.0
    %6215 = vmatpush1.xpose.msra.mxu0 0.0
    %6216 = vmatprep.subr.mxu0 0.0
    %6217 = vmatpush1.xpose.msra.mxu0 0.0
    %6218 = vmatprep.subr.mxu0 0.0
    %6219 = vmatpush1.xpose.msra.mxu0 0.0
    %6220 = vmatprep.subr.mxu0 0.0
    %6221 = vmatpush1.xpose.msra.mxu0 0.0
    %6222 = vmatprep.subr.mxu0 0.0
    %6223 = vmatpush1.xpose.msra.mxu0 0.0
    %6224 = vmatprep.subr.mxu0 0.0
    %6225 = vmatpush1.xpose.msra.mxu0 0.0
    %6226 = vmatprep.subr.mxu0 0.0
    %6227 = vmatpush1.xpose.msra.mxu0 0.0
    %6228 = vmatprep.subr.mxu0 0.0
    %6229 = vmatpush1.xpose.msra.mxu0 0.0
    %6230 = vmatprep.subr.mxu0 0.0
    %6231 = vmatpush1.xpose.msra.mxu0 0.0
    %6232 = vmatprep.subr.mxu0 0.0
    %6233 = vmatpush1.xpose.msra.mxu0 0.0
    %6234 = vmatprep.subr.mxu0 0.0
    %6235 = vmatpush1.xpose.msra.mxu0 0.0
    %6236 = vmatprep.subr.mxu0 0.0
    %6237 = vmatpush1.xpose.msra.mxu0 0.0
    %6238 = vmatprep.subr.mxu0 0.0
    %6239 = vmatpush1.xpose.msra.mxu0 0.0
    %6240 = vmatprep.subr.mxu0 0.0
    %6241 = vmatpush1.xpose.msra.mxu0 0.0
    %6242 = vmatprep.subr.mxu0 0.0
    %6243 = vmatpush1.xpose.msra.mxu0 0.0
    %6244 = vmatprep.subr.mxu0 0.0
    %6245 = vmatpush1.xpose.msra.mxu0 0.0
    %6246 = vmatprep.subr.mxu0 0.0
    %6247 = vmatpush1.xpose.msra.mxu0 0.0
    %6248 = vmatprep.subr.mxu0 0.0
    %6249 = vmatpush1.xpose.msra.mxu0 0.0
    %6250 = vmatprep.subr.mxu0 0.0
    %6251 = vmatpush1.xpose.msra.mxu0 0.0
    %6252 = vmatprep.subr.mxu0 0.0
    %6253 = vmatpush1.xpose.msra.mxu0 0.0
    %6254 = vmatprep.subr.mxu0 0.0
    %6255 = vmatpush1.xpose.msra.mxu0 0.0
    %6256 = vmatprep.subr.mxu0 0.0
    %6257 = vmatpush1.xpose.msra.mxu0 0.0
    %6258 = vmatprep.subr.mxu0 0.0
    %6259 = vmatpush1.xpose.msra.mxu0 0.0
    %6260 = vmatprep.subr.mxu0 0.0
    %6261 = vmatpush1.xpose.msra.mxu0 0.0
    %6262 = vmatprep.mubr.f32.mxu0 0.0
    %6263 = vmatmul.mubr.f32.gmra.mrb[0].mxu0 %v6187
    %v6264 = vpop.f32.mrb[0].mxu0
    %v6265 = vadd.f32 0.0, %v6264
    %v6266 = vpop.f32.mrb[0].mxu0
    %6267 = vmatprep.mubr.f32.mxu0 0.0
    %6268 = vmatmul.mubr.f32.gmra.mrb[0].mxu0 %v6190
    %v6269 = vpop.f32.mrb[0].mxu0
    %v6270 = vadd.f32 0.0, %v6269
    %v6271 = vpop.f32.mrb[0].mxu0
    %6272 = vdwg.mxu0
    %v6274 = vsel %vm415, %v5996, 0
    %v6277 = vsel %vm415, %v6001, 0
    %v6280 = vsel %vm415, %v6087, 0
    %v6283 = vsel %vm415, %v6092, 0
    %6285 = vmatprep.subr.mxu0 0.0
    %6286 = vmatpush1.xpose.msra.mxu0 %v6280
    %6287 = vmatprep.subr.mxu0 0.0
    %6288 = vmatpush1.xpose.msra.mxu0 %v6283
    %6289 = vmatprep.subr.mxu0 0.0
    %6290 = vmatpush1.xpose.msra.mxu0 0.0
    %6291 = vmatprep.subr.mxu0 0.0
    %6292 = vmatpush1.xpose.msra.mxu0 0.0
    %6293 = vmatprep.subr.mxu0 0.0
    %6294 = vmatpush1.xpose.msra.mxu0 0.0
    %6295 = vmatprep.subr.mxu0 0.0
    %6296 = vmatpush1.xpose.msra.mxu0 0.0
    %6297 = vmatprep.subr.mxu0 0.0
    %6298 = vmatpush1.xpose.msra.mxu0 0.0
    %6299 = vmatprep.subr.mxu0 0.0
    %6300 = vmatpush1.xpose.msra.mxu0 0.0
    %6301 = vmatprep.subr.mxu0 0.0
    %6302 = vmatpush1.xpose.msra.mxu0 0.0
    %6303 = vmatprep.subr.mxu0 0.0
    %6304 = vmatpush1.xpose.msra.mxu0 0.0
    %6305 = vmatprep.subr.mxu0 0.0
    %6306 = vmatpush1.xpose.msra.mxu0 0.0
    %6307 = vmatprep.subr.mxu0 0.0
    %6308 = vmatpush1.xpose.msra.mxu0 0.0
    %6309 = vmatprep.subr.mxu0 0.0
    %6310 = vmatpush1.xpose.msra.mxu0 0.0
    %6311 = vmatprep.subr.mxu0 0.0
    %6312 = vmatpush1.xpose.msra.mxu0 0.0
    %6313 = vmatprep.subr.mxu0 0.0
    %6314 = vmatpush1.xpose.msra.mxu0 0.0
    %6315 = vmatprep.subr.mxu0 0.0
    %6316 = vmatpush1.xpose.msra.mxu0 0.0
    %6317 = vmatprep.subr.mxu0 0.0
    %6318 = vmatpush1.xpose.msra.mxu0 0.0
    %6319 = vmatprep.subr.mxu0 0.0
    %6320 = vmatpush1.xpose.msra.mxu0 0.0
    %6321 = vmatprep.subr.mxu0 0.0
    %6322 = vmatpush1.xpose.msra.mxu0 0.0
    %6323 = vmatprep.subr.mxu0 0.0
    %6324 = vmatpush1.xpose.msra.mxu0 0.0
    %6325 = vmatprep.subr.mxu0 0.0
    %6326 = vmatpush1.xpose.msra.mxu0 0.0
    %6327 = vmatprep.subr.mxu0 0.0
    %6328 = vmatpush1.xpose.msra.mxu0 0.0
    %6329 = vmatprep.subr.mxu0 0.0
    %6330 = vmatpush1.xpose.msra.mxu0 0.0
    %6331 = vmatprep.subr.mxu0 0.0
    %6332 = vmatpush1.xpose.msra.mxu0 0.0
    %6333 = vmatprep.subr.mxu0 0.0
    %6334 = vmatpush1.xpose.msra.mxu0 0.0
    %6335 = vmatprep.subr.mxu0 0.0
    %6336 = vmatpush1.xpose.msra.mxu0 0.0
    %6337 = vmatprep.subr.mxu0 0.0
    %6338 = vmatpush1.xpose.msra.mxu0 0.0
    %6339 = vmatprep.subr.mxu0 0.0
    %6340 = vmatpush1.xpose.msra.mxu0 0.0
    %6341 = vmatprep.subr.mxu0 0.0
    %6342 = vmatpush1.xpose.msra.mxu0 0.0
    %6343 = vmatprep.subr.mxu0 0.0
    %6344 = vmatpush1.xpose.msra.mxu0 0.0
    %6345 = vmatprep.subr.mxu0 0.0
    %6346 = vmatpush1.xpose.msra.mxu0 0.0
    %6347 = vmatprep.subr.mxu0 0.0
    %6348 = vmatpush1.xpose.msra.mxu0 0.0
    %6349 = vmatprep.mubr.f32.mxu0 0.0
    %6350 = vmatmul.mubr.f32.gmra.mrb[0].mxu0 %v6274
    %v6351 = vpop.f32.mrb[0].mxu0
    %v6352 = vadd.f32 0.0, %v6351
    %v6353 = vpop.f32.mrb[0].mxu0
    %6354 = vmatprep.mubr.f32.mxu0 0.0
    %6355 = vmatmul.mubr.f32.gmra.mrb[0].mxu0 %v6277
    %v6356 = vpop.f32.mrb[0].mxu0
    %v6357 = vadd.f32 0.0, %v6356
    %v6358 = vpop.f32.mrb[0].mxu0
    %6359 = vdwg.mxu0
    %v6360 = vmul.f32 %v6265, 0.25
    %v6361 = vmul.f32 %v6270, 0.25
    %v6362 = vmul.f32 %v6352, 0.25
    %v6363 = vmul.f32 %v6357, 0.25
    %v6364 = vsel %vm415, %v6360, -inf
    %6365 = vmax.xlane.f32.xlu0 %v6364
    %v6366 = vpop.xlane.xlu0 %6365
    %v6367 = vsel %vm415, %v6361, -inf
    %6368 = vmax.xlane.f32.xlu0 %v6367
    %v6369 = vpop.xlane.xlu0 %6368
    %v6370 = vsel %vm415, %v6362, -inf
    %6371 = vmax.xlane.f32.xlu0 %v6370
    %v6372 = vpop.xlane.xlu0 %6371
    %v6373 = vsel %vm415, %v6363, -inf
    %6374 = vmax.xlane.f32.xlu0 %v6373
    %v6375 = vpop.xlane.xlu0 %6374
    %v6376 = vsub.f32 %v6360, %v6366
    %v6377 = vsub.f32 %v6361, %v6369
    %v6378 = vsub.f32 %v6362, %v6372
    %v6379 = vsub.f32 %v6363, %v6375
    %v6380 = vmul.f32 %v6376, 1.442695
    %v6381 = vpow.pop %v6380
    %v6382 = vmul.f32 %v6377, 1.442695
    %v6383 = vpow.pop %v6382
    %v6384 = vmul.f32 %v6378, 1.442695
    %v6385 = vpow.pop %v6384
    %v6386 = vmul.f32 %v6379, 1.442695
    %v6387 = vpow.pop %v6386
    %v6388 = vsel %vm415, %v6381, 0.0
    %6389 = vadd.xlane.f32.xlu0 %v6388
    %v6390 = vpop.xlane.xlu0 %6389
    %v6391 = vsel %vm415, %v6383, 0.0
    %6392 = vadd.xlane.f32.xlu0 %v6391
    %v6393 = vpop.xlane.xlu0 %6392
    %v6394 = vsel %vm415, %v6385, 0.0
    %6395 = vadd.xlane.f32.xlu0 %v6394
    %v6396 = vpop.xlane.xlu0 %6395
    %v6397 = vsel %vm415, %v6387, 0.0
    %6398 = vadd.xlane.f32.xlu0 %v6397
    %v6399 = vpop.xlane.xlu0 %6398
    %v6400 = vrcp.pop %v6390
    %v6401 = vmul.f32 %v6381, %v6400
    %v6402 = vrcp.pop %v6393
    %v6403 = vmul.f32 %v6383, %v6402
    %v6404 = vrcp.pop %v6396
    %v6405 = vmul.f32 %v6385, %v6404
    %v6406 = vrcp.pop %v6399
    %v6407 = vmul.f32 %v6387, %v6406
    %v6409 = vsel %vm415, %v6401, 0
    %v6412 = vsel %vm415, %v6403, 0
    %6414 = vmatprep.subr.mxu0 0.0
    %6415 = vmatpush1.msra.mxu0 %v6168
    %6416 = vmatprep.subr.mxu0 0.0
    %6417 = vmatpush1.msra.mxu0 %v6173
    %6418 = vmatprep.subr.mxu0 0.0
    %6419 = vmatpush1.msra.mxu0 0.0
    %6420 = vmatprep.subr.mxu0 0.0
    %6421 = vmatpush1.msra.mxu0 0.0
    %6422 = vmatprep.subr.mxu0 0.0
    %6423 = vmatpush1.msra.mxu0 0.0
    %6424 = vmatprep.subr.mxu0 0.0
    %6425 = vmatpush1.msra.mxu0 0.0
    %6426 = vmatprep.subr.mxu0 0.0
    %6427 = vmatpush1.msra.mxu0 0.0
    %6428 = vmatprep.subr.mxu0 0.0
    %6429 = vmatpush1.msra.mxu0 0.0
    %6430 = vmatprep.subr.mxu0 0.0
    %6431 = vmatpush1.msra.mxu0 0.0
    %6432 = vmatprep.subr.mxu0 0.0
    %6433 = vmatpush1.msra.mxu0 0.0
    %6434 = vmatprep.subr.mxu0 0.0
    %6435 = vmatpush1.msra.mxu0 0.0
    %6436 = vmatprep.subr.mxu0 0.0
    %6437 = vmatpush1.msra.mxu0 0.0
    %6438 = vmatprep.subr.mxu0 0.0
    %6439 = vmatpush1.msra.mxu0 0.0
    %6440 = vmatprep.subr.mxu0 0.0
    %6441 = vmatpush1.msra.mxu0 0.0
    %6442 = vmatprep.subr.mxu0 0.0
    %6443 = vmatpush1.msra.mxu0 0.0
    %6444 = vmatprep.subr.mxu0 0.0
    %6445 = vmatpush1.msra.mxu0 0.0
    %6446 = vmatprep.subr.mxu0 0.0
    %6447 = vmatpush1.msra.mxu0 0.0
    %6448 = vmatprep.subr.mxu0 0.0
    %6449 = vmatpush1.msra.mxu0 0.0
    %6450 = vmatprep.subr.mxu0 0.0
    %6451 = vmatpush1.msra.mxu0 0.0
    %6452 = vmatprep.subr.mxu0 0.0
    %6453 = vmatpush1.msra.mxu0 0.0
    %6454 = vmatprep.subr.mxu0 0.0
    %6455 = vmatpush1.msra.mxu0 0.0
    %6456 = vmatprep.subr.mxu0 0.0
    %6457 = vmatpush1.msra.mxu0 0.0
    %6458 = vmatprep.subr.mxu0 0.0
    %6459 = vmatpush1.msra.mxu0 0.0
    %6460 = vmatprep.subr.mxu0 0.0
    %6461 = vmatpush1.msra.mxu0 0.0
    %6462 = vmatprep.subr.mxu0 0.0
    %6463 = vmatpush1.msra.mxu0 0.0
    %6464 = vmatprep.subr.mxu0 0.0
    %6465 = vmatpush1.msra.mxu0 0.0
    %6466 = vmatprep.subr.mxu0 0.0
    %6467 = vmatpush1.msra.mxu0 0.0
    %6468 = vmatprep.subr.mxu0 0.0
    %6469 = vmatpush1.msra.mxu0 0.0
    %6470 = vmatprep.subr.mxu0 0.0
    %6471 = vmatpush1.msra.mxu0 0.0
    %6472 = vmatprep.subr.mxu0 0.0
    %6473 = vmatpush1.msra.mxu0 0.0
    %6474 = vmatprep.subr.mxu0 0.0
    %6475 = vmatpush1.msra.mxu0 0.0
    %6476 = vmatprep.subr.mxu0 0.0
    %6477 = vmatpush1.msra.mxu0 0.0
    %6478 = vmatprep.mubr.f32.mxu0 0.0
    %6479 = vmatmul.mubr.f32.gmra.mrb[0].mxu0 %v6409
    %v6480 = vpop.f32.mrb[0].mxu0
    %v6481 = vadd.f32 0.0, %v6480
    %v6482 = vpop.f32.mrb[0].mxu0
    %6483 = vmatprep.mubr.f32.mxu0 0.0
    %6484 = vmatmul.mubr.f32.gmra.mrb[0].mxu0 %v6412
    %v6485 = vpop.f32.mrb[0].mxu0
    %v6486 = vadd.f32 0.0, %v6485
    %v6487 = vpop.f32.mrb[0].mxu0
    %6488 = vdwg.mxu0
    %v6490 = vsel %vm415, %v6405, 0
    %v6493 = vsel %vm415, %v6407, 0
    %6495 = vmatprep.subr.mxu0 0.0
    %6496 = vmatpush1.msra.mxu0 %v6178
    %6497 = vmatprep.subr.mxu0 0.0
    %6498 = vmatpush1.msra.mxu0 %v6183
    %6499 = vmatprep.subr.mxu0 0.0
    %6500 = vmatpush1.msra.mxu0 0.0
    %6501 = vmatprep.subr.mxu0 0.0
    %6502 = vmatpush1.msra.mxu0 0.0
    %6503 = vmatprep.subr.mxu0 0.0
    %6504 = vmatpush1.msra.mxu0 0.0
    %6505 = vmatprep.subr.mxu0 0.0
    %6506 = vmatpush1.msra.mxu0 0.0
    %6507 = vmatprep.subr.mxu0 0.0
    %6508 = vmatpush1.msra.mxu0 0.0
    %6509 = vmatprep.subr.mxu0 0.0
    %6510 = vmatpush1.msra.mxu0 0.0
    %6511 = vmatprep.subr.mxu0 0.0
    %6512 = vmatpush1.msra.mxu0 0.0
    %6513 = vmatprep.subr.mxu0 0.0
    %6514 = vmatpush1.msra.mxu0 0.0
    %6515 = vmatprep.subr.mxu0 0.0
    %6516 = vmatpush1.msra.mxu0 0.0
    %6517 = vmatprep.subr.mxu0 0.0
    %6518 = vmatpush1.msra.mxu0 0.0
    %6519 = vmatprep.subr.mxu0 0.0
    %6520 = vmatpush1.msra.mxu0 0.0
    %6521 = vmatprep.subr.mxu0 0.0
    %6522 = vmatpush1.msra.mxu0 0.0
    %6523 = vmatprep.subr.mxu0 0.0
    %6524 = vmatpush1.msra.mxu0 0.0
    %6525 = vmatprep.subr.mxu0 0.0
    %6526 = vmatpush1.msra.mxu0 0.0
    %6527 = vmatprep.subr.mxu0 0.0
    %6528 = vmatpush1.msra.mxu0 0.0
    %6529 = vmatprep.subr.mxu0 0.0
    %6530 = vmatpush1.msra.mxu0 0.0
    %6531 = vmatprep.subr.mxu0 0.0
    %6532 = vmatpush1.msra.mxu0 0.0
    %6533 = vmatprep.subr.mxu0 0.0
    %6534 = vmatpush1.msra.mxu0 0.0
    %6535 = vmatprep.subr.mxu0 0.0
    %6536 = vmatpush1.msra.mxu0 0.0
    %6537 = vmatprep.subr.mxu0 0.0
    %6538 = vmatpush1.msra.mxu0 0.0
    %6539 = vmatprep.subr.mxu0 0.0
    %6540 = vmatpush1.msra.mxu0 0.0
    %6541 = vmatprep.subr.mxu0 0.0
    %6542 = vmatpush1.msra.mxu0 0.0
    %6543 = vmatprep.subr.mxu0 0.0
    %6544 = vmatpush1.msra.mxu0 0.0
    %6545 = vmatprep.subr.mxu0 0.0
    %6546 = vmatpush1.msra.mxu0 0.0
    %6547 = vmatprep.subr.mxu0 0.0
    %6548 = vmatpush1.msra.mxu0 0.0
    %6549 = vmatprep.subr.mxu0 0.0
    %6550 = vmatpush1.msra.mxu0 0.0
    %6551 = vmatprep.subr.mxu0 0.0
    %6552 = vmatpush1.msra.mxu0 0.0
    %6553 = vmatprep.subr.mxu0 0.0
    %6554 = vmatpush1.msra.mxu0 0.0
    %6555 = vmatprep.subr.mxu0 0.0
    %6556 = vmatpush1.msra.mxu0 0.0
    %6557 = vmatprep.subr.mxu0 0.0
    %6558 = vmatpush1.msra.mxu0 0.0
    %6559 = vmatprep.mubr.f32.mxu0 0.0
    %6560 = vmatmul.mubr.f32.gmra.mrb[0].mxu0 %v6490
    %v6561 = vpop.f32.mrb[0].mxu0
    %v6562 = vadd.f32 0.0, %v6561
    %v6563 = vpop.f32.mrb[0].mxu0
    %6564 = vmatprep.mubr.f32.mxu0 0.0
    %6565 = vmatmul.mubr.f32.gmra.mrb[0].mxu0 %v6493
    %v6566 = vpop.f32.mrb[0].mxu0
    %v6567 = vadd.f32 0.0, %v6566
    %v6568 = vpop.f32.mrb[0].mxu0
    %6569 = vdwg.mxu0
    %v6571 = vsel %vm415, %v6481, 0
    %v6574 = vsel %vm415, %v6486, 0
    %v6577 = vsel %vm415, %v6562, 0
    %v6580 = vsel %vm415, %v6567, 0
    %6582 = vmatprep.subr.mxu0 0.0
    %6583 = vmatpush1.msra.mxu0 %v3618
    %6584 = vmatprep.subr.mxu0 0.0
    %6585 = vmatpush1.msra.mxu0 %v3619
    %6586 = vmatprep.subr.mxu0 0.0
    %6587 = vmatpush1.msra.mxu0 0.0
    %6588 = vmatprep.subr.mxu0 0.0
    %6589 = vmatpush1.msra.mxu0 0.0
    %6590 = vmatprep.subr.mxu0 0.0
    %6591 = vmatpush1.msra.mxu0 0.0
    %6592 = vmatprep.subr.mxu0 0.0
    %6593 = vmatpush1.msra.mxu0 0.0
    %6594 = vmatprep.subr.mxu0 0.0
    %6595 = vmatpush1.msra.mxu0 0.0
    %6596 = vmatprep.subr.mxu0 0.0
    %6597 = vmatpush1.msra.mxu0 0.0
    %6598 = vmatprep.subr.mxu0 0.0
    %6599 = vmatpush1.msra.mxu0 0.0
    %6600 = vmatprep.subr.mxu0 0.0
    %6601 = vmatpush1.msra.mxu0 0.0
    %6602 = vmatprep.subr.mxu0 0.0
    %6603 = vmatpush1.msra.mxu0 0.0
    %6604 = vmatprep.subr.mxu0 0.0
    %6605 = vmatpush1.msra.mxu0 0.0
    %6606 = vmatprep.subr.mxu0 0.0
    %6607 = vmatpush1.msra.mxu0 0.0
    %6608 = vmatprep.subr.mxu0 0.0
    %6609 = vmatpush1.msra.mxu0 0.0
    %6610 = vmatprep.subr.mxu0 0.0
    %6611 = vmatpush1.msra.mxu0 0.0
    %6612 = vmatprep.subr.mxu0 0.0
    %6613 = vmatpush1.msra.mxu0 0.0
    %6614 = vmatprep.subr.mxu0 0.0
    %6615 = vmatpush1.msra.mxu0 0.0
    %6616 = vmatprep.subr.mxu0 0.0
    %6617 = vmatpush1.msra.mxu0 0.0
    %6618 = vmatprep.subr.mxu0 0.0
    %6619 = vmatpush1.msra.mxu0 0.0
    %6620 = vmatprep.subr.mxu0 0.0
    %6621 = vmatpush1.msra.mxu0 0.0
    %6622 = vmatprep.subr.mxu0 0.0
    %6623 = vmatpush1.msra.mxu0 0.0
    %6624 = vmatprep.subr.mxu0 0.0
    %6625 = vmatpush1.msra.mxu0 0.0
    %6626 = vmatprep.subr.mxu0 0.0
    %6627 = vmatpush1.msra.mxu0 0.0
    %6628 = vmatprep.subr.mxu0 0.0
    %6629 = vmatpush1.msra.mxu0 0.0
    %6630 = vmatprep.subr.mxu0 0.0
    %6631 = vmatpush1.msra.mxu0 0.0
    %6632 = vmatprep.subr.mxu0 0.0
    %6633 = vmatpush1.msra.mxu0 0.0
    %6634 = vmatprep.subr.mxu0 0.0
    %6635 = vmatpush1.msra.mxu0 0.0
    %6636 = vmatprep.subr.mxu0 0.0
    %6637 = vmatpush1.msra.mxu0 0.0
    %6638 = vmatprep.subr.mxu0 0.0
    %6639 = vmatpush1.msra.mxu0 0.0
    %6640 = vmatprep.subr.mxu0 0.0
    %6641 = vmatpush1.msra.mxu0 0.0
    %6642 = vmatprep.subr.mxu0 0.0
    %6643 = vmatpush1.msra.mxu0 0.0
    %6644 = vmatprep.subr.mxu0 0.0
    %6645 = vmatpush1.msra.mxu0 0.0
    %6646 = vmatprep.mubr.f32.mxu0 0.0
    %6647 = vmatmul.mubr.f32.gmra.mrb[0].mxu0 %v6571
    %v6648 = vpop.f32.mrb[0].mxu0
    %v6649 = vadd.f32 0.0, %v6648
    %v6650 = vpop.f32.mrb[0].mxu0
    %6651 = vmatprep.mubr.f32.mxu0 0.0
    %6652 = vmatmul.mubr.f32.gmra.mrb[0].mxu0 %v6574
    %v6653 = vpop.f32.mrb[0].mxu0
    %v6654 = vadd.f32 0.0, %v6653
    %v6655 = vpop.f32.mrb[0].mxu0
    %6656 = vmatprep.mubr.f32.mxu0 0.0
    %6657 = vmatmul.mubr.f32.gmra.mrb[0].mxu0 %v6577
    %v6658 = vpop.f32.mrb[0].mxu0
    %v6659 = vadd.f32 0.0, %v6658
    %v6660 = vpop.f32.mrb[0].mxu0
    %6661 = vmatprep.mubr.f32.mxu0 0.0
    %6662 = vmatmul.mubr.f32.gmra.mrb[0].mxu0 %v6580
    %v6663 = vpop.f32.mrb[0].mxu0
    %v6664 = vadd.f32 0.0, %v6663
    %v6665 = vpop.f32.mrb[0].mxu0
    %6666 = vdwg.mxu0
    %v6667 = vadd.f32 %v5909, %v6649
    %v6668 = vadd.f32 %v5910, %v6654
    %v6669 = vadd.f32 %v5911, %v6659
    %v6670 = vadd.f32 %v5912, %v6664
    %v6671 = vadd.f32 %v3556, %v6667
    %v6672 = vadd.f32 %v3557, %v6668
    %v6673 = vadd.f32 %v3558, %v6669
    %v6674 = vadd.f32 %v3559, %v6670
    %s6675 = scalar_lea.vmem %s8, 1
    %v6676 = vld [vmem:[%s6675] sm:$0x1]
    %v6678 = vlaneseq
    %v6679 = vshrl.u32 %v6678, 7
    %v6680 = vsub.s32 0, %v6679
    %v6681 = vrot.slane %v6676, %v6680
    %v6683 = vadd.f32 %v6671, %v6681
    %v6684 = vadd.f32 %v6672, %v6681
    %v6685 = vadd.f32 %v6673, %v6681
    %v6686 = vadd.f32 %v6674, %v6681
    %s6687 = scalar_lea.vmem %s9, 1
    %v6688 = vld [vmem:[%s6687] sm:$0x1]
    %s6689 = scalar_lea.vmem %s10, 1
    %v6690 = vld [vmem:[%s6689] sm:$0x1]
    %v6691 = vsel %vm135, %v6683, 0.0
    %6692 = vadd.xlane.f32.xlu0 %v6691
    %v6693 = vpop.xlane.xlu0 %6692
    %v6694 = vsel %vm135, %v6684, 0.0
    %6695 = vadd.xlane.f32.xlu0 %v6694
    %v6696 = vpop.xlane.xlu0 %6695
    %v6697 = vsel %vm135, %v6685, 0.0
    %6698 = vadd.xlane.f32.xlu0 %v6697
    %v6699 = vpop.xlane.xlu0 %6698
    %v6700 = vsel %vm135, %v6686, 0.0
    %6701 = vadd.xlane.f32.xlu0 %v6700
    %v6702 = vpop.xlane.xlu0 %6701
    %v6703 = vmul.f32 %v6693, %v3196
    %v6704 = vmul.f32 %v6696, %v3196
    %v6705 = vmul.f32 %v6699, %v3196
    %v6706 = vmul.f32 %v6702, %v3196
    %v6707 = vsub.f32 %v6683, %v6703
    %v6708 = vsub.f32 %v6684, %v6704
    %v6709 = vsub.f32 %v6685, %v6705
    %v6710 = vsub.f32 %v6686, %v6706
    %v6711 = vmul.f32 %v6707, %v6707
    %v6712 = vmul.f32 %v6708, %v6708
    %v6713 = vmul.f32 %v6709, %v6709
    %v6714 = vmul.f32 %v6710, %v6710
    %v6715 = vsel %vm135, %v6711, 0.0
    %6716 = vadd.xlane.f32.xlu0 %v6715
    %v6717 = vpop.xlane.xlu0 %6716
    %v6718 = vsel %vm135, %v6712, 0.0
    %6719 = vadd.xlane.f32.xlu0 %v6718
    %v6720 = vpop.xlane.xlu0 %6719
    %v6721 = vsel %vm135, %v6713, 0.0
    %6722 = vadd.xlane.f32.xlu0 %v6721
    %v6723 = vpop.xlane.xlu0 %6722
    %v6724 = vsel %vm135, %v6714, 0.0
    %6725 = vadd.xlane.f32.xlu0 %v6724
    %v6726 = vpop.xlane.xlu0 %6725
    %v6727 = vmul.f32 %v6717, %v3196
    %v6728 = vmul.f32 %v6720, %v3196
    %v6729 = vmul.f32 %v6723, %v3196
    %v6730 = vmul.f32 %v6726, %v3196
    %v6732 = vlaneseq
    %v6733 = vshrl.u32 %v6732, 7
    %v6734 = vsub.s32 0, %v6733
    %v6735 = vrot.slane %v6688, %v6734
    %v6737 = vmul.f32 %v6735, %v6707
    %v6738 = vmul.f32 %v6735, %v6708
    %v6739 = vmul.f32 %v6735, %v6709
    %v6740 = vmul.f32 %v6735, %v6710
    %v6741 = vadd.f32 %v6727, 1e-05
    %v6742 = vadd.f32 %v6728, 1e-05
    %v6743 = vadd.f32 %v6729, 1e-05
    %v6744 = vadd.f32 %v6730, 1e-05
    %v6745 = vrsqrt.pop %v6741
    %v6746 = vrsqrt.pop %v6742
    %v6747 = vrsqrt.pop %v6743
    %v6748 = vrsqrt.pop %v6744
    %v6749 = vmul.f32 %v6737, %v6745
    %v6750 = vmul.f32 %v6738, %v6746
    %v6751 = vmul.f32 %v6739, %v6747
    %v6752 = vmul.f32 %v6740, %v6748
    %v6754 = vlaneseq
    %v6755 = vshrl.u32 %v6754, 7
    %v6756 = vsub.s32 0, %v6755
    %v6757 = vrot.slane %v6690, %v6756
    %v6759 = vadd.f32 %v6749, %v6757
    %v6760 = vadd.f32 %v6750, %v6757
    %v6761 = vadd.f32 %v6751, %v6757
    %v6762 = vadd.f32 %v6752, %v6757
    %s6763 = scalar_lea.vmem %s11, 32
    %v6764 = vld [vmem:[%s6763] sm:$0xff]
    %v6765 = vld [vmem:[%s6763 + $0x8] sm:$0xff]
    %v6766 = vld [vmem:[%s6763 + $0x10] sm:$0xff]
    %v6767 = vld [vmem:[%s6763 + $0x18] sm:$0xff]
    %s6768 = scalar_lea.vmem %s12, 1
    %v6769 = vld [vmem:[%s6768] sm:$0x1]
    %v6771 = vlaneseq
    %v6772 = vshrl.u32 %v6771, 7
    %v6773 = vsub.s32 0, %v6772
    %v6774 = vrot.slane %v6769, %v6773
    %v6777 = vsel %vm135, %v6759, 0
    %v6780 = vsel %vm135, %v6760, 0
    %v6783 = vsel %vm135, %v6761, 0
    %v6786 = vsel %vm135, %v6762, 0
    %6788 = vmatprep.subr.mxu0 0.0
    %6789 = vmatpush1.msra.mxu0 %v6764
    %6790 = vmatprep.subr.mxu0 0.0
    %6791 = vmatpush1.msra.mxu0 %v6765
    %6792 = vmatprep.subr.mxu0 0.0
    %6793 = vmatpush1.msra.mxu0 %v6766
    %6794 = vmatprep.subr.mxu0 0.0
    %6795 = vmatpush1.msra.mxu0 %v6767
    %6796 = vmatprep.subr.mxu0 0.0
    %6797 = vmatpush1.msra.mxu0 0.0
    %6798 = vmatprep.subr.mxu0 0.0
    %6799 = vmatpush1.msra.mxu0 0.0
    %6800 = vmatprep.subr.mxu0 0.0
    %6801 = vmatpush1.msra.mxu0 0.0
    %6802 = vmatprep.subr.mxu0 0.0
    %6803 = vmatpush1.msra.mxu0 0.0
    %6804 = vmatprep.subr.mxu0 0.0
    %6805 = vmatpush1.msra.mxu0 0.0
    %6806 = vmatprep.subr.mxu0 0.0
    %6807 = vmatpush1.msra.mxu0 0.0
    %6808 = vmatprep.subr.mxu0 0.0
    %6809 = vmatpush1.msra.mxu0 0.0
    %6810 = vmatprep.subr.mxu0 0.0
    %6811 = vmatpush1.msra.mxu0 0.0
    %6812 = vmatprep.subr.mxu0 0.0
    %6813 = vmatpush1.msra.mxu0 0.0
    %6814 = vmatprep.subr.mxu0 0.0
    %6815 = vmatpush1.msra.mxu0 0.0
    %6816 = vmatprep.subr.mxu0 0.0
    %6817 = vmatpush1.msra.mxu0 0.0
    %6818 = vmatprep.subr.mxu0 0.0
    %6819 = vmatpush1.msra.mxu0 0.0
    %6820 = vmatprep.subr.mxu0 0.0
    %6821 = vmatpush1.msra.mxu0 0.0
    %6822 = vmatprep.subr.mxu0 0.0
    %6823 = vmatpush1.msra.mxu0 0.0
    %6824 = vmatprep.subr.mxu0 0.0
    %6825 = vmatpush1.msra.mxu0 0.0
    %6826 = vmatprep.subr.mxu0 0.0
    %6827 = vmatpush1.msra.mxu0 0.0
    %6828 = vmatprep.subr.mxu0 0.0
    %6829 = vmatpush1.msra.mxu0 0.0
    %6830 = vmatprep.subr.mxu0 0.0
    %6831 = vmatpush1.msra.mxu0 0.0
    %6832 = vmatprep.subr.mxu0 0.0
    %6833 = vmatpush1.msra.mxu0 0.0
    %6834 = vmatprep.subr.mxu0 0.0
    %6835 = vmatpush1.msra.mxu0 0.0
    %6836 = vmatprep.subr.mxu0 0.0
    %6837 = vmatpush1.msra.mxu0 0.0
    %6838 = vmatprep.subr.mxu0 0.0
    %6839 = vmatpush1.msra.mxu0 0.0
    %6840 = vmatprep.subr.mxu0 0.0
    %6841 = vmatpush1.msra.mxu0 0.0
    %6842 = vmatprep.subr.mxu0 0.0
    %6843 = vmatpush1.msra.mxu0 0.0
    %6844 = vmatprep.subr.mxu0 0.0
    %6845 = vmatpush1.msra.mxu0 0.0
    %6846 = vmatprep.subr.mxu0 0.0
    %6847 = vmatpush1.msra.mxu0 0.0
    %6848 = vmatprep.subr.mxu0 0.0
    %6849 = vmatpush1.msra.mxu0 0.0
    %6850 = vmatprep.subr.mxu0 0.0
    %6851 = vmatpush1.msra.mxu0 0.0
    %6852 = vmatprep.mubr.f32.mxu0 0.0
    %6853 = vmatmul.mubr.f32.gmra.mrb[0].mxu0 %v6777
    %v6854 = vpop.f32.mrb[0].mxu0
    %v6855 = vadd.f32 %v6774, %v6854
    %v6856 = vpop.f32.mrb[0].mxu0
    %6857 = vmatprep.mubr.f32.mxu0 0.0
    %6858 = vmatmul.mubr.f32.gmra.mrb[0].mxu0 %v6780
    %v6859 = vpop.f32.mrb[0].mxu0
    %v6860 = vadd.f32 %v6774, %v6859
    %v6861 = vpop.f32.mrb[0].mxu0
    %6862 = vmatprep.mubr.f32.mxu0 0.0
    %6863 = vmatmul.mubr.f32.gmra.mrb[0].mxu0 %v6783
    %v6864 = vpop.f32.mrb[0].mxu0
    %v6865 = vadd.f32 %v6774, %v6864
    %v6866 = vpop.f32.mrb[0].mxu0
    %6867 = vmatprep.mubr.f32.mxu0 0.0
    %6868 = vmatmul.mubr.f32.gmra.mrb[0].mxu0 %v6786
    %v6869 = vpop.f32.mrb[0].mxu0
    %v6870 = vadd.f32 %v6774, %v6869
    %v6871 = vpop.f32.mrb[0].mxu0
    %6872 = vdwg.mxu0
    %v6873 = vmax.f32 %v6855, 0.0
    %v6874 = vmax.f32 %v6860, 0.0
    %v6875 = vmax.f32 %v6865, 0.0
    %v6876 = vmax.f32 %v6870, 0.0
    %s6877 = scalar_lea.vmem %s13, 64
    %v6878 = vld [vmem:[%s6877] sm:$0xff]
    %v6879 = vld [vmem:[%s6877 + $0x8] sm:$0xff]
    %v6880 = vld [vmem:[%s6877 + $0x10] sm:$0xff]
    %v6881 = vld [vmem:[%s6877 + $0x18] sm:$0xff]
    %v6882 = vld [vmem:[%s6877 + $0x20] sm:$0xff]
    %v6883 = vld [vmem:[%s6877 + $0x28] sm:$0xff]
    %v6884 = vld [vmem:[%s6877 + $0x30] sm:$0xff]
    %v6885 = vld [vmem:[%s6877 + $0x38] sm:$0xff]
    %s6886 = scalar_lea.vmem %s14, 1
    %v6887 = vld [vmem:[%s6886] sm:$0x1]
    %v6889 = vlaneseq
    %v6890 = vshrl.u32 %v6889, 7
    %v6891 = vsub.s32 0, %v6890
    %v6892 = vrot.slane %v6887, %v6891
    %v6895 = vsel %vm3384, %v6873, 0
    %v6898 = vsel %vm3384, %v6874, 0
    %v6901 = vsel %vm3384, %v6875, 0
    %v6904 = vsel %vm3384, %v6876, 0
    %6906 = vmatprep.subr.mxu0 0.0
    %6907 = vmatpush1.msra.mxu0 %v6878
    %6908 = vmatprep.subr.mxu0 0.0
    %6909 = vmatpush1.msra.mxu0 %v6879
    %6910 = vmatprep.subr.mxu0 0.0
    %6911 = vmatpush1.msra.mxu0 %v6880
    %6912 = vmatprep.subr.mxu0 0.0
    %6913 = vmatpush1.msra.mxu0 %v6881
    %6914 = vmatprep.subr.mxu0 0.0
    %6915 = vmatpush1.msra.mxu0 %v6882
    %6916 = vmatprep.subr.mxu0 0.0
    %6917 = vmatpush1.msra.mxu0 %v6883
    %6918 = vmatprep.subr.mxu0 0.0
    %6919 = vmatpush1.msra.mxu0 %v6884
    %6920 = vmatprep.subr.mxu0 0.0
    %6921 = vmatpush1.msra.mxu0 %v6885
    %6922 = vmatprep.subr.mxu0 0.0
    %6923 = vmatpush1.msra.mxu0 0.0
    %6924 = vmatprep.subr.mxu0 0.0
    %6925 = vmatpush1.msra.mxu0 0.0
    %6926 = vmatprep.subr.mxu0 0.0
    %6927 = vmatpush1.msra.mxu0 0.0
    %6928 = vmatprep.subr.mxu0 0.0
    %6929 = vmatpush1.msra.mxu0 0.0
    %6930 = vmatprep.subr.mxu0 0.0
    %6931 = vmatpush1.msra.mxu0 0.0
    %6932 = vmatprep.subr.mxu0 0.0
    %6933 = vmatpush1.msra.mxu0 0.0
    %6934 = vmatprep.subr.mxu0 0.0
    %6935 = vmatpush1.msra.mxu0 0.0
    %6936 = vmatprep.subr.mxu0 0.0
    %6937 = vmatpush1.msra.mxu0 0.0
    %6938 = vmatprep.subr.mxu0 0.0
    %6939 = vmatpush1.msra.mxu0 0.0
    %6940 = vmatprep.subr.mxu0 0.0
    %6941 = vmatpush1.msra.mxu0 0.0
    %6942 = vmatprep.subr.mxu0 0.0
    %6943 = vmatpush1.msra.mxu0 0.0
    %6944 = vmatprep.subr.mxu0 0.0
    %6945 = vmatpush1.msra.mxu0 0.0
    %6946 = vmatprep.subr.mxu0 0.0
    %6947 = vmatpush1.msra.mxu0 0.0
    %6948 = vmatprep.subr.mxu0 0.0
    %6949 = vmatpush1.msra.mxu0 0.0
    %6950 = vmatprep.subr.mxu0 0.0
    %6951 = vmatpush1.msra.mxu0 0.0
    %6952 = vmatprep.subr.mxu0 0.0
    %6953 = vmatpush1.msra.mxu0 0.0
    %6954 = vmatprep.subr.mxu0 0.0
    %6955 = vmatpush1.msra.mxu0 0.0
    %6956 = vmatprep.subr.mxu0 0.0
    %6957 = vmatpush1.msra.mxu0 0.0
    %6958 = vmatprep.subr.mxu0 0.0
    %6959 = vmatpush1.msra.mxu0 0.0
    %6960 = vmatprep.subr.mxu0 0.0
    %6961 = vmatpush1.msra.mxu0 0.0
    %6962 = vmatprep.subr.mxu0 0.0
    %6963 = vmatpush1.msra.mxu0 0.0
    %6964 = vmatprep.subr.mxu0 0.0
    %6965 = vmatpush1.msra.mxu0 0.0
    %6966 = vmatprep.subr.mxu0 0.0
    %6967 = vmatpush1.msra.mxu0 0.0
    %6968 = vmatprep.subr.mxu0 0.0
    %6969 = vmatpush1.msra.mxu0 0.0
    %6970 = vmatprep.mubr.f32.mxu0 0.0
    %6971 = vmatmul.mubr.f32.gmra.mrb[0].mxu0 %v6895
    %v6972 = vpop.f32.mrb[0].mxu0
    %v6973 = vadd.f32 %v6892, %v6972
    %v6974 = vpop.f32.mrb[0].mxu0
    %6975 = vmatprep.mubr.f32.mxu0 0.0
    %6976 = vmatmul.mubr.f32.gmra.mrb[0].mxu0 %v6898
    %v6977 = vpop.f32.mrb[0].mxu0
    %v6978 = vadd.f32 %v6892, %v6977
    %v6979 = vpop.f32.mrb[0].mxu0
    %6980 = vmatprep.mubr.f32.mxu0 0.0
    %6981 = vmatmul.mubr.f32.gmra.mrb[0].mxu0 %v6901
    %v6982 = vpop.f32.mrb[0].mxu0
    %v6983 = vadd.f32 %v6892, %v6982
    %v6984 = vpop.f32.mrb[0].mxu0
    %6985 = vmatprep.mubr.f32.mxu0 0.0
    %6986 = vmatmul.mubr.f32.gmra.mrb[0].mxu0 %v6904
    %v6987 = vpop.f32.mrb[0].mxu0
    %v6988 = vadd.f32 %v6892, %v6987
    %v6989 = vpop.f32.mrb[0].mxu0
    %6990 = vdwg.mxu0
    %v6991 = vadd.f32 %v6759, %v6973
    %v6992 = vadd.f32 %v6760, %v6978
    %v6993 = vadd.f32 %v6761, %v6983
    %v6994 = vadd.f32 %v6762, %v6988
    %s6995 = scalar_lea.vmem %s15, 1
    %v6996 = vld [vmem:[%s6995] sm:$0x1]
    %s6997 = scalar_lea.vmem %s16, 1
    %v6998 = vld [vmem:[%s6997] sm:$0x1]
    %v6999 = vsel %vm135, %v6991, 0.0
    %7000 = vadd.xlane.f32.xlu0 %v6999
    %v7001 = vpop.xlane.xlu0 %7000
    %v7002 = vsel %vm135, %v6992, 0.0
    %7003 = vadd.xlane.f32.xlu0 %v7002
    %v7004 = vpop.xlane.xlu0 %7003
    %v7005 = vsel %vm135, %v6993, 0.0
    %7006 = vadd.xlane.f32.xlu0 %v7005
    %v7007 = vpop.xlane.xlu0 %7006
    %v7008 = vsel %vm135, %v6994, 0.0
    %7009 = vadd.xlane.f32.xlu0 %v7008
    %v7010 = vpop.xlane.xlu0 %7009
    %v7011 = vmul.f32 %v7001, %v3196
    %v7012 = vmul.f32 %v7004, %v3196
    %v7013 = vmul.f32 %v7007, %v3196
    %v7014 = vmul.f32 %v7010, %v3196
    %v7015 = vsub.f32 %v6991, %v7011
    %v7016 = vsub.f32 %v6992, %v7012
    %v7017 = vsub.f32 %v6993, %v7013
    %v7018 = vsub.f32 %v6994, %v7014
    %v7019 = vmul.f32 %v7015, %v7015
    %v7020 = vmul.f32 %v7016, %v7016
    %v7021 = vmul.f32 %v7017, %v7017
    %v7022 = vmul.f32 %v7018, %v7018
    %v7023 = vsel %vm135, %v7019, 0.0
    %7024 = vadd.xlane.f32.xlu0 %v7023
    %v7025 = vpop.xlane.xlu0 %7024
    %v7026 = vsel %vm135, %v7020, 0.0
    %7027 = vadd.xlane.f32.xlu0 %v7026
    %v7028 = vpop.xlane.xlu0 %7027
    %v7029 = vsel %vm135, %v7021, 0.0
    %7030 = vadd.xlane.f32.xlu0 %v7029
    %v7031 = vpop.xlane.xlu0 %7030
    %v7032 = vsel %vm135, %v7022, 0.0
    %7033 = vadd.xlane.f32.xlu0 %v7032
    %v7034 = vpop.xlane.xlu0 %7033
    %v7035 = vmul.f32 %v7025, %v3196
    %v7036 = vmul.f32 %v7028, %v3196
    %v7037 = vmul.f32 %v7031, %v3196
    %v7038 = vmul.f32 %v7034, %v3196
    %v7040 = vlaneseq
    %v7041 = vshrl.u32 %v7040, 7
    %v7042 = vsub.s32 0, %v7041
    %v7043 = vrot.slane %v6996, %v7042
    %v7045 = vmul.f32 %v7043, %v7015
    %v7046 = vmul.f32 %v7043, %v7016
    %v7047 = vmul.f32 %v7043, %v7017
    %v7048 = vmul.f32 %v7043, %v7018
    %v7049 = vadd.f32 %v7035, 1e-05
    %v7050 = vadd.f32 %v7036, 1e-05
    %v7051 = vadd.f32 %v7037, 1e-05
    %v7052 = vadd.f32 %v7038, 1e-05
    %v7053 = vrsqrt.pop %v7049
    %v7054 = vrsqrt.pop %v7050
    %v7055 = vrsqrt.pop %v7051
    %v7056 = vrsqrt.pop %v7052
    %v7057 = vmul.f32 %v7045, %v7053
    %v7058 = vmul.f32 %v7046, %v7054
    %v7059 = vmul.f32 %v7047, %v7055
    %v7060 = vmul.f32 %v7048, %v7056
    %v7062 = vlaneseq
    %v7063 = vshrl.u32 %v7062, 7
    %v7064 = vsub.s32 0, %v7063
    %v7065 = vrot.slane %v6998, %v7064
    %v7067 = vadd.f32 %v7057, %v7065
    %v7068 = vadd.f32 %v7058, %v7065
    %v7069 = vadd.f32 %v7059, %v7065
    %v7070 = vadd.f32 %v7060, %v7065
    %7071 = vst.msk [vmem:[#allocation2] sm:$0xff] %vm135, %v7067
    %7072 = vst.msk [vmem:[#allocation2 + $0x8] sm:$0xff] %vm135, %v7068
    %7073 = vst.msk [vmem:[#allocation2 + $0x10] sm:$0xff] %vm135, %v7069
    %7074 = vst.msk [vmem:[#allocation2 + $0x18] sm:$0xff] %vm135, %v7070
    // Predicated region
    $region70: #{tpu_custom_call.1} parent=1 // pred_check
      _
    $region71: #{tpu_custom_call.1} parent=1 // pred_check_branch
      %7076 = sbr.rel (0) target = $region73
    $region72: #{tpu_custom_call.1} parent=1 // pred_region
      %s7078 = ssub.s32 512, 512
      %7079 = vsyncadd [#allocation3], %s7078
      %s7080 = sshll.u32 [#allocation2], 4
      %s7081 = int_to_ptr.vmem [resolvable:$true] %s7080
      %7086 = dma.vmem_to_hbm [thread:$0]  %s7081, 512, %s17, [#allocation3], 128, 128, 8
    $region73: #{tpu_custom_call.1} parent=1 // pred_fallthru
      _
    // Predicated region
    $region74: #{tpu_custom_call.1} parent=1 // pred_check
      _
    $region75: #{tpu_custom_call.1} parent=1 // pred_check_branch
      %7088 = sbr.rel (0) target = $region77
    $region76: #{tpu_custom_call.1} parent=1 // pred_region
      %7089 = dma.done [#allocation3], 512
    $region77: #{tpu_custom_call.1} parent=1 // pred_fallthru
      _
    %7090 = vsyncpa [#allocation3], 1

</llo_original>
